<compile_context>
chip_gen: v7x
topology: tpu7x:2x2x1
jax: 0.10.0
libtpu: 0.0.40
codegen_flags: <defaults>
</compile_context>

<pallas_src>
import functools
import math

import jax
import jax.numpy as jnp
from jax import lax
from jax.experimental import pallas as pl
from jax.experimental.pallas import tpu as pltpu


# ---------------------------------------------------------------------------
# Fused LSTM-stage kernel: relu(linearIn) -> LSTM recurrence -> linearOut
# Grid = (batch_blocks ["parallel"], time_chunks ["arbitrary"]).
# ---------------------------------------------------------------------------
def _lstm_stage_kernel(x_ref, w_in_ref, b_in_ref, w_ih_ref, w_hh_ref, b_g_ref,
                       w_out_ref, b_out_ref,
                       y_ref, hn_ref, cn_ref,
                       h_sc, c_sc, gx_sc, hist_sc):
    ck = pl.program_id(1)                       # time-chunk index (sequential)
    t_chunk, b_blk, nin = x_ref.shape
    H = h_sc.shape[-1]

    # New batch block -> reset the carried LSTM state.
    @pl.when(ck == 0)
    def _init():
        h_sc[...] = jnp.zeros_like(h_sc)
        c_sc[...] = jnp.zeros_like(c_sc)

    # ---- fused linearIn + ReLU + input-gate projection for the whole chunk:
    # (T_CHUNK*B_BLK, nin) @ (nin, H) then (T_CHUNK*B_BLK, H) @ (H, 4H).
    # gx stays in VMEM scratch (no HBM round trip).
    x_flat = x_ref[...].reshape(t_chunk * b_blk, nin)
    x0 = jnp.maximum(
        jnp.dot(x_flat.astype(w_in_ref.dtype), w_in_ref[...],
                preferred_element_type=jnp.float32) + b_in_ref[...],
        0.0)
    gx = jnp.dot(x0.astype(w_ih_ref.dtype), w_ih_ref[...],
                 preferred_element_type=jnp.float32) + b_g_ref[...]
    gx_sc[...] = gx.reshape(t_chunk, b_blk, 4 * H)

    # ---- serial LSTM recurrence over the chunk (unrolled; gates/state in f32).
    def step(t, carry):
        h, c = carry
        gates = gx_sc[t] + jnp.dot(h.astype(w_hh_ref.dtype), w_hh_ref[...],
                                   preferred_element_type=jnp.float32)
        i_g = jax.nn.sigmoid(gates[:, 0 * H:1 * H])
        f_g = jax.nn.sigmoid(gates[:, 1 * H:2 * H])
        g_g = jnp.tanh(gates[:, 2 * H:3 * H])
        o_g = jax.nn.sigmoid(gates[:, 3 * H:4 * H])
        c_new = f_g * c + i_g * g_g
        h_new = o_g * jnp.tanh(c_new)
        hist_sc[t] = h_new
        return h_new, c_new

    h_last, c_last = lax.fori_loop(
        0, t_chunk, step, (h_sc[...], c_sc[...]), unroll=True)
    h_sc[...] = h_last
    c_sc[...] = c_last
    hn_ref[...] = h_last
    cn_ref[...] = c_last

    # ---- linearOut for the whole chunk: one MXU matmul + one store per chunk.
    h_hist = hist_sc[...].reshape(t_chunk * b_blk, H)
    y = jnp.dot(h_hist.astype(w_out_ref.dtype), w_out_ref[...],
                preferred_element_type=jnp.float32) + b_out_ref[...]
    y_ref[...] = y.reshape(t_chunk, b_blk, -1).astype(y_ref.dtype)


# ---------------------------------------------------------------------------
# Per-stage wrapper
# ---------------------------------------------------------------------------
def _largest_divisor_at_most(n, target):
    c = max(1, min(target, n))
    while n % c:
        c -= 1
    return c


def lstm_stage_forward(x, p, *, t_chunk=8, num_batch_blocks=1,
                       compute_dtype=jnp.float32):
    """relu(linear(x)) -> single-layer cuDNN-style LSTM -> linear."""
    T, B, nin = x.shape
    H = p["w_hh_t"].shape[0]
    ny = p["w_out_t"].shape[1]

    tc = _largest_divisor_at_most(T, t_chunk)
    n_chunks = T // tc

    # Pad batch to a multiple of 8 (f32 sublane count) so in-kernel
    # (t, b, f) <-> (t*b, f) reshapes stay tile-aligned; padded rows are
    # independent of the real ones and are sliced off afterwards.
    b_pad = (-B) % 8
    if b_pad:
        x = jnp.pad(x, ((0, 0), (0, b_pad), (0, 0)))
    Bp = B + b_pad

    nbb = num_batch_blocks
    if nbb < 1 or Bp % nbb != 0 or (Bp // nbb) % 8 != 0:
        nbb = 1                                   # fall back: no batch split
    b_blk = Bp // nbb

    cd = compute_dtype
    # MXU operands in compute_dtype (bf16 recommended); biases/state stay f32.
    w_in = p["w_in_t"].astype(cd)
    w_ih = p["w_ih_t"].astype(cd)
    w_hh = p["w_hh_t"].astype(cd)
    w_out = p["w_out_t"].astype(cd)
    b_in = p["b_in"].reshape(1, H).astype(jnp.float32)
    b_g = (p["b_ih"] + p["b_hh"]).reshape(1, 4 * H).astype(jnp.float32)
    b_out = p["b_out"].reshape(1, ny).astype(jnp.float32)
    x = x.astype(jnp.float32)

    # Weight/bias blocks use constant index_maps so they are fetched once and
    # revisited.  NOTE: for very large H, add pipeline_mode=pl.Buffered(1) to
    # these specs so the constant blocks are not double-buffered in VMEM.
    const = lambda bb, ck: (0, 0)

    y, hn, cn = pl.pallas_call(
        _lstm_stage_kernel,
        out_shape=(
            jax.ShapeDtypeStruct((T, Bp, ny), jnp.float32),
            jax.ShapeDtypeStruct((Bp, H), jnp.float32),
            jax.ShapeDtypeStruct((Bp, H), jnp.float32),
        ),
        grid_spec=pltpu.PrefetchScalarGridSpec(
            num_scalar_prefetch=0,
            grid=(nbb, n_chunks),
            in_specs=[
                pl.BlockSpec((tc, b_blk, nin), lambda bb, ck: (ck, bb, 0)),
                pl.BlockSpec((nin, H), const),
                pl.BlockSpec((1, H), const),
                pl.BlockSpec((H, 4 * H), const),
                pl.BlockSpec((H, 4 * H), const),
                pl.BlockSpec((1, 4 * H), const),
                pl.BlockSpec((H, ny), const),
                pl.BlockSpec((1, ny), const),
            ],
            out_specs=(
                pl.BlockSpec((tc, b_blk, ny), lambda bb, ck: (ck, bb, 0)),
                pl.BlockSpec((b_blk, H), lambda bb, ck: (bb, 0)),
                pl.BlockSpec((b_blk, H), lambda bb, ck: (bb, 0)),
            ),
            scratch_shapes=[
                pltpu.VMEM((b_blk, H), jnp.float32),           # h state
                pltpu.VMEM((b_blk, H), jnp.float32),           # c state
                pltpu.VMEM((tc, b_blk, 4 * H), jnp.float32),   # gate pre-acts
                pltpu.VMEM((tc, b_blk, H), jnp.float32),       # h history
            ],
        ),
        compiler_params=pltpu.CompilerParams(
            # Batch axis is safely parallel (2 TCs on v7x); the chunked time
            # axis carries h/c state and must stay "arbitrary".
            dimension_semantics=("parallel", "arbitrary"),
            vmem_limit_bytes=64 * 1024 * 1024,
        ),
    )(x, w_in, b_in, w_ih, w_hh, b_g, w_out, b_out)

    if b_pad:
        y, hn, cn = y[:, :B], hn[:B], cn[:B]
    return y, hn.reshape(1, B, H), cn.reshape(1, B, H)


# ---------------------------------------------------------------------------
# Full-module forward (two stages), matching CudnnLstmModelLstmKernel.forward
# ---------------------------------------------------------------------------
def cudnn_lstm_model_lstm_kernel_forward(x, params, *, cut=False, delta_s=False,
                                         t_chunk=8, num_batch_blocks=1,
                                         compute_dtype=jnp.float32):
    gen, _, _ = lstm_stage_forward(
        x, params["stage1"], t_chunk=t_chunk,
        num_batch_blocks=num_batch_blocks, compute_dtype=compute_dtype)
    if cut:
        gen = jnp.broadcast_to(gen[-1:], gen.shape)   # repeat last step over T
    x1 = jnp.concatenate([x.astype(jnp.float32), gen], axis=-1)
    out, _, _ = lstm_stage_forward(
        x1, params["stage2"], t_chunk=t_chunk,
        num_batch_blocks=num_batch_blocks, compute_dtype=compute_dtype)
    return (gen - out) if delta_s else (out, gen)


# ---------------------------------------------------------------------------
# Pure-JAX reference (lax.scan) for correctness checking
# ---------------------------------------------------------------------------
def _lstm_stage_reference(x, p):
    H = p["w_hh_t"].shape[0]
    B = x.shape[1]
    x0 = jax.nn.relu(jnp.einsum("tbi,ih->tbh", x, p["w_in_t"]) + p["b_in"])
    gx = jnp.einsum("tbh,hg->tbg", x0, p["w_ih_t"]) + (p["b_ih"] + p["b_hh"])

    def step(carry, g_t):
        h, c = carry
        gates = g_t + h @ p["w_hh_t"]
        i_g = jax.nn.sigmoid(gates[:, 0 * H:1 * H])
        f_g = jax.nn.sigmoid(gates[:, 1 * H:2 * H])
        g_g = jnp.tanh(gates[:, 2 * H:3 * H])
        o_g = jax.nn.sigmoid(gates[:, 3 * H:4 * H])
        c = f_g * c + i_g * g_g
        h = o_g * jnp.tanh(c)
        return (h, c), h

    init = (jnp.zeros((B, H), jnp.float32), jnp.zeros((B, H), jnp.float32))
    (hn, cn), hs = lax.scan(step, init, gx)
    y = jnp.einsum("tbh,hy->tby", hs, p["w_out_t"]) + p["b_out"]
    return y, hn[None], cn[None]


def reference_forward(x, params, *, cut=False, delta_s=False):
    gen, _, _ = _lstm_stage_reference(x, params["stage1"])
    if cut:
        gen = jnp.broadcast_to(gen[-1:], gen.shape)
    x1 = jnp.concatenate([x, gen], axis=-1)
    out, _, _ = _lstm_stage_reference(x1, params["stage2"])
    return (gen - out) if delta_s else (out, gen)


# ---------------------------------------------------------------------------
# Parameter init (uniform(-1/sqrt(fan), 1/sqrt(fan)), like the torch module)
# ---------------------------------------------------------------------------
def init_params(key, nx, ny, hidden_size, nk=None, hidden_size_later=None):
    if nk is None:
        nk = ny
    if hidden_size_later is None:
        hidden_size_later = hidden_size

    def stage(k, nin, H, nout):
        ks = jax.random.split(k, 8)
        s_in = 1.0 / math.sqrt(nin)
        s_h = 1.0 / math.sqrt(H)
        u = lambda kk, shp, s: jax.random.uniform(kk, shp, jnp.float32, -s, s)
        return {
            "w_in_t": u(ks[0], (nin, H), s_in),        # linearIn.weight.T
            "b_in":   u(ks[1], (H,), s_in),
            "w_ih_t": u(ks[2], (H, 4 * H), s_h),       # lstm.w_ih.T (i|f|g|o)
            "w_hh_t": u(ks[3], (H, 4 * H), s_h),       # lstm.w_hh.T
            "b_ih":   u(ks[4], (4 * H,), s_h),
            "b_hh":   u(ks[5], (4 * H,), s_h),
            "w_out_t": u(ks[6], (H, nout), s_h),       # linearOut.weight.T
            "b_out":  u(ks[7], (nout,), s_h),
        }

    k1, k2 = jax.random.split(key)
    return {
        "stage1": stage(k1, nx, hidden_size, ny),
        "stage2": stage(k2, nx + nk, hidden_size_later, ny),
    }


if __name__ == "__main__":
    # H is a multiple of 128 so gate slices are lane-aligned (review item).
    T, B, nx, ny, H = 16, 16, 16, 2, 128
    key = jax.random.PRNGKey(0)
    k_x, k_p = jax.random.split(key)
    x = jax.random.normal(k_x, (T, B, nx), jnp.float32)
    params = init_params(k_p, nx, ny, H)

    # f32 MXU operands: tight check vs. pure-JAX reference.
    fwd_f32 = jax.jit(functools.partial(
        cudnn_lstm_model_lstm_kernel_forward,
        t_chunk=8, num_batch_blocks=2, compute_dtype=jnp.float32))
    out, gen = fwd_f32(x, params)
    jax.block_until_ready((out, gen))

    out_ref, gen_ref = reference_forward(x, params)
    assert out.shape == (T, B, ny) and gen.shape == (T, B, ny)
    assert jnp.allclose(gen, gen_ref, atol=5e-4, rtol=5e-4), \
        float(jnp.max(jnp.abs(gen - gen_ref)))
    assert jnp.allclose(out, out_ref, atol=5e-4, rtol=5e-4), \
        float(jnp.max(jnp.abs(out - out_ref)))

    # bf16 MXU operands (gates/state in f32): looser tolerance.
    fwd_bf16 = jax.jit(functools.partial(
        cudnn_lstm_model_lstm_kernel_forward,
        t_chunk=8, num_batch_blocks=2, compute_dtype=jnp.bfloat16))
    out_b, gen_b = fwd_bf16(x, params)
    jax.block_until_ready((out_b, gen_b))
    assert jnp.allclose(out_b, out_ref, atol=1e-1, rtol=1e-1)
    assert jnp.allclose(gen_b, gen_ref, atol=1e-1, rtol=1e-1)

    print("KERNEL_OK")
</pallas_src>

<mosaic_0001>
module attributes {stable_mosaic.version = 11 : i64} {
  func.func @_lstm_stage_kernel(%arg0: i32, %arg1: i32, %arg2: memref<8x8x16xf32, #tpu.memory_space<vmem>>, %arg3: memref<16x128xf32, #tpu.memory_space<vmem>>, %arg4: memref<1x128xf32, #tpu.memory_space<vmem>>, %arg5: memref<128x512xf32, #tpu.memory_space<vmem>>, %arg6: memref<128x512xf32, #tpu.memory_space<vmem>>, %arg7: memref<1x512xf32, #tpu.memory_space<vmem>>, %arg8: memref<128x2xf32, #tpu.memory_space<vmem>>, %arg9: memref<1x2xf32, #tpu.memory_space<vmem>>, %arg10: memref<8x8x2xf32, #tpu.memory_space<vmem>>, %arg11: memref<8x128xf32, #tpu.memory_space<vmem>>, %arg12: memref<8x128xf32, #tpu.memory_space<vmem>>, %arg13: memref<8x128xf32, #tpu.memory_space<vmem>>, %arg14: memref<8x128xf32, #tpu.memory_space<vmem>>, %arg15: memref<8x8x512xf32, #tpu.memory_space<vmem>>, %arg16: memref<8x8x128xf32, #tpu.memory_space<vmem>>) attributes {dimension_semantics = [#tpu.dimension_semantics<parallel>, #tpu.dimension_semantics<arbitrary>], iteration_bounds = array<i64: 2, 2>, scalar_prefetch = 0 : i64, scratch_operands = 4 : i64, tpu.core_type = #tpu.core_type<tc>, window_params = [{transform_indices = @transform_0, window_bounds = array<i64: 8, 8, 16>}, {pipeline_mode = #tpu.pipeline_mode<synchronous>, transform_indices = @transform_1, window_bounds = array<i64: 16, 128>}, {pipeline_mode = #tpu.pipeline_mode<synchronous>, transform_indices = @transform_2, window_bounds = array<i64: 1, 128>}, {pipeline_mode = #tpu.pipeline_mode<synchronous>, transform_indices = @transform_3, window_bounds = array<i64: 128, 512>}, {pipeline_mode = #tpu.pipeline_mode<synchronous>, transform_indices = @transform_4, window_bounds = array<i64: 128, 512>}, {pipeline_mode = #tpu.pipeline_mode<synchronous>, transform_indices = @transform_5, window_bounds = array<i64: 1, 512>}, {pipeline_mode = #tpu.pipeline_mode<synchronous>, transform_indices = @transform_6, window_bounds = array<i64: 128, 2>}, {pipeline_mode = #tpu.pipeline_mode<synchronous>, transform_indices = @transform_7, window_bounds = array<i64: 1, 2>}, {transform_indices = @transform_8, window_bounds = array<i64: 8, 8, 2>}, {transform_indices = @transform_9, window_bounds = array<i64: 8, 128>}, {transform_indices = @transform_10, window_bounds = array<i64: 8, 128>}]} {
    %c0_i32 = arith.constant 0 : i32
    %0 = arith.cmpi eq, %arg1, %c0_i32 : i32
    %1 = arith.extui %0 : i1 to i32
    %c0_i32_0 = arith.constant 0 : i32
    %2 = arith.cmpi ne, %1, %c0_i32_0 : i32
    scf.if %2 {
      %cst_120 = arith.constant 0.000000e+00 : f32
      %314 = vector.broadcast %cst_120 : f32 to vector<8x128xf32>
      %c0_121 = arith.constant 0 : index
      %c0_122 = arith.constant 0 : index
      %315 = vector.load %arg13[%c0_121, %c0_122] : memref<8x128xf32, #tpu.memory_space<vmem>>, vector<8x128xf32>
      tpu.vector_store %arg13[%c0_121, %c0_122], %314 {strides = array<i32>} : memref<8x128xf32, #tpu.memory_space<vmem>>, vector<8x128xf32>,
      %cst_123 = arith.constant 0.000000e+00 : f32
      %316 = vector.broadcast %cst_123 : f32 to vector<8x128xf32>
      %c0_124 = arith.constant 0 : index
      %c0_125 = arith.constant 0 : index
      %317 = vector.load %arg14[%c0_124, %c0_125] : memref<8x128xf32, #tpu.memory_space<vmem>>, vector<8x128xf32>
      tpu.vector_store %arg14[%c0_124, %c0_125], %316 {strides = array<i32>} : memref<8x128xf32, #tpu.memory_space<vmem>>, vector<8x128xf32>,
    } else {
    }
    %c0 = arith.constant 0 : index
    %c0_1 = arith.constant 0 : index
    %c0_2 = arith.constant 0 : index
    %3 = vector.load %arg2[%c0, %c0_1, %c0_2] : memref<8x8x16xf32, #tpu.memory_space<vmem>>, vector<8x8x16xf32>
    %4 = vector.shape_cast %3 : vector<8x8x16xf32> to vector<64x16xf32>
    %c0_3 = arith.constant 0 : index
    %c0_4 = arith.constant 0 : index
    %5 = vector.load %arg3[%c0_3, %c0_4] : memref<16x128xf32, #tpu.memory_space<vmem>>, vector<16x128xf32>
    %cst = arith.constant dense<0.000000e+00> : vector<64x128xf32>
    %6 = tpu.matmul %4, %5, %cst {dimension_numbers = #tpu.dot_dimension_numbers<[1], [0], [0], [1], [0, 0, 1, 1], [], []>} : vector<64x16xf32>, vector<16x128xf32>, vector<64x128xf32> -> vector<64x128xf32>
    %c0_5 = arith.constant 0 : index
    %c0_6 = arith.constant 0 : index
    %7 = vector.load %arg4[%c0_5, %c0_6] : memref<1x128xf32, #tpu.memory_space<vmem>>, vector<1x128xf32>
    %8 = vector.broadcast %7 : vector<1x128xf32> to vector<64x128xf32>
    %9 = arith.addf %6, %8 : vector<64x128xf32>
    %cst_7 = arith.constant 0.000000e+00 : f32
    %10 = vector.broadcast %cst_7 : f32 to vector<64x128xf32>
    %11 = arith.maximumf %9, %10 : vector<64x128xf32>
    %c0_8 = arith.constant 0 : index
    %c0_9 = arith.constant 0 : index
    %12 = vector.load %arg5[%c0_8, %c0_9] : memref<128x512xf32, #tpu.memory_space<vmem>>, vector<128x512xf32>
    %cst_10 = arith.constant dense<0.000000e+00> : vector<64x512xf32>
    %13 = tpu.matmul %11, %12, %cst_10 {dimension_numbers = #tpu.dot_dimension_numbers<[1], [0], [0], [1], [0, 0, 1, 1], [], []>} : vector<64x128xf32>, vector<128x512xf32>, vector<64x512xf32> -> vector<64x512xf32>
    %c0_11 = arith.constant 0 : index
    %c0_12 = arith.constant 0 : index
    %14 = vector.load %arg7[%c0_11, %c0_12] : memref<1x512xf32, #tpu.memory_space<vmem>>, vector<1x512xf32>
    %15 = vector.broadcast %14 : vector<1x512xf32> to vector<64x512xf32>
    %16 = arith.addf %13, %15 : vector<64x512xf32>
    %17 = vector.shape_cast %16 : vector<64x512xf32> to vector<8x8x512xf32>
    %c0_13 = arith.constant 0 : index
    %c0_14 = arith.constant 0 : index
    %c0_15 = arith.constant 0 : index
    %18 = vector.load %arg15[%c0_13, %c0_14, %c0_15] : memref<8x8x512xf32, #tpu.memory_space<vmem>>, vector<8x8x512xf32>
    tpu.vector_store %arg15[%c0_13, %c0_14, %c0_15], %17 {strides = array<i32>} : memref<8x8x512xf32, #tpu.memory_space<vmem>>, vector<8x8x512xf32>,
    %c0_16 = arith.constant 0 : index
    %c0_17 = arith.constant 0 : index
    %19 = vector.load %arg13[%c0_16, %c0_17] : memref<8x128xf32, #tpu.memory_space<vmem>>, vector<8x128xf32>
    %c0_18 = arith.constant 0 : index
    %c0_19 = arith.constant 0 : index
    %20 = vector.load %arg14[%c0_18, %c0_19] : memref<8x128xf32, #tpu.memory_space<vmem>>, vector<8x128xf32>
    %c0_i32_20 = arith.constant 0 : i32
    %21 = arith.index_cast %c0_i32_20 : i32 to index
    %c0_21 = arith.constant 0 : index
    %c0_22 = arith.constant 0 : index
    %22 = vector.load %arg15[%21, %c0_21, %c0_22] : memref<8x8x512xf32, #tpu.memory_space<vmem>>, vector<1x8x512xf32>
    %23 = vector.shape_cast %22 : vector<1x8x512xf32> to vector<8x512xf32>
    %c0_23 = arith.constant 0 : index
    %c0_24 = arith.constant 0 : index
    %24 = vector.load %arg6[%c0_23, %c0_24] : memref<128x512xf32, #tpu.memory_space<vmem>>, vector<128x512xf32>
    %cst_25 = arith.constant dense<0.000000e+00> : vector<8x512xf32>
    %25 = tpu.matmul %19, %24, %cst_25 {dimension_numbers = #tpu.dot_dimension_numbers<[1], [0], [0], [1], [0, 0, 1, 1], [], []>} : vector<8x128xf32>, vector<128x512xf32>, vector<8x512xf32> -> vector<8x512xf32>
    %26 = arith.addf %23, %25 : vector<8x512xf32>
    %27 = vector.extract_strided_slice %26 {offsets = [0, 0], sizes = [8, 128], strides = [1, 1]} : vector<8x512xf32> to vector<8x128xf32>
    %28 = arith.negf %27 : vector<8x128xf32>
    %29 = math.exp %28 : vector<8x128xf32>
    %cst_26 = arith.constant 1.000000e+00 : f32
    %30 = vector.broadcast %cst_26 : f32 to vector<8x128xf32>
    %31 = arith.addf %30, %29 : vector<8x128xf32>
    %32 = arith.divf %30, %31 : vector<8x128xf32>
    %33 = vector.extract_strided_slice %26 {offsets = [0, 128], sizes = [8, 128], strides = [1, 1]} : vector<8x512xf32> to vector<8x128xf32>
    %34 = arith.negf %33 : vector<8x128xf32>
    %35 = math.exp %34 : vector<8x128xf32>
    %cst_27 = arith.constant 1.000000e+00 : f32
    %36 = vector.broadcast %cst_27 : f32 to vector<8x128xf32>
    %37 = arith.addf %36, %35 : vector<8x128xf32>
    %38 = arith.divf %36, %37 : vector<8x128xf32>
    %39 = vector.extract_strided_slice %26 {offsets = [0, 256], sizes = [8, 128], strides = [1, 1]} : vector<8x512xf32> to vector<8x128xf32>
    %40 = math.tanh %39 : vector<8x128xf32>
    %41 = vector.extract_strided_slice %26 {offsets = [0, 384], sizes = [8, 128], strides = [1, 1]} : vector<8x512xf32> to vector<8x128xf32>
    %42 = arith.negf %41 : vector<8x128xf32>
    %43 = math.exp %42 : vector<8x128xf32>
    %cst_28 = arith.constant 1.000000e+00 : f32
    %44 = vector.broadcast %cst_28 : f32 to vector<8x128xf32>
    %45 = arith.addf %44, %43 : vector<8x128xf32>
    %46 = arith.divf %44, %45 : vector<8x128xf32>
    %47 = arith.mulf %38, %20 : vector<8x128xf32>
    %48 = arith.mulf %32, %40 : vector<8x128xf32>
    %49 = arith.addf %47, %48 : vector<8x128xf32>
    %50 = math.tanh %49 : vector<8x128xf32>
    %51 = arith.mulf %46, %50 : vector<8x128xf32>
    %52 = arith.index_cast %c0_i32_20 : i32 to index
    %c0_29 = arith.constant 0 : index
    %c0_30 = arith.constant 0 : index
    %53 = vector.load %arg16[%52, %c0_29, %c0_30] : memref<8x8x128xf32, #tpu.memory_space<vmem>>, vector<1x8x128xf32>
    %54 = vector.shape_cast %53 : vector<1x8x128xf32> to vector<8x128xf32>
    %55 = vector.shape_cast %51 : vector<8x128xf32> to vector<1x8x128xf32>
    tpu.vector_store %arg16[%52, %c0_29, %c0_30], %55 {strides = array<i32>} : memref<8x8x128xf32, #tpu.memory_space<vmem>>, vector<1x8x128xf32>,
    %c1_i32 = arith.constant 1 : i32
    %56 = arith.index_cast %c1_i32 : i32 to index
    %c0_31 = arith.constant 0 : index
    %c0_32 = arith.constant 0 : index
    %57 = vector.load %arg15[%56, %c0_31, %c0_32] : memref<8x8x512xf32, #tpu.memory_space<vmem>>, vector<1x8x512xf32>
    %58 = vector.shape_cast %57 : vector<1x8x512xf32> to vector<8x512xf32>
    %c0_33 = arith.constant 0 : index
    %c0_34 = arith.constant 0 : index
    %59 = vector.load %arg6[%c0_33, %c0_34] : memref<128x512xf32, #tpu.memory_space<vmem>>, vector<128x512xf32>
    %cst_35 = arith.constant dense<0.000000e+00> : vector<8x512xf32>
    %60 = tpu.matmul %51, %59, %cst_35 {dimension_numbers = #tpu.dot_dimension_numbers<[1], [0], [0], [1], [0, 0, 1, 1], [], []>} : vector<8x128xf32>, vector<128x512xf32>, vector<8x512xf32> -> vector<8x512xf32>
    %61 = arith.addf %58, %60 : vector<8x512xf32>
    %62 = vector.extract_strided_slice %61 {offsets = [0, 0], sizes = [8, 128], strides = [1, 1]} : vector<8x512xf32> to vector<8x128xf32>
    %63 = arith.negf %62 : vector<8x128xf32>
    %64 = math.exp %63 : vector<8x128xf32>
    %cst_36 = arith.constant 1.000000e+00 : f32
    %65 = vector.broadcast %cst_36 : f32 to vector<8x128xf32>
    %66 = arith.addf %65, %64 : vector<8x128xf32>
    %67 = arith.divf %65, %66 : vector<8x128xf32>
    %68 = vector.extract_strided_slice %61 {offsets = [0, 128], sizes = [8, 128], strides = [1, 1]} : vector<8x512xf32> to vector<8x128xf32>
    %69 = arith.negf %68 : vector<8x128xf32>
    %70 = math.exp %69 : vector<8x128xf32>
    %cst_37 = arith.constant 1.000000e+00 : f32
    %71 = vector.broadcast %cst_37 : f32 to vector<8x128xf32>
    %72 = arith.addf %71, %70 : vector<8x128xf32>
    %73 = arith.divf %71, %72 : vector<8x128xf32>
    %74 = vector.extract_strided_slice %61 {offsets = [0, 256], sizes = [8, 128], strides = [1, 1]} : vector<8x512xf32> to vector<8x128xf32>
    %75 = math.tanh %74 : vector<8x128xf32>
    %76 = vector.extract_strided_slice %61 {offsets = [0, 384], sizes = [8, 128], strides = [1, 1]} : vector<8x512xf32> to vector<8x128xf32>
    %77 = arith.negf %76 : vector<8x128xf32>
    %78 = math.exp %77 : vector<8x128xf32>
    %cst_38 = arith.constant 1.000000e+00 : f32
    %79 = vector.broadcast %cst_38 : f32 to vector<8x128xf32>
    %80 = arith.addf %79, %78 : vector<8x128xf32>
    %81 = arith.divf %79, %80 : vector<8x128xf32>
    %82 = arith.mulf %73, %49 : vector<8x128xf32>
    %83 = arith.mulf %67, %75 : vector<8x128xf32>
    %84 = arith.addf %82, %83 : vector<8x128xf32>
    %85 = math.tanh %84 : vector<8x128xf32>
    %86 = arith.mulf %81, %85 : vector<8x128xf32>
    %87 = arith.index_cast %c1_i32 : i32 to index
    %c0_39 = arith.constant 0 : index
    %c0_40 = arith.constant 0 : index
    %88 = vector.load %arg16[%87, %c0_39, %c0_40] : memref<8x8x128xf32, #tpu.memory_space<vmem>>, vector<1x8x128xf32>
    %89 = vector.shape_cast %88 : vector<1x8x128xf32> to vector<8x128xf32>
    %90 = vector.shape_cast %86 : vector<8x128xf32> to vector<1x8x128xf32>
    tpu.vector_store %arg16[%87, %c0_39, %c0_40], %90 {strides = array<i32>} : memref<8x8x128xf32, #tpu.memory_space<vmem>>, vector<1x8x128xf32>,
    %c2_i32 = arith.constant 2 : i32
    %91 = arith.index_cast %c2_i32 : i32 to index
    %c0_41 = arith.constant 0 : index
    %c0_42 = arith.constant 0 : index
    %92 = vector.load %arg15[%91, %c0_41, %c0_42] : memref<8x8x512xf32, #tpu.memory_space<vmem>>, vector<1x8x512xf32>
    %93 = vector.shape_cast %92 : vector<1x8x512xf32> to vector<8x512xf32>
    %c0_43 = arith.constant 0 : index
    %c0_44 = arith.constant 0 : index
    %94 = vector.load %arg6[%c0_43, %c0_44] : memref<128x512xf32, #tpu.memory_space<vmem>>, vector<128x512xf32>
    %cst_45 = arith.constant dense<0.000000e+00> : vector<8x512xf32>
    %95 = tpu.matmul %86, %94, %cst_45 {dimension_numbers = #tpu.dot_dimension_numbers<[1], [0], [0], [1], [0, 0, 1, 1], [], []>} : vector<8x128xf32>, vector<128x512xf32>, vector<8x512xf32> -> vector<8x512xf32>
    %96 = arith.addf %93, %95 : vector<8x512xf32>
    %97 = vector.extract_strided_slice %96 {offsets = [0, 0], sizes = [8, 128], strides = [1, 1]} : vector<8x512xf32> to vector<8x128xf32>
    %98 = arith.negf %97 : vector<8x128xf32>
    %99 = math.exp %98 : vector<8x128xf32>
    %cst_46 = arith.constant 1.000000e+00 : f32
    %100 = vector.broadcast %cst_46 : f32 to vector<8x128xf32>
    %101 = arith.addf %100, %99 : vector<8x128xf32>
    %102 = arith.divf %100, %101 : vector<8x128xf32>
    %103 = vector.extract_strided_slice %96 {offsets = [0, 128], sizes = [8, 128], strides = [1, 1]} : vector<8x512xf32> to vector<8x128xf32>
    %104 = arith.negf %103 : vector<8x128xf32>
    %105 = math.exp %104 : vector<8x128xf32>
    %cst_47 = arith.constant 1.000000e+00 : f32
    %106 = vector.broadcast %cst_47 : f32 to vector<8x128xf32>
    %107 = arith.addf %106, %105 : vector<8x128xf32>
    %108 = arith.divf %106, %107 : vector<8x128xf32>
    %109 = vector.extract_strided_slice %96 {offsets = [0, 256], sizes = [8, 128], strides = [1, 1]} : vector<8x512xf32> to vector<8x128xf32>
    %110 = math.tanh %109 : vector<8x128xf32>
    %111 = vector.extract_strided_slice %96 {offsets = [0, 384], sizes = [8, 128], strides = [1, 1]} : vector<8x512xf32> to vector<8x128xf32>
    %112 = arith.negf %111 : vector<8x128xf32>
    %113 = math.exp %112 : vector<8x128xf32>
    %cst_48 = arith.constant 1.000000e+00 : f32
    %114 = vector.broadcast %cst_48 : f32 to vector<8x128xf32>
    %115 = arith.addf %114, %113 : vector<8x128xf32>
    %116 = arith.divf %114, %115 : vector<8x128xf32>
    %117 = arith.mulf %108, %84 : vector<8x128xf32>
    %118 = arith.mulf %102, %110 : vector<8x128xf32>
    %119 = arith.addf %117, %118 : vector<8x128xf32>
    %120 = math.tanh %119 : vector<8x128xf32>
    %121 = arith.mulf %116, %120 : vector<8x128xf32>
    %122 = arith.index_cast %c2_i32 : i32 to index
    %c0_49 = arith.constant 0 : index
    %c0_50 = arith.constant 0 : index
    %123 = vector.load %arg16[%122, %c0_49, %c0_50] : memref<8x8x128xf32, #tpu.memory_space<vmem>>, vector<1x8x128xf32>
    %124 = vector.shape_cast %123 : vector<1x8x128xf32> to vector<8x128xf32>
    %125 = vector.shape_cast %121 : vector<8x128xf32> to vector<1x8x128xf32>
    tpu.vector_store %arg16[%122, %c0_49, %c0_50], %125 {strides = array<i32>} : memref<8x8x128xf32, #tpu.memory_space<vmem>>, vector<1x8x128xf32>,
    %c3_i32 = arith.constant 3 : i32
    %126 = arith.index_cast %c3_i32 : i32 to index
    %c0_51 = arith.constant 0 : index
    %c0_52 = arith.constant 0 : index
    %127 = vector.load %arg15[%126, %c0_51, %c0_52] : memref<8x8x512xf32, #tpu.memory_space<vmem>>, vector<1x8x512xf32>
    %128 = vector.shape_cast %127 : vector<1x8x512xf32> to vector<8x512xf32>
    %c0_53 = arith.constant 0 : index
    %c0_54 = arith.constant 0 : index
    %129 = vector.load %arg6[%c0_53, %c0_54] : memref<128x512xf32, #tpu.memory_space<vmem>>, vector<128x512xf32>
    %cst_55 = arith.constant dense<0.000000e+00> : vector<8x512xf32>
    %130 = tpu.matmul %121, %129, %cst_55 {dimension_numbers = #tpu.dot_dimension_numbers<[1], [0], [0], [1], [0, 0, 1, 1], [], []>} : vector<8x128xf32>, vector<128x512xf32>, vector<8x512xf32> -> vector<8x512xf32>
    %131 = arith.addf %128, %130 : vector<8x512xf32>
    %132 = vector.extract_strided_slice %131 {offsets = [0, 0], sizes = [8, 128], strides = [1, 1]} : vector<8x512xf32> to vector<8x128xf32>
    %133 = arith.negf %132 : vector<8x128xf32>
    %134 = math.exp %133 : vector<8x128xf32>
    %cst_56 = arith.constant 1.000000e+00 : f32
    %135 = vector.broadcast %cst_56 : f32 to vector<8x128xf32>
    %136 = arith.addf %135, %134 : vector<8x128xf32>
    %137 = arith.divf %135, %136 : vector<8x128xf32>
    %138 = vector.extract_strided_slice %131 {offsets = [0, 128], sizes = [8, 128], strides = [1, 1]} : vector<8x512xf32> to vector<8x128xf32>
    %139 = arith.negf %138 : vector<8x128xf32>
    %140 = math.exp %139 : vector<8x128xf32>
    %cst_57 = arith.constant 1.000000e+00 : f32
    %141 = vector.broadcast %cst_57 : f32 to vector<8x128xf32>
    %142 = arith.addf %141, %140 : vector<8x128xf32>
    %143 = arith.divf %141, %142 : vector<8x128xf32>
    %144 = vector.extract_strided_slice %131 {offsets = [0, 256], sizes = [8, 128], strides = [1, 1]} : vector<8x512xf32> to vector<8x128xf32>
    %145 = math.tanh %144 : vector<8x128xf32>
    %146 = vector.extract_strided_slice %131 {offsets = [0, 384], sizes = [8, 128], strides = [1, 1]} : vector<8x512xf32> to vector<8x128xf32>
    %147 = arith.negf %146 : vector<8x128xf32>
    %148 = math.exp %147 : vector<8x128xf32>
    %cst_58 = arith.constant 1.000000e+00 : f32
    %149 = vector.broadcast %cst_58 : f32 to vector<8x128xf32>
    %150 = arith.addf %149, %148 : vector<8x128xf32>
    %151 = arith.divf %149, %150 : vector<8x128xf32>
    %152 = arith.mulf %143, %119 : vector<8x128xf32>
    %153 = arith.mulf %137, %145 : vector<8x128xf32>
    %154 = arith.addf %152, %153 : vector<8x128xf32>
    %155 = math.tanh %154 : vector<8x128xf32>
    %156 = arith.mulf %151, %155 : vector<8x128xf32>
    %157 = arith.index_cast %c3_i32 : i32 to index
    %c0_59 = arith.constant 0 : index
    %c0_60 = arith.constant 0 : index
    %158 = vector.load %arg16[%157, %c0_59, %c0_60] : memref<8x8x128xf32, #tpu.memory_space<vmem>>, vector<1x8x128xf32>
    %159 = vector.shape_cast %158 : vector<1x8x128xf32> to vector<8x128xf32>
    %160 = vector.shape_cast %156 : vector<8x128xf32> to vector<1x8x128xf32>
    tpu.vector_store %arg16[%157, %c0_59, %c0_60], %160 {strides = array<i32>} : memref<8x8x128xf32, #tpu.memory_space<vmem>>, vector<1x8x128xf32>,
    %c4_i32 = arith.constant 4 : i32
    %161 = arith.index_cast %c4_i32 : i32 to index
    %c0_61 = arith.constant 0 : index
    %c0_62 = arith.constant 0 : index
    %162 = vector.load %arg15[%161, %c0_61, %c0_62] : memref<8x8x512xf32, #tpu.memory_space<vmem>>, vector<1x8x512xf32>
    %163 = vector.shape_cast %162 : vector<1x8x512xf32> to vector<8x512xf32>
    %c0_63 = arith.constant 0 : index
    %c0_64 = arith.constant 0 : index
    %164 = vector.load %arg6[%c0_63, %c0_64] : memref<128x512xf32, #tpu.memory_space<vmem>>, vector<128x512xf32>
    %cst_65 = arith.constant dense<0.000000e+00> : vector<8x512xf32>
    %165 = tpu.matmul %156, %164, %cst_65 {dimension_numbers = #tpu.dot_dimension_numbers<[1], [0], [0], [1], [0, 0, 1, 1], [], []>} : vector<8x128xf32>, vector<128x512xf32>, vector<8x512xf32> -> vector<8x512xf32>
    %166 = arith.addf %163, %165 : vector<8x512xf32>
    %167 = vector.extract_strided_slice %166 {offsets = [0, 0], sizes = [8, 128], strides = [1, 1]} : vector<8x512xf32> to vector<8x128xf32>
    %168 = arith.negf %167 : vector<8x128xf32>
    %169 = math.exp %168 : vector<8x128xf32>
    %cst_66 = arith.constant 1.000000e+00 : f32
    %170 = vector.broadcast %cst_66 : f32 to vector<8x128xf32>
    %171 = arith.addf %170, %169 : vector<8x128xf32>
    %172 = arith.divf %170, %171 : vector<8x128xf32>
    %173 = vector.extract_strided_slice %166 {offsets = [0, 128], sizes = [8, 128], strides = [1, 1]} : vector<8x512xf32> to vector<8x128xf32>
    %174 = arith.negf %173 : vector<8x128xf32>
    %175 = math.exp %174 : vector<8x128xf32>
    %cst_67 = arith.constant 1.000000e+00 : f32
    %176 = vector.broadcast %cst_67 : f32 to vector<8x128xf32>
    %177 = arith.addf %176, %175 : vector<8x128xf32>
    %178 = arith.divf %176, %177 : vector<8x128xf32>
    %179 = vector.extract_strided_slice %166 {offsets = [0, 256], sizes = [8, 128], strides = [1, 1]} : vector<8x512xf32> to vector<8x128xf32>
    %180 = math.tanh %179 : vector<8x128xf32>
    %181 = vector.extract_strided_slice %166 {offsets = [0, 384], sizes = [8, 128], strides = [1, 1]} : vector<8x512xf32> to vector<8x128xf32>
    %182 = arith.negf %181 : vector<8x128xf32>
    %183 = math.exp %182 : vector<8x128xf32>
    %cst_68 = arith.constant 1.000000e+00 : f32
    %184 = vector.broadcast %cst_68 : f32 to vector<8x128xf32>
    %185 = arith.addf %184, %183 : vector<8x128xf32>
    %186 = arith.divf %184, %185 : vector<8x128xf32>
    %187 = arith.mulf %178, %154 : vector<8x128xf32>
    %188 = arith.mulf %172, %180 : vector<8x128xf32>
    %189 = arith.addf %187, %188 : vector<8x128xf32>
    %190 = math.tanh %189 : vector<8x128xf32>
    %191 = arith.mulf %186, %190 : vector<8x128xf32>
    %192 = arith.index_cast %c4_i32 : i32 to index
    %c0_69 = arith.constant 0 : index
    %c0_70 = arith.constant 0 : index
    %193 = vector.load %arg16[%192, %c0_69, %c0_70] : memref<8x8x128xf32, #tpu.memory_space<vmem>>, vector<1x8x128xf32>
    %194 = vector.shape_cast %193 : vector<1x8x128xf32> to vector<8x128xf32>
    %195 = vector.shape_cast %191 : vector<8x128xf32> to vector<1x8x128xf32>
    tpu.vector_store %arg16[%192, %c0_69, %c0_70], %195 {strides = array<i32>} : memref<8x8x128xf32, #tpu.memory_space<vmem>>, vector<1x8x128xf32>,
    %c5_i32 = arith.constant 5 : i32
    %196 = arith.index_cast %c5_i32 : i32 to index
    %c0_71 = arith.constant 0 : index
    %c0_72 = arith.constant 0 : index
    %197 = vector.load %arg15[%196, %c0_71, %c0_72] : memref<8x8x512xf32, #tpu.memory_space<vmem>>, vector<1x8x512xf32>
    %198 = vector.shape_cast %197 : vector<1x8x512xf32> to vector<8x512xf32>
    %c0_73 = arith.constant 0 : index
    %c0_74 = arith.constant 0 : index
    %199 = vector.load %arg6[%c0_73, %c0_74] : memref<128x512xf32, #tpu.memory_space<vmem>>, vector<128x512xf32>
    %cst_75 = arith.constant dense<0.000000e+00> : vector<8x512xf32>
    %200 = tpu.matmul %191, %199, %cst_75 {dimension_numbers = #tpu.dot_dimension_numbers<[1], [0], [0], [1], [0, 0, 1, 1], [], []>} : vector<8x128xf32>, vector<128x512xf32>, vector<8x512xf32> -> vector<8x512xf32>
    %201 = arith.addf %198, %200 : vector<8x512xf32>
    %202 = vector.extract_strided_slice %201 {offsets = [0, 0], sizes = [8, 128], strides = [1, 1]} : vector<8x512xf32> to vector<8x128xf32>
    %203 = arith.negf %202 : vector<8x128xf32>
    %204 = math.exp %203 : vector<8x128xf32>
    %cst_76 = arith.constant 1.000000e+00 : f32
    %205 = vector.broadcast %cst_76 : f32 to vector<8x128xf32>
    %206 = arith.addf %205, %204 : vector<8x128xf32>
    %207 = arith.divf %205, %206 : vector<8x128xf32>
    %208 = vector.extract_strided_slice %201 {offsets = [0, 128], sizes = [8, 128], strides = [1, 1]} : vector<8x512xf32> to vector<8x128xf32>
    %209 = arith.negf %208 : vector<8x128xf32>
    %210 = math.exp %209 : vector<8x128xf32>
    %cst_77 = arith.constant 1.000000e+00 : f32
    %211 = vector.broadcast %cst_77 : f32 to vector<8x128xf32>
    %212 = arith.addf %211, %210 : vector<8x128xf32>
    %213 = arith.divf %211, %212 : vector<8x128xf32>
    %214 = vector.extract_strided_slice %201 {offsets = [0, 256], sizes = [8, 128], strides = [1, 1]} : vector<8x512xf32> to vector<8x128xf32>
    %215 = math.tanh %214 : vector<8x128xf32>
    %216 = vector.extract_strided_slice %201 {offsets = [0, 384], sizes = [8, 128], strides = [1, 1]} : vector<8x512xf32> to vector<8x128xf32>
    %217 = arith.negf %216 : vector<8x128xf32>
    %218 = math.exp %217 : vector<8x128xf32>
    %cst_78 = arith.constant 1.000000e+00 : f32
    %219 = vector.broadcast %cst_78 : f32 to vector<8x128xf32>
    %220 = arith.addf %219, %218 : vector<8x128xf32>
    %221 = arith.divf %219, %220 : vector<8x128xf32>
    %222 = arith.mulf %213, %189 : vector<8x128xf32>
    %223 = arith.mulf %207, %215 : vector<8x128xf32>
    %224 = arith.addf %222, %223 : vector<8x128xf32>
    %225 = math.tanh %224 : vector<8x128xf32>
    %226 = arith.mulf %221, %225 : vector<8x128xf32>
    %227 = arith.index_cast %c5_i32 : i32 to index
    %c0_79 = arith.constant 0 : index
    %c0_80 = arith.constant 0 : index
    %228 = vector.load %arg16[%227, %c0_79, %c0_80] : memref<8x8x128xf32, #tpu.memory_space<vmem>>, vector<1x8x128xf32>
    %229 = vector.shape_cast %228 : vector<1x8x128xf32> to vector<8x128xf32>
    %230 = vector.shape_cast %226 : vector<8x128xf32> to vector<1x8x128xf32>
    tpu.vector_store %arg16[%227, %c0_79, %c0_80], %230 {strides = array<i32>} : memref<8x8x128xf32, #tpu.memory_space<vmem>>, vector<1x8x128xf32>,
    %c6_i32 = arith.constant 6 : i32
    %231 = arith.index_cast %c6_i32 : i32 to index
    %c0_81 = arith.constant 0 : index
    %c0_82 = arith.constant 0 : index
    %232 = vector.load %arg15[%231, %c0_81, %c0_82] : memref<8x8x512xf32, #tpu.memory_space<vmem>>, vector<1x8x512xf32>
    %233 = vector.shape_cast %232 : vector<1x8x512xf32> to vector<8x512xf32>
    %c0_83 = arith.constant 0 : index
    %c0_84 = arith.constant 0 : index
    %234 = vector.load %arg6[%c0_83, %c0_84] : memref<128x512xf32, #tpu.memory_space<vmem>>, vector<128x512xf32>
    %cst_85 = arith.constant dense<0.000000e+00> : vector<8x512xf32>
    %235 = tpu.matmul %226, %234, %cst_85 {dimension_numbers = #tpu.dot_dimension_numbers<[1], [0], [0], [1], [0, 0, 1, 1], [], []>} : vector<8x128xf32>, vector<128x512xf32>, vector<8x512xf32> -> vector<8x512xf32>
    %236 = arith.addf %233, %235 : vector<8x512xf32>
    %237 = vector.extract_strided_slice %236 {offsets = [0, 0], sizes = [8, 128], strides = [1, 1]} : vector<8x512xf32> to vector<8x128xf32>
    %238 = arith.negf %237 : vector<8x128xf32>
    %239 = math.exp %238 : vector<8x128xf32>
    %cst_86 = arith.constant 1.000000e+00 : f32
    %240 = vector.broadcast %cst_86 : f32 to vector<8x128xf32>
    %241 = arith.addf %240, %239 : vector<8x128xf32>
    %242 = arith.divf %240, %241 : vector<8x128xf32>
    %243 = vector.extract_strided_slice %236 {offsets = [0, 128], sizes = [8, 128], strides = [1, 1]} : vector<8x512xf32> to vector<8x128xf32>
    %244 = arith.negf %243 : vector<8x128xf32>
    %245 = math.exp %244 : vector<8x128xf32>
    %cst_87 = arith.constant 1.000000e+00 : f32
    %246 = vector.broadcast %cst_87 : f32 to vector<8x128xf32>
    %247 = arith.addf %246, %245 : vector<8x128xf32>
    %248 = arith.divf %246, %247 : vector<8x128xf32>
    %249 = vector.extract_strided_slice %236 {offsets = [0, 256], sizes = [8, 128], strides = [1, 1]} : vector<8x512xf32> to vector<8x128xf32>
    %250 = math.tanh %249 : vector<8x128xf32>
    %251 = vector.extract_strided_slice %236 {offsets = [0, 384], sizes = [8, 128], strides = [1, 1]} : vector<8x512xf32> to vector<8x128xf32>
    %252 = arith.negf %251 : vector<8x128xf32>
    %253 = math.exp %252 : vector<8x128xf32>
    %cst_88 = arith.constant 1.000000e+00 : f32
    %254 = vector.broadcast %cst_88 : f32 to vector<8x128xf32>
    %255 = arith.addf %254, %253 : vector<8x128xf32>
    %256 = arith.divf %254, %255 : vector<8x128xf32>
    %257 = arith.mulf %248, %224 : vector<8x128xf32>
    %258 = arith.mulf %242, %250 : vector<8x128xf32>
    %259 = arith.addf %257, %258 : vector<8x128xf32>
    %260 = math.tanh %259 : vector<8x128xf32>
    %261 = arith.mulf %256, %260 : vector<8x128xf32>
    %262 = arith.index_cast %c6_i32 : i32 to index
    %c0_89 = arith.constant 0 : index
    %c0_90 = arith.constant 0 : index
    %263 = vector.load %arg16[%262, %c0_89, %c0_90] : memref<8x8x128xf32, #tpu.memory_space<vmem>>, vector<1x8x128xf32>
    %264 = vector.shape_cast %263 : vector<1x8x128xf32> to vector<8x128xf32>
    %265 = vector.shape_cast %261 : vector<8x128xf32> to vector<1x8x128xf32>
    tpu.vector_store %arg16[%262, %c0_89, %c0_90], %265 {strides = array<i32>} : memref<8x8x128xf32, #tpu.memory_space<vmem>>, vector<1x8x128xf32>,
    %c7_i32 = arith.constant 7 : i32
    %266 = arith.index_cast %c7_i32 : i32 to index
    %c0_91 = arith.constant 0 : index
    %c0_92 = arith.constant 0 : index
    %267 = vector.load %arg15[%266, %c0_91, %c0_92] : memref<8x8x512xf32, #tpu.memory_space<vmem>>, vector<1x8x512xf32>
    %268 = vector.shape_cast %267 : vector<1x8x512xf32> to vector<8x512xf32>
    %c0_93 = arith.constant 0 : index
    %c0_94 = arith.constant 0 : index
    %269 = vector.load %arg6[%c0_93, %c0_94] : memref<128x512xf32, #tpu.memory_space<vmem>>, vector<128x512xf32>
    %cst_95 = arith.constant dense<0.000000e+00> : vector<8x512xf32>
    %270 = tpu.matmul %261, %269, %cst_95 {dimension_numbers = #tpu.dot_dimension_numbers<[1], [0], [0], [1], [0, 0, 1, 1], [], []>} : vector<8x128xf32>, vector<128x512xf32>, vector<8x512xf32> -> vector<8x512xf32>
    %271 = arith.addf %268, %270 : vector<8x512xf32>
    %272 = vector.extract_strided_slice %271 {offsets = [0, 0], sizes = [8, 128], strides = [1, 1]} : vector<8x512xf32> to vector<8x128xf32>
    %273 = arith.negf %272 : vector<8x128xf32>
    %274 = math.exp %273 : vector<8x128xf32>
    %cst_96 = arith.constant 1.000000e+00 : f32
    %275 = vector.broadcast %cst_96 : f32 to vector<8x128xf32>
    %276 = arith.addf %275, %274 : vector<8x128xf32>
    %277 = arith.divf %275, %276 : vector<8x128xf32>
    %278 = vector.extract_strided_slice %271 {offsets = [0, 128], sizes = [8, 128], strides = [1, 1]} : vector<8x512xf32> to vector<8x128xf32>
    %279 = arith.negf %278 : vector<8x128xf32>
    %280 = math.exp %279 : vector<8x128xf32>
    %cst_97 = arith.constant 1.000000e+00 : f32
    %281 = vector.broadcast %cst_97 : f32 to vector<8x128xf32>
    %282 = arith.addf %281, %280 : vector<8x128xf32>
    %283 = arith.divf %281, %282 : vector<8x128xf32>
    %284 = vector.extract_strided_slice %271 {offsets = [0, 256], sizes = [8, 128], strides = [1, 1]} : vector<8x512xf32> to vector<8x128xf32>
    %285 = math.tanh %284 : vector<8x128xf32>
    %286 = vector.extract_strided_slice %271 {offsets = [0, 384], sizes = [8, 128], strides = [1, 1]} : vector<8x512xf32> to vector<8x128xf32>
    %287 = arith.negf %286 : vector<8x128xf32>
    %288 = math.exp %287 : vector<8x128xf32>
    %cst_98 = arith.constant 1.000000e+00 : f32
    %289 = vector.broadcast %cst_98 : f32 to vector<8x128xf32>
    %290 = arith.addf %289, %288 : vector<8x128xf32>
    %291 = arith.divf %289, %290 : vector<8x128xf32>
    %292 = arith.mulf %283, %259 : vector<8x128xf32>
    %293 = arith.mulf %277, %285 : vector<8x128xf32>
    %294 = arith.addf %292, %293 : vector<8x128xf32>
    %295 = math.tanh %294 : vector<8x128xf32>
    %296 = arith.mulf %291, %295 : vector<8x128xf32>
    %297 = arith.index_cast %c7_i32 : i32 to index
    %c0_99 = arith.constant 0 : index
    %c0_100 = arith.constant 0 : index
    %298 = vector.load %arg16[%297, %c0_99, %c0_100] : memref<8x8x128xf32, #tpu.memory_space<vmem>>, vector<1x8x128xf32>
    %299 = vector.shape_cast %298 : vector<1x8x128xf32> to vector<8x128xf32>
    %300 = vector.shape_cast %296 : vector<8x128xf32> to vector<1x8x128xf32>
    tpu.vector_store %arg16[%297, %c0_99, %c0_100], %300 {strides = array<i32>} : memref<8x8x128xf32, #tpu.memory_space<vmem>>, vector<1x8x128xf32>,
    %c8_i32 = arith.constant 8 : i32
    %c0_101 = arith.constant 0 : index
    %c0_102 = arith.constant 0 : index
    %301 = vector.load %arg13[%c0_101, %c0_102] : memref<8x128xf32, #tpu.memory_space<vmem>>, vector<8x128xf32>
    tpu.vector_store %arg13[%c0_101, %c0_102], %296 {strides = array<i32>} : memref<8x128xf32, #tpu.memory_space<vmem>>, vector<8x128xf32>,
    %c0_103 = arith.constant 0 : index
    %c0_104 = arith.constant 0 : index
    %302 = vector.load %arg14[%c0_103, %c0_104] : memref<8x128xf32, #tpu.memory_space<vmem>>, vector<8x128xf32>
    tpu.vector_store %arg14[%c0_103, %c0_104], %294 {strides = array<i32>} : memref<8x128xf32, #tpu.memory_space<vmem>>, vector<8x128xf32>,
    %c0_105 = arith.constant 0 : index
    %c0_106 = arith.constant 0 : index
    %303 = vector.load %arg11[%c0_105, %c0_106] : memref<8x128xf32, #tpu.memory_space<vmem>>, vector<8x128xf32>
    tpu.vector_store %arg11[%c0_105, %c0_106], %296 {strides = array<i32>} : memref<8x128xf32, #tpu.memory_space<vmem>>, vector<8x128xf32>,
    %c0_107 = arith.constant 0 : index
    %c0_108 = arith.constant 0 : index
    %304 = vector.load %arg12[%c0_107, %c0_108] : memref<8x128xf32, #tpu.memory_space<vmem>>, vector<8x128xf32>
    tpu.vector_store %arg12[%c0_107, %c0_108], %294 {strides = array<i32>} : memref<8x128xf32, #tpu.memory_space<vmem>>, vector<8x128xf32>,
    %c0_109 = arith.constant 0 : index
    %c0_110 = arith.constant 0 : index
    %c0_111 = arith.constant 0 : index
    %305 = vector.load %arg16[%c0_109, %c0_110, %c0_111] : memref<8x8x128xf32, #tpu.memory_space<vmem>>, vector<8x8x128xf32>
    %306 = vector.shape_cast %305 : vector<8x8x128xf32> to vector<64x128xf32>
    %c0_112 = arith.constant 0 : index
    %c0_113 = arith.constant 0 : index
    %307 = vector.load %arg8[%c0_112, %c0_113] : memref<128x2xf32, #tpu.memory_space<vmem>>, vector<128x2xf32>
    %cst_114 = arith.constant dense<0.000000e+00> : vector<64x2xf32>
    %308 = tpu.matmul %306, %307, %cst_114 {dimension_numbers = #tpu.dot_dimension_numbers<[1], [0], [0], [1], [0, 0, 1, 1], [], []>} : vector<64x128xf32>, vector<128x2xf32>, vector<64x2xf32> -> vector<64x2xf32>
    %c0_115 = arith.constant 0 : index
    %c0_116 = arith.constant 0 : index
    %309 = vector.load %arg9[%c0_115, %c0_116] : memref<1x2xf32, #tpu.memory_space<vmem>>, vector<1x2xf32>
    %310 = vector.broadcast %309 : vector<1x2xf32> to vector<64x2xf32>
    %311 = arith.addf %308, %310 : vector<64x2xf32>
    %312 = vector.shape_cast %311 : vector<64x2xf32> to vector<8x8x2xf32>
    %c0_117 = arith.constant 0 : index
    %c0_118 = arith.constant 0 : index
    %c0_119 = arith.constant 0 : index
    %313 = vector.load %arg10[%c0_117, %c0_118, %c0_119] : memref<8x8x2xf32, #tpu.memory_space<vmem>>, vector<8x8x2xf32>
    tpu.vector_store %arg10[%c0_117, %c0_118, %c0_119], %312 {strides = array<i32>} : memref<8x8x2xf32, #tpu.memory_space<vmem>>, vector<8x8x2xf32>,
    return
  }
  func.func @transform_0(%arg0: i32, %arg1: i32) -> (i32, i32, i32) {
    %c0_i32 = arith.constant 0 : i32
    %c0_i32_0 = arith.constant 0 : i32
    return %arg1, %arg0, %c0_i32 : i32, i32, i32
  }
  func.func @transform_1(%arg0: i32, %arg1: i32) -> (i32, i32) {
    %c0_i32 = arith.constant 0 : i32
    %c0_i32_0 = arith.constant 0 : i32
    %c0_i32_1 = arith.constant 0 : i32
    return %c0_i32, %c0_i32_0 : i32, i32
  }
  func.func @transform_2(%arg0: i32, %arg1: i32) -> (i32, i32) {
    %c0_i32 = arith.constant 0 : i32
    %c0_i32_0 = arith.constant 0 : i32
    %c0_i32_1 = arith.constant 0 : i32
    return %c0_i32, %c0_i32_0 : i32, i32
  }
  func.func @transform_3(%arg0: i32, %arg1: i32) -> (i32, i32) {
    %c0_i32 = arith.constant 0 : i32
    %c0_i32_0 = arith.constant 0 : i32
    %c0_i32_1 = arith.constant 0 : i32
    return %c0_i32, %c0_i32_0 : i32, i32
  }
  func.func @transform_4(%arg0: i32, %arg1: i32) -> (i32, i32) {
    %c0_i32 = arith.constant 0 : i32
    %c0_i32_0 = arith.constant 0 : i32
    %c0_i32_1 = arith.constant 0 : i32
    return %c0_i32, %c0_i32_0 : i32, i32
  }
  func.func @transform_5(%arg0: i32, %arg1: i32) -> (i32, i32) {
    %c0_i32 = arith.constant 0 : i32
    %c0_i32_0 = arith.constant 0 : i32
    %c0_i32_1 = arith.constant 0 : i32
    return %c0_i32, %c0_i32_0 : i32, i32
  }
  func.func @transform_6(%arg0: i32, %arg1: i32) -> (i32, i32) {
    %c0_i32 = arith.constant 0 : i32
    %c0_i32_0 = arith.constant 0 : i32
    %c0_i32_1 = arith.constant 0 : i32
    return %c0_i32, %c0_i32_0 : i32, i32
  }
  func.func @transform_7(%arg0: i32, %arg1: i32) -> (i32, i32) {
    %c0_i32 = arith.constant 0 : i32
    %c0_i32_0 = arith.constant 0 : i32
    %c0_i32_1 = arith.constant 0 : i32
    return %c0_i32, %c0_i32_0 : i32, i32
  }
  func.func @transform_8(%arg0: i32, %arg1: i32) -> (i32, i32, i32) {
    %c0_i32 = arith.constant 0 : i32
    %c0_i32_0 = arith.constant 0 : i32
    return %arg1, %arg0, %c0_i32 : i32, i32, i32
  }
  func.func @transform_9(%arg0: i32, %arg1: i32) -> (i32, i32) {
    %c0_i32 = arith.constant 0 : i32
    %c0_i32_0 = arith.constant 0 : i32
    return %arg0, %c0_i32 : i32, i32
  }
  func.func @transform_10(%arg0: i32, %arg1: i32) -> (i32, i32) {
    %c0_i32 = arith.constant 0 : i32
    %c0_i32_0 = arith.constant 0 : i32
    return %arg0, %c0_i32 : i32, i32
  }
}

module attributes {stable_mosaic.version = 11 : i64} {
  func.func @_lstm_stage_kernel(%arg0: i32, %arg1: i32, %arg2: memref<8x8x18xf32, #tpu.memory_space<vmem>>, %arg3: memref<18x128xf32, #tpu.memory_space<vmem>>, %arg4: memref<1x128xf32, #tpu.memory_space<vmem>>, %arg5: memref<128x512xf32, #tpu.memory_space<vmem>>, %arg6: memref<128x512xf32, #tpu.memory_space<vmem>>, %arg7: memref<1x512xf32, #tpu.memory_space<vmem>>, %arg8: memref<128x2xf32, #tpu.memory_space<vmem>>, %arg9: memref<1x2xf32, #tpu.memory_space<vmem>>, %arg10: memref<8x8x2xf32, #tpu.memory_space<vmem>>, %arg11: memref<8x128xf32, #tpu.memory_space<vmem>>, %arg12: memref<8x128xf32, #tpu.memory_space<vmem>>, %arg13: memref<8x128xf32, #tpu.memory_space<vmem>>, %arg14: memref<8x128xf32, #tpu.memory_space<vmem>>, %arg15: memref<8x8x512xf32, #tpu.memory_space<vmem>>, %arg16: memref<8x8x128xf32, #tpu.memory_space<vmem>>) attributes {dimension_semantics = [#tpu.dimension_semantics<parallel>, #tpu.dimension_semantics<arbitrary>], iteration_bounds = array<i64: 2, 2>, scalar_prefetch = 0 : i64, scratch_operands = 4 : i64, tpu.core_type = #tpu.core_type<tc>, window_params = [{transform_indices = @transform_0, window_bounds = array<i64: 8, 8, 18>}, {pipeline_mode = #tpu.pipeline_mode<synchronous>, transform_indices = @transform_1, window_bounds = array<i64: 18, 128>}, {pipeline_mode = #tpu.pipeline_mode<synchronous>, transform_indices = @transform_2, window_bounds = array<i64: 1, 128>}, {pipeline_mode = #tpu.pipeline_mode<synchronous>, transform_indices = @transform_3, window_bounds = array<i64: 128, 512>}, {pipeline_mode = #tpu.pipeline_mode<synchronous>, transform_indices = @transform_4, window_bounds = array<i64: 128, 512>}, {pipeline_mode = #tpu.pipeline_mode<synchronous>, transform_indices = @transform_5, window_bounds = array<i64: 1, 512>}, {pipeline_mode = #tpu.pipeline_mode<synchronous>, transform_indices = @transform_6, window_bounds = array<i64: 128, 2>}, {pipeline_mode = #tpu.pipeline_mode<synchronous>, transform_indices = @transform_7, window_bounds = array<i64: 1, 2>}, {transform_indices = @transform_8, window_bounds = array<i64: 8, 8, 2>}, {transform_indices = @transform_9, window_bounds = array<i64: 8, 128>}, {transform_indices = @transform_10, window_bounds = array<i64: 8, 128>}]} {
    %c0_i32 = arith.constant 0 : i32
    %0 = arith.cmpi eq, %arg1, %c0_i32 : i32
    %1 = arith.extui %0 : i1 to i32
    %c0_i32_0 = arith.constant 0 : i32
    %2 = arith.cmpi ne, %1, %c0_i32_0 : i32
    scf.if %2 {
      %cst_120 = arith.constant 0.000000e+00 : f32
      %314 = vector.broadcast %cst_120 : f32 to vector<8x128xf32>
      %c0_121 = arith.constant 0 : index
      %c0_122 = arith.constant 0 : index
      %315 = vector.load %arg13[%c0_121, %c0_122] : memref<8x128xf32, #tpu.memory_space<vmem>>, vector<8x128xf32>
      tpu.vector_store %arg13[%c0_121, %c0_122], %314 {strides = array<i32>} : memref<8x128xf32, #tpu.memory_space<vmem>>, vector<8x128xf32>,
      %cst_123 = arith.constant 0.000000e+00 : f32
      %316 = vector.broadcast %cst_123 : f32 to vector<8x128xf32>
      %c0_124 = arith.constant 0 : index
      %c0_125 = arith.constant 0 : index
      %317 = vector.load %arg14[%c0_124, %c0_125] : memref<8x128xf32, #tpu.memory_space<vmem>>, vector<8x128xf32>
      tpu.vector_store %arg14[%c0_124, %c0_125], %316 {strides = array<i32>} : memref<8x128xf32, #tpu.memory_space<vmem>>, vector<8x128xf32>,
    } else {
    }
    %c0 = arith.constant 0 : index
    %c0_1 = arith.constant 0 : index
    %c0_2 = arith.constant 0 : index
    %3 = vector.load %arg2[%c0, %c0_1, %c0_2] : memref<8x8x18xf32, #tpu.memory_space<vmem>>, vector<8x8x18xf32>
    %4 = vector.shape_cast %3 : vector<8x8x18xf32> to vector<64x18xf32>
    %c0_3 = arith.constant 0 : index
    %c0_4 = arith.constant 0 : index
    %5 = vector.load %arg3[%c0_3, %c0_4] : memref<18x128xf32, #tpu.memory_space<vmem>>, vector<18x128xf32>
    %cst = arith.constant dense<0.000000e+00> : vector<64x128xf32>
    %6 = tpu.matmul %4, %5, %cst {dimension_numbers = #tpu.dot_dimension_numbers<[1], [0], [0], [1], [0, 0, 1, 1], [], []>} : vector<64x18xf32>, vector<18x128xf32>, vector<64x128xf32> -> vector<64x128xf32>
    %c0_5 = arith.constant 0 : index
    %c0_6 = arith.constant 0 : index
    %7 = vector.load %arg4[%c0_5, %c0_6] : memref<1x128xf32, #tpu.memory_space<vmem>>, vector<1x128xf32>
    %8 = vector.broadcast %7 : vector<1x128xf32> to vector<64x128xf32>
    %9 = arith.addf %6, %8 : vector<64x128xf32>
    %cst_7 = arith.constant 0.000000e+00 : f32
    %10 = vector.broadcast %cst_7 : f32 to vector<64x128xf32>
    %11 = arith.maximumf %9, %10 : vector<64x128xf32>
    %c0_8 = arith.constant 0 : index
    %c0_9 = arith.constant 0 : index
    %12 = vector.load %arg5[%c0_8, %c0_9] : memref<128x512xf32, #tpu.memory_space<vmem>>, vector<128x512xf32>
    %cst_10 = arith.constant dense<0.000000e+00> : vector<64x512xf32>
    %13 = tpu.matmul %11, %12, %cst_10 {dimension_numbers = #tpu.dot_dimension_numbers<[1], [0], [0], [1], [0, 0, 1, 1], [], []>} : vector<64x128xf32>, vector<128x512xf32>, vector<64x512xf32> -> vector<64x512xf32>
    %c0_11 = arith.constant 0 : index
    %c0_12 = arith.constant 0 : index
    %14 = vector.load %arg7[%c0_11, %c0_12] : memref<1x512xf32, #tpu.memory_space<vmem>>, vector<1x512xf32>
    %15 = vector.broadcast %14 : vector<1x512xf32> to vector<64x512xf32>
    %16 = arith.addf %13, %15 : vector<64x512xf32>
    %17 = vector.shape_cast %16 : vector<64x512xf32> to vector<8x8x512xf32>
    %c0_13 = arith.constant 0 : index
    %c0_14 = arith.constant 0 : index
    %c0_15 = arith.constant 0 : index
    %18 = vector.load %arg15[%c0_13, %c0_14, %c0_15] : memref<8x8x512xf32, #tpu.memory_space<vmem>>, vector<8x8x512xf32>
    tpu.vector_store %arg15[%c0_13, %c0_14, %c0_15], %17 {strides = array<i32>} : memref<8x8x512xf32, #tpu.memory_space<vmem>>, vector<8x8x512xf32>,
    %c0_16 = arith.constant 0 : index
    %c0_17 = arith.constant 0 : index
    %19 = vector.load %arg13[%c0_16, %c0_17] : memref<8x128xf32, #tpu.memory_space<vmem>>, vector<8x128xf32>
    %c0_18 = arith.constant 0 : index
    %c0_19 = arith.constant 0 : index
    %20 = vector.load %arg14[%c0_18, %c0_19] : memref<8x128xf32, #tpu.memory_space<vmem>>, vector<8x128xf32>
    %c0_i32_20 = arith.constant 0 : i32
    %21 = arith.index_cast %c0_i32_20 : i32 to index
    %c0_21 = arith.constant 0 : index
    %c0_22 = arith.constant 0 : index
    %22 = vector.load %arg15[%21, %c0_21, %c0_22] : memref<8x8x512xf32, #tpu.memory_space<vmem>>, vector<1x8x512xf32>
    %23 = vector.shape_cast %22 : vector<1x8x512xf32> to vector<8x512xf32>
    %c0_23 = arith.constant 0 : index
    %c0_24 = arith.constant 0 : index
    %24 = vector.load %arg6[%c0_23, %c0_24] : memref<128x512xf32, #tpu.memory_space<vmem>>, vector<128x512xf32>
    %cst_25 = arith.constant dense<0.000000e+00> : vector<8x512xf32>
    %25 = tpu.matmul %19, %24, %cst_25 {dimension_numbers = #tpu.dot_dimension_numbers<[1], [0], [0], [1], [0, 0, 1, 1], [], []>} : vector<8x128xf32>, vector<128x512xf32>, vector<8x512xf32> -> vector<8x512xf32>
    %26 = arith.addf %23, %25 : vector<8x512xf32>
    %27 = vector.extract_strided_slice %26 {offsets = [0, 0], sizes = [8, 128], strides = [1, 1]} : vector<8x512xf32> to vector<8x128xf32>
    %28 = arith.negf %27 : vector<8x128xf32>
    %29 = math.exp %28 : vector<8x128xf32>
    %cst_26 = arith.constant 1.000000e+00 : f32
    %30 = vector.broadcast %cst_26 : f32 to vector<8x128xf32>
    %31 = arith.addf %30, %29 : vector<8x128xf32>
    %32 = arith.divf %30, %31 : vector<8x128xf32>
    %33 = vector.extract_strided_slice %26 {offsets = [0, 128], sizes = [8, 128], strides = [1, 1]} : vector<8x512xf32> to vector<8x128xf32>
    %34 = arith.negf %33 : vector<8x128xf32>
    %35 = math.exp %34 : vector<8x128xf32>
    %cst_27 = arith.constant 1.000000e+00 : f32
    %36 = vector.broadcast %cst_27 : f32 to vector<8x128xf32>
    %37 = arith.addf %36, %35 : vector<8x128xf32>
    %38 = arith.divf %36, %37 : vector<8x128xf32>
    %39 = vector.extract_strided_slice %26 {offsets = [0, 256], sizes = [8, 128], strides = [1, 1]} : vector<8x512xf32> to vector<8x128xf32>
    %40 = math.tanh %39 : vector<8x128xf32>
    %41 = vector.extract_strided_slice %26 {offsets = [0, 384], sizes = [8, 128], strides = [1, 1]} : vector<8x512xf32> to vector<8x128xf32>
    %42 = arith.negf %41 : vector<8x128xf32>
    %43 = math.exp %42 : vector<8x128xf32>
    %cst_28 = arith.constant 1.000000e+00 : f32
    %44 = vector.broadcast %cst_28 : f32 to vector<8x128xf32>
    %45 = arith.addf %44, %43 : vector<8x128xf32>
    %46 = arith.divf %44, %45 : vector<8x128xf32>
    %47 = arith.mulf %38, %20 : vector<8x128xf32>
    %48 = arith.mulf %32, %40 : vector<8x128xf32>
    %49 = arith.addf %47, %48 : vector<8x128xf32>
    %50 = math.tanh %49 : vector<8x128xf32>
    %51 = arith.mulf %46, %50 : vector<8x128xf32>
    %52 = arith.index_cast %c0_i32_20 : i32 to index
    %c0_29 = arith.constant 0 : index
    %c0_30 = arith.constant 0 : index
    %53 = vector.load %arg16[%52, %c0_29, %c0_30] : memref<8x8x128xf32, #tpu.memory_space<vmem>>, vector<1x8x128xf32>
    %54 = vector.shape_cast %53 : vector<1x8x128xf32> to vector<8x128xf32>
    %55 = vector.shape_cast %51 : vector<8x128xf32> to vector<1x8x128xf32>
    tpu.vector_store %arg16[%52, %c0_29, %c0_30], %55 {strides = array<i32>} : memref<8x8x128xf32, #tpu.memory_space<vmem>>, vector<1x8x128xf32>,
    %c1_i32 = arith.constant 1 : i32
    %56 = arith.index_cast %c1_i32 : i32 to index
    %c0_31 = arith.constant 0 : index
    %c0_32 = arith.constant 0 : index
    %57 = vector.load %arg15[%56, %c0_31, %c0_32] : memref<8x8x512xf32, #tpu.memory_space<vmem>>, vector<1x8x512xf32>
    %58 = vector.shape_cast %57 : vector<1x8x512xf32> to vector<8x512xf32>
    %c0_33 = arith.constant 0 : index
    %c0_34 = arith.constant 0 : index
    %59 = vector.load %arg6[%c0_33, %c0_34] : memref<128x512xf32, #tpu.memory_space<vmem>>, vector<128x512xf32>
    %cst_35 = arith.constant dense<0.000000e+00> : vector<8x512xf32>
    %60 = tpu.matmul %51, %59, %cst_35 {dimension_numbers = #tpu.dot_dimension_numbers<[1], [0], [0], [1], [0, 0, 1, 1], [], []>} : vector<8x128xf32>, vector<128x512xf32>, vector<8x512xf32> -> vector<8x512xf32>
    %61 = arith.addf %58, %60 : vector<8x512xf32>
    %62 = vector.extract_strided_slice %61 {offsets = [0, 0], sizes = [8, 128], strides = [1, 1]} : vector<8x512xf32> to vector<8x128xf32>
    %63 = arith.negf %62 : vector<8x128xf32>
    %64 = math.exp %63 : vector<8x128xf32>
    %cst_36 = arith.constant 1.000000e+00 : f32
    %65 = vector.broadcast %cst_36 : f32 to vector<8x128xf32>
    %66 = arith.addf %65, %64 : vector<8x128xf32>
    %67 = arith.divf %65, %66 : vector<8x128xf32>
    %68 = vector.extract_strided_slice %61 {offsets = [0, 128], sizes = [8, 128], strides = [1, 1]} : vector<8x512xf32> to vector<8x128xf32>
    %69 = arith.negf %68 : vector<8x128xf32>
    %70 = math.exp %69 : vector<8x128xf32>
    %cst_37 = arith.constant 1.000000e+00 : f32
    %71 = vector.broadcast %cst_37 : f32 to vector<8x128xf32>
    %72 = arith.addf %71, %70 : vector<8x128xf32>
    %73 = arith.divf %71, %72 : vector<8x128xf32>
    %74 = vector.extract_strided_slice %61 {offsets = [0, 256], sizes = [8, 128], strides = [1, 1]} : vector<8x512xf32> to vector<8x128xf32>
    %75 = math.tanh %74 : vector<8x128xf32>
    %76 = vector.extract_strided_slice %61 {offsets = [0, 384], sizes = [8, 128], strides = [1, 1]} : vector<8x512xf32> to vector<8x128xf32>
    %77 = arith.negf %76 : vector<8x128xf32>
    %78 = math.exp %77 : vector<8x128xf32>
    %cst_38 = arith.constant 1.000000e+00 : f32
    %79 = vector.broadcast %cst_38 : f32 to vector<8x128xf32>
    %80 = arith.addf %79, %78 : vector<8x128xf32>
    %81 = arith.divf %79, %80 : vector<8x128xf32>
    %82 = arith.mulf %73, %49 : vector<8x128xf32>
    %83 = arith.mulf %67, %75 : vector<8x128xf32>
    %84 = arith.addf %82, %83 : vector<8x128xf32>
    %85 = math.tanh %84 : vector<8x128xf32>
    %86 = arith.mulf %81, %85 : vector<8x128xf32>
    %87 = arith.index_cast %c1_i32 : i32 to index
    %c0_39 = arith.constant 0 : index
    %c0_40 = arith.constant 0 : index
    %88 = vector.load %arg16[%87, %c0_39, %c0_40] : memref<8x8x128xf32, #tpu.memory_space<vmem>>, vector<1x8x128xf32>
    %89 = vector.shape_cast %88 : vector<1x8x128xf32> to vector<8x128xf32>
    %90 = vector.shape_cast %86 : vector<8x128xf32> to vector<1x8x128xf32>
    tpu.vector_store %arg16[%87, %c0_39, %c0_40], %90 {strides = array<i32>} : memref<8x8x128xf32, #tpu.memory_space<vmem>>, vector<1x8x128xf32>,
    %c2_i32 = arith.constant 2 : i32
    %91 = arith.index_cast %c2_i32 : i32 to index
    %c0_41 = arith.constant 0 : index
    %c0_42 = arith.constant 0 : index
    %92 = vector.load %arg15[%91, %c0_41, %c0_42] : memref<8x8x512xf32, #tpu.memory_space<vmem>>, vector<1x8x512xf32>
    %93 = vector.shape_cast %92 : vector<1x8x512xf32> to vector<8x512xf32>
    %c0_43 = arith.constant 0 : index
    %c0_44 = arith.constant 0 : index
    %94 = vector.load %arg6[%c0_43, %c0_44] : memref<128x512xf32, #tpu.memory_space<vmem>>, vector<128x512xf32>
    %cst_45 = arith.constant dense<0.000000e+00> : vector<8x512xf32>
    %95 = tpu.matmul %86, %94, %cst_45 {dimension_numbers = #tpu.dot_dimension_numbers<[1], [0], [0], [1], [0, 0, 1, 1], [], []>} : vector<8x128xf32>, vector<128x512xf32>, vector<8x512xf32> -> vector<8x512xf32>
    %96 = arith.addf %93, %95 : vector<8x512xf32>
    %97 = vector.extract_strided_slice %96 {offsets = [0, 0], sizes = [8, 128], strides = [1, 1]} : vector<8x512xf32> to vector<8x128xf32>
    %98 = arith.negf %97 : vector<8x128xf32>
    %99 = math.exp %98 : vector<8x128xf32>
    %cst_46 = arith.constant 1.000000e+00 : f32
    %100 = vector.broadcast %cst_46 : f32 to vector<8x128xf32>
    %101 = arith.addf %100, %99 : vector<8x128xf32>
    %102 = arith.divf %100, %101 : vector<8x128xf32>
    %103 = vector.extract_strided_slice %96 {offsets = [0, 128], sizes = [8, 128], strides = [1, 1]} : vector<8x512xf32> to vector<8x128xf32>
    %104 = arith.negf %103 : vector<8x128xf32>
    %105 = math.exp %104 : vector<8x128xf32>
    %cst_47 = arith.constant 1.000000e+00 : f32
    %106 = vector.broadcast %cst_47 : f32 to vector<8x128xf32>
    %107 = arith.addf %106, %105 : vector<8x128xf32>
    %108 = arith.divf %106, %107 : vector<8x128xf32>
    %109 = vector.extract_strided_slice %96 {offsets = [0, 256], sizes = [8, 128], strides = [1, 1]} : vector<8x512xf32> to vector<8x128xf32>
    %110 = math.tanh %109 : vector<8x128xf32>
    %111 = vector.extract_strided_slice %96 {offsets = [0, 384], sizes = [8, 128], strides = [1, 1]} : vector<8x512xf32> to vector<8x128xf32>
    %112 = arith.negf %111 : vector<8x128xf32>
    %113 = math.exp %112 : vector<8x128xf32>
    %cst_48 = arith.constant 1.000000e+00 : f32
    %114 = vector.broadcast %cst_48 : f32 to vector<8x128xf32>
    %115 = arith.addf %114, %113 : vector<8x128xf32>
    %116 = arith.divf %114, %115 : vector<8x128xf32>
    %117 = arith.mulf %108, %84 : vector<8x128xf32>
    %118 = arith.mulf %102, %110 : vector<8x128xf32>
    %119 = arith.addf %117, %118 : vector<8x128xf32>
    %120 = math.tanh %119 : vector<8x128xf32>
    %121 = arith.mulf %116, %120 : vector<8x128xf32>
    %122 = arith.index_cast %c2_i32 : i32 to index
    %c0_49 = arith.constant 0 : index
    %c0_50 = arith.constant 0 : index
    %123 = vector.load %arg16[%122, %c0_49, %c0_50] : memref<8x8x128xf32, #tpu.memory_space<vmem>>, vector<1x8x128xf32>
    %124 = vector.shape_cast %123 : vector<1x8x128xf32> to vector<8x128xf32>
    %125 = vector.shape_cast %121 : vector<8x128xf32> to vector<1x8x128xf32>
    tpu.vector_store %arg16[%122, %c0_49, %c0_50], %125 {strides = array<i32>} : memref<8x8x128xf32, #tpu.memory_space<vmem>>, vector<1x8x128xf32>,
    %c3_i32 = arith.constant 3 : i32
    %126 = arith.index_cast %c3_i32 : i32 to index
    %c0_51 = arith.constant 0 : index
    %c0_52 = arith.constant 0 : index
    %127 = vector.load %arg15[%126, %c0_51, %c0_52] : memref<8x8x512xf32, #tpu.memory_space<vmem>>, vector<1x8x512xf32>
    %128 = vector.shape_cast %127 : vector<1x8x512xf32> to vector<8x512xf32>
    %c0_53 = arith.constant 0 : index
    %c0_54 = arith.constant 0 : index
    %129 = vector.load %arg6[%c0_53, %c0_54] : memref<128x512xf32, #tpu.memory_space<vmem>>, vector<128x512xf32>
    %cst_55 = arith.constant dense<0.000000e+00> : vector<8x512xf32>
    %130 = tpu.matmul %121, %129, %cst_55 {dimension_numbers = #tpu.dot_dimension_numbers<[1], [0], [0], [1], [0, 0, 1, 1], [], []>} : vector<8x128xf32>, vector<128x512xf32>, vector<8x512xf32> -> vector<8x512xf32>
    %131 = arith.addf %128, %130 : vector<8x512xf32>
    %132 = vector.extract_strided_slice %131 {offsets = [0, 0], sizes = [8, 128], strides = [1, 1]} : vector<8x512xf32> to vector<8x128xf32>
    %133 = arith.negf %132 : vector<8x128xf32>
    %134 = math.exp %133 : vector<8x128xf32>
    %cst_56 = arith.constant 1.000000e+00 : f32
    %135 = vector.broadcast %cst_56 : f32 to vector<8x128xf32>
    %136 = arith.addf %135, %134 : vector<8x128xf32>
    %137 = arith.divf %135, %136 : vector<8x128xf32>
    %138 = vector.extract_strided_slice %131 {offsets = [0, 128], sizes = [8, 128], strides = [1, 1]} : vector<8x512xf32> to vector<8x128xf32>
    %139 = arith.negf %138 : vector<8x128xf32>
    %140 = math.exp %139 : vector<8x128xf32>
    %cst_57 = arith.constant 1.000000e+00 : f32
    %141 = vector.broadcast %cst_57 : f32 to vector<8x128xf32>
    %142 = arith.addf %141, %140 : vector<8x128xf32>
    %143 = arith.divf %141, %142 : vector<8x128xf32>
    %144 = vector.extract_strided_slice %131 {offsets = [0, 256], sizes = [8, 128], strides = [1, 1]} : vector<8x512xf32> to vector<8x128xf32>
    %145 = math.tanh %144 : vector<8x128xf32>
    %146 = vector.extract_strided_slice %131 {offsets = [0, 384], sizes = [8, 128], strides = [1, 1]} : vector<8x512xf32> to vector<8x128xf32>
    %147 = arith.negf %146 : vector<8x128xf32>
    %148 = math.exp %147 : vector<8x128xf32>
    %cst_58 = arith.constant 1.000000e+00 : f32
    %149 = vector.broadcast %cst_58 : f32 to vector<8x128xf32>
    %150 = arith.addf %149, %148 : vector<8x128xf32>
    %151 = arith.divf %149, %150 : vector<8x128xf32>
    %152 = arith.mulf %143, %119 : vector<8x128xf32>
    %153 = arith.mulf %137, %145 : vector<8x128xf32>
    %154 = arith.addf %152, %153 : vector<8x128xf32>
    %155 = math.tanh %154 : vector<8x128xf32>
    %156 = arith.mulf %151, %155 : vector<8x128xf32>
    %157 = arith.index_cast %c3_i32 : i32 to index
    %c0_59 = arith.constant 0 : index
    %c0_60 = arith.constant 0 : index
    %158 = vector.load %arg16[%157, %c0_59, %c0_60] : memref<8x8x128xf32, #tpu.memory_space<vmem>>, vector<1x8x128xf32>
    %159 = vector.shape_cast %158 : vector<1x8x128xf32> to vector<8x128xf32>
    %160 = vector.shape_cast %156 : vector<8x128xf32> to vector<1x8x128xf32>
    tpu.vector_store %arg16[%157, %c0_59, %c0_60], %160 {strides = array<i32>} : memref<8x8x128xf32, #tpu.memory_space<vmem>>, vector<1x8x128xf32>,
    %c4_i32 = arith.constant 4 : i32
    %161 = arith.index_cast %c4_i32 : i32 to index
    %c0_61 = arith.constant 0 : index
    %c0_62 = arith.constant 0 : index
    %162 = vector.load %arg15[%161, %c0_61, %c0_62] : memref<8x8x512xf32, #tpu.memory_space<vmem>>, vector<1x8x512xf32>
    %163 = vector.shape_cast %162 : vector<1x8x512xf32> to vector<8x512xf32>
    %c0_63 = arith.constant 0 : index
    %c0_64 = arith.constant 0 : index
    %164 = vector.load %arg6[%c0_63, %c0_64] : memref<128x512xf32, #tpu.memory_space<vmem>>, vector<128x512xf32>
    %cst_65 = arith.constant dense<0.000000e+00> : vector<8x512xf32>
    %165 = tpu.matmul %156, %164, %cst_65 {dimension_numbers = #tpu.dot_dimension_numbers<[1], [0], [0], [1], [0, 0, 1, 1], [], []>} : vector<8x128xf32>, vector<128x512xf32>, vector<8x512xf32> -> vector<8x512xf32>
    %166 = arith.addf %163, %165 : vector<8x512xf32>
    %167 = vector.extract_strided_slice %166 {offsets = [0, 0], sizes = [8, 128], strides = [1, 1]} : vector<8x512xf32> to vector<8x128xf32>
    %168 = arith.negf %167 : vector<8x128xf32>
    %169 = math.exp %168 : vector<8x128xf32>
    %cst_66 = arith.constant 1.000000e+00 : f32
    %170 = vector.broadcast %cst_66 : f32 to vector<8x128xf32>
    %171 = arith.addf %170, %169 : vector<8x128xf32>
    %172 = arith.divf %170, %171 : vector<8x128xf32>
    %173 = vector.extract_strided_slice %166 {offsets = [0, 128], sizes = [8, 128], strides = [1, 1]} : vector<8x512xf32> to vector<8x128xf32>
    %174 = arith.negf %173 : vector<8x128xf32>
    %175 = math.exp %174 : vector<8x128xf32>
    %cst_67 = arith.constant 1.000000e+00 : f32
    %176 = vector.broadcast %cst_67 : f32 to vector<8x128xf32>
    %177 = arith.addf %176, %175 : vector<8x128xf32>
    %178 = arith.divf %176, %177 : vector<8x128xf32>
    %179 = vector.extract_strided_slice %166 {offsets = [0, 256], sizes = [8, 128], strides = [1, 1]} : vector<8x512xf32> to vector<8x128xf32>
    %180 = math.tanh %179 : vector<8x128xf32>
    %181 = vector.extract_strided_slice %166 {offsets = [0, 384], sizes = [8, 128], strides = [1, 1]} : vector<8x512xf32> to vector<8x128xf32>
    %182 = arith.negf %181 : vector<8x128xf32>
    %183 = math.exp %182 : vector<8x128xf32>
    %cst_68 = arith.constant 1.000000e+00 : f32
    %184 = vector.broadcast %cst_68 : f32 to vector<8x128xf32>
    %185 = arith.addf %184, %183 : vector<8x128xf32>
    %186 = arith.divf %184, %185 : vector<8x128xf32>
    %187 = arith.mulf %178, %154 : vector<8x128xf32>
    %188 = arith.mulf %172, %180 : vector<8x128xf32>
    %189 = arith.addf %187, %188 : vector<8x128xf32>
    %190 = math.tanh %189 : vector<8x128xf32>
    %191 = arith.mulf %186, %190 : vector<8x128xf32>
    %192 = arith.index_cast %c4_i32 : i32 to index
    %c0_69 = arith.constant 0 : index
    %c0_70 = arith.constant 0 : index
    %193 = vector.load %arg16[%192, %c0_69, %c0_70] : memref<8x8x128xf32, #tpu.memory_space<vmem>>, vector<1x8x128xf32>
    %194 = vector.shape_cast %193 : vector<1x8x128xf32> to vector<8x128xf32>
    %195 = vector.shape_cast %191 : vector<8x128xf32> to vector<1x8x128xf32>
    tpu.vector_store %arg16[%192, %c0_69, %c0_70], %195 {strides = array<i32>} : memref<8x8x128xf32, #tpu.memory_space<vmem>>, vector<1x8x128xf32>,
    %c5_i32 = arith.constant 5 : i32
    %196 = arith.index_cast %c5_i32 : i32 to index
    %c0_71 = arith.constant 0 : index
    %c0_72 = arith.constant 0 : index
    %197 = vector.load %arg15[%196, %c0_71, %c0_72] : memref<8x8x512xf32, #tpu.memory_space<vmem>>, vector<1x8x512xf32>
    %198 = vector.shape_cast %197 : vector<1x8x512xf32> to vector<8x512xf32>
    %c0_73 = arith.constant 0 : index
    %c0_74 = arith.constant 0 : index
    %199 = vector.load %arg6[%c0_73, %c0_74] : memref<128x512xf32, #tpu.memory_space<vmem>>, vector<128x512xf32>
    %cst_75 = arith.constant dense<0.000000e+00> : vector<8x512xf32>
    %200 = tpu.matmul %191, %199, %cst_75 {dimension_numbers = #tpu.dot_dimension_numbers<[1], [0], [0], [1], [0, 0, 1, 1], [], []>} : vector<8x128xf32>, vector<128x512xf32>, vector<8x512xf32> -> vector<8x512xf32>
    %201 = arith.addf %198, %200 : vector<8x512xf32>
    %202 = vector.extract_strided_slice %201 {offsets = [0, 0], sizes = [8, 128], strides = [1, 1]} : vector<8x512xf32> to vector<8x128xf32>
    %203 = arith.negf %202 : vector<8x128xf32>
    %204 = math.exp %203 : vector<8x128xf32>
    %cst_76 = arith.constant 1.000000e+00 : f32
    %205 = vector.broadcast %cst_76 : f32 to vector<8x128xf32>
    %206 = arith.addf %205, %204 : vector<8x128xf32>
    %207 = arith.divf %205, %206 : vector<8x128xf32>
    %208 = vector.extract_strided_slice %201 {offsets = [0, 128], sizes = [8, 128], strides = [1, 1]} : vector<8x512xf32> to vector<8x128xf32>
    %209 = arith.negf %208 : vector<8x128xf32>
    %210 = math.exp %209 : vector<8x128xf32>
    %cst_77 = arith.constant 1.000000e+00 : f32
    %211 = vector.broadcast %cst_77 : f32 to vector<8x128xf32>
    %212 = arith.addf %211, %210 : vector<8x128xf32>
    %213 = arith.divf %211, %212 : vector<8x128xf32>
    %214 = vector.extract_strided_slice %201 {offsets = [0, 256], sizes = [8, 128], strides = [1, 1]} : vector<8x512xf32> to vector<8x128xf32>
    %215 = math.tanh %214 : vector<8x128xf32>
    %216 = vector.extract_strided_slice %201 {offsets = [0, 384], sizes = [8, 128], strides = [1, 1]} : vector<8x512xf32> to vector<8x128xf32>
    %217 = arith.negf %216 : vector<8x128xf32>
    %218 = math.exp %217 : vector<8x128xf32>
    %cst_78 = arith.constant 1.000000e+00 : f32
    %219 = vector.broadcast %cst_78 : f32 to vector<8x128xf32>
    %220 = arith.addf %219, %218 : vector<8x128xf32>
    %221 = arith.divf %219, %220 : vector<8x128xf32>
    %222 = arith.mulf %213, %189 : vector<8x128xf32>
    %223 = arith.mulf %207, %215 : vector<8x128xf32>
    %224 = arith.addf %222, %223 : vector<8x128xf32>
    %225 = math.tanh %224 : vector<8x128xf32>
    %226 = arith.mulf %221, %225 : vector<8x128xf32>
    %227 = arith.index_cast %c5_i32 : i32 to index
    %c0_79 = arith.constant 0 : index
    %c0_80 = arith.constant 0 : index
    %228 = vector.load %arg16[%227, %c0_79, %c0_80] : memref<8x8x128xf32, #tpu.memory_space<vmem>>, vector<1x8x128xf32>
    %229 = vector.shape_cast %228 : vector<1x8x128xf32> to vector<8x128xf32>
    %230 = vector.shape_cast %226 : vector<8x128xf32> to vector<1x8x128xf32>
    tpu.vector_store %arg16[%227, %c0_79, %c0_80], %230 {strides = array<i32>} : memref<8x8x128xf32, #tpu.memory_space<vmem>>, vector<1x8x128xf32>,
    %c6_i32 = arith.constant 6 : i32
    %231 = arith.index_cast %c6_i32 : i32 to index
    %c0_81 = arith.constant 0 : index
    %c0_82 = arith.constant 0 : index
    %232 = vector.load %arg15[%231, %c0_81, %c0_82] : memref<8x8x512xf32, #tpu.memory_space<vmem>>, vector<1x8x512xf32>
    %233 = vector.shape_cast %232 : vector<1x8x512xf32> to vector<8x512xf32>
    %c0_83 = arith.constant 0 : index
    %c0_84 = arith.constant 0 : index
    %234 = vector.load %arg6[%c0_83, %c0_84] : memref<128x512xf32, #tpu.memory_space<vmem>>, vector<128x512xf32>
    %cst_85 = arith.constant dense<0.000000e+00> : vector<8x512xf32>
    %235 = tpu.matmul %226, %234, %cst_85 {dimension_numbers = #tpu.dot_dimension_numbers<[1], [0], [0], [1], [0, 0, 1, 1], [], []>} : vector<8x128xf32>, vector<128x512xf32>, vector<8x512xf32> -> vector<8x512xf32>
    %236 = arith.addf %233, %235 : vector<8x512xf32>
    %237 = vector.extract_strided_slice %236 {offsets = [0, 0], sizes = [8, 128], strides = [1, 1]} : vector<8x512xf32> to vector<8x128xf32>
    %238 = arith.negf %237 : vector<8x128xf32>
    %239 = math.exp %238 : vector<8x128xf32>
    %cst_86 = arith.constant 1.000000e+00 : f32
    %240 = vector.broadcast %cst_86 : f32 to vector<8x128xf32>
    %241 = arith.addf %240, %239 : vector<8x128xf32>
    %242 = arith.divf %240, %241 : vector<8x128xf32>
    %243 = vector.extract_strided_slice %236 {offsets = [0, 128], sizes = [8, 128], strides = [1, 1]} : vector<8x512xf32> to vector<8x128xf32>
    %244 = arith.negf %243 : vector<8x128xf32>
    %245 = math.exp %244 : vector<8x128xf32>
    %cst_87 = arith.constant 1.000000e+00 : f32
    %246 = vector.broadcast %cst_87 : f32 to vector<8x128xf32>
    %247 = arith.addf %246, %245 : vector<8x128xf32>
    %248 = arith.divf %246, %247 : vector<8x128xf32>
    %249 = vector.extract_strided_slice %236 {offsets = [0, 256], sizes = [8, 128], strides = [1, 1]} : vector<8x512xf32> to vector<8x128xf32>
    %250 = math.tanh %249 : vector<8x128xf32>
    %251 = vector.extract_strided_slice %236 {offsets = [0, 384], sizes = [8, 128], strides = [1, 1]} : vector<8x512xf32> to vector<8x128xf32>
    %252 = arith.negf %251 : vector<8x128xf32>
    %253 = math.exp %252 : vector<8x128xf32>
    %cst_88 = arith.constant 1.000000e+00 : f32
    %254 = vector.broadcast %cst_88 : f32 to vector<8x128xf32>
    %255 = arith.addf %254, %253 : vector<8x128xf32>
    %256 = arith.divf %254, %255 : vector<8x128xf32>
    %257 = arith.mulf %248, %224 : vector<8x128xf32>
    %258 = arith.mulf %242, %250 : vector<8x128xf32>
    %259 = arith.addf %257, %258 : vector<8x128xf32>
    %260 = math.tanh %259 : vector<8x128xf32>
    %261 = arith.mulf %256, %260 : vector<8x128xf32>
    %262 = arith.index_cast %c6_i32 : i32 to index
    %c0_89 = arith.constant 0 : index
    %c0_90 = arith.constant 0 : index
    %263 = vector.load %arg16[%262, %c0_89, %c0_90] : memref<8x8x128xf32, #tpu.memory_space<vmem>>, vector<1x8x128xf32>
    %264 = vector.shape_cast %263 : vector<1x8x128xf32> to vector<8x128xf32>
    %265 = vector.shape_cast %261 : vector<8x128xf32> to vector<1x8x128xf32>
    tpu.vector_store %arg16[%262, %c0_89, %c0_90], %265 {strides = array<i32>} : memref<8x8x128xf32, #tpu.memory_space<vmem>>, vector<1x8x128xf32>,
    %c7_i32 = arith.constant 7 : i32
    %266 = arith.index_cast %c7_i32 : i32 to index
    %c0_91 = arith.constant 0 : index
    %c0_92 = arith.constant 0 : index
    %267 = vector.load %arg15[%266, %c0_91, %c0_92] : memref<8x8x512xf32, #tpu.memory_space<vmem>>, vector<1x8x512xf32>
    %268 = vector.shape_cast %267 : vector<1x8x512xf32> to vector<8x512xf32>
    %c0_93 = arith.constant 0 : index
    %c0_94 = arith.constant 0 : index
    %269 = vector.load %arg6[%c0_93, %c0_94] : memref<128x512xf32, #tpu.memory_space<vmem>>, vector<128x512xf32>
    %cst_95 = arith.constant dense<0.000000e+00> : vector<8x512xf32>
    %270 = tpu.matmul %261, %269, %cst_95 {dimension_numbers = #tpu.dot_dimension_numbers<[1], [0], [0], [1], [0, 0, 1, 1], [], []>} : vector<8x128xf32>, vector<128x512xf32>, vector<8x512xf32> -> vector<8x512xf32>
    %271 = arith.addf %268, %270 : vector<8x512xf32>
    %272 = vector.extract_strided_slice %271 {offsets = [0, 0], sizes = [8, 128], strides = [1, 1]} : vector<8x512xf32> to vector<8x128xf32>
    %273 = arith.negf %272 : vector<8x128xf32>
    %274 = math.exp %273 : vector<8x128xf32>
    %cst_96 = arith.constant 1.000000e+00 : f32
    %275 = vector.broadcast %cst_96 : f32 to vector<8x128xf32>
    %276 = arith.addf %275, %274 : vector<8x128xf32>
    %277 = arith.divf %275, %276 : vector<8x128xf32>
    %278 = vector.extract_strided_slice %271 {offsets = [0, 128], sizes = [8, 128], strides = [1, 1]} : vector<8x512xf32> to vector<8x128xf32>
    %279 = arith.negf %278 : vector<8x128xf32>
    %280 = math.exp %279 : vector<8x128xf32>
    %cst_97 = arith.constant 1.000000e+00 : f32
    %281 = vector.broadcast %cst_97 : f32 to vector<8x128xf32>
    %282 = arith.addf %281, %280 : vector<8x128xf32>
    %283 = arith.divf %281, %282 : vector<8x128xf32>
    %284 = vector.extract_strided_slice %271 {offsets = [0, 256], sizes = [8, 128], strides = [1, 1]} : vector<8x512xf32> to vector<8x128xf32>
    %285 = math.tanh %284 : vector<8x128xf32>
    %286 = vector.extract_strided_slice %271 {offsets = [0, 384], sizes = [8, 128], strides = [1, 1]} : vector<8x512xf32> to vector<8x128xf32>
    %287 = arith.negf %286 : vector<8x128xf32>
    %288 = math.exp %287 : vector<8x128xf32>
    %cst_98 = arith.constant 1.000000e+00 : f32
    %289 = vector.broadcast %cst_98 : f32 to vector<8x128xf32>
    %290 = arith.addf %289, %288 : vector<8x128xf32>
    %291 = arith.divf %289, %290 : vector<8x128xf32>
    %292 = arith.mulf %283, %259 : vector<8x128xf32>
    %293 = arith.mulf %277, %285 : vector<8x128xf32>
    %294 = arith.addf %292, %293 : vector<8x128xf32>
    %295 = math.tanh %294 : vector<8x128xf32>
    %296 = arith.mulf %291, %295 : vector<8x128xf32>
    %297 = arith.index_cast %c7_i32 : i32 to index
    %c0_99 = arith.constant 0 : index
    %c0_100 = arith.constant 0 : index
    %298 = vector.load %arg16[%297, %c0_99, %c0_100] : memref<8x8x128xf32, #tpu.memory_space<vmem>>, vector<1x8x128xf32>
    %299 = vector.shape_cast %298 : vector<1x8x128xf32> to vector<8x128xf32>
    %300 = vector.shape_cast %296 : vector<8x128xf32> to vector<1x8x128xf32>
    tpu.vector_store %arg16[%297, %c0_99, %c0_100], %300 {strides = array<i32>} : memref<8x8x128xf32, #tpu.memory_space<vmem>>, vector<1x8x128xf32>,
    %c8_i32 = arith.constant 8 : i32
    %c0_101 = arith.constant 0 : index
    %c0_102 = arith.constant 0 : index
    %301 = vector.load %arg13[%c0_101, %c0_102] : memref<8x128xf32, #tpu.memory_space<vmem>>, vector<8x128xf32>
    tpu.vector_store %arg13[%c0_101, %c0_102], %296 {strides = array<i32>} : memref<8x128xf32, #tpu.memory_space<vmem>>, vector<8x128xf32>,
    %c0_103 = arith.constant 0 : index
    %c0_104 = arith.constant 0 : index
    %302 = vector.load %arg14[%c0_103, %c0_104] : memref<8x128xf32, #tpu.memory_space<vmem>>, vector<8x128xf32>
    tpu.vector_store %arg14[%c0_103, %c0_104], %294 {strides = array<i32>} : memref<8x128xf32, #tpu.memory_space<vmem>>, vector<8x128xf32>,
    %c0_105 = arith.constant 0 : index
    %c0_106 = arith.constant 0 : index
    %303 = vector.load %arg11[%c0_105, %c0_106] : memref<8x128xf32, #tpu.memory_space<vmem>>, vector<8x128xf32>
    tpu.vector_store %arg11[%c0_105, %c0_106], %296 {strides = array<i32>} : memref<8x128xf32, #tpu.memory_space<vmem>>, vector<8x128xf32>,
    %c0_107 = arith.constant 0 : index
    %c0_108 = arith.constant 0 : index
    %304 = vector.load %arg12[%c0_107, %c0_108] : memref<8x128xf32, #tpu.memory_space<vmem>>, vector<8x128xf32>
    tpu.vector_store %arg12[%c0_107, %c0_108], %294 {strides = array<i32>} : memref<8x128xf32, #tpu.memory_space<vmem>>, vector<8x128xf32>,
    %c0_109 = arith.constant 0 : index
    %c0_110 = arith.constant 0 : index
    %c0_111 = arith.constant 0 : index
    %305 = vector.load %arg16[%c0_109, %c0_110, %c0_111] : memref<8x8x128xf32, #tpu.memory_space<vmem>>, vector<8x8x128xf32>
    %306 = vector.shape_cast %305 : vector<8x8x128xf32> to vector<64x128xf32>
    %c0_112 = arith.constant 0 : index
    %c0_113 = arith.constant 0 : index
    %307 = vector.load %arg8[%c0_112, %c0_113] : memref<128x2xf32, #tpu.memory_space<vmem>>, vector<128x2xf32>
    %cst_114 = arith.constant dense<0.000000e+00> : vector<64x2xf32>
    %308 = tpu.matmul %306, %307, %cst_114 {dimension_numbers = #tpu.dot_dimension_numbers<[1], [0], [0], [1], [0, 0, 1, 1], [], []>} : vector<64x128xf32>, vector<128x2xf32>, vector<64x2xf32> -> vector<64x2xf32>
    %c0_115 = arith.constant 0 : index
    %c0_116 = arith.constant 0 : index
    %309 = vector.load %arg9[%c0_115, %c0_116] : memref<1x2xf32, #tpu.memory_space<vmem>>, vector<1x2xf32>
    %310 = vector.broadcast %309 : vector<1x2xf32> to vector<64x2xf32>
    %311 = arith.addf %308, %310 : vector<64x2xf32>
    %312 = vector.shape_cast %311 : vector<64x2xf32> to vector<8x8x2xf32>
    %c0_117 = arith.constant 0 : index
    %c0_118 = arith.constant 0 : index
    %c0_119 = arith.constant 0 : index
    %313 = vector.load %arg10[%c0_117, %c0_118, %c0_119] : memref<8x8x2xf32, #tpu.memory_space<vmem>>, vector<8x8x2xf32>
    tpu.vector_store %arg10[%c0_117, %c0_118, %c0_119], %312 {strides = array<i32>} : memref<8x8x2xf32, #tpu.memory_space<vmem>>, vector<8x8x2xf32>,
    return
  }
  func.func @transform_0(%arg0: i32, %arg1: i32) -> (i32, i32, i32) {
    %c0_i32 = arith.constant 0 : i32
    %c0_i32_0 = arith.constant 0 : i32
    return %arg1, %arg0, %c0_i32 : i32, i32, i32
  }
  func.func @transform_1(%arg0: i32, %arg1: i32) -> (i32, i32) {
    %c0_i32 = arith.constant 0 : i32
    %c0_i32_0 = arith.constant 0 : i32
    %c0_i32_1 = arith.constant 0 : i32
    return %c0_i32, %c0_i32_0 : i32, i32
  }
  func.func @transform_2(%arg0: i32, %arg1: i32) -> (i32, i32) {
    %c0_i32 = arith.constant 0 : i32
    %c0_i32_0 = arith.constant 0 : i32
    %c0_i32_1 = arith.constant 0 : i32
    return %c0_i32, %c0_i32_0 : i32, i32
  }
  func.func @transform_3(%arg0: i32, %arg1: i32) -> (i32, i32) {
    %c0_i32 = arith.constant 0 : i32
    %c0_i32_0 = arith.constant 0 : i32
    %c0_i32_1 = arith.constant 0 : i32
    return %c0_i32, %c0_i32_0 : i32, i32
  }
  func.func @transform_4(%arg0: i32, %arg1: i32) -> (i32, i32) {
    %c0_i32 = arith.constant 0 : i32
    %c0_i32_0 = arith.constant 0 : i32
    %c0_i32_1 = arith.constant 0 : i32
    return %c0_i32, %c0_i32_0 : i32, i32
  }
  func.func @transform_5(%arg0: i32, %arg1: i32) -> (i32, i32) {
    %c0_i32 = arith.constant 0 : i32
    %c0_i32_0 = arith.constant 0 : i32
    %c0_i32_1 = arith.constant 0 : i32
    return %c0_i32, %c0_i32_0 : i32, i32
  }
  func.func @transform_6(%arg0: i32, %arg1: i32) -> (i32, i32) {
    %c0_i32 = arith.constant 0 : i32
    %c0_i32_0 = arith.constant 0 : i32
    %c0_i32_1 = arith.constant 0 : i32
    return %c0_i32, %c0_i32_0 : i32, i32
  }
  func.func @transform_7(%arg0: i32, %arg1: i32) -> (i32, i32) {
    %c0_i32 = arith.constant 0 : i32
    %c0_i32_0 = arith.constant 0 : i32
    %c0_i32_1 = arith.constant 0 : i32
    return %c0_i32, %c0_i32_0 : i32, i32
  }
  func.func @transform_8(%arg0: i32, %arg1: i32) -> (i32, i32, i32) {
    %c0_i32 = arith.constant 0 : i32
    %c0_i32_0 = arith.constant 0 : i32
    return %arg1, %arg0, %c0_i32 : i32, i32, i32
  }
  func.func @transform_9(%arg0: i32, %arg1: i32) -> (i32, i32) {
    %c0_i32 = arith.constant 0 : i32
    %c0_i32_0 = arith.constant 0 : i32
    return %arg0, %c0_i32 : i32, i32
  }
  func.func @transform_10(%arg0: i32, %arg1: i32) -> (i32, i32) {
    %c0_i32 = arith.constant 0 : i32
    %c0_i32_0 = arith.constant 0 : i32
    return %arg0, %c0_i32 : i32, i32
  }
}

</mosaic_0001>

<llo_original>
// kernel: cudnn_lstm_model_lstm_kernel_forward.2
$region0: #{cudnn_lstm_model_lstm_kernel_forward.2}
  #allocation0 [shape = 'u32[]', space=smem, size = 0x4, offset = 0x4, fixed_abs, tag = 'smem constant byte address 0x4 - core index']
  #allocation1 [shape = 'u32[144,128]{1,0:T(1,128)}', space=vmem, size = 0x12000, scoped, tag = 'internal scratch']
  #allocation2 [shape = 'f32[8,128]{1,0:T(8,128)}', space=vmem, size = 0x1000, scoped, tag = 'scratch operand']
  #allocation3 [shape = 'f32[8,128]{1,0:T(8,128)}', space=vmem, size = 0x1000, scoped, tag = 'scratch operand']
  #allocation4 [shape = 'f32[8,8,512]{2,1,0:T(8,128)}', space=vmem, size = 0x20000, scoped, tag = 'scratch operand']
  #allocation5 [shape = 'f32[8,8,128]{2,1,0:T(8,128)}', space=vmem, size = 0x8000, scoped, tag = 'scratch operand']
  %s0 = inlined_call_operand.hbm [shape: f32[16,16,16], index: 0, kind: input, shape index: {}]
  %s1 = inlined_call_operand.hbm [shape: f32[16,128], index: 1, kind: input, shape index: {}]
  %s2 = inlined_call_operand.hbm [shape: f32[1,128], index: 2, kind: input, shape index: {}]
  %s3 = inlined_call_operand.hbm [shape: f32[128,512], index: 3, kind: input, shape index: {}]
  %s4 = inlined_call_operand.hbm [shape: f32[128,512], index: 4, kind: input, shape index: {}]
  %s5 = inlined_call_operand.hbm [shape: f32[1,512], index: 5, kind: input, shape index: {}]
  %s6 = inlined_call_operand.hbm [shape: f32[128,2], index: 6, kind: input, shape index: {}]
  %s7 = inlined_call_operand.hbm [shape: f32[1,2], index: 7, kind: input, shape index: {}]
  %s8 = inlined_call_operand.hbm [shape: f32[16,16,2], index: 8, kind: output, shape index: {0}]
  %s9 = inlined_call_operand.hbm [shape: f32[16,128], index: 9, kind: output, shape index: {1}]
  %s10 = inlined_call_operand.hbm [shape: f32[16,128], index: 10, kind: output, shape index: {2}]
  %11 = xla_tuple %s8, %s9, %s10
  %s12 = sld [smem:[#allocation0]]
  $region117: #{cudnn_lstm_model_lstm_kernel_forward.2} parent=0
    _
  %s14 = ssub.s32 1, %s12
  %s15 = scalar_select 0, %s14, %s12
  $region1: #{cudnn_lstm_model_lstm_kernel_forward.2} parent=0
    #allocation6 [shape = 'u8[65536]{0}', space=vmem, size = 0x10000, scoped, tag = 'input window, operand 0']
    #allocation7 [shape = 's32[2]{0}', space=sflag, size = 0x8, scoped, tag = 'scoped memory for cudnn_lstm_model_lstm_kernel_forward.2']
    #allocation8 [shape = 's32[2]{0}', space=sflag, size = 0x8, scoped, tag = 'scoped memory for cudnn_lstm_model_lstm_kernel_forward.2']
    #allocation9 [shape = 'u8[8192]{0}', space=vmem, size = 0x2000, scoped, tag = 'input window, operand 1, single buffered']
    #allocation10 [shape = 's32[1]{0}', space=sflag, size = 0x4, scoped, tag = 'scoped memory for cudnn_lstm_model_lstm_kernel_forward.2']
    #allocation11 [shape = 'u8[512]{0}', space=vmem, size = 0x400, scoped, tag = 'input window, operand 2, single buffered']
    #allocation12 [shape = 'u8[262144]{0}', space=vmem, size = 0x40000, scoped, tag = 'input window, operand 3, single buffered']
    #allocation13 [shape = 's32[1]{0}', space=sflag, size = 0x4, scoped, tag = 'scoped memory for cudnn_lstm_model_lstm_kernel_forward.2']
    #allocation14 [shape = 'u8[262144]{0}', space=vmem, size = 0x40000, scoped, tag = 'input window, operand 4, single buffered']
    #allocation15 [shape = 'u8[2048]{0}', space=vmem, size = 0x800, scoped, tag = 'input window, operand 5, single buffered']
    #allocation16 [shape = 's32[1]{0}', space=sflag, size = 0x4, scoped, tag = 'scoped memory for cudnn_lstm_model_lstm_kernel_forward.2']
    #allocation17 [shape = 'u8[65536]{0}', space=vmem, size = 0x10000, scoped, tag = 'input window, operand 6, single buffered']
    #allocation18 [shape = 'u8[512]{0}', space=vmem, size = 0x400, scoped, tag = 'input window, operand 7, single buffered']
    #allocation19 [shape = 's32[1]{0}', space=sflag, size = 0x4, scoped, tag = 'scoped memory for cudnn_lstm_model_lstm_kernel_forward.2']
    #allocation20 [shape = 'u8[65536]{0}', space=vmem, size = 0x10000, scoped, tag = 'output window, operand 0']
    #allocation21 [shape = 'u8[8192]{0}', space=vmem, size = 0x2000, scoped, tag = 'output window, operand 1']
    #allocation22 [shape = 's32[2]{0}', space=sflag, size = 0x8, scoped, tag = 'scoped memory for cudnn_lstm_model_lstm_kernel_forward.2']
    #allocation23 [shape = 'u8[8192]{0}', space=vmem, size = 0x2000, scoped, tag = 'output window, operand 2']
    %16 = vsyncpa [#allocation7], 0
    %s17 = scalar_lea.sflag [#allocation7], 1
    %18 = vsyncpa %s17, 0
    %19 = vsyncpa [#allocation10], 0
    %20 = vsyncpa [#allocation13], 0
    %21 = vsyncpa [#allocation16], 0
    %22 = vsyncpa [#allocation19], 0
    %23 = vsyncpa [#allocation8], 0
    %s24 = scalar_lea.sflag [#allocation8], 1
    %25 = vsyncpa %s24, 0
    %26 = vsyncpa [#allocation22], 0
    %s27 = scalar_lea.sflag [#allocation22], 1
    %28 = vsyncpa %s27, 0
    loop: start=0, step=1, limit=6
    $region2: #{cudnn_lstm_model_lstm_kernel_forward.2} parent=1 // loop_pre_header
      _
    $region3: #{cudnn_lstm_model_lstm_kernel_forward.2} parent=1 // loop_header
      %s30 = sphi 0, %s34
      %p31 = scmp.ge.s32.totalorder %s30, 6
      %s37 = sphi 0, %s49
      %s38 = sphi 0, %s45
      %s39 = sphi 0, %s37
      %s40 = sphi 0, %s38
      %s41 = sphi 0, %s39
      %s42 = sphi 0, %s40
      %s54 = sphi 0, %s56
      %s57 = sphi 0, %s54
      %s58 = sphi 0, %s57
      %s74 = sphi 0, %s58
      %s78 = sphi 0, %s78
      %s80 = sphi 0, %s78
      %s81 = sphi 0, %s80
      %s95 = sphi 0, %s81
      %s99 = sphi 0, %s99
      %s101 = sphi 0, %s99
      %s102 = sphi 0, %s101
      %s116 = sphi 0, %s102
      %s120 = sphi 0, %s120
      %s122 = sphi 0, %s120
      %s123 = sphi 0, %s122
      %s137 = sphi 0, %s123
      %s141 = sphi 0, %s141
      %s143 = sphi 0, %s141
      %s144 = sphi 0, %s143
      %s158 = sphi 0, %s144
      %s162 = sphi 0, %s162
      %s164 = sphi 0, %s162
      %s165 = sphi 0, %s164
      %s179 = sphi 0, %s165
      %s183 = sphi 0, %s183
      %s185 = sphi 0, %s183
      %s186 = sphi 0, %s185
      %s200 = sphi 0, %s186
      %s204 = sphi 0, %s204
      %s206 = sphi 0, %s204
      %s207 = sphi 0, %s206
      %s221 = sphi 0, %s207
      %s229 = sphi 0, %s231
      %s232 = sphi 0, %s229
      %s233 = sphi 0, %s232
      %s249 = sphi 0, %s233
      %s255 = sphi 0, %s257
      %s258 = sphi 0, %s255
      %s259 = sphi 0, %s258
      %s275 = sphi 0, %s259
      %s281 = sphi 0, %s283
      %s284 = sphi 0, %s281
      %s285 = sphi 0, %s284
      %s301 = sphi 0, %s285
    $region4: #{cudnn_lstm_model_lstm_kernel_forward.2} parent=1 // loop_header_branch
      %33 = sbr.rel (%p31) target = $region8
    $region5: #{cudnn_lstm_model_lstm_kernel_forward.2} parent=1 // loop_body
      %s35 = ssub.s32 %s30, 1
      %s36 = ssub.s32 %s30, 2
      %s43 = sadd.s32 1, %s38
      %p44 = scmp.ge.s32.totalorder %s43, 2
      %s45 = scalar_select %p44, 0, %s43
      %s46 = sadd.s32 1, %s37
      %s47 = scalar_select %p44, %s46, %s37
      %p48 = scmp.ge.s32.totalorder %s47, 2
      %s49 = scalar_select %p48, 0, %s47
      %s50 = ssub.s32 %s38, %s45
      %s51 = ssub.s32 %s37, %s49
      %s52 = sor.u32 %s50, %s51
      %p53 = scmp.eq.s32.totalorder %s52, 0
      %s55 = sadd.s32 %s54, 1
      %s56 = scalar_select %p53, %s54, %s55
      %p59 = pneg %p53
      %p60 = scmp.eq.s32.totalorder %s30, 3
      %p61 = por %p59, %p60
      %p62 = scmp.ne.s32.totalorder %s54, %s57
      %p63 = scmp.eq.s32.totalorder %s30, 0
      %p64 = por %p62, %p63
      %p65 = scmp.ne.s32.totalorder %s54, %s57
      %p66 = scmp.eq.s32.totalorder %s35, 3
      %p67 = por %p65, %p66
      %p68 = scmp.ne.s32.totalorder %s57, %s58
      %p69 = scmp.eq.s32.totalorder %s35, 0
      %p70 = por %p68, %p69
      %p71 = scmp.ne.s32.totalorder %s57, %s58
      %p72 = scmp.eq.s32.totalorder %s36, 3
      %p73 = por %p71, %p72
      %p75 = scmp.ne.s32.totalorder %s58, %s74
      %p76 = scmp.eq.s32.totalorder %s36, 0
      %p77 = por %p75, %p76
      %s79 = sadd.s32 %s78, 1
      %p82 = scmp.eq.s32.totalorder %s30, 3
      %p83 = scmp.ne.s32.totalorder %s78, %s80
      %p84 = scmp.eq.s32.totalorder %s30, 0
      %p85 = por %p83, %p84
      %p86 = scmp.ne.s32.totalorder %s78, %s80
      %p87 = scmp.eq.s32.totalorder %s35, 3
      %p88 = por %p86, %p87
      %p89 = scmp.ne.s32.totalorder %s80, %s81
      %p90 = scmp.eq.s32.totalorder %s35, 0
      %p91 = por %p89, %p90
      %p92 = scmp.ne.s32.totalorder %s80, %s81
      %p93 = scmp.eq.s32.totalorder %s36, 3
      %p94 = por %p92, %p93
      %p96 = scmp.ne.s32.totalorder %s81, %s95
      %p97 = scmp.eq.s32.totalorder %s36, 0
      %p98 = por %p96, %p97
      %s100 = sadd.s32 %s99, 1
      %p103 = scmp.eq.s32.totalorder %s30, 3
      %p104 = scmp.ne.s32.totalorder %s99, %s101
      %p105 = scmp.eq.s32.totalorder %s30, 0
      %p106 = por %p104, %p105
      %p107 = scmp.ne.s32.totalorder %s99, %s101
      %p108 = scmp.eq.s32.totalorder %s35, 3
      %p109 = por %p107, %p108
      %p110 = scmp.ne.s32.totalorder %s101, %s102
      %p111 = scmp.eq.s32.totalorder %s35, 0
      %p112 = por %p110, %p111
      %p113 = scmp.ne.s32.totalorder %s101, %s102
      %p114 = scmp.eq.s32.totalorder %s36, 3
      %p115 = por %p113, %p114
      %p117 = scmp.ne.s32.totalorder %s102, %s116
      %p118 = scmp.eq.s32.totalorder %s36, 0
      %p119 = por %p117, %p118
      %s121 = sadd.s32 %s120, 1
      %p124 = scmp.eq.s32.totalorder %s30, 3
      %p125 = scmp.ne.s32.totalorder %s120, %s122
      %p126 = scmp.eq.s32.totalorder %s30, 0
      %p127 = por %p125, %p126
      %p128 = scmp.ne.s32.totalorder %s120, %s122
      %p129 = scmp.eq.s32.totalorder %s35, 3
      %p130 = por %p128, %p129
      %p131 = scmp.ne.s32.totalorder %s122, %s123
      %p132 = scmp.eq.s32.totalorder %s35, 0
      %p133 = por %p131, %p132
      %p134 = scmp.ne.s32.totalorder %s122, %s123
      %p135 = scmp.eq.s32.totalorder %s36, 3
      %p136 = por %p134, %p135
      %p138 = scmp.ne.s32.totalorder %s123, %s137
      %p139 = scmp.eq.s32.totalorder %s36, 0
      %p140 = por %p138, %p139
      %s142 = sadd.s32 %s141, 1
      %p145 = scmp.eq.s32.totalorder %s30, 3
      %p146 = scmp.ne.s32.totalorder %s141, %s143
      %p147 = scmp.eq.s32.totalorder %s30, 0
      %p148 = por %p146, %p147
      %p149 = scmp.ne.s32.totalorder %s141, %s143
      %p150 = scmp.eq.s32.totalorder %s35, 3
      %p151 = por %p149, %p150
      %p152 = scmp.ne.s32.totalorder %s143, %s144
      %p153 = scmp.eq.s32.totalorder %s35, 0
      %p154 = por %p152, %p153
      %p155 = scmp.ne.s32.totalorder %s143, %s144
      %p156 = scmp.eq.s32.totalorder %s36, 3
      %p157 = por %p155, %p156
      %p159 = scmp.ne.s32.totalorder %s144, %s158
      %p160 = scmp.eq.s32.totalorder %s36, 0
      %p161 = por %p159, %p160
      %s163 = sadd.s32 %s162, 1
      %p166 = scmp.eq.s32.totalorder %s30, 3
      %p167 = scmp.ne.s32.totalorder %s162, %s164
      %p168 = scmp.eq.s32.totalorder %s30, 0
      %p169 = por %p167, %p168
      %p170 = scmp.ne.s32.totalorder %s162, %s164
      %p171 = scmp.eq.s32.totalorder %s35, 3
      %p172 = por %p170, %p171
      %p173 = scmp.ne.s32.totalorder %s164, %s165
      %p174 = scmp.eq.s32.totalorder %s35, 0
      %p175 = por %p173, %p174
      %p176 = scmp.ne.s32.totalorder %s164, %s165
      %p177 = scmp.eq.s32.totalorder %s36, 3
      %p178 = por %p176, %p177
      %p180 = scmp.ne.s32.totalorder %s165, %s179
      %p181 = scmp.eq.s32.totalorder %s36, 0
      %p182 = por %p180, %p181
      %s184 = sadd.s32 %s183, 1
      %p187 = scmp.eq.s32.totalorder %s30, 3
      %p188 = scmp.ne.s32.totalorder %s183, %s185
      %p189 = scmp.eq.s32.totalorder %s30, 0
      %p190 = por %p188, %p189
      %p191 = scmp.ne.s32.totalorder %s183, %s185
      %p192 = scmp.eq.s32.totalorder %s35, 3
      %p193 = por %p191, %p192
      %p194 = scmp.ne.s32.totalorder %s185, %s186
      %p195 = scmp.eq.s32.totalorder %s35, 0
      %p196 = por %p194, %p195
      %p197 = scmp.ne.s32.totalorder %s185, %s186
      %p198 = scmp.eq.s32.totalorder %s36, 3
      %p199 = por %p197, %p198
      %p201 = scmp.ne.s32.totalorder %s186, %s200
      %p202 = scmp.eq.s32.totalorder %s36, 0
      %p203 = por %p201, %p202
      %s205 = sadd.s32 %s204, 1
      %p208 = scmp.eq.s32.totalorder %s30, 3
      %p209 = scmp.ne.s32.totalorder %s204, %s206
      %p210 = scmp.eq.s32.totalorder %s30, 0
      %p211 = por %p209, %p210
      %p212 = scmp.ne.s32.totalorder %s204, %s206
      %p213 = scmp.eq.s32.totalorder %s35, 3
      %p214 = por %p212, %p213
      %p215 = scmp.ne.s32.totalorder %s206, %s207
      %p216 = scmp.eq.s32.totalorder %s35, 0
      %p217 = por %p215, %p216
      %p218 = scmp.ne.s32.totalorder %s206, %s207
      %p219 = scmp.eq.s32.totalorder %s36, 3
      %p220 = por %p218, %p219
      %p222 = scmp.ne.s32.totalorder %s207, %s221
      %p223 = scmp.eq.s32.totalorder %s36, 0
      %p224 = por %p222, %p223
      %s225 = ssub.s32 %s38, %s45
      %s226 = ssub.s32 %s37, %s49
      %s227 = sor.u32 %s225, %s226
      %p228 = scmp.eq.s32.totalorder %s227, 0
      %s230 = sadd.s32 %s229, 1
      %s231 = scalar_select %p228, %s229, %s230
      %p234 = pneg %p228
      %p235 = scmp.eq.s32.totalorder %s30, 3
      %p236 = por %p234, %p235
      %p237 = scmp.ne.s32.totalorder %s229, %s232
      %p238 = scmp.eq.s32.totalorder %s30, 0
      %p239 = por %p237, %p238
      %p240 = scmp.ne.s32.totalorder %s229, %s232
      %p241 = scmp.eq.s32.totalorder %s35, 3
      %p242 = por %p240, %p241
      %p243 = scmp.ne.s32.totalorder %s232, %s233
      %p244 = scmp.eq.s32.totalorder %s35, 0
      %p245 = por %p243, %p244
      %p246 = scmp.ne.s32.totalorder %s232, %s233
      %p247 = scmp.eq.s32.totalorder %s36, 3
      %p248 = por %p246, %p247
      %p250 = scmp.ne.s32.totalorder %s233, %s249
      %p251 = scmp.eq.s32.totalorder %s36, 0
      %p252 = por %p250, %p251
      %s253 = ssub.s32 %s37, %s49
      %p254 = scmp.eq.s32.totalorder %s253, 0
      %s256 = sadd.s32 %s255, 1
      %s257 = scalar_select %p254, %s255, %s256
      %p260 = pneg %p254
      %p261 = scmp.eq.s32.totalorder %s30, 3
      %p262 = por %p260, %p261
      %p263 = scmp.ne.s32.totalorder %s255, %s258
      %p264 = scmp.eq.s32.totalorder %s30, 0
      %p265 = por %p263, %p264
      %p266 = scmp.ne.s32.totalorder %s255, %s258
      %p267 = scmp.eq.s32.totalorder %s35, 3
      %p268 = por %p266, %p267
      %p269 = scmp.ne.s32.totalorder %s258, %s259
      %p270 = scmp.eq.s32.totalorder %s35, 0
      %p271 = por %p269, %p270
      %p272 = scmp.ne.s32.totalorder %s258, %s259
      %p273 = scmp.eq.s32.totalorder %s36, 3
      %p274 = por %p272, %p273
      %p276 = scmp.ne.s32.totalorder %s259, %s275
      %p277 = scmp.eq.s32.totalorder %s36, 0
      %p278 = por %p276, %p277
      %s279 = ssub.s32 %s37, %s49
      %p280 = scmp.eq.s32.totalorder %s279, 0
      %s282 = sadd.s32 %s281, 1
      %s283 = scalar_select %p280, %s281, %s282
      %p286 = pneg %p280
      %p287 = scmp.eq.s32.totalorder %s30, 3
      %p288 = por %p286, %p287
      %p289 = scmp.ne.s32.totalorder %s281, %s284
      %p290 = scmp.eq.s32.totalorder %s30, 0
      %p291 = por %p289, %p290
      %p292 = scmp.ne.s32.totalorder %s281, %s284
      %p293 = scmp.eq.s32.totalorder %s35, 3
      %p294 = por %p292, %p293
      %p295 = scmp.ne.s32.totalorder %s284, %s285
      %p296 = scmp.eq.s32.totalorder %s35, 0
      %p297 = por %p295, %p296
      %p298 = scmp.ne.s32.totalorder %s284, %s285
      %p299 = scmp.eq.s32.totalorder %s36, 3
      %p300 = por %p298, %p299
      %p302 = scmp.ne.s32.totalorder %s285, %s301
      %p303 = scmp.eq.s32.totalorder %s36, 0
      %p304 = por %p302, %p303
      %p305 = scmp.le.s32.totalorder 1, %s30
      %p306 = scmp.lt.s32.totalorder %s30, 5
      %p307 = pnand %p305, %p306
      %p308 = pneg %p307
      // Predicated region
      $region9: #{cudnn_lstm_model_lstm_kernel_forward.2} parent=5 // pred_check
        _
      $region10: #{cudnn_lstm_model_lstm_kernel_forward.2} parent=5 // pred_check_branch
        %310 = sbr.rel (%p307) target = $region12
      $region11: #{cudnn_lstm_model_lstm_kernel_forward.2} parent=5 // pred_region
        %s311 = ssub.s32 %s30, 1
        // Predicated region
        $region13: #{cudnn_lstm_model_lstm_kernel_forward.2} parent=11 // pred_check
          %p312 = pneg %p91
        $region14: #{cudnn_lstm_model_lstm_kernel_forward.2} parent=11 // pred_check_branch
          %314 = sbr.rel (%p312) target = $region16
        $region15: #{cudnn_lstm_model_lstm_kernel_forward.2} parent=11 // pred_region
          %s316 = ssub.s32 256, 256
          %317 = vsyncadd [#allocation10], %s316
          %s318 = sshll.u32 [#allocation9], 4
          %s319 = int_to_ptr.vmem [resolvable:$true] %s318
          %324 = dma.hbm_to_vmem [thread:$0]  %s1, 256, %s319, [#allocation10], 128, 128, 8
        $region16: #{cudnn_lstm_model_lstm_kernel_forward.2} parent=11 // pred_fallthru
          _
        // Predicated region
        $region17: #{cudnn_lstm_model_lstm_kernel_forward.2} parent=11 // pred_check
          %p325 = pneg %p112
        $region18: #{cudnn_lstm_model_lstm_kernel_forward.2} parent=11 // pred_check_branch
          %327 = sbr.rel (%p325) target = $region20
        $region19: #{cudnn_lstm_model_lstm_kernel_forward.2} parent=11 // pred_region
          %s329 = ssub.s32 16, 16
          %330 = vsyncadd [#allocation10], %s329
          %s332 = sshll.u32 [#allocation11], 4
          %s333 = int_to_ptr.vmem [resolvable:$true] %s332
          %335 = dma.hbm_to_vmem [thread:$0]  %s2, 16, %s333, [#allocation10]
        $region20: #{cudnn_lstm_model_lstm_kernel_forward.2} parent=11 // pred_fallthru
          _
        // Predicated region
        $region21: #{cudnn_lstm_model_lstm_kernel_forward.2} parent=11 // pred_check
          %p336 = pneg %p133
        $region22: #{cudnn_lstm_model_lstm_kernel_forward.2} parent=11 // pred_check_branch
          %338 = sbr.rel (%p336) target = $region24
        $region23: #{cudnn_lstm_model_lstm_kernel_forward.2} parent=11 // pred_region
          %s340 = ssub.s32 8192, 8192
          %341 = vsyncadd [#allocation13], %s340
          %s342 = sshll.u32 [#allocation12], 4
          %s343 = int_to_ptr.vmem [resolvable:$true] %s342
          %348 = dma.hbm_to_vmem [thread:$0]  %s3, 8192, %s343, [#allocation13], 512, 512, 32
        $region24: #{cudnn_lstm_model_lstm_kernel_forward.2} parent=11 // pred_fallthru
          _
        // Predicated region
        $region25: #{cudnn_lstm_model_lstm_kernel_forward.2} parent=11 // pred_check
          %p349 = pneg %p154
        $region26: #{cudnn_lstm_model_lstm_kernel_forward.2} parent=11 // pred_check_branch
          %351 = sbr.rel (%p349) target = $region28
        $region27: #{cudnn_lstm_model_lstm_kernel_forward.2} parent=11 // pred_region
          %s353 = ssub.s32 8192, 8192
          %354 = vsyncadd [#allocation13], %s353
          %s355 = sshll.u32 [#allocation14], 4
          %s356 = int_to_ptr.vmem [resolvable:$true] %s355
          %361 = dma.hbm_to_vmem [thread:$0]  %s4, 8192, %s356, [#allocation13], 512, 512, 32
        $region28: #{cudnn_lstm_model_lstm_kernel_forward.2} parent=11 // pred_fallthru
          _
        // Predicated region
        $region29: #{cudnn_lstm_model_lstm_kernel_forward.2} parent=11 // pred_check
          %p362 = pneg %p175
        $region30: #{cudnn_lstm_model_lstm_kernel_forward.2} parent=11 // pred_check_branch
          %364 = sbr.rel (%p362) target = $region32
        $region31: #{cudnn_lstm_model_lstm_kernel_forward.2} parent=11 // pred_region
          %s366 = ssub.s32 64, 64
          %367 = vsyncadd [#allocation16], %s366
          %s369 = sshll.u32 [#allocation15], 4
          %s370 = int_to_ptr.vmem [resolvable:$true] %s369
          %372 = dma.hbm_to_vmem [thread:$0]  %s5, 64, %s370, [#allocation16]
        $region32: #{cudnn_lstm_model_lstm_kernel_forward.2} parent=11 // pred_fallthru
          _
        // Predicated region
        $region33: #{cudnn_lstm_model_lstm_kernel_forward.2} parent=11 // pred_check
          %p373 = pneg %p196
        $region34: #{cudnn_lstm_model_lstm_kernel_forward.2} parent=11 // pred_check_branch
          %375 = sbr.rel (%p373) target = $region36
        $region35: #{cudnn_lstm_model_lstm_kernel_forward.2} parent=11 // pred_region
          %s377 = ssub.s32 2048, 2048
          %378 = vsyncadd [#allocation16], %s377
          %s379 = sshll.u32 [#allocation17], 4
          %s380 = int_to_ptr.vmem [resolvable:$true] %s379
          %385 = dma.hbm_to_vmem [thread:$0]  %s6, 2048, %s380, [#allocation16], 128, 128, 8
        $region36: #{cudnn_lstm_model_lstm_kernel_forward.2} parent=11 // pred_fallthru
          _
        // Predicated region
        $region37: #{cudnn_lstm_model_lstm_kernel_forward.2} parent=11 // pred_check
          %p386 = pneg %p217
        $region38: #{cudnn_lstm_model_lstm_kernel_forward.2} parent=11 // pred_check_branch
          %388 = sbr.rel (%p386) target = $region40
        $region39: #{cudnn_lstm_model_lstm_kernel_forward.2} parent=11 // pred_region
          %s390 = ssub.s32 16, 16
          %391 = vsyncadd [#allocation19], %s390
          %s393 = sshll.u32 [#allocation18], 4
          %s394 = int_to_ptr.vmem [resolvable:$true] %s393
          %396 = dma.hbm_to_vmem [thread:$0]  %s7, 16, %s394, [#allocation19]
        $region40: #{cudnn_lstm_model_lstm_kernel_forward.2} parent=11 // pred_fallthru
          _
      $region12: #{cudnn_lstm_model_lstm_kernel_forward.2} parent=5 // pred_fallthru
        _
      %p397 = scmp.lt.s32.totalorder %s30, 4
      // Predicated region
      $region41: #{cudnn_lstm_model_lstm_kernel_forward.2} parent=5 // pred_check
        %p398 = pneg %p397
      $region42: #{cudnn_lstm_model_lstm_kernel_forward.2} parent=5 // pred_check_branch
        %400 = sbr.rel (%p398) target = $region44
      $region43: #{cudnn_lstm_model_lstm_kernel_forward.2} parent=5 // pred_region
        // Predicated region
        $region45: #{cudnn_lstm_model_lstm_kernel_forward.2} parent=43 // pred_check
          %p401 = pneg %p64
        $region46: #{cudnn_lstm_model_lstm_kernel_forward.2} parent=43 // pred_check_branch
          %403 = sbr.rel (%p401) target = $region48
        $region47: #{cudnn_lstm_model_lstm_kernel_forward.2} parent=43 // pred_region
          %s404 = sand.u32 %s54, 1
          %s405 = scalar_lea.sflag [#allocation7], %s404
          %s406 = sand.u32 %s54, 1
          %s407 = smul.addr %s406, 64
          %s408 = scalar_lea.vmem [#allocation6], %s407
          %s409 = smul.u32 8, %s38
          %s411 = ssub.s32 1024, 1024
          %412 = vsyncadd %s405, %s411
          %s413 = smul.addr %s409, 2
          %s414 = sadd.s32 %s37, %s413
          %s415 = smul.addr %s414, 128
          %s416 = scalar_lea.hbm %s0, %s415
          %s417 = sshll.u32 %s408, 4
          %s418 = int_to_ptr.vmem [resolvable:$true] %s417
          %423 = dma.hbm_to_vmem [thread:$0]  %s416, 1024, %s418, %s405, 256, 128, 8
        $region48: #{cudnn_lstm_model_lstm_kernel_forward.2} parent=43 // pred_fallthru
          _
      $region44: #{cudnn_lstm_model_lstm_kernel_forward.2} parent=5 // pred_fallthru
        _
      %p424 = scmp.le.s32.totalorder 1, %s30
      %p425 = scmp.lt.s32.totalorder %s30, 5
      %p426 = pnand %p424, %p425
      %p427 = pneg %p426
      // Predicated region
      $region49: #{cudnn_lstm_model_lstm_kernel_forward.2} parent=5 // pred_check
        _
      $region50: #{cudnn_lstm_model_lstm_kernel_forward.2} parent=5 // pred_check_branch
        %429 = sbr.rel (%p426) target = $region52
      $region51: #{cudnn_lstm_model_lstm_kernel_forward.2} parent=5 // pred_region
        %s430 = ssub.s32 %s30, 1
        %s431 = sand.u32 %s57, 1
        %s432 = scalar_lea.sflag [#allocation7], %s431
        %s433 = sand.u32 %s57, 1
        %s434 = smul.addr %s433, 64
        %s435 = scalar_lea.vmem [#allocation6], %s434
        // Predicated region
        $region53: #{cudnn_lstm_model_lstm_kernel_forward.2} parent=51 // pred_check
          %p436 = pneg %p70
        $region54: #{cudnn_lstm_model_lstm_kernel_forward.2} parent=51 // pred_check_branch
          %438 = sbr.rel (%p436) target = $region56
        $region55: #{cudnn_lstm_model_lstm_kernel_forward.2} parent=51 // pred_region
          %439 = dma.done %s432, 1024
        $region56: #{cudnn_lstm_model_lstm_kernel_forward.2} parent=51 // pred_fallthru
          _
        // Predicated region
        $region57: #{cudnn_lstm_model_lstm_kernel_forward.2} parent=51 // pred_check
          %p440 = pneg %p91
        $region58: #{cudnn_lstm_model_lstm_kernel_forward.2} parent=51 // pred_check_branch
          %442 = sbr.rel (%p440) target = $region60
        $region59: #{cudnn_lstm_model_lstm_kernel_forward.2} parent=51 // pred_region
          %443 = dma.done [#allocation10], 256
        $region60: #{cudnn_lstm_model_lstm_kernel_forward.2} parent=51 // pred_fallthru
          _
        // Predicated region
        $region61: #{cudnn_lstm_model_lstm_kernel_forward.2} parent=51 // pred_check
          %p444 = pneg %p112
        $region62: #{cudnn_lstm_model_lstm_kernel_forward.2} parent=51 // pred_check_branch
          %446 = sbr.rel (%p444) target = $region64
        $region63: #{cudnn_lstm_model_lstm_kernel_forward.2} parent=51 // pred_region
          %447 = dma.done [#allocation10], 16
        $region64: #{cudnn_lstm_model_lstm_kernel_forward.2} parent=51 // pred_fallthru
          _
        // Predicated region
        $region65: #{cudnn_lstm_model_lstm_kernel_forward.2} parent=51 // pred_check
          %p448 = pneg %p133
        $region66: #{cudnn_lstm_model_lstm_kernel_forward.2} parent=51 // pred_check_branch
          %450 = sbr.rel (%p448) target = $region68
        $region67: #{cudnn_lstm_model_lstm_kernel_forward.2} parent=51 // pred_region
          %451 = dma.done [#allocation13], 8192
        $region68: #{cudnn_lstm_model_lstm_kernel_forward.2} parent=51 // pred_fallthru
          _
        // Predicated region
        $region69: #{cudnn_lstm_model_lstm_kernel_forward.2} parent=51 // pred_check
          %p452 = pneg %p154
        $region70: #{cudnn_lstm_model_lstm_kernel_forward.2} parent=51 // pred_check_branch
          %454 = sbr.rel (%p452) target = $region72
        $region71: #{cudnn_lstm_model_lstm_kernel_forward.2} parent=51 // pred_region
          %455 = dma.done [#allocation13], 8192
        $region72: #{cudnn_lstm_model_lstm_kernel_forward.2} parent=51 // pred_fallthru
          _
        // Predicated region
        $region73: #{cudnn_lstm_model_lstm_kernel_forward.2} parent=51 // pred_check
          %p456 = pneg %p175
        $region74: #{cudnn_lstm_model_lstm_kernel_forward.2} parent=51 // pred_check_branch
          %458 = sbr.rel (%p456) target = $region76
        $region75: #{cudnn_lstm_model_lstm_kernel_forward.2} parent=51 // pred_region
          %459 = dma.done [#allocation16], 64
        $region76: #{cudnn_lstm_model_lstm_kernel_forward.2} parent=51 // pred_fallthru
          _
        // Predicated region
        $region77: #{cudnn_lstm_model_lstm_kernel_forward.2} parent=51 // pred_check
          %p460 = pneg %p196
        $region78: #{cudnn_lstm_model_lstm_kernel_forward.2} parent=51 // pred_check_branch
          %462 = sbr.rel (%p460) target = $region80
        $region79: #{cudnn_lstm_model_lstm_kernel_forward.2} parent=51 // pred_region
          %463 = dma.done [#allocation16], 2048
        $region80: #{cudnn_lstm_model_lstm_kernel_forward.2} parent=51 // pred_fallthru
          _
        // Predicated region
        $region81: #{cudnn_lstm_model_lstm_kernel_forward.2} parent=51 // pred_check
          %p464 = pneg %p217
        $region82: #{cudnn_lstm_model_lstm_kernel_forward.2} parent=51 // pred_check_branch
          %466 = sbr.rel (%p464) target = $region84
        $region83: #{cudnn_lstm_model_lstm_kernel_forward.2} parent=51 // pred_region
          %467 = dma.done [#allocation19], 16
        $region84: #{cudnn_lstm_model_lstm_kernel_forward.2} parent=51 // pred_fallthru
          _
        %s468 = sand.u32 %s57, 1
        %s469 = scalar_lea.sflag [#allocation7], %s468
        %s470 = sand.u32 %s57, 1
        %s471 = smul.addr %s470, 64
        %s472 = scalar_lea.vmem [#allocation6], %s471
        %p473 = pneg %p70
        %p474 = pneg %p67
        %p475 = pneg %p91
        %p476 = pneg %p88
        %p477 = pneg %p112
        %p478 = pneg %p109
        %p479 = pneg %p133
        %p480 = pneg %p130
        %p481 = pneg %p154
        %p482 = pneg %p151
        %p483 = pneg %p175
        %p484 = pneg %p172
        %p485 = pneg %p196
        %p486 = pneg %p193
        %p487 = pneg %p217
        %p488 = pneg %p214
        %p489 = pneg %p245
        %p490 = pneg %p242
        %s491 = sand.u32 %s232, 1
        %s492 = scalar_lea.sflag [#allocation8], %s491
        %s493 = sand.u32 %s232, 1
        %s494 = smul.addr %s493, 64
        %s495 = scalar_lea.vmem [#allocation20], %s494
        %p496 = pneg %p271
        %p497 = pneg %p268
        %s498 = sand.u32 %s35, 1
        %s499 = scalar_lea.sflag [#allocation22], %s498
        %s500 = sand.u32 %s258, 1
        %s501 = smul.addr %s500, 8
        %s502 = scalar_lea.vmem [#allocation21], %s501
        %p503 = pneg %p297
        %p504 = pneg %p294
        %s505 = sand.u32 %s35, 1
        %s506 = scalar_lea.sflag [#allocation22], %s505
        %s507 = sand.u32 %s284, 1
        %s508 = smul.addr %s507, 8
        %s509 = scalar_lea.vmem [#allocation23], %s508
        %s510 = smul.u32 8, %s40
        %s511 = smul.u32 8, %s40
        %p512 = scmp.eq.s32.totalorder %s40, 0
        // Predicated region
        $region85: #{cudnn_lstm_model_lstm_kernel_forward.2} parent=51 // pred_check
          %p513 = pneg %p512
        $region86: #{cudnn_lstm_model_lstm_kernel_forward.2} parent=51 // pred_check_branch
          %515 = sbr.rel (%p513) target = $region88
        $region87: #{cudnn_lstm_model_lstm_kernel_forward.2} parent=51 // pred_region
          %516 = vst [vmem:[#allocation2] sm:$0xff] 0.0
          %517 = vst [vmem:[#allocation3] sm:$0xff] 0.0
        $region88: #{cudnn_lstm_model_lstm_kernel_forward.2} parent=51 // pred_fallthru
          _
        %v518 = vld [vmem:[%s435] sm:$0xff]
        %v519 = vld [vmem:[%s435 + $0x8] sm:$0xff]
        %v520 = vld [vmem:[%s435 + $0x10] sm:$0xff]
        %v521 = vld [vmem:[%s435 + $0x18] sm:$0xff]
        %v522 = vld [vmem:[%s435 + $0x20] sm:$0xff]
        %v523 = vld [vmem:[%s435 + $0x28] sm:$0xff]
        %v524 = vld [vmem:[%s435 + $0x30] sm:$0xff]
        %v525 = vld [vmem:[%s435 + $0x38] sm:$0xff]
        %v526 = vld [vmem:[#allocation9] sm:$0xff]
        %v527 = vld [vmem:[#allocation9 + $0x8] sm:$0xff]
        %v528 = vld [vmem:[#allocation11] sm:$0x1]
        %v530 = vlaneseq
        %v531 = vshrl.u32 %v530, 7
        %v532 = vsub.s32 0, %v531
        %v533 = vrot.slane %v528, %v532
        %vm535 = vcmask 130048
        %v537 = vsel %vm535, %v518, 0
        %v540 = vsel %vm535, %v519, 0
        %v543 = vsel %vm535, %v520, 0
        %v546 = vsel %vm535, %v521, 0
        %v549 = vsel %vm535, %v522, 0
        %v552 = vsel %vm535, %v523, 0
        %v555 = vsel %vm535, %v524, 0
        %v558 = vsel %vm535, %v525, 0
        %560 = vmatprep.subr.mxu0 0.0
        %561 = vmatpush1.msra.mxu0 %v526
        %562 = vmatprep.subr.mxu0 0.0
        %563 = vmatpush1.msra.mxu0 %v527
        %564 = vmatprep.subr.mxu0 0.0
        %565 = vmatpush1.msra.mxu0 0.0
        %566 = vmatprep.subr.mxu0 0.0
        %567 = vmatpush1.msra.mxu0 0.0
        %568 = vmatprep.subr.mxu0 0.0
        %569 = vmatpush1.msra.mxu0 0.0
        %570 = vmatprep.subr.mxu0 0.0
        %571 = vmatpush1.msra.mxu0 0.0
        %572 = vmatprep.subr.mxu0 0.0
        %573 = vmatpush1.msra.mxu0 0.0
        %574 = vmatprep.subr.mxu0 0.0
        %575 = vmatpush1.msra.mxu0 0.0
        %576 = vmatprep.subr.mxu0 0.0
        %577 = vmatpush1.msra.mxu0 0.0
        %578 = vmatprep.subr.mxu0 0.0
        %579 = vmatpush1.msra.mxu0 0.0
        %580 = vmatprep.subr.mxu0 0.0
        %581 = vmatpush1.msra.mxu0 0.0
        %582 = vmatprep.subr.mxu0 0.0
        %583 = vmatpush1.msra.mxu0 0.0
        %584 = vmatprep.subr.mxu0 0.0
        %585 = vmatpush1.msra.mxu0 0.0
        %586 = vmatprep.subr.mxu0 0.0
        %587 = vmatpush1.msra.mxu0 0.0
        %588 = vmatprep.subr.mxu0 0.0
        %589 = vmatpush1.msra.mxu0 0.0
        %590 = vmatprep.subr.mxu0 0.0
        %591 = vmatpush1.msra.mxu0 0.0
        %592 = vmatprep.subr.mxu0 0.0
        %593 = vmatpush1.msra.mxu0 0.0
        %594 = vmatprep.subr.mxu0 0.0
        %595 = vmatpush1.msra.mxu0 0.0
        %596 = vmatprep.subr.mxu0 0.0
        %597 = vmatpush1.msra.mxu0 0.0
        %598 = vmatprep.subr.mxu0 0.0
        %599 = vmatpush1.msra.mxu0 0.0
        %600 = vmatprep.subr.mxu0 0.0
        %601 = vmatpush1.msra.mxu0 0.0
        %602 = vmatprep.subr.mxu0 0.0
        %603 = vmatpush1.msra.mxu0 0.0
        %604 = vmatprep.subr.mxu0 0.0
        %605 = vmatpush1.msra.mxu0 0.0
        %606 = vmatprep.subr.mxu0 0.0
        %607 = vmatpush1.msra.mxu0 0.0
        %608 = vmatprep.subr.mxu0 0.0
        %609 = vmatpush1.msra.mxu0 0.0
        %610 = vmatprep.subr.mxu0 0.0
        %611 = vmatpush1.msra.mxu0 0.0
        %612 = vmatprep.subr.mxu0 0.0
        %613 = vmatpush1.msra.mxu0 0.0
        %614 = vmatprep.subr.mxu0 0.0
        %615 = vmatpush1.msra.mxu0 0.0
        %616 = vmatprep.subr.mxu0 0.0
        %617 = vmatpush1.msra.mxu0 0.0
        %618 = vmatprep.subr.mxu0 0.0
        %619 = vmatpush1.msra.mxu0 0.0
        %620 = vmatprep.subr.mxu0 0.0
        %621 = vmatpush1.msra.mxu0 0.0
        %622 = vmatprep.subr.mxu0 0.0
        %623 = vmatpush1.msra.mxu0 0.0
        %624 = vmatprep.mubr.f32.mxu0 0.0
        %625 = vmatmul.mubr.f32.gmra.mrb[0].mxu0 %v537
        %v626 = vpop.f32.mrb[0].mxu0
        %v627 = vadd.f32 %v533, %v626
        %v628 = vpop.f32.mrb[0].mxu0
        %629 = vmatprep.mubr.f32.mxu0 0.0
        %630 = vmatmul.mubr.f32.gmra.mrb[0].mxu0 %v540
        %v631 = vpop.f32.mrb[0].mxu0
        %v632 = vadd.f32 %v533, %v631
        %v633 = vpop.f32.mrb[0].mxu0
        %634 = vmatprep.mubr.f32.mxu0 0.0
        %635 = vmatmul.mubr.f32.gmra.mrb[0].mxu0 %v543
        %v636 = vpop.f32.mrb[0].mxu0
        %v637 = vadd.f32 %v533, %v636
        %v638 = vpop.f32.mrb[0].mxu0
        %639 = vmatprep.mubr.f32.mxu0 0.0
        %640 = vmatmul.mubr.f32.gmra.mrb[0].mxu0 %v546
        %v641 = vpop.f32.mrb[0].mxu0
        %v642 = vadd.f32 %v533, %v641
        %v643 = vpop.f32.mrb[0].mxu0
        %644 = vmatprep.mubr.f32.mxu0 0.0
        %645 = vmatmul.mubr.f32.gmra.mrb[0].mxu0 %v549
        %v646 = vpop.f32.mrb[0].mxu0
        %v647 = vadd.f32 %v533, %v646
        %v648 = vpop.f32.mrb[0].mxu0
        %649 = vmatprep.mubr.f32.mxu0 0.0
        %650 = vmatmul.mubr.f32.gmra.mrb[0].mxu0 %v552
        %v651 = vpop.f32.mrb[0].mxu0
        %v652 = vadd.f32 %v533, %v651
        %v653 = vpop.f32.mrb[0].mxu0
        %654 = vmatprep.mubr.f32.mxu0 0.0
        %655 = vmatmul.mubr.f32.gmra.mrb[0].mxu0 %v555
        %v656 = vpop.f32.mrb[0].mxu0
        %v657 = vadd.f32 %v533, %v656
        %v658 = vpop.f32.mrb[0].mxu0
        %659 = vmatprep.mubr.f32.mxu0 0.0
        %660 = vmatmul.mubr.f32.gmra.mrb[0].mxu0 %v558
        %v661 = vpop.f32.mrb[0].mxu0
        %v662 = vadd.f32 %v533, %v661
        %v663 = vpop.f32.mrb[0].mxu0
        %664 = vdwg.mxu0
        %v665 = vmax.f32 %v627, 0.0
        %v666 = vmax.f32 %v632, 0.0
        %v667 = vmax.f32 %v637, 0.0
        %v668 = vmax.f32 %v642, 0.0
        %v669 = vmax.f32 %v647, 0.0
        %v670 = vmax.f32 %v652, 0.0
        %v671 = vmax.f32 %v657, 0.0
        %v672 = vmax.f32 %v662, 0.0
        %v673 = vld [vmem:[#allocation12] sm:$0xff]
        %v674 = vld [vmem:[#allocation12 + $0x8] sm:$0xff]
        %v675 = vld [vmem:[#allocation12 + $0x10] sm:$0xff]
        %v676 = vld [vmem:[#allocation12 + $0x18] sm:$0xff]
        %v677 = vld [vmem:[#allocation12 + $0x20] sm:$0xff]
        %v678 = vld [vmem:[#allocation12 + $0x28] sm:$0xff]
        %v679 = vld [vmem:[#allocation12 + $0x30] sm:$0xff]
        %v680 = vld [vmem:[#allocation12 + $0x38] sm:$0xff]
        %v681 = vld [vmem:[#allocation12 + $0x40] sm:$0xff]
        %v682 = vld [vmem:[#allocation12 + $0x48] sm:$0xff]
        %v683 = vld [vmem:[#allocation12 + $0x50] sm:$0xff]
        %v684 = vld [vmem:[#allocation12 + $0x58] sm:$0xff]
        %v685 = vld [vmem:[#allocation12 + $0x60] sm:$0xff]
        %v686 = vld [vmem:[#allocation12 + $0x68] sm:$0xff]
        %v687 = vld [vmem:[#allocation12 + $0x70] sm:$0xff]
        %v688 = vld [vmem:[#allocation12 + $0x78] sm:$0xff]
        %v689 = vld [vmem:[#allocation12 + $0x80] sm:$0xff]
        %v690 = vld [vmem:[#allocation12 + $0x88] sm:$0xff]
        %v691 = vld [vmem:[#allocation12 + $0x90] sm:$0xff]
        %v692 = vld [vmem:[#allocation12 + $0x98] sm:$0xff]
        %v693 = vld [vmem:[#allocation12 + $0xa0] sm:$0xff]
        %v694 = vld [vmem:[#allocation12 + $0xa8] sm:$0xff]
        %v695 = vld [vmem:[#allocation12 + $0xb0] sm:$0xff]
        %v696 = vld [vmem:[#allocation12 + $0xb8] sm:$0xff]
        %v697 = vld [vmem:[#allocation12 + $0xc0] sm:$0xff]
        %v698 = vld [vmem:[#allocation12 + $0xc8] sm:$0xff]
        %v699 = vld [vmem:[#allocation12 + $0xd0] sm:$0xff]
        %v700 = vld [vmem:[#allocation12 + $0xd8] sm:$0xff]
        %v701 = vld [vmem:[#allocation12 + $0xe0] sm:$0xff]
        %v702 = vld [vmem:[#allocation12 + $0xe8] sm:$0xff]
        %v703 = vld [vmem:[#allocation12 + $0xf0] sm:$0xff]
        %v704 = vld [vmem:[#allocation12 + $0xf8] sm:$0xff]
        %v705 = vld [vmem:[#allocation12 + $0x100] sm:$0xff]
        %v706 = vld [vmem:[#allocation12 + $0x108] sm:$0xff]
        %v707 = vld [vmem:[#allocation12 + $0x110] sm:$0xff]
        %v708 = vld [vmem:[#allocation12 + $0x118] sm:$0xff]
        %v709 = vld [vmem:[#allocation12 + $0x120] sm:$0xff]
        %v710 = vld [vmem:[#allocation12 + $0x128] sm:$0xff]
        %v711 = vld [vmem:[#allocation12 + $0x130] sm:$0xff]
        %v712 = vld [vmem:[#allocation12 + $0x138] sm:$0xff]
        %v713 = vld [vmem:[#allocation12 + $0x140] sm:$0xff]
        %v714 = vld [vmem:[#allocation12 + $0x148] sm:$0xff]
        %v715 = vld [vmem:[#allocation12 + $0x150] sm:$0xff]
        %v716 = vld [vmem:[#allocation12 + $0x158] sm:$0xff]
        %v717 = vld [vmem:[#allocation12 + $0x160] sm:$0xff]
        %v718 = vld [vmem:[#allocation12 + $0x168] sm:$0xff]
        %v719 = vld [vmem:[#allocation12 + $0x170] sm:$0xff]
        %v720 = vld [vmem:[#allocation12 + $0x178] sm:$0xff]
        %v721 = vld [vmem:[#allocation12 + $0x180] sm:$0xff]
        %v722 = vld [vmem:[#allocation12 + $0x188] sm:$0xff]
        %v723 = vld [vmem:[#allocation12 + $0x190] sm:$0xff]
        %v724 = vld [vmem:[#allocation12 + $0x198] sm:$0xff]
        %v725 = vld [vmem:[#allocation12 + $0x1a0] sm:$0xff]
        %v726 = vld [vmem:[#allocation12 + $0x1a8] sm:$0xff]
        %v727 = vld [vmem:[#allocation12 + $0x1b0] sm:$0xff]
        %v728 = vld [vmem:[#allocation12 + $0x1b8] sm:$0xff]
        %v729 = vld [vmem:[#allocation12 + $0x1c0] sm:$0xff]
        %v730 = vld [vmem:[#allocation12 + $0x1c8] sm:$0xff]
        %v731 = vld [vmem:[#allocation12 + $0x1d0] sm:$0xff]
        %v732 = vld [vmem:[#allocation12 + $0x1d8] sm:$0xff]
        %v733 = vld [vmem:[#allocation12 + $0x1e0] sm:$0xff]
        %v734 = vld [vmem:[#allocation12 + $0x1e8] sm:$0xff]
        %v735 = vld [vmem:[#allocation12 + $0x1f0] sm:$0xff]
        %v736 = vld [vmem:[#allocation12 + $0x1f8] sm:$0xff]
        %v737 = vld [vmem:[#allocation15] sm:$0xf]
        %v739 = vlaneseq
        %v740 = vshrl.u32 %v739, 7
        %v741 = vsub.s32 0, %v740
        %v742 = vrot.slane %v737, %v741
        %v743 = vlaneseq
        %v744 = vshrl.u32 %v743, 7
        %v745 = vsub.s32 1, %v744
        %v746 = vrot.slane %v737, %v745
        %v747 = vlaneseq
        %v748 = vshrl.u32 %v747, 7
        %v749 = vsub.s32 2, %v748
        %v750 = vrot.slane %v737, %v749
        %v751 = vlaneseq
        %v752 = vshrl.u32 %v751, 7
        %v753 = vsub.s32 3, %v752
        %v754 = vrot.slane %v737, %v753
        %759 = vmatprep.subr.mxu0 %v674
        %760 = vmatpush1.msra.mxu0 %v673
        %761 = vmatprep.subr.mxu0 %v678
        %762 = vmatpush1.msra.mxu0 %v677
        %763 = vmatprep.subr.mxu0 %v682
        %764 = vmatpush1.msra.mxu0 %v681
        %765 = vmatprep.subr.mxu0 %v686
        %766 = vmatpush1.msra.mxu0 %v685
        %767 = vmatprep.subr.mxu0 %v690
        %768 = vmatpush1.msra.mxu0 %v689
        %769 = vmatprep.subr.mxu0 %v694
        %770 = vmatpush1.msra.mxu0 %v693
        %771 = vmatprep.subr.mxu0 %v698
        %772 = vmatpush1.msra.mxu0 %v697
        %773 = vmatprep.subr.mxu0 %v702
        %774 = vmatpush1.msra.mxu0 %v701
        %775 = vmatprep.subr.mxu0 %v706
        %776 = vmatpush1.msra.mxu0 %v705
        %777 = vmatprep.subr.mxu0 %v710
        %778 = vmatpush1.msra.mxu0 %v709
        %779 = vmatprep.subr.mxu0 %v714
        %780 = vmatpush1.msra.mxu0 %v713
        %781 = vmatprep.subr.mxu0 %v718
        %782 = vmatpush1.msra.mxu0 %v717
        %783 = vmatprep.subr.mxu0 %v722
        %784 = vmatpush1.msra.mxu0 %v721
        %785 = vmatprep.subr.mxu0 %v726
        %786 = vmatpush1.msra.mxu0 %v725
        %787 = vmatprep.subr.mxu0 %v730
        %788 = vmatpush1.msra.mxu0 %v729
        %789 = vmatprep.subr.mxu0 %v734
        %790 = vmatpush1.msra.mxu0 %v733
        %791 = vmatprep.subr.mxu0 0.0
        %792 = vmatpush1.msra.mxu0 0.0
        %793 = vmatprep.subr.mxu0 0.0
        %794 = vmatpush1.msra.mxu0 0.0
        %795 = vmatprep.subr.mxu0 0.0
        %796 = vmatpush1.msra.mxu0 0.0
        %797 = vmatprep.subr.mxu0 0.0
        %798 = vmatpush1.msra.mxu0 0.0
        %799 = vmatprep.subr.mxu0 0.0
        %800 = vmatpush1.msra.mxu0 0.0
        %801 = vmatprep.subr.mxu0 0.0
        %802 = vmatpush1.msra.mxu0 0.0
        %803 = vmatprep.subr.mxu0 0.0
        %804 = vmatpush1.msra.mxu0 0.0
        %805 = vmatprep.subr.mxu0 0.0
        %806 = vmatpush1.msra.mxu0 0.0
        %807 = vmatprep.subr.mxu0 0.0
        %808 = vmatpush1.msra.mxu0 0.0
        %809 = vmatprep.subr.mxu0 0.0
        %810 = vmatpush1.msra.mxu0 0.0
        %811 = vmatprep.subr.mxu0 0.0
        %812 = vmatpush1.msra.mxu0 0.0
        %813 = vmatprep.subr.mxu0 0.0
        %814 = vmatpush1.msra.mxu0 0.0
        %815 = vmatprep.subr.mxu0 0.0
        %816 = vmatpush1.msra.mxu0 0.0
        %817 = vmatprep.subr.mxu0 0.0
        %818 = vmatpush1.msra.mxu0 0.0
        %819 = vmatprep.subr.mxu0 0.0
        %820 = vmatpush1.msra.mxu0 0.0
        %821 = vmatprep.subr.mxu0 0.0
        %822 = vmatpush1.msra.mxu0 0.0
        %823 = vmatprep.mubr.f32.mxu0 0.0
        %824 = vmatmul.mubr.f32.gmra.mrb[0].mxu0 %v665
        %v825 = vpop.f32.mrb[0].mxu0
        %v826 = vadd.f32 %v742, %v825
        %v827 = vpop.f32.mrb[0].mxu0
        %v828 = vadd.f32 %v746, %v827
        %829 = vmatprep.mubr.f32.mxu0 0.0
        %830 = vmatmul.mubr.f32.gmra.mrb[0].mxu0 %v666
        %v831 = vpop.f32.mrb[0].mxu0
        %v832 = vadd.f32 %v742, %v831
        %v833 = vpop.f32.mrb[0].mxu0
        %v834 = vadd.f32 %v746, %v833
        %835 = vmatprep.mubr.f32.mxu0 0.0
        %836 = vmatmul.mubr.f32.gmra.mrb[0].mxu0 %v667
        %v837 = vpop.f32.mrb[0].mxu0
        %v838 = vadd.f32 %v742, %v837
        %v839 = vpop.f32.mrb[0].mxu0
        %v840 = vadd.f32 %v746, %v839
        %841 = vmatprep.mubr.f32.mxu0 0.0
        %842 = vmatmul.mubr.f32.gmra.mrb[0].mxu0 %v668
        %v843 = vpop.f32.mrb[0].mxu0
        %v844 = vadd.f32 %v742, %v843
        %v845 = vpop.f32.mrb[0].mxu0
        %v846 = vadd.f32 %v746, %v845
        %847 = vmatprep.mubr.f32.mxu0 0.0
        %848 = vmatmul.mubr.f32.gmra.mrb[0].mxu0 %v669
        %v849 = vpop.f32.mrb[0].mxu0
        %v850 = vadd.f32 %v742, %v849
        %v851 = vpop.f32.mrb[0].mxu0
        %v852 = vadd.f32 %v746, %v851
        %853 = vmatprep.mubr.f32.mxu0 0.0
        %854 = vmatmul.mubr.f32.gmra.mrb[0].mxu0 %v670
        %v855 = vpop.f32.mrb[0].mxu0
        %v856 = vadd.f32 %v742, %v855
        %v857 = vpop.f32.mrb[0].mxu0
        %v858 = vadd.f32 %v746, %v857
        %859 = vmatprep.mubr.f32.mxu0 0.0
        %860 = vmatmul.mubr.f32.gmra.mrb[0].mxu0 %v671
        %v861 = vpop.f32.mrb[0].mxu0
        %v862 = vadd.f32 %v742, %v861
        %v863 = vpop.f32.mrb[0].mxu0
        %v864 = vadd.f32 %v746, %v863
        %865 = vmatprep.mubr.f32.mxu0 0.0
        %866 = vmatmul.mubr.f32.gmra.mrb[0].mxu0 %v672
        %v867 = vpop.f32.mrb[0].mxu0
        %v868 = vadd.f32 %v742, %v867
        %v869 = vpop.f32.mrb[0].mxu0
        %v870 = vadd.f32 %v746, %v869
        %871 = vdwg.mxu0
        %872 = vmatprep.subr.mxu0 %v676
        %873 = vmatpush1.msra.mxu0 %v675
        %874 = vmatprep.subr.mxu0 %v680
        %875 = vmatpush1.msra.mxu0 %v679
        %876 = vmatprep.subr.mxu0 %v684
        %877 = vmatpush1.msra.mxu0 %v683
        %878 = vmatprep.subr.mxu0 %v688
        %879 = vmatpush1.msra.mxu0 %v687
        %880 = vmatprep.subr.mxu0 %v692
        %881 = vmatpush1.msra.mxu0 %v691
        %882 = vmatprep.subr.mxu0 %v696
        %883 = vmatpush1.msra.mxu0 %v695
        %884 = vmatprep.subr.mxu0 %v700
        %885 = vmatpush1.msra.mxu0 %v699
        %886 = vmatprep.subr.mxu0 %v704
        %887 = vmatpush1.msra.mxu0 %v703
        %888 = vmatprep.subr.mxu0 %v708
        %889 = vmatpush1.msra.mxu0 %v707
        %890 = vmatprep.subr.mxu0 %v712
        %891 = vmatpush1.msra.mxu0 %v711
        %892 = vmatprep.subr.mxu0 %v716
        %893 = vmatpush1.msra.mxu0 %v715
        %894 = vmatprep.subr.mxu0 %v720
        %895 = vmatpush1.msra.mxu0 %v719
        %896 = vmatprep.subr.mxu0 %v724
        %897 = vmatpush1.msra.mxu0 %v723
        %898 = vmatprep.subr.mxu0 %v728
        %899 = vmatpush1.msra.mxu0 %v727
        %900 = vmatprep.subr.mxu0 %v732
        %901 = vmatpush1.msra.mxu0 %v731
        %902 = vmatprep.subr.mxu0 %v736
        %903 = vmatpush1.msra.mxu0 %v735
        %904 = vmatprep.subr.mxu0 0.0
        %905 = vmatpush1.msra.mxu0 0.0
        %906 = vmatprep.subr.mxu0 0.0
        %907 = vmatpush1.msra.mxu0 0.0
        %908 = vmatprep.subr.mxu0 0.0
        %909 = vmatpush1.msra.mxu0 0.0
        %910 = vmatprep.subr.mxu0 0.0
        %911 = vmatpush1.msra.mxu0 0.0
        %912 = vmatprep.subr.mxu0 0.0
        %913 = vmatpush1.msra.mxu0 0.0
        %914 = vmatprep.subr.mxu0 0.0
        %915 = vmatpush1.msra.mxu0 0.0
        %916 = vmatprep.subr.mxu0 0.0
        %917 = vmatpush1.msra.mxu0 0.0
        %918 = vmatprep.subr.mxu0 0.0
        %919 = vmatpush1.msra.mxu0 0.0
        %920 = vmatprep.subr.mxu0 0.0
        %921 = vmatpush1.msra.mxu0 0.0
        %922 = vmatprep.subr.mxu0 0.0
        %923 = vmatpush1.msra.mxu0 0.0
        %924 = vmatprep.subr.mxu0 0.0
        %925 = vmatpush1.msra.mxu0 0.0
        %926 = vmatprep.subr.mxu0 0.0
        %927 = vmatpush1.msra.mxu0 0.0
        %928 = vmatprep.subr.mxu0 0.0
        %929 = vmatpush1.msra.mxu0 0.0
        %930 = vmatprep.subr.mxu0 0.0
        %931 = vmatpush1.msra.mxu0 0.0
        %932 = vmatprep.subr.mxu0 0.0
        %933 = vmatpush1.msra.mxu0 0.0
        %934 = vmatprep.subr.mxu0 0.0
        %935 = vmatpush1.msra.mxu0 0.0
        %936 = vmatprep.mubr.f32.mxu0 0.0
        %937 = vmatmul.mubr.f32.gmra.mrb[0].mxu0 %v665
        %v938 = vpop.f32.mrb[0].mxu0
        %v939 = vadd.f32 %v750, %v938
        %v940 = vpop.f32.mrb[0].mxu0
        %v941 = vadd.f32 %v754, %v940
        %942 = vmatprep.mubr.f32.mxu0 0.0
        %943 = vmatmul.mubr.f32.gmra.mrb[0].mxu0 %v666
        %v944 = vpop.f32.mrb[0].mxu0
        %v945 = vadd.f32 %v750, %v944
        %v946 = vpop.f32.mrb[0].mxu0
        %v947 = vadd.f32 %v754, %v946
        %948 = vmatprep.mubr.f32.mxu0 0.0
        %949 = vmatmul.mubr.f32.gmra.mrb[0].mxu0 %v667
        %v950 = vpop.f32.mrb[0].mxu0
        %v951 = vadd.f32 %v750, %v950
        %v952 = vpop.f32.mrb[0].mxu0
        %v953 = vadd.f32 %v754, %v952
        %954 = vmatprep.mubr.f32.mxu0 0.0
        %955 = vmatmul.mubr.f32.gmra.mrb[0].mxu0 %v668
        %v956 = vpop.f32.mrb[0].mxu0
        %v957 = vadd.f32 %v750, %v956
        %v958 = vpop.f32.mrb[0].mxu0
        %v959 = vadd.f32 %v754, %v958
        %960 = vmatprep.mubr.f32.mxu0 0.0
        %961 = vmatmul.mubr.f32.gmra.mrb[0].mxu0 %v669
        %v962 = vpop.f32.mrb[0].mxu0
        %v963 = vadd.f32 %v750, %v962
        %v964 = vpop.f32.mrb[0].mxu0
        %v965 = vadd.f32 %v754, %v964
        %966 = vmatprep.mubr.f32.mxu0 0.0
        %967 = vmatmul.mubr.f32.gmra.mrb[0].mxu0 %v670
        %v968 = vpop.f32.mrb[0].mxu0
        %v969 = vadd.f32 %v750, %v968
        %v970 = vpop.f32.mrb[0].mxu0
        %v971 = vadd.f32 %v754, %v970
        %972 = vmatprep.mubr.f32.mxu0 0.0
        %973 = vmatmul.mubr.f32.gmra.mrb[0].mxu0 %v671
        %v974 = vpop.f32.mrb[0].mxu0
        %v975 = vadd.f32 %v750, %v974
        %v976 = vpop.f32.mrb[0].mxu0
        %v977 = vadd.f32 %v754, %v976
        %978 = vmatprep.mubr.f32.mxu0 0.0
        %979 = vmatmul.mubr.f32.gmra.mrb[0].mxu0 %v672
        %v980 = vpop.f32.mrb[0].mxu0
        %v981 = vadd.f32 %v750, %v980
        %v982 = vpop.f32.mrb[0].mxu0
        %v983 = vadd.f32 %v754, %v982
        %984 = vdwg.mxu0
        %985 = vst [vmem:[#allocation4] sm:$0xff] %v826
        %986 = vst [vmem:[#allocation4 + $0x8] sm:$0xff] %v828
        %987 = vst [vmem:[#allocation4 + $0x10] sm:$0xff] %v939
        %988 = vst [vmem:[#allocation4 + $0x18] sm:$0xff] %v941
        %989 = vst [vmem:[#allocation4 + $0x20] sm:$0xff] %v832
        %990 = vst [vmem:[#allocation4 + $0x28] sm:$0xff] %v834
        %991 = vst [vmem:[#allocation4 + $0x30] sm:$0xff] %v945
        %992 = vst [vmem:[#allocation4 + $0x38] sm:$0xff] %v947
        %993 = vst [vmem:[#allocation4 + $0x40] sm:$0xff] %v838
        %994 = vst [vmem:[#allocation4 + $0x48] sm:$0xff] %v840
        %995 = vst [vmem:[#allocation4 + $0x50] sm:$0xff] %v951
        %996 = vst [vmem:[#allocation4 + $0x58] sm:$0xff] %v953
        %997 = vst [vmem:[#allocation4 + $0x60] sm:$0xff] %v844
        %998 = vst [vmem:[#allocation4 + $0x68] sm:$0xff] %v846
        %999 = vst [vmem:[#allocation4 + $0x70] sm:$0xff] %v957
        %1000 = vst [vmem:[#allocation4 + $0x78] sm:$0xff] %v959
        %1001 = vst [vmem:[#allocation4 + $0x80] sm:$0xff] %v850
        %1002 = vst [vmem:[#allocation4 + $0x88] sm:$0xff] %v852
        %1003 = vst [vmem:[#allocation4 + $0x90] sm:$0xff] %v963
        %1004 = vst [vmem:[#allocation4 + $0x98] sm:$0xff] %v965
        %1005 = vst [vmem:[#allocation4 + $0xa0] sm:$0xff] %v856
        %1006 = vst [vmem:[#allocation4 + $0xa8] sm:$0xff] %v858
        %1007 = vst [vmem:[#allocation4 + $0xb0] sm:$0xff] %v969
        %1008 = vst [vmem:[#allocation4 + $0xb8] sm:$0xff] %v971
        %1009 = vst [vmem:[#allocation4 + $0xc0] sm:$0xff] %v862
        %1010 = vst [vmem:[#allocation4 + $0xc8] sm:$0xff] %v864
        %1011 = vst [vmem:[#allocation4 + $0xd0] sm:$0xff] %v975
        %1012 = vst [vmem:[#allocation4 + $0xd8] sm:$0xff] %v977
        %1013 = vst [vmem:[#allocation4 + $0xe0] sm:$0xff] %v868
        %1014 = vst [vmem:[#allocation4 + $0xe8] sm:$0xff] %v870
        %1015 = vst [vmem:[#allocation4 + $0xf0] sm:$0xff] %v981
        %1016 = vst [vmem:[#allocation4 + $0xf8] sm:$0xff] %v983
        %v1017 = vld [vmem:[#allocation2] sm:$0xff]
        %v1018 = vld [vmem:[#allocation3] sm:$0xff]
        %v1019 = vld [vmem:[#allocation4] sm:$0xff]
        %v1020 = vld [vmem:[#allocation4 + $0x8] sm:$0xff]
        %v1021 = vld [vmem:[#allocation4 + $0x10] sm:$0xff]
        %v1022 = vld [vmem:[#allocation4 + $0x18] sm:$0xff]
        %v1023 = vld [vmem:[#allocation14] sm:$0xff]
        %v1024 = vld [vmem:[#allocation14 + $0x8] sm:$0xff]
        %v1025 = vld [vmem:[#allocation14 + $0x10] sm:$0xff]
        %v1026 = vld [vmem:[#allocation14 + $0x18] sm:$0xff]
        %v1027 = vld [vmem:[#allocation14 + $0x20] sm:$0xff]
        %v1028 = vld [vmem:[#allocation14 + $0x28] sm:$0xff]
        %v1029 = vld [vmem:[#allocation14 + $0x30] sm:$0xff]
        %v1030 = vld [vmem:[#allocation14 + $0x38] sm:$0xff]
        %v1031 = vld [vmem:[#allocation14 + $0x40] sm:$0xff]
        %v1032 = vld [vmem:[#allocation14 + $0x48] sm:$0xff]
        %v1033 = vld [vmem:[#allocation14 + $0x50] sm:$0xff]
        %v1034 = vld [vmem:[#allocation14 + $0x58] sm:$0xff]
        %v1035 = vld [vmem:[#allocation14 + $0x60] sm:$0xff]
        %v1036 = vld [vmem:[#allocation14 + $0x68] sm:$0xff]
        %v1037 = vld [vmem:[#allocation14 + $0x70] sm:$0xff]
        %v1038 = vld [vmem:[#allocation14 + $0x78] sm:$0xff]
        %v1039 = vld [vmem:[#allocation14 + $0x80] sm:$0xff]
        %v1040 = vld [vmem:[#allocation14 + $0x88] sm:$0xff]
        %v1041 = vld [vmem:[#allocation14 + $0x90] sm:$0xff]
        %v1042 = vld [vmem:[#allocation14 + $0x98] sm:$0xff]
        %v1043 = vld [vmem:[#allocation14 + $0xa0] sm:$0xff]
        %v1044 = vld [vmem:[#allocation14 + $0xa8] sm:$0xff]
        %v1045 = vld [vmem:[#allocation14 + $0xb0] sm:$0xff]
        %v1046 = vld [vmem:[#allocation14 + $0xb8] sm:$0xff]
        %v1047 = vld [vmem:[#allocation14 + $0xc0] sm:$0xff]
        %v1048 = vld [vmem:[#allocation14 + $0xc8] sm:$0xff]
        %v1049 = vld [vmem:[#allocation14 + $0xd0] sm:$0xff]
        %v1050 = vld [vmem:[#allocation14 + $0xd8] sm:$0xff]
        %v1051 = vld [vmem:[#allocation14 + $0xe0] sm:$0xff]
        %v1052 = vld [vmem:[#allocation14 + $0xe8] sm:$0xff]
        %v1053 = vld [vmem:[#allocation14 + $0xf0] sm:$0xff]
        %v1054 = vld [vmem:[#allocation14 + $0xf8] sm:$0xff]
        %v1055 = vld [vmem:[#allocation14 + $0x100] sm:$0xff]
        %v1056 = vld [vmem:[#allocation14 + $0x108] sm:$0xff]
        %v1057 = vld [vmem:[#allocation14 + $0x110] sm:$0xff]
        %v1058 = vld [vmem:[#allocation14 + $0x118] sm:$0xff]
        %v1059 = vld [vmem:[#allocation14 + $0x120] sm:$0xff]
        %v1060 = vld [vmem:[#allocation14 + $0x128] sm:$0xff]
        %v1061 = vld [vmem:[#allocation14 + $0x130] sm:$0xff]
        %v1062 = vld [vmem:[#allocation14 + $0x138] sm:$0xff]
        %v1063 = vld [vmem:[#allocation14 + $0x140] sm:$0xff]
        %v1064 = vld [vmem:[#allocation14 + $0x148] sm:$0xff]
        %v1065 = vld [vmem:[#allocation14 + $0x150] sm:$0xff]
        %v1066 = vld [vmem:[#allocation14 + $0x158] sm:$0xff]
        %v1067 = vld [vmem:[#allocation14 + $0x160] sm:$0xff]
        %v1068 = vld [vmem:[#allocation14 + $0x168] sm:$0xff]
        %v1069 = vld [vmem:[#allocation14 + $0x170] sm:$0xff]
        %v1070 = vld [vmem:[#allocation14 + $0x178] sm:$0xff]
        %v1071 = vld [vmem:[#allocation14 + $0x180] sm:$0xff]
        %v1072 = vld [vmem:[#allocation14 + $0x188] sm:$0xff]
        %v1073 = vld [vmem:[#allocation14 + $0x190] sm:$0xff]
        %v1074 = vld [vmem:[#allocation14 + $0x198] sm:$0xff]
        %v1075 = vld [vmem:[#allocation14 + $0x1a0] sm:$0xff]
        %v1076 = vld [vmem:[#allocation14 + $0x1a8] sm:$0xff]
        %v1077 = vld [vmem:[#allocation14 + $0x1b0] sm:$0xff]
        %v1078 = vld [vmem:[#allocation14 + $0x1b8] sm:$0xff]
        %v1079 = vld [vmem:[#allocation14 + $0x1c0] sm:$0xff]
        %v1080 = vld [vmem:[#allocation14 + $0x1c8] sm:$0xff]
        %v1081 = vld [vmem:[#allocation14 + $0x1d0] sm:$0xff]
        %v1082 = vld [vmem:[#allocation14 + $0x1d8] sm:$0xff]
        %v1083 = vld [vmem:[#allocation14 + $0x1e0] sm:$0xff]
        %v1084 = vld [vmem:[#allocation14 + $0x1e8] sm:$0xff]
        %v1085 = vld [vmem:[#allocation14 + $0x1f0] sm:$0xff]
        %v1086 = vld [vmem:[#allocation14 + $0x1f8] sm:$0xff]
        %1087 = vmatprep.subr.mxu0 %v1024
        %1088 = vmatpush1.msra.mxu0 %v1023
        %1089 = vmatprep.subr.mxu0 %v1028
        %1090 = vmatpush1.msra.mxu0 %v1027
        %1091 = vmatprep.subr.mxu0 %v1032
        %1092 = vmatpush1.msra.mxu0 %v1031
        %1093 = vmatprep.subr.mxu0 %v1036
        %1094 = vmatpush1.msra.mxu0 %v1035
        %1095 = vmatprep.subr.mxu0 %v1040
        %1096 = vmatpush1.msra.mxu0 %v1039
        %1097 = vmatprep.subr.mxu0 %v1044
        %1098 = vmatpush1.msra.mxu0 %v1043
        %1099 = vmatprep.subr.mxu0 %v1048
        %1100 = vmatpush1.msra.mxu0 %v1047
        %1101 = vmatprep.subr.mxu0 %v1052
        %1102 = vmatpush1.msra.mxu0 %v1051
        %1103 = vmatprep.subr.mxu0 %v1056
        %1104 = vmatpush1.msra.mxu0 %v1055
        %1105 = vmatprep.subr.mxu0 %v1060
        %1106 = vmatpush1.msra.mxu0 %v1059
        %1107 = vmatprep.subr.mxu0 %v1064
        %1108 = vmatpush1.msra.mxu0 %v1063
        %1109 = vmatprep.subr.mxu0 %v1068
        %1110 = vmatpush1.msra.mxu0 %v1067
        %1111 = vmatprep.subr.mxu0 %v1072
        %1112 = vmatpush1.msra.mxu0 %v1071
        %1113 = vmatprep.subr.mxu0 %v1076
        %1114 = vmatpush1.msra.mxu0 %v1075
        %1115 = vmatprep.subr.mxu0 %v1080
        %1116 = vmatpush1.msra.mxu0 %v1079
        %1117 = vmatprep.subr.mxu0 %v1084
        %1118 = vmatpush1.msra.mxu0 %v1083
        %1119 = vmatprep.subr.mxu0 0.0
        %1120 = vmatpush1.msra.mxu0 0.0
        %1121 = vmatprep.subr.mxu0 0.0
        %1122 = vmatpush1.msra.mxu0 0.0
        %1123 = vmatprep.subr.mxu0 0.0
        %1124 = vmatpush1.msra.mxu0 0.0
        %1125 = vmatprep.subr.mxu0 0.0
        %1126 = vmatpush1.msra.mxu0 0.0
        %1127 = vmatprep.subr.mxu0 0.0
        %1128 = vmatpush1.msra.mxu0 0.0
        %1129 = vmatprep.subr.mxu0 0.0
        %1130 = vmatpush1.msra.mxu0 0.0
        %1131 = vmatprep.subr.mxu0 0.0
        %1132 = vmatpush1.msra.mxu0 0.0
        %1133 = vmatprep.subr.mxu0 0.0
        %1134 = vmatpush1.msra.mxu0 0.0
        %1135 = vmatprep.subr.mxu0 0.0
        %1136 = vmatpush1.msra.mxu0 0.0
        %1137 = vmatprep.subr.mxu0 0.0
        %1138 = vmatpush1.msra.mxu0 0.0
        %1139 = vmatprep.subr.mxu0 0.0
        %1140 = vmatpush1.msra.mxu0 0.0
        %1141 = vmatprep.subr.mxu0 0.0
        %1142 = vmatpush1.msra.mxu0 0.0
        %1143 = vmatprep.subr.mxu0 0.0
        %1144 = vmatpush1.msra.mxu0 0.0
        %1145 = vmatprep.subr.mxu0 0.0
        %1146 = vmatpush1.msra.mxu0 0.0
        %1147 = vmatprep.subr.mxu0 0.0
        %1148 = vmatpush1.msra.mxu0 0.0
        %1149 = vmatprep.subr.mxu0 0.0
        %1150 = vmatpush1.msra.mxu0 0.0
        %1151 = vmatprep.mubr.f32.mxu0 0.0
        %1152 = vmatmul.mubr.f32.gmra.mrb[0].mxu0 %v1017
        %v1153 = vpop.f32.mrb[0].mxu0
        %v1154 = vadd.f32 0.0, %v1153
        %v1155 = vpop.f32.mrb[0].mxu0
        %v1156 = vadd.f32 0.0, %v1155
        %1157 = vdwg.mxu0
        %1158 = vmatprep.subr.mxu0 %v1026
        %1159 = vmatpush1.msra.mxu0 %v1025
        %1160 = vmatprep.subr.mxu0 %v1030
        %1161 = vmatpush1.msra.mxu0 %v1029
        %1162 = vmatprep.subr.mxu0 %v1034
        %1163 = vmatpush1.msra.mxu0 %v1033
        %1164 = vmatprep.subr.mxu0 %v1038
        %1165 = vmatpush1.msra.mxu0 %v1037
        %1166 = vmatprep.subr.mxu0 %v1042
        %1167 = vmatpush1.msra.mxu0 %v1041
        %1168 = vmatprep.subr.mxu0 %v1046
        %1169 = vmatpush1.msra.mxu0 %v1045
        %1170 = vmatprep.subr.mxu0 %v1050
        %1171 = vmatpush1.msra.mxu0 %v1049
        %1172 = vmatprep.subr.mxu0 %v1054
        %1173 = vmatpush1.msra.mxu0 %v1053
        %1174 = vmatprep.subr.mxu0 %v1058
        %1175 = vmatpush1.msra.mxu0 %v1057
        %1176 = vmatprep.subr.mxu0 %v1062
        %1177 = vmatpush1.msra.mxu0 %v1061
        %1178 = vmatprep.subr.mxu0 %v1066
        %1179 = vmatpush1.msra.mxu0 %v1065
        %1180 = vmatprep.subr.mxu0 %v1070
        %1181 = vmatpush1.msra.mxu0 %v1069
        %1182 = vmatprep.subr.mxu0 %v1074
        %1183 = vmatpush1.msra.mxu0 %v1073
        %1184 = vmatprep.subr.mxu0 %v1078
        %1185 = vmatpush1.msra.mxu0 %v1077
        %1186 = vmatprep.subr.mxu0 %v1082
        %1187 = vmatpush1.msra.mxu0 %v1081
        %1188 = vmatprep.subr.mxu0 %v1086
        %1189 = vmatpush1.msra.mxu0 %v1085
        %1190 = vmatprep.subr.mxu0 0.0
        %1191 = vmatpush1.msra.mxu0 0.0
        %1192 = vmatprep.subr.mxu0 0.0
        %1193 = vmatpush1.msra.mxu0 0.0
        %1194 = vmatprep.subr.mxu0 0.0
        %1195 = vmatpush1.msra.mxu0 0.0
        %1196 = vmatprep.subr.mxu0 0.0
        %1197 = vmatpush1.msra.mxu0 0.0
        %1198 = vmatprep.subr.mxu0 0.0
        %1199 = vmatpush1.msra.mxu0 0.0
        %1200 = vmatprep.subr.mxu0 0.0
        %1201 = vmatpush1.msra.mxu0 0.0
        %1202 = vmatprep.subr.mxu0 0.0
        %1203 = vmatpush1.msra.mxu0 0.0
        %1204 = vmatprep.subr.mxu0 0.0
        %1205 = vmatpush1.msra.mxu0 0.0
        %1206 = vmatprep.subr.mxu0 0.0
        %1207 = vmatpush1.msra.mxu0 0.0
        %1208 = vmatprep.subr.mxu0 0.0
        %1209 = vmatpush1.msra.mxu0 0.0
        %1210 = vmatprep.subr.mxu0 0.0
        %1211 = vmatpush1.msra.mxu0 0.0
        %1212 = vmatprep.subr.mxu0 0.0
        %1213 = vmatpush1.msra.mxu0 0.0
        %1214 = vmatprep.subr.mxu0 0.0
        %1215 = vmatpush1.msra.mxu0 0.0
        %1216 = vmatprep.subr.mxu0 0.0
        %1217 = vmatpush1.msra.mxu0 0.0
        %1218 = vmatprep.subr.mxu0 0.0
        %1219 = vmatpush1.msra.mxu0 0.0
        %1220 = vmatprep.subr.mxu0 0.0
        %1221 = vmatpush1.msra.mxu0 0.0
        %1222 = vmatprep.mubr.f32.mxu0 0.0
        %1223 = vmatmul.mubr.f32.gmra.mrb[0].mxu0 %v1017
        %v1224 = vpop.f32.mrb[0].mxu0
        %v1225 = vadd.f32 0.0, %v1224
        %v1226 = vpop.f32.mrb[0].mxu0
        %v1227 = vadd.f32 0.0, %v1226
        %1228 = vdwg.mxu0
        %v1229 = vadd.f32 %v1019, %v1154
        %v1230 = vadd.f32 %v1020, %v1156
        %v1231 = vadd.f32 %v1021, %v1225
        %v1232 = vadd.f32 %v1022, %v1227
        %v1233 = vxor.u32 %v1229, 2147483648
        %v1234 = vmul.f32 %v1233, 1.442695
        %v1235 = vpow.pop %v1234
        %v1236 = vadd.f32 %v1235, 1.0
        %v1237 = vrcp.pop %v1236
        %v1238 = vmul.f32 1.0, %v1237
        %v1239 = vxor.u32 %v1230, 2147483648
        %v1240 = vmul.f32 %v1239, 1.442695
        %v1241 = vpow.pop %v1240
        %v1242 = vadd.f32 %v1241, 1.0
        %v1243 = vrcp.pop %v1242
        %v1244 = vmul.f32 1.0, %v1243
        %v1245 = vtanh.pop %v1231
        %v1246 = vxor.u32 %v1232, 2147483648
        %v1247 = vmul.f32 %v1246, 1.442695
        %v1248 = vpow.pop %v1247
        %v1249 = vadd.f32 %v1248, 1.0
        %v1250 = vrcp.pop %v1249
        %v1251 = vmul.f32 1.0, %v1250
        %v1252 = vmul.f32 %v1244, %v1018
        %v1253 = vmul.f32 %v1238, %v1245
        %v1254 = vadd.f32 %v1252, %v1253
        %v1255 = vtanh.pop %v1254
        %v1256 = vmul.f32 %v1251, %v1255
        %1257 = vst [vmem:[#allocation5] sm:$0xff] %v1256
        %s1258 = scalar_lea.vmem [#allocation4], 32
        %v1259 = vld [vmem:[%s1258] sm:$0xff]
        %v1260 = vld [vmem:[%s1258 + $0x8] sm:$0xff]
        %v1261 = vld [vmem:[%s1258 + $0x10] sm:$0xff]
        %v1262 = vld [vmem:[%s1258 + $0x18] sm:$0xff]
        %v1263 = vld [vmem:[#allocation14] sm:$0xff]
        %v1264 = vld [vmem:[#allocation14 + $0x8] sm:$0xff]
        %v1265 = vld [vmem:[#allocation14 + $0x10] sm:$0xff]
        %v1266 = vld [vmem:[#allocation14 + $0x18] sm:$0xff]
        %v1267 = vld [vmem:[#allocation14 + $0x20] sm:$0xff]
        %v1268 = vld [vmem:[#allocation14 + $0x28] sm:$0xff]
        %v1269 = vld [vmem:[#allocation14 + $0x30] sm:$0xff]
        %v1270 = vld [vmem:[#allocation14 + $0x38] sm:$0xff]
        %v1271 = vld [vmem:[#allocation14 + $0x40] sm:$0xff]
        %v1272 = vld [vmem:[#allocation14 + $0x48] sm:$0xff]
        %v1273 = vld [vmem:[#allocation14 + $0x50] sm:$0xff]
        %v1274 = vld [vmem:[#allocation14 + $0x58] sm:$0xff]
        %v1275 = vld [vmem:[#allocation14 + $0x60] sm:$0xff]
        %v1276 = vld [vmem:[#allocation14 + $0x68] sm:$0xff]
        %v1277 = vld [vmem:[#allocation14 + $0x70] sm:$0xff]
        %v1278 = vld [vmem:[#allocation14 + $0x78] sm:$0xff]
        %v1279 = vld [vmem:[#allocation14 + $0x80] sm:$0xff]
        %v1280 = vld [vmem:[#allocation14 + $0x88] sm:$0xff]
        %v1281 = vld [vmem:[#allocation14 + $0x90] sm:$0xff]
        %v1282 = vld [vmem:[#allocation14 + $0x98] sm:$0xff]
        %v1283 = vld [vmem:[#allocation14 + $0xa0] sm:$0xff]
        %v1284 = vld [vmem:[#allocation14 + $0xa8] sm:$0xff]
        %v1285 = vld [vmem:[#allocation14 + $0xb0] sm:$0xff]
        %v1286 = vld [vmem:[#allocation14 + $0xb8] sm:$0xff]
        %v1287 = vld [vmem:[#allocation14 + $0xc0] sm:$0xff]
        %v1288 = vld [vmem:[#allocation14 + $0xc8] sm:$0xff]
        %v1289 = vld [vmem:[#allocation14 + $0xd0] sm:$0xff]
        %v1290 = vld [vmem:[#allocation14 + $0xd8] sm:$0xff]
        %v1291 = vld [vmem:[#allocation14 + $0xe0] sm:$0xff]
        %v1292 = vld [vmem:[#allocation14 + $0xe8] sm:$0xff]
        %v1293 = vld [vmem:[#allocation14 + $0xf0] sm:$0xff]
        %v1294 = vld [vmem:[#allocation14 + $0xf8] sm:$0xff]
        %v1295 = vld [vmem:[#allocation14 + $0x100] sm:$0xff]
        %v1296 = vld [vmem:[#allocation14 + $0x108] sm:$0xff]
        %v1297 = vld [vmem:[#allocation14 + $0x110] sm:$0xff]
        %v1298 = vld [vmem:[#allocation14 + $0x118] sm:$0xff]
        %v1299 = vld [vmem:[#allocation14 + $0x120] sm:$0xff]
        %v1300 = vld [vmem:[#allocation14 + $0x128] sm:$0xff]
        %v1301 = vld [vmem:[#allocation14 + $0x130] sm:$0xff]
        %v1302 = vld [vmem:[#allocation14 + $0x138] sm:$0xff]
        %v1303 = vld [vmem:[#allocation14 + $0x140] sm:$0xff]
        %v1304 = vld [vmem:[#allocation14 + $0x148] sm:$0xff]
        %v1305 = vld [vmem:[#allocation14 + $0x150] sm:$0xff]
        %v1306 = vld [vmem:[#allocation14 + $0x158] sm:$0xff]
        %v1307 = vld [vmem:[#allocation14 + $0x160] sm:$0xff]
        %v1308 = vld [vmem:[#allocation14 + $0x168] sm:$0xff]
        %v1309 = vld [vmem:[#allocation14 + $0x170] sm:$0xff]
        %v1310 = vld [vmem:[#allocation14 + $0x178] sm:$0xff]
        %v1311 = vld [vmem:[#allocation14 + $0x180] sm:$0xff]
        %v1312 = vld [vmem:[#allocation14 + $0x188] sm:$0xff]
        %v1313 = vld [vmem:[#allocation14 + $0x190] sm:$0xff]
        %v1314 = vld [vmem:[#allocation14 + $0x198] sm:$0xff]
        %v1315 = vld [vmem:[#allocation14 + $0x1a0] sm:$0xff]
        %v1316 = vld [vmem:[#allocation14 + $0x1a8] sm:$0xff]
        %v1317 = vld [vmem:[#allocation14 + $0x1b0] sm:$0xff]
        %v1318 = vld [vmem:[#allocation14 + $0x1b8] sm:$0xff]
        %v1319 = vld [vmem:[#allocation14 + $0x1c0] sm:$0xff]
        %v1320 = vld [vmem:[#allocation14 + $0x1c8] sm:$0xff]
        %v1321 = vld [vmem:[#allocation14 + $0x1d0] sm:$0xff]
        %v1322 = vld [vmem:[#allocation14 + $0x1d8] sm:$0xff]
        %v1323 = vld [vmem:[#allocation14 + $0x1e0] sm:$0xff]
        %v1324 = vld [vmem:[#allocation14 + $0x1e8] sm:$0xff]
        %v1325 = vld [vmem:[#allocation14 + $0x1f0] sm:$0xff]
        %v1326 = vld [vmem:[#allocation14 + $0x1f8] sm:$0xff]
        %1327 = vmatprep.subr.mxu0 %v1264
        %1328 = vmatpush1.msra.mxu0 %v1263
        %1329 = vmatprep.subr.mxu0 %v1268
        %1330 = vmatpush1.msra.mxu0 %v1267
        %1331 = vmatprep.subr.mxu0 %v1272
        %1332 = vmatpush1.msra.mxu0 %v1271
        %1333 = vmatprep.subr.mxu0 %v1276
        %1334 = vmatpush1.msra.mxu0 %v1275
        %1335 = vmatprep.subr.mxu0 %v1280
        %1336 = vmatpush1.msra.mxu0 %v1279
        %1337 = vmatprep.subr.mxu0 %v1284
        %1338 = vmatpush1.msra.mxu0 %v1283
        %1339 = vmatprep.subr.mxu0 %v1288
        %1340 = vmatpush1.msra.mxu0 %v1287
        %1341 = vmatprep.subr.mxu0 %v1292
        %1342 = vmatpush1.msra.mxu0 %v1291
        %1343 = vmatprep.subr.mxu0 %v1296
        %1344 = vmatpush1.msra.mxu0 %v1295
        %1345 = vmatprep.subr.mxu0 %v1300
        %1346 = vmatpush1.msra.mxu0 %v1299
        %1347 = vmatprep.subr.mxu0 %v1304
        %1348 = vmatpush1.msra.mxu0 %v1303
        %1349 = vmatprep.subr.mxu0 %v1308
        %1350 = vmatpush1.msra.mxu0 %v1307
        %1351 = vmatprep.subr.mxu0 %v1312
        %1352 = vmatpush1.msra.mxu0 %v1311
        %1353 = vmatprep.subr.mxu0 %v1316
        %1354 = vmatpush1.msra.mxu0 %v1315
        %1355 = vmatprep.subr.mxu0 %v1320
        %1356 = vmatpush1.msra.mxu0 %v1319
        %1357 = vmatprep.subr.mxu0 %v1324
        %1358 = vmatpush1.msra.mxu0 %v1323
        %1359 = vmatprep.subr.mxu0 0.0
        %1360 = vmatpush1.msra.mxu0 0.0
        %1361 = vmatprep.subr.mxu0 0.0
        %1362 = vmatpush1.msra.mxu0 0.0
        %1363 = vmatprep.subr.mxu0 0.0
        %1364 = vmatpush1.msra.mxu0 0.0
        %1365 = vmatprep.subr.mxu0 0.0
        %1366 = vmatpush1.msra.mxu0 0.0
        %1367 = vmatprep.subr.mxu0 0.0
        %1368 = vmatpush1.msra.mxu0 0.0
        %1369 = vmatprep.subr.mxu0 0.0
        %1370 = vmatpush1.msra.mxu0 0.0
        %1371 = vmatprep.subr.mxu0 0.0
        %1372 = vmatpush1.msra.mxu0 0.0
        %1373 = vmatprep.subr.mxu0 0.0
        %1374 = vmatpush1.msra.mxu0 0.0
        %1375 = vmatprep.subr.mxu0 0.0
        %1376 = vmatpush1.msra.mxu0 0.0
        %1377 = vmatprep.subr.mxu0 0.0
        %1378 = vmatpush1.msra.mxu0 0.0
        %1379 = vmatprep.subr.mxu0 0.0
        %1380 = vmatpush1.msra.mxu0 0.0
        %1381 = vmatprep.subr.mxu0 0.0
        %1382 = vmatpush1.msra.mxu0 0.0
        %1383 = vmatprep.subr.mxu0 0.0
        %1384 = vmatpush1.msra.mxu0 0.0
        %1385 = vmatprep.subr.mxu0 0.0
        %1386 = vmatpush1.msra.mxu0 0.0
        %1387 = vmatprep.subr.mxu0 0.0
        %1388 = vmatpush1.msra.mxu0 0.0
        %1389 = vmatprep.subr.mxu0 0.0
        %1390 = vmatpush1.msra.mxu0 0.0
        %1391 = vmatprep.mubr.f32.mxu0 0.0
        %1392 = vmatmul.mubr.f32.gmra.mrb[0].mxu0 %v1256
        %v1393 = vpop.f32.mrb[0].mxu0
        %v1394 = vadd.f32 0.0, %v1393
        %v1395 = vpop.f32.mrb[0].mxu0
        %v1396 = vadd.f32 0.0, %v1395
        %1397 = vdwg.mxu0
        %1398 = vmatprep.subr.mxu0 %v1266
        %1399 = vmatpush1.msra.mxu0 %v1265
        %1400 = vmatprep.subr.mxu0 %v1270
        %1401 = vmatpush1.msra.mxu0 %v1269
        %1402 = vmatprep.subr.mxu0 %v1274
        %1403 = vmatpush1.msra.mxu0 %v1273
        %1404 = vmatprep.subr.mxu0 %v1278
        %1405 = vmatpush1.msra.mxu0 %v1277
        %1406 = vmatprep.subr.mxu0 %v1282
        %1407 = vmatpush1.msra.mxu0 %v1281
        %1408 = vmatprep.subr.mxu0 %v1286
        %1409 = vmatpush1.msra.mxu0 %v1285
        %1410 = vmatprep.subr.mxu0 %v1290
        %1411 = vmatpush1.msra.mxu0 %v1289
        %1412 = vmatprep.subr.mxu0 %v1294
        %1413 = vmatpush1.msra.mxu0 %v1293
        %1414 = vmatprep.subr.mxu0 %v1298
        %1415 = vmatpush1.msra.mxu0 %v1297
        %1416 = vmatprep.subr.mxu0 %v1302
        %1417 = vmatpush1.msra.mxu0 %v1301
        %1418 = vmatprep.subr.mxu0 %v1306
        %1419 = vmatpush1.msra.mxu0 %v1305
        %1420 = vmatprep.subr.mxu0 %v1310
        %1421 = vmatpush1.msra.mxu0 %v1309
        %1422 = vmatprep.subr.mxu0 %v1314
        %1423 = vmatpush1.msra.mxu0 %v1313
        %1424 = vmatprep.subr.mxu0 %v1318
        %1425 = vmatpush1.msra.mxu0 %v1317
        %1426 = vmatprep.subr.mxu0 %v1322
        %1427 = vmatpush1.msra.mxu0 %v1321
        %1428 = vmatprep.subr.mxu0 %v1326
        %1429 = vmatpush1.msra.mxu0 %v1325
        %1430 = vmatprep.subr.mxu0 0.0
        %1431 = vmatpush1.msra.mxu0 0.0
        %1432 = vmatprep.subr.mxu0 0.0
        %1433 = vmatpush1.msra.mxu0 0.0
        %1434 = vmatprep.subr.mxu0 0.0
        %1435 = vmatpush1.msra.mxu0 0.0
        %1436 = vmatprep.subr.mxu0 0.0
        %1437 = vmatpush1.msra.mxu0 0.0
        %1438 = vmatprep.subr.mxu0 0.0
        %1439 = vmatpush1.msra.mxu0 0.0
        %1440 = vmatprep.subr.mxu0 0.0
        %1441 = vmatpush1.msra.mxu0 0.0
        %1442 = vmatprep.subr.mxu0 0.0
        %1443 = vmatpush1.msra.mxu0 0.0
        %1444 = vmatprep.subr.mxu0 0.0
        %1445 = vmatpush1.msra.mxu0 0.0
        %1446 = vmatprep.subr.mxu0 0.0
        %1447 = vmatpush1.msra.mxu0 0.0
        %1448 = vmatprep.subr.mxu0 0.0
        %1449 = vmatpush1.msra.mxu0 0.0
        %1450 = vmatprep.subr.mxu0 0.0
        %1451 = vmatpush1.msra.mxu0 0.0
        %1452 = vmatprep.subr.mxu0 0.0
        %1453 = vmatpush1.msra.mxu0 0.0
        %1454 = vmatprep.subr.mxu0 0.0
        %1455 = vmatpush1.msra.mxu0 0.0
        %1456 = vmatprep.subr.mxu0 0.0
        %1457 = vmatpush1.msra.mxu0 0.0
        %1458 = vmatprep.subr.mxu0 0.0
        %1459 = vmatpush1.msra.mxu0 0.0
        %1460 = vmatprep.subr.mxu0 0.0
        %1461 = vmatpush1.msra.mxu0 0.0
        %1462 = vmatprep.mubr.f32.mxu0 0.0
        %1463 = vmatmul.mubr.f32.gmra.mrb[0].mxu0 %v1256
        %v1464 = vpop.f32.mrb[0].mxu0
        %v1465 = vadd.f32 0.0, %v1464
        %v1466 = vpop.f32.mrb[0].mxu0
        %v1467 = vadd.f32 0.0, %v1466
        %1468 = vdwg.mxu0
        %v1469 = vadd.f32 %v1259, %v1394
        %v1470 = vadd.f32 %v1260, %v1396
        %v1471 = vadd.f32 %v1261, %v1465
        %v1472 = vadd.f32 %v1262, %v1467
        %v1473 = vxor.u32 %v1469, 2147483648
        %v1474 = vmul.f32 %v1473, 1.442695
        %v1475 = vpow.pop %v1474
        %v1476 = vadd.f32 %v1475, 1.0
        %v1477 = vrcp.pop %v1476
        %v1478 = vmul.f32 1.0, %v1477
        %v1479 = vxor.u32 %v1470, 2147483648
        %v1480 = vmul.f32 %v1479, 1.442695
        %v1481 = vpow.pop %v1480
        %v1482 = vadd.f32 %v1481, 1.0
        %v1483 = vrcp.pop %v1482
        %v1484 = vmul.f32 1.0, %v1483
        %v1485 = vtanh.pop %v1471
        %v1486 = vxor.u32 %v1472, 2147483648
        %v1487 = vmul.f32 %v1486, 1.442695
        %v1488 = vpow.pop %v1487
        %v1489 = vadd.f32 %v1488, 1.0
        %v1490 = vrcp.pop %v1489
        %v1491 = vmul.f32 1.0, %v1490
        %v1492 = vmul.f32 %v1484, %v1254
        %v1493 = vmul.f32 %v1478, %v1485
        %v1494 = vadd.f32 %v1492, %v1493
        %v1495 = vtanh.pop %v1494
        %v1496 = vmul.f32 %v1491, %v1495
        %s1497 = scalar_lea.vmem [#allocation5], 8
        %1498 = vst [vmem:[%s1497] sm:$0xff] %v1496
        %s1499 = scalar_lea.vmem [#allocation4], 64
        %v1500 = vld [vmem:[%s1499] sm:$0xff]
        %v1501 = vld [vmem:[%s1499 + $0x8] sm:$0xff]
        %v1502 = vld [vmem:[%s1499 + $0x10] sm:$0xff]
        %v1503 = vld [vmem:[%s1499 + $0x18] sm:$0xff]
        %v1504 = vld [vmem:[#allocation14] sm:$0xff]
        %v1505 = vld [vmem:[#allocation14 + $0x8] sm:$0xff]
        %v1506 = vld [vmem:[#allocation14 + $0x10] sm:$0xff]
        %v1507 = vld [vmem:[#allocation14 + $0x18] sm:$0xff]
        %v1508 = vld [vmem:[#allocation14 + $0x20] sm:$0xff]
        %v1509 = vld [vmem:[#allocation14 + $0x28] sm:$0xff]
        %v1510 = vld [vmem:[#allocation14 + $0x30] sm:$0xff]
        %v1511 = vld [vmem:[#allocation14 + $0x38] sm:$0xff]
        %v1512 = vld [vmem:[#allocation14 + $0x40] sm:$0xff]
        %v1513 = vld [vmem:[#allocation14 + $0x48] sm:$0xff]
        %v1514 = vld [vmem:[#allocation14 + $0x50] sm:$0xff]
        %v1515 = vld [vmem:[#allocation14 + $0x58] sm:$0xff]
        %v1516 = vld [vmem:[#allocation14 + $0x60] sm:$0xff]
        %v1517 = vld [vmem:[#allocation14 + $0x68] sm:$0xff]
        %v1518 = vld [vmem:[#allocation14 + $0x70] sm:$0xff]
        %v1519 = vld [vmem:[#allocation14 + $0x78] sm:$0xff]
        %v1520 = vld [vmem:[#allocation14 + $0x80] sm:$0xff]
        %v1521 = vld [vmem:[#allocation14 + $0x88] sm:$0xff]
        %v1522 = vld [vmem:[#allocation14 + $0x90] sm:$0xff]
        %v1523 = vld [vmem:[#allocation14 + $0x98] sm:$0xff]
        %v1524 = vld [vmem:[#allocation14 + $0xa0] sm:$0xff]
        %v1525 = vld [vmem:[#allocation14 + $0xa8] sm:$0xff]
        %v1526 = vld [vmem:[#allocation14 + $0xb0] sm:$0xff]
        %v1527 = vld [vmem:[#allocation14 + $0xb8] sm:$0xff]
        %v1528 = vld [vmem:[#allocation14 + $0xc0] sm:$0xff]
        %v1529 = vld [vmem:[#allocation14 + $0xc8] sm:$0xff]
        %v1530 = vld [vmem:[#allocation14 + $0xd0] sm:$0xff]
        %v1531 = vld [vmem:[#allocation14 + $0xd8] sm:$0xff]
        %v1532 = vld [vmem:[#allocation14 + $0xe0] sm:$0xff]
        %v1533 = vld [vmem:[#allocation14 + $0xe8] sm:$0xff]
        %v1534 = vld [vmem:[#allocation14 + $0xf0] sm:$0xff]
        %v1535 = vld [vmem:[#allocation14 + $0xf8] sm:$0xff]
        %v1536 = vld [vmem:[#allocation14 + $0x100] sm:$0xff]
        %v1537 = vld [vmem:[#allocation14 + $0x108] sm:$0xff]
        %v1538 = vld [vmem:[#allocation14 + $0x110] sm:$0xff]
        %v1539 = vld [vmem:[#allocation14 + $0x118] sm:$0xff]
        %v1540 = vld [vmem:[#allocation14 + $0x120] sm:$0xff]
        %v1541 = vld [vmem:[#allocation14 + $0x128] sm:$0xff]
        %v1542 = vld [vmem:[#allocation14 + $0x130] sm:$0xff]
        %v1543 = vld [vmem:[#allocation14 + $0x138] sm:$0xff]
        %v1544 = vld [vmem:[#allocation14 + $0x140] sm:$0xff]
        %v1545 = vld [vmem:[#allocation14 + $0x148] sm:$0xff]
        %v1546 = vld [vmem:[#allocation14 + $0x150] sm:$0xff]
        %v1547 = vld [vmem:[#allocation14 + $0x158] sm:$0xff]
        %v1548 = vld [vmem:[#allocation14 + $0x160] sm:$0xff]
        %v1549 = vld [vmem:[#allocation14 + $0x168] sm:$0xff]
        %v1550 = vld [vmem:[#allocation14 + $0x170] sm:$0xff]
        %v1551 = vld [vmem:[#allocation14 + $0x178] sm:$0xff]
        %v1552 = vld [vmem:[#allocation14 + $0x180] sm:$0xff]
        %v1553 = vld [vmem:[#allocation14 + $0x188] sm:$0xff]
        %v1554 = vld [vmem:[#allocation14 + $0x190] sm:$0xff]
        %v1555 = vld [vmem:[#allocation14 + $0x198] sm:$0xff]
        %v1556 = vld [vmem:[#allocation14 + $0x1a0] sm:$0xff]
        %v1557 = vld [vmem:[#allocation14 + $0x1a8] sm:$0xff]
        %v1558 = vld [vmem:[#allocation14 + $0x1b0] sm:$0xff]
        %v1559 = vld [vmem:[#allocation14 + $0x1b8] sm:$0xff]
        %v1560 = vld [vmem:[#allocation14 + $0x1c0] sm:$0xff]
        %v1561 = vld [vmem:[#allocation14 + $0x1c8] sm:$0xff]
        %v1562 = vld [vmem:[#allocation14 + $0x1d0] sm:$0xff]
        %v1563 = vld [vmem:[#allocation14 + $0x1d8] sm:$0xff]
        %v1564 = vld [vmem:[#allocation14 + $0x1e0] sm:$0xff]
        %v1565 = vld [vmem:[#allocation14 + $0x1e8] sm:$0xff]
        %v1566 = vld [vmem:[#allocation14 + $0x1f0] sm:$0xff]
        %v1567 = vld [vmem:[#allocation14 + $0x1f8] sm:$0xff]
        %1568 = vmatprep.subr.mxu0 %v1505
        %1569 = vmatpush1.msra.mxu0 %v1504
        %1570 = vmatprep.subr.mxu0 %v1509
        %1571 = vmatpush1.msra.mxu0 %v1508
        %1572 = vmatprep.subr.mxu0 %v1513
        %1573 = vmatpush1.msra.mxu0 %v1512
        %1574 = vmatprep.subr.mxu0 %v1517
        %1575 = vmatpush1.msra.mxu0 %v1516
        %1576 = vmatprep.subr.mxu0 %v1521
        %1577 = vmatpush1.msra.mxu0 %v1520
        %1578 = vmatprep.subr.mxu0 %v1525
        %1579 = vmatpush1.msra.mxu0 %v1524
        %1580 = vmatprep.subr.mxu0 %v1529
        %1581 = vmatpush1.msra.mxu0 %v1528
        %1582 = vmatprep.subr.mxu0 %v1533
        %1583 = vmatpush1.msra.mxu0 %v1532
        %1584 = vmatprep.subr.mxu0 %v1537
        %1585 = vmatpush1.msra.mxu0 %v1536
        %1586 = vmatprep.subr.mxu0 %v1541
        %1587 = vmatpush1.msra.mxu0 %v1540
        %1588 = vmatprep.subr.mxu0 %v1545
        %1589 = vmatpush1.msra.mxu0 %v1544
        %1590 = vmatprep.subr.mxu0 %v1549
        %1591 = vmatpush1.msra.mxu0 %v1548
        %1592 = vmatprep.subr.mxu0 %v1553
        %1593 = vmatpush1.msra.mxu0 %v1552
        %1594 = vmatprep.subr.mxu0 %v1557
        %1595 = vmatpush1.msra.mxu0 %v1556
        %1596 = vmatprep.subr.mxu0 %v1561
        %1597 = vmatpush1.msra.mxu0 %v1560
        %1598 = vmatprep.subr.mxu0 %v1565
        %1599 = vmatpush1.msra.mxu0 %v1564
        %1600 = vmatprep.subr.mxu0 0.0
        %1601 = vmatpush1.msra.mxu0 0.0
        %1602 = vmatprep.subr.mxu0 0.0
        %1603 = vmatpush1.msra.mxu0 0.0
        %1604 = vmatprep.subr.mxu0 0.0
        %1605 = vmatpush1.msra.mxu0 0.0
        %1606 = vmatprep.subr.mxu0 0.0
        %1607 = vmatpush1.msra.mxu0 0.0
        %1608 = vmatprep.subr.mxu0 0.0
        %1609 = vmatpush1.msra.mxu0 0.0
        %1610 = vmatprep.subr.mxu0 0.0
        %1611 = vmatpush1.msra.mxu0 0.0
        %1612 = vmatprep.subr.mxu0 0.0
        %1613 = vmatpush1.msra.mxu0 0.0
        %1614 = vmatprep.subr.mxu0 0.0
        %1615 = vmatpush1.msra.mxu0 0.0
        %1616 = vmatprep.subr.mxu0 0.0
        %1617 = vmatpush1.msra.mxu0 0.0
        %1618 = vmatprep.subr.mxu0 0.0
        %1619 = vmatpush1.msra.mxu0 0.0
        %1620 = vmatprep.subr.mxu0 0.0
        %1621 = vmatpush1.msra.mxu0 0.0
        %1622 = vmatprep.subr.mxu0 0.0
        %1623 = vmatpush1.msra.mxu0 0.0
        %1624 = vmatprep.subr.mxu0 0.0
        %1625 = vmatpush1.msra.mxu0 0.0
        %1626 = vmatprep.subr.mxu0 0.0
        %1627 = vmatpush1.msra.mxu0 0.0
        %1628 = vmatprep.subr.mxu0 0.0
        %1629 = vmatpush1.msra.mxu0 0.0
        %1630 = vmatprep.subr.mxu0 0.0
        %1631 = vmatpush1.msra.mxu0 0.0
        %1632 = vmatprep.mubr.f32.mxu0 0.0
        %1633 = vmatmul.mubr.f32.gmra.mrb[0].mxu0 %v1496
        %v1634 = vpop.f32.mrb[0].mxu0
        %v1635 = vadd.f32 0.0, %v1634
        %v1636 = vpop.f32.mrb[0].mxu0
        %v1637 = vadd.f32 0.0, %v1636
        %1638 = vdwg.mxu0
        %1639 = vmatprep.subr.mxu0 %v1507
        %1640 = vmatpush1.msra.mxu0 %v1506
        %1641 = vmatprep.subr.mxu0 %v1511
        %1642 = vmatpush1.msra.mxu0 %v1510
        %1643 = vmatprep.subr.mxu0 %v1515
        %1644 = vmatpush1.msra.mxu0 %v1514
        %1645 = vmatprep.subr.mxu0 %v1519
        %1646 = vmatpush1.msra.mxu0 %v1518
        %1647 = vmatprep.subr.mxu0 %v1523
        %1648 = vmatpush1.msra.mxu0 %v1522
        %1649 = vmatprep.subr.mxu0 %v1527
        %1650 = vmatpush1.msra.mxu0 %v1526
        %1651 = vmatprep.subr.mxu0 %v1531
        %1652 = vmatpush1.msra.mxu0 %v1530
        %1653 = vmatprep.subr.mxu0 %v1535
        %1654 = vmatpush1.msra.mxu0 %v1534
        %1655 = vmatprep.subr.mxu0 %v1539
        %1656 = vmatpush1.msra.mxu0 %v1538
        %1657 = vmatprep.subr.mxu0 %v1543
        %1658 = vmatpush1.msra.mxu0 %v1542
        %1659 = vmatprep.subr.mxu0 %v1547
        %1660 = vmatpush1.msra.mxu0 %v1546
        %1661 = vmatprep.subr.mxu0 %v1551
        %1662 = vmatpush1.msra.mxu0 %v1550
        %1663 = vmatprep.subr.mxu0 %v1555
        %1664 = vmatpush1.msra.mxu0 %v1554
        %1665 = vmatprep.subr.mxu0 %v1559
        %1666 = vmatpush1.msra.mxu0 %v1558
        %1667 = vmatprep.subr.mxu0 %v1563
        %1668 = vmatpush1.msra.mxu0 %v1562
        %1669 = vmatprep.subr.mxu0 %v1567
        %1670 = vmatpush1.msra.mxu0 %v1566
        %1671 = vmatprep.subr.mxu0 0.0
        %1672 = vmatpush1.msra.mxu0 0.0
        %1673 = vmatprep.subr.mxu0 0.0
        %1674 = vmatpush1.msra.mxu0 0.0
        %1675 = vmatprep.subr.mxu0 0.0
        %1676 = vmatpush1.msra.mxu0 0.0
        %1677 = vmatprep.subr.mxu0 0.0
        %1678 = vmatpush1.msra.mxu0 0.0
        %1679 = vmatprep.subr.mxu0 0.0
        %1680 = vmatpush1.msra.mxu0 0.0
        %1681 = vmatprep.subr.mxu0 0.0
        %1682 = vmatpush1.msra.mxu0 0.0
        %1683 = vmatprep.subr.mxu0 0.0
        %1684 = vmatpush1.msra.mxu0 0.0
        %1685 = vmatprep.subr.mxu0 0.0
        %1686 = vmatpush1.msra.mxu0 0.0
        %1687 = vmatprep.subr.mxu0 0.0
        %1688 = vmatpush1.msra.mxu0 0.0
        %1689 = vmatprep.subr.mxu0 0.0
        %1690 = vmatpush1.msra.mxu0 0.0
        %1691 = vmatprep.subr.mxu0 0.0
        %1692 = vmatpush1.msra.mxu0 0.0
        %1693 = vmatprep.subr.mxu0 0.0
        %1694 = vmatpush1.msra.mxu0 0.0
        %1695 = vmatprep.subr.mxu0 0.0
        %1696 = vmatpush1.msra.mxu0 0.0
        %1697 = vmatprep.subr.mxu0 0.0
        %1698 = vmatpush1.msra.mxu0 0.0
        %1699 = vmatprep.subr.mxu0 0.0
        %1700 = vmatpush1.msra.mxu0 0.0
        %1701 = vmatprep.subr.mxu0 0.0
        %1702 = vmatpush1.msra.mxu0 0.0
        %1703 = vmatprep.mubr.f32.mxu0 0.0
        %1704 = vmatmul.mubr.f32.gmra.mrb[0].mxu0 %v1496
        %v1705 = vpop.f32.mrb[0].mxu0
        %v1706 = vadd.f32 0.0, %v1705
        %v1707 = vpop.f32.mrb[0].mxu0
        %v1708 = vadd.f32 0.0, %v1707
        %1709 = vdwg.mxu0
        %v1710 = vadd.f32 %v1500, %v1635
        %v1711 = vadd.f32 %v1501, %v1637
        %v1712 = vadd.f32 %v1502, %v1706
        %v1713 = vadd.f32 %v1503, %v1708
        %v1714 = vxor.u32 %v1710, 2147483648
        %v1715 = vmul.f32 %v1714, 1.442695
        %v1716 = vpow.pop %v1715
        %v1717 = vadd.f32 %v1716, 1.0
        %v1718 = vrcp.pop %v1717
        %v1719 = vmul.f32 1.0, %v1718
        %v1720 = vxor.u32 %v1711, 2147483648
        %v1721 = vmul.f32 %v1720, 1.442695
        %v1722 = vpow.pop %v1721
        %v1723 = vadd.f32 %v1722, 1.0
        %v1724 = vrcp.pop %v1723
        %v1725 = vmul.f32 1.0, %v1724
        %v1726 = vtanh.pop %v1712
        %v1727 = vxor.u32 %v1713, 2147483648
        %v1728 = vmul.f32 %v1727, 1.442695
        %v1729 = vpow.pop %v1728
        %v1730 = vadd.f32 %v1729, 1.0
        %v1731 = vrcp.pop %v1730
        %v1732 = vmul.f32 1.0, %v1731
        %v1733 = vmul.f32 %v1725, %v1494
        %v1734 = vmul.f32 %v1719, %v1726
        %v1735 = vadd.f32 %v1733, %v1734
        %v1736 = vtanh.pop %v1735
        %v1737 = vmul.f32 %v1732, %v1736
        %s1738 = scalar_lea.vmem [#allocation5], 16
        %1739 = vst [vmem:[%s1738] sm:$0xff] %v1737
        %s1740 = scalar_lea.vmem [#allocation4], 96
        %v1741 = vld [vmem:[%s1740] sm:$0xff]
        %v1742 = vld [vmem:[%s1740 + $0x8] sm:$0xff]
        %v1743 = vld [vmem:[%s1740 + $0x10] sm:$0xff]
        %v1744 = vld [vmem:[%s1740 + $0x18] sm:$0xff]
        %v1745 = vld [vmem:[#allocation14] sm:$0xff]
        %v1746 = vld [vmem:[#allocation14 + $0x8] sm:$0xff]
        %v1747 = vld [vmem:[#allocation14 + $0x10] sm:$0xff]
        %v1748 = vld [vmem:[#allocation14 + $0x18] sm:$0xff]
        %v1749 = vld [vmem:[#allocation14 + $0x20] sm:$0xff]
        %v1750 = vld [vmem:[#allocation14 + $0x28] sm:$0xff]
        %v1751 = vld [vmem:[#allocation14 + $0x30] sm:$0xff]
        %v1752 = vld [vmem:[#allocation14 + $0x38] sm:$0xff]
        %v1753 = vld [vmem:[#allocation14 + $0x40] sm:$0xff]
        %v1754 = vld [vmem:[#allocation14 + $0x48] sm:$0xff]
        %v1755 = vld [vmem:[#allocation14 + $0x50] sm:$0xff]
        %v1756 = vld [vmem:[#allocation14 + $0x58] sm:$0xff]
        %v1757 = vld [vmem:[#allocation14 + $0x60] sm:$0xff]
        %v1758 = vld [vmem:[#allocation14 + $0x68] sm:$0xff]
        %v1759 = vld [vmem:[#allocation14 + $0x70] sm:$0xff]
        %v1760 = vld [vmem:[#allocation14 + $0x78] sm:$0xff]
        %v1761 = vld [vmem:[#allocation14 + $0x80] sm:$0xff]
        %v1762 = vld [vmem:[#allocation14 + $0x88] sm:$0xff]
        %v1763 = vld [vmem:[#allocation14 + $0x90] sm:$0xff]
        %v1764 = vld [vmem:[#allocation14 + $0x98] sm:$0xff]
        %v1765 = vld [vmem:[#allocation14 + $0xa0] sm:$0xff]
        %v1766 = vld [vmem:[#allocation14 + $0xa8] sm:$0xff]
        %v1767 = vld [vmem:[#allocation14 + $0xb0] sm:$0xff]
        %v1768 = vld [vmem:[#allocation14 + $0xb8] sm:$0xff]
        %v1769 = vld [vmem:[#allocation14 + $0xc0] sm:$0xff]
        %v1770 = vld [vmem:[#allocation14 + $0xc8] sm:$0xff]
        %v1771 = vld [vmem:[#allocation14 + $0xd0] sm:$0xff]
        %v1772 = vld [vmem:[#allocation14 + $0xd8] sm:$0xff]
        %v1773 = vld [vmem:[#allocation14 + $0xe0] sm:$0xff]
        %v1774 = vld [vmem:[#allocation14 + $0xe8] sm:$0xff]
        %v1775 = vld [vmem:[#allocation14 + $0xf0] sm:$0xff]
        %v1776 = vld [vmem:[#allocation14 + $0xf8] sm:$0xff]
        %v1777 = vld [vmem:[#allocation14 + $0x100] sm:$0xff]
        %v1778 = vld [vmem:[#allocation14 + $0x108] sm:$0xff]
        %v1779 = vld [vmem:[#allocation14 + $0x110] sm:$0xff]
        %v1780 = vld [vmem:[#allocation14 + $0x118] sm:$0xff]
        %v1781 = vld [vmem:[#allocation14 + $0x120] sm:$0xff]
        %v1782 = vld [vmem:[#allocation14 + $0x128] sm:$0xff]
        %v1783 = vld [vmem:[#allocation14 + $0x130] sm:$0xff]
        %v1784 = vld [vmem:[#allocation14 + $0x138] sm:$0xff]
        %v1785 = vld [vmem:[#allocation14 + $0x140] sm:$0xff]
        %v1786 = vld [vmem:[#allocation14 + $0x148] sm:$0xff]
        %v1787 = vld [vmem:[#allocation14 + $0x150] sm:$0xff]
        %v1788 = vld [vmem:[#allocation14 + $0x158] sm:$0xff]
        %v1789 = vld [vmem:[#allocation14 + $0x160] sm:$0xff]
        %v1790 = vld [vmem:[#allocation14 + $0x168] sm:$0xff]
        %v1791 = vld [vmem:[#allocation14 + $0x170] sm:$0xff]
        %v1792 = vld [vmem:[#allocation14 + $0x178] sm:$0xff]
        %v1793 = vld [vmem:[#allocation14 + $0x180] sm:$0xff]
        %v1794 = vld [vmem:[#allocation14 + $0x188] sm:$0xff]
        %v1795 = vld [vmem:[#allocation14 + $0x190] sm:$0xff]
        %v1796 = vld [vmem:[#allocation14 + $0x198] sm:$0xff]
        %v1797 = vld [vmem:[#allocation14 + $0x1a0] sm:$0xff]
        %v1798 = vld [vmem:[#allocation14 + $0x1a8] sm:$0xff]
        %v1799 = vld [vmem:[#allocation14 + $0x1b0] sm:$0xff]
        %v1800 = vld [vmem:[#allocation14 + $0x1b8] sm:$0xff]
        %v1801 = vld [vmem:[#allocation14 + $0x1c0] sm:$0xff]
        %v1802 = vld [vmem:[#allocation14 + $0x1c8] sm:$0xff]
        %v1803 = vld [vmem:[#allocation14 + $0x1d0] sm:$0xff]
        %v1804 = vld [vmem:[#allocation14 + $0x1d8] sm:$0xff]
        %v1805 = vld [vmem:[#allocation14 + $0x1e0] sm:$0xff]
        %v1806 = vld [vmem:[#allocation14 + $0x1e8] sm:$0xff]
        %v1807 = vld [vmem:[#allocation14 + $0x1f0] sm:$0xff]
        %v1808 = vld [vmem:[#allocation14 + $0x1f8] sm:$0xff]
        %1809 = vmatprep.subr.mxu0 %v1746
        %1810 = vmatpush1.msra.mxu0 %v1745
        %1811 = vmatprep.subr.mxu0 %v1750
        %1812 = vmatpush1.msra.mxu0 %v1749
        %1813 = vmatprep.subr.mxu0 %v1754
        %1814 = vmatpush1.msra.mxu0 %v1753
        %1815 = vmatprep.subr.mxu0 %v1758
        %1816 = vmatpush1.msra.mxu0 %v1757
        %1817 = vmatprep.subr.mxu0 %v1762
        %1818 = vmatpush1.msra.mxu0 %v1761
        %1819 = vmatprep.subr.mxu0 %v1766
        %1820 = vmatpush1.msra.mxu0 %v1765
        %1821 = vmatprep.subr.mxu0 %v1770
        %1822 = vmatpush1.msra.mxu0 %v1769
        %1823 = vmatprep.subr.mxu0 %v1774
        %1824 = vmatpush1.msra.mxu0 %v1773
        %1825 = vmatprep.subr.mxu0 %v1778
        %1826 = vmatpush1.msra.mxu0 %v1777
        %1827 = vmatprep.subr.mxu0 %v1782
        %1828 = vmatpush1.msra.mxu0 %v1781
        %1829 = vmatprep.subr.mxu0 %v1786
        %1830 = vmatpush1.msra.mxu0 %v1785
        %1831 = vmatprep.subr.mxu0 %v1790
        %1832 = vmatpush1.msra.mxu0 %v1789
        %1833 = vmatprep.subr.mxu0 %v1794
        %1834 = vmatpush1.msra.mxu0 %v1793
        %1835 = vmatprep.subr.mxu0 %v1798
        %1836 = vmatpush1.msra.mxu0 %v1797
        %1837 = vmatprep.subr.mxu0 %v1802
        %1838 = vmatpush1.msra.mxu0 %v1801
        %1839 = vmatprep.subr.mxu0 %v1806
        %1840 = vmatpush1.msra.mxu0 %v1805
        %1841 = vmatprep.subr.mxu0 0.0
        %1842 = vmatpush1.msra.mxu0 0.0
        %1843 = vmatprep.subr.mxu0 0.0
        %1844 = vmatpush1.msra.mxu0 0.0
        %1845 = vmatprep.subr.mxu0 0.0
        %1846 = vmatpush1.msra.mxu0 0.0
        %1847 = vmatprep.subr.mxu0 0.0
        %1848 = vmatpush1.msra.mxu0 0.0
        %1849 = vmatprep.subr.mxu0 0.0
        %1850 = vmatpush1.msra.mxu0 0.0
        %1851 = vmatprep.subr.mxu0 0.0
        %1852 = vmatpush1.msra.mxu0 0.0
        %1853 = vmatprep.subr.mxu0 0.0
        %1854 = vmatpush1.msra.mxu0 0.0
        %1855 = vmatprep.subr.mxu0 0.0
        %1856 = vmatpush1.msra.mxu0 0.0
        %1857 = vmatprep.subr.mxu0 0.0
        %1858 = vmatpush1.msra.mxu0 0.0
        %1859 = vmatprep.subr.mxu0 0.0
        %1860 = vmatpush1.msra.mxu0 0.0
        %1861 = vmatprep.subr.mxu0 0.0
        %1862 = vmatpush1.msra.mxu0 0.0
        %1863 = vmatprep.subr.mxu0 0.0
        %1864 = vmatpush1.msra.mxu0 0.0
        %1865 = vmatprep.subr.mxu0 0.0
        %1866 = vmatpush1.msra.mxu0 0.0
        %1867 = vmatprep.subr.mxu0 0.0
        %1868 = vmatpush1.msra.mxu0 0.0
        %1869 = vmatprep.subr.mxu0 0.0
        %1870 = vmatpush1.msra.mxu0 0.0
        %1871 = vmatprep.subr.mxu0 0.0
        %1872 = vmatpush1.msra.mxu0 0.0
        %1873 = vmatprep.mubr.f32.mxu0 0.0
        %1874 = vmatmul.mubr.f32.gmra.mrb[0].mxu0 %v1737
        %v1875 = vpop.f32.mrb[0].mxu0
        %v1876 = vadd.f32 0.0, %v1875
        %v1877 = vpop.f32.mrb[0].mxu0
        %v1878 = vadd.f32 0.0, %v1877
        %1879 = vdwg.mxu0
        %1880 = vmatprep.subr.mxu0 %v1748
        %1881 = vmatpush1.msra.mxu0 %v1747
        %1882 = vmatprep.subr.mxu0 %v1752
        %1883 = vmatpush1.msra.mxu0 %v1751
        %1884 = vmatprep.subr.mxu0 %v1756
        %1885 = vmatpush1.msra.mxu0 %v1755
        %1886 = vmatprep.subr.mxu0 %v1760
        %1887 = vmatpush1.msra.mxu0 %v1759
        %1888 = vmatprep.subr.mxu0 %v1764
        %1889 = vmatpush1.msra.mxu0 %v1763
        %1890 = vmatprep.subr.mxu0 %v1768
        %1891 = vmatpush1.msra.mxu0 %v1767
        %1892 = vmatprep.subr.mxu0 %v1772
        %1893 = vmatpush1.msra.mxu0 %v1771
        %1894 = vmatprep.subr.mxu0 %v1776
        %1895 = vmatpush1.msra.mxu0 %v1775
        %1896 = vmatprep.subr.mxu0 %v1780
        %1897 = vmatpush1.msra.mxu0 %v1779
        %1898 = vmatprep.subr.mxu0 %v1784
        %1899 = vmatpush1.msra.mxu0 %v1783
        %1900 = vmatprep.subr.mxu0 %v1788
        %1901 = vmatpush1.msra.mxu0 %v1787
        %1902 = vmatprep.subr.mxu0 %v1792
        %1903 = vmatpush1.msra.mxu0 %v1791
        %1904 = vmatprep.subr.mxu0 %v1796
        %1905 = vmatpush1.msra.mxu0 %v1795
        %1906 = vmatprep.subr.mxu0 %v1800
        %1907 = vmatpush1.msra.mxu0 %v1799
        %1908 = vmatprep.subr.mxu0 %v1804
        %1909 = vmatpush1.msra.mxu0 %v1803
        %1910 = vmatprep.subr.mxu0 %v1808
        %1911 = vmatpush1.msra.mxu0 %v1807
        %1912 = vmatprep.subr.mxu0 0.0
        %1913 = vmatpush1.msra.mxu0 0.0
        %1914 = vmatprep.subr.mxu0 0.0
        %1915 = vmatpush1.msra.mxu0 0.0
        %1916 = vmatprep.subr.mxu0 0.0
        %1917 = vmatpush1.msra.mxu0 0.0
        %1918 = vmatprep.subr.mxu0 0.0
        %1919 = vmatpush1.msra.mxu0 0.0
        %1920 = vmatprep.subr.mxu0 0.0
        %1921 = vmatpush1.msra.mxu0 0.0
        %1922 = vmatprep.subr.mxu0 0.0
        %1923 = vmatpush1.msra.mxu0 0.0
        %1924 = vmatprep.subr.mxu0 0.0
        %1925 = vmatpush1.msra.mxu0 0.0
        %1926 = vmatprep.subr.mxu0 0.0
        %1927 = vmatpush1.msra.mxu0 0.0
        %1928 = vmatprep.subr.mxu0 0.0
        %1929 = vmatpush1.msra.mxu0 0.0
        %1930 = vmatprep.subr.mxu0 0.0
        %1931 = vmatpush1.msra.mxu0 0.0
        %1932 = vmatprep.subr.mxu0 0.0
        %1933 = vmatpush1.msra.mxu0 0.0
        %1934 = vmatprep.subr.mxu0 0.0
        %1935 = vmatpush1.msra.mxu0 0.0
        %1936 = vmatprep.subr.mxu0 0.0
        %1937 = vmatpush1.msra.mxu0 0.0
        %1938 = vmatprep.subr.mxu0 0.0
        %1939 = vmatpush1.msra.mxu0 0.0
        %1940 = vmatprep.subr.mxu0 0.0
        %1941 = vmatpush1.msra.mxu0 0.0
        %1942 = vmatprep.subr.mxu0 0.0
        %1943 = vmatpush1.msra.mxu0 0.0
        %1944 = vmatprep.mubr.f32.mxu0 0.0
        %1945 = vmatmul.mubr.f32.gmra.mrb[0].mxu0 %v1737
        %v1946 = vpop.f32.mrb[0].mxu0
        %v1947 = vadd.f32 0.0, %v1946
        %v1948 = vpop.f32.mrb[0].mxu0
        %v1949 = vadd.f32 0.0, %v1948
        %1950 = vdwg.mxu0
        %v1951 = vadd.f32 %v1741, %v1876
        %v1952 = vadd.f32 %v1742, %v1878
        %v1953 = vadd.f32 %v1743, %v1947
        %v1954 = vadd.f32 %v1744, %v1949
        %v1955 = vxor.u32 %v1951, 2147483648
        %v1956 = vmul.f32 %v1955, 1.442695
        %v1957 = vpow.pop %v1956
        %v1958 = vadd.f32 %v1957, 1.0
        %v1959 = vrcp.pop %v1958
        %v1960 = vmul.f32 1.0, %v1959
        %v1961 = vxor.u32 %v1952, 2147483648
        %v1962 = vmul.f32 %v1961, 1.442695
        %v1963 = vpow.pop %v1962
        %v1964 = vadd.f32 %v1963, 1.0
        %v1965 = vrcp.pop %v1964
        %v1966 = vmul.f32 1.0, %v1965
        %v1967 = vtanh.pop %v1953
        %v1968 = vxor.u32 %v1954, 2147483648
        %v1969 = vmul.f32 %v1968, 1.442695
        %v1970 = vpow.pop %v1969
        %v1971 = vadd.f32 %v1970, 1.0
        %v1972 = vrcp.pop %v1971
        %v1973 = vmul.f32 1.0, %v1972
        %v1974 = vmul.f32 %v1966, %v1735
        %v1975 = vmul.f32 %v1960, %v1967
        %v1976 = vadd.f32 %v1974, %v1975
        %v1977 = vtanh.pop %v1976
        %v1978 = vmul.f32 %v1973, %v1977
        %s1979 = scalar_lea.vmem [#allocation5], 24
        %1980 = vst [vmem:[%s1979] sm:$0xff] %v1978
        %s1981 = scalar_lea.vmem [#allocation4], 128
        %v1982 = vld [vmem:[%s1981] sm:$0xff]
        %v1983 = vld [vmem:[%s1981 + $0x8] sm:$0xff]
        %v1984 = vld [vmem:[%s1981 + $0x10] sm:$0xff]
        %v1985 = vld [vmem:[%s1981 + $0x18] sm:$0xff]
        %v1986 = vld [vmem:[#allocation14] sm:$0xff]
        %v1987 = vld [vmem:[#allocation14 + $0x8] sm:$0xff]
        %v1988 = vld [vmem:[#allocation14 + $0x10] sm:$0xff]
        %v1989 = vld [vmem:[#allocation14 + $0x18] sm:$0xff]
        %v1990 = vld [vmem:[#allocation14 + $0x20] sm:$0xff]
        %v1991 = vld [vmem:[#allocation14 + $0x28] sm:$0xff]
        %v1992 = vld [vmem:[#allocation14 + $0x30] sm:$0xff]
        %v1993 = vld [vmem:[#allocation14 + $0x38] sm:$0xff]
        %v1994 = vld [vmem:[#allocation14 + $0x40] sm:$0xff]
        %v1995 = vld [vmem:[#allocation14 + $0x48] sm:$0xff]
        %v1996 = vld [vmem:[#allocation14 + $0x50] sm:$0xff]
        %v1997 = vld [vmem:[#allocation14 + $0x58] sm:$0xff]
        %v1998 = vld [vmem:[#allocation14 + $0x60] sm:$0xff]
        %v1999 = vld [vmem:[#allocation14 + $0x68] sm:$0xff]
        %v2000 = vld [vmem:[#allocation14 + $0x70] sm:$0xff]
        %v2001 = vld [vmem:[#allocation14 + $0x78] sm:$0xff]
        %v2002 = vld [vmem:[#allocation14 + $0x80] sm:$0xff]
        %v2003 = vld [vmem:[#allocation14 + $0x88] sm:$0xff]
        %v2004 = vld [vmem:[#allocation14 + $0x90] sm:$0xff]
        %v2005 = vld [vmem:[#allocation14 + $0x98] sm:$0xff]
        %v2006 = vld [vmem:[#allocation14 + $0xa0] sm:$0xff]
        %v2007 = vld [vmem:[#allocation14 + $0xa8] sm:$0xff]
        %v2008 = vld [vmem:[#allocation14 + $0xb0] sm:$0xff]
        %v2009 = vld [vmem:[#allocation14 + $0xb8] sm:$0xff]
        %v2010 = vld [vmem:[#allocation14 + $0xc0] sm:$0xff]
        %v2011 = vld [vmem:[#allocation14 + $0xc8] sm:$0xff]
        %v2012 = vld [vmem:[#allocation14 + $0xd0] sm:$0xff]
        %v2013 = vld [vmem:[#allocation14 + $0xd8] sm:$0xff]
        %v2014 = vld [vmem:[#allocation14 + $0xe0] sm:$0xff]
        %v2015 = vld [vmem:[#allocation14 + $0xe8] sm:$0xff]
        %v2016 = vld [vmem:[#allocation14 + $0xf0] sm:$0xff]
        %v2017 = vld [vmem:[#allocation14 + $0xf8] sm:$0xff]
        %v2018 = vld [vmem:[#allocation14 + $0x100] sm:$0xff]
        %v2019 = vld [vmem:[#allocation14 + $0x108] sm:$0xff]
        %v2020 = vld [vmem:[#allocation14 + $0x110] sm:$0xff]
        %v2021 = vld [vmem:[#allocation14 + $0x118] sm:$0xff]
        %v2022 = vld [vmem:[#allocation14 + $0x120] sm:$0xff]
        %v2023 = vld [vmem:[#allocation14 + $0x128] sm:$0xff]
        %v2024 = vld [vmem:[#allocation14 + $0x130] sm:$0xff]
        %v2025 = vld [vmem:[#allocation14 + $0x138] sm:$0xff]
        %v2026 = vld [vmem:[#allocation14 + $0x140] sm:$0xff]
        %v2027 = vld [vmem:[#allocation14 + $0x148] sm:$0xff]
        %v2028 = vld [vmem:[#allocation14 + $0x150] sm:$0xff]
        %v2029 = vld [vmem:[#allocation14 + $0x158] sm:$0xff]
        %v2030 = vld [vmem:[#allocation14 + $0x160] sm:$0xff]
        %v2031 = vld [vmem:[#allocation14 + $0x168] sm:$0xff]
        %v2032 = vld [vmem:[#allocation14 + $0x170] sm:$0xff]
        %v2033 = vld [vmem:[#allocation14 + $0x178] sm:$0xff]
        %v2034 = vld [vmem:[#allocation14 + $0x180] sm:$0xff]
        %v2035 = vld [vmem:[#allocation14 + $0x188] sm:$0xff]
        %v2036 = vld [vmem:[#allocation14 + $0x190] sm:$0xff]
        %v2037 = vld [vmem:[#allocation14 + $0x198] sm:$0xff]
        %v2038 = vld [vmem:[#allocation14 + $0x1a0] sm:$0xff]
        %v2039 = vld [vmem:[#allocation14 + $0x1a8] sm:$0xff]
        %v2040 = vld [vmem:[#allocation14 + $0x1b0] sm:$0xff]
        %v2041 = vld [vmem:[#allocation14 + $0x1b8] sm:$0xff]
        %v2042 = vld [vmem:[#allocation14 + $0x1c0] sm:$0xff]
        %v2043 = vld [vmem:[#allocation14 + $0x1c8] sm:$0xff]
        %v2044 = vld [vmem:[#allocation14 + $0x1d0] sm:$0xff]
        %v2045 = vld [vmem:[#allocation14 + $0x1d8] sm:$0xff]
        %v2046 = vld [vmem:[#allocation14 + $0x1e0] sm:$0xff]
        %v2047 = vld [vmem:[#allocation14 + $0x1e8] sm:$0xff]
        %v2048 = vld [vmem:[#allocation14 + $0x1f0] sm:$0xff]
        %v2049 = vld [vmem:[#allocation14 + $0x1f8] sm:$0xff]
        %2050 = vmatprep.subr.mxu0 %v1987
        %2051 = vmatpush1.msra.mxu0 %v1986
        %2052 = vmatprep.subr.mxu0 %v1991
        %2053 = vmatpush1.msra.mxu0 %v1990
        %2054 = vmatprep.subr.mxu0 %v1995
        %2055 = vmatpush1.msra.mxu0 %v1994
        %2056 = vmatprep.subr.mxu0 %v1999
        %2057 = vmatpush1.msra.mxu0 %v1998
        %2058 = vmatprep.subr.mxu0 %v2003
        %2059 = vmatpush1.msra.mxu0 %v2002
        %2060 = vmatprep.subr.mxu0 %v2007
        %2061 = vmatpush1.msra.mxu0 %v2006
        %2062 = vmatprep.subr.mxu0 %v2011
        %2063 = vmatpush1.msra.mxu0 %v2010
        %2064 = vmatprep.subr.mxu0 %v2015
        %2065 = vmatpush1.msra.mxu0 %v2014
        %2066 = vmatprep.subr.mxu0 %v2019
        %2067 = vmatpush1.msra.mxu0 %v2018
        %2068 = vmatprep.subr.mxu0 %v2023
        %2069 = vmatpush1.msra.mxu0 %v2022
        %2070 = vmatprep.subr.mxu0 %v2027
        %2071 = vmatpush1.msra.mxu0 %v2026
        %2072 = vmatprep.subr.mxu0 %v2031
        %2073 = vmatpush1.msra.mxu0 %v2030
        %2074 = vmatprep.subr.mxu0 %v2035
        %2075 = vmatpush1.msra.mxu0 %v2034
        %2076 = vmatprep.subr.mxu0 %v2039
        %2077 = vmatpush1.msra.mxu0 %v2038
        %2078 = vmatprep.subr.mxu0 %v2043
        %2079 = vmatpush1.msra.mxu0 %v2042
        %2080 = vmatprep.subr.mxu0 %v2047
        %2081 = vmatpush1.msra.mxu0 %v2046
        %2082 = vmatprep.subr.mxu0 0.0
        %2083 = vmatpush1.msra.mxu0 0.0
        %2084 = vmatprep.subr.mxu0 0.0
        %2085 = vmatpush1.msra.mxu0 0.0
        %2086 = vmatprep.subr.mxu0 0.0
        %2087 = vmatpush1.msra.mxu0 0.0
        %2088 = vmatprep.subr.mxu0 0.0
        %2089 = vmatpush1.msra.mxu0 0.0
        %2090 = vmatprep.subr.mxu0 0.0
        %2091 = vmatpush1.msra.mxu0 0.0
        %2092 = vmatprep.subr.mxu0 0.0
        %2093 = vmatpush1.msra.mxu0 0.0
        %2094 = vmatprep.subr.mxu0 0.0
        %2095 = vmatpush1.msra.mxu0 0.0
        %2096 = vmatprep.subr.mxu0 0.0
        %2097 = vmatpush1.msra.mxu0 0.0
        %2098 = vmatprep.subr.mxu0 0.0
        %2099 = vmatpush1.msra.mxu0 0.0
        %2100 = vmatprep.subr.mxu0 0.0
        %2101 = vmatpush1.msra.mxu0 0.0
        %2102 = vmatprep.subr.mxu0 0.0
        %2103 = vmatpush1.msra.mxu0 0.0
        %2104 = vmatprep.subr.mxu0 0.0
        %2105 = vmatpush1.msra.mxu0 0.0
        %2106 = vmatprep.subr.mxu0 0.0
        %2107 = vmatpush1.msra.mxu0 0.0
        %2108 = vmatprep.subr.mxu0 0.0
        %2109 = vmatpush1.msra.mxu0 0.0
        %2110 = vmatprep.subr.mxu0 0.0
        %2111 = vmatpush1.msra.mxu0 0.0
        %2112 = vmatprep.subr.mxu0 0.0
        %2113 = vmatpush1.msra.mxu0 0.0
        %2114 = vmatprep.mubr.f32.mxu0 0.0
        %2115 = vmatmul.mubr.f32.gmra.mrb[0].mxu0 %v1978
        %v2116 = vpop.f32.mrb[0].mxu0
        %v2117 = vadd.f32 0.0, %v2116
        %v2118 = vpop.f32.mrb[0].mxu0
        %v2119 = vadd.f32 0.0, %v2118
        %2120 = vdwg.mxu0
        %2121 = vmatprep.subr.mxu0 %v1989
        %2122 = vmatpush1.msra.mxu0 %v1988
        %2123 = vmatprep.subr.mxu0 %v1993
        %2124 = vmatpush1.msra.mxu0 %v1992
        %2125 = vmatprep.subr.mxu0 %v1997
        %2126 = vmatpush1.msra.mxu0 %v1996
        %2127 = vmatprep.subr.mxu0 %v2001
        %2128 = vmatpush1.msra.mxu0 %v2000
        %2129 = vmatprep.subr.mxu0 %v2005
        %2130 = vmatpush1.msra.mxu0 %v2004
        %2131 = vmatprep.subr.mxu0 %v2009
        %2132 = vmatpush1.msra.mxu0 %v2008
        %2133 = vmatprep.subr.mxu0 %v2013
        %2134 = vmatpush1.msra.mxu0 %v2012
        %2135 = vmatprep.subr.mxu0 %v2017
        %2136 = vmatpush1.msra.mxu0 %v2016
        %2137 = vmatprep.subr.mxu0 %v2021
        %2138 = vmatpush1.msra.mxu0 %v2020
        %2139 = vmatprep.subr.mxu0 %v2025
        %2140 = vmatpush1.msra.mxu0 %v2024
        %2141 = vmatprep.subr.mxu0 %v2029
        %2142 = vmatpush1.msra.mxu0 %v2028
        %2143 = vmatprep.subr.mxu0 %v2033
        %2144 = vmatpush1.msra.mxu0 %v2032
        %2145 = vmatprep.subr.mxu0 %v2037
        %2146 = vmatpush1.msra.mxu0 %v2036
        %2147 = vmatprep.subr.mxu0 %v2041
        %2148 = vmatpush1.msra.mxu0 %v2040
        %2149 = vmatprep.subr.mxu0 %v2045
        %2150 = vmatpush1.msra.mxu0 %v2044
        %2151 = vmatprep.subr.mxu0 %v2049
        %2152 = vmatpush1.msra.mxu0 %v2048
        %2153 = vmatprep.subr.mxu0 0.0
        %2154 = vmatpush1.msra.mxu0 0.0
        %2155 = vmatprep.subr.mxu0 0.0
        %2156 = vmatpush1.msra.mxu0 0.0
        %2157 = vmatprep.subr.mxu0 0.0
        %2158 = vmatpush1.msra.mxu0 0.0
        %2159 = vmatprep.subr.mxu0 0.0
        %2160 = vmatpush1.msra.mxu0 0.0
        %2161 = vmatprep.subr.mxu0 0.0
        %2162 = vmatpush1.msra.mxu0 0.0
        %2163 = vmatprep.subr.mxu0 0.0
        %2164 = vmatpush1.msra.mxu0 0.0
        %2165 = vmatprep.subr.mxu0 0.0
        %2166 = vmatpush1.msra.mxu0 0.0
        %2167 = vmatprep.subr.mxu0 0.0
        %2168 = vmatpush1.msra.mxu0 0.0
        %2169 = vmatprep.subr.mxu0 0.0
        %2170 = vmatpush1.msra.mxu0 0.0
        %2171 = vmatprep.subr.mxu0 0.0
        %2172 = vmatpush1.msra.mxu0 0.0
        %2173 = vmatprep.subr.mxu0 0.0
        %2174 = vmatpush1.msra.mxu0 0.0
        %2175 = vmatprep.subr.mxu0 0.0
        %2176 = vmatpush1.msra.mxu0 0.0
        %2177 = vmatprep.subr.mxu0 0.0
        %2178 = vmatpush1.msra.mxu0 0.0
        %2179 = vmatprep.subr.mxu0 0.0
        %2180 = vmatpush1.msra.mxu0 0.0
        %2181 = vmatprep.subr.mxu0 0.0
        %2182 = vmatpush1.msra.mxu0 0.0
        %2183 = vmatprep.subr.mxu0 0.0
        %2184 = vmatpush1.msra.mxu0 0.0
        %2185 = vmatprep.mubr.f32.mxu0 0.0
        %2186 = vmatmul.mubr.f32.gmra.mrb[0].mxu0 %v1978
        %v2187 = vpop.f32.mrb[0].mxu0
        %v2188 = vadd.f32 0.0, %v2187
        %v2189 = vpop.f32.mrb[0].mxu0
        %v2190 = vadd.f32 0.0, %v2189
        %2191 = vdwg.mxu0
        %v2192 = vadd.f32 %v1982, %v2117
        %v2193 = vadd.f32 %v1983, %v2119
        %v2194 = vadd.f32 %v1984, %v2188
        %v2195 = vadd.f32 %v1985, %v2190
        %v2196 = vxor.u32 %v2192, 2147483648
        %v2197 = vmul.f32 %v2196, 1.442695
        %v2198 = vpow.pop %v2197
        %v2199 = vadd.f32 %v2198, 1.0
        %v2200 = vrcp.pop %v2199
        %v2201 = vmul.f32 1.0, %v2200
        %v2202 = vxor.u32 %v2193, 2147483648
        %v2203 = vmul.f32 %v2202, 1.442695
        %v2204 = vpow.pop %v2203
        %v2205 = vadd.f32 %v2204, 1.0
        %v2206 = vrcp.pop %v2205
        %v2207 = vmul.f32 1.0, %v2206
        %v2208 = vtanh.pop %v2194
        %v2209 = vxor.u32 %v2195, 2147483648
        %v2210 = vmul.f32 %v2209, 1.442695
        %v2211 = vpow.pop %v2210
        %v2212 = vadd.f32 %v2211, 1.0
        %v2213 = vrcp.pop %v2212
        %v2214 = vmul.f32 1.0, %v2213
        %v2215 = vmul.f32 %v2207, %v1976
        %v2216 = vmul.f32 %v2201, %v2208
        %v2217 = vadd.f32 %v2215, %v2216
        %v2218 = vtanh.pop %v2217
        %v2219 = vmul.f32 %v2214, %v2218
        %s2220 = scalar_lea.vmem [#allocation5], 32
        %2221 = vst [vmem:[%s2220] sm:$0xff] %v2219
        %s2222 = scalar_lea.vmem [#allocation4], 160
        %v2223 = vld [vmem:[%s2222] sm:$0xff]
        %v2224 = vld [vmem:[%s2222 + $0x8] sm:$0xff]
        %v2225 = vld [vmem:[%s2222 + $0x10] sm:$0xff]
        %v2226 = vld [vmem:[%s2222 + $0x18] sm:$0xff]
        %v2227 = vld [vmem:[#allocation14] sm:$0xff]
        %v2228 = vld [vmem:[#allocation14 + $0x8] sm:$0xff]
        %v2229 = vld [vmem:[#allocation14 + $0x10] sm:$0xff]
        %v2230 = vld [vmem:[#allocation14 + $0x18] sm:$0xff]
        %v2231 = vld [vmem:[#allocation14 + $0x20] sm:$0xff]
        %v2232 = vld [vmem:[#allocation14 + $0x28] sm:$0xff]
        %v2233 = vld [vmem:[#allocation14 + $0x30] sm:$0xff]
        %v2234 = vld [vmem:[#allocation14 + $0x38] sm:$0xff]
        %v2235 = vld [vmem:[#allocation14 + $0x40] sm:$0xff]
        %v2236 = vld [vmem:[#allocation14 + $0x48] sm:$0xff]
        %v2237 = vld [vmem:[#allocation14 + $0x50] sm:$0xff]
        %v2238 = vld [vmem:[#allocation14 + $0x58] sm:$0xff]
        %v2239 = vld [vmem:[#allocation14 + $0x60] sm:$0xff]
        %v2240 = vld [vmem:[#allocation14 + $0x68] sm:$0xff]
        %v2241 = vld [vmem:[#allocation14 + $0x70] sm:$0xff]
        %v2242 = vld [vmem:[#allocation14 + $0x78] sm:$0xff]
        %v2243 = vld [vmem:[#allocation14 + $0x80] sm:$0xff]
        %v2244 = vld [vmem:[#allocation14 + $0x88] sm:$0xff]
        %v2245 = vld [vmem:[#allocation14 + $0x90] sm:$0xff]
        %v2246 = vld [vmem:[#allocation14 + $0x98] sm:$0xff]
        %v2247 = vld [vmem:[#allocation14 + $0xa0] sm:$0xff]
        %v2248 = vld [vmem:[#allocation14 + $0xa8] sm:$0xff]
        %v2249 = vld [vmem:[#allocation14 + $0xb0] sm:$0xff]
        %v2250 = vld [vmem:[#allocation14 + $0xb8] sm:$0xff]
        %v2251 = vld [vmem:[#allocation14 + $0xc0] sm:$0xff]
        %v2252 = vld [vmem:[#allocation14 + $0xc8] sm:$0xff]
        %v2253 = vld [vmem:[#allocation14 + $0xd0] sm:$0xff]
        %v2254 = vld [vmem:[#allocation14 + $0xd8] sm:$0xff]
        %v2255 = vld [vmem:[#allocation14 + $0xe0] sm:$0xff]
        %v2256 = vld [vmem:[#allocation14 + $0xe8] sm:$0xff]
        %v2257 = vld [vmem:[#allocation14 + $0xf0] sm:$0xff]
        %v2258 = vld [vmem:[#allocation14 + $0xf8] sm:$0xff]
        %v2259 = vld [vmem:[#allocation14 + $0x100] sm:$0xff]
        %v2260 = vld [vmem:[#allocation14 + $0x108] sm:$0xff]
        %v2261 = vld [vmem:[#allocation14 + $0x110] sm:$0xff]
        %v2262 = vld [vmem:[#allocation14 + $0x118] sm:$0xff]
        %v2263 = vld [vmem:[#allocation14 + $0x120] sm:$0xff]
        %v2264 = vld [vmem:[#allocation14 + $0x128] sm:$0xff]
        %v2265 = vld [vmem:[#allocation14 + $0x130] sm:$0xff]
        %v2266 = vld [vmem:[#allocation14 + $0x138] sm:$0xff]
        %v2267 = vld [vmem:[#allocation14 + $0x140] sm:$0xff]
        %v2268 = vld [vmem:[#allocation14 + $0x148] sm:$0xff]
        %v2269 = vld [vmem:[#allocation14 + $0x150] sm:$0xff]
        %v2270 = vld [vmem:[#allocation14 + $0x158] sm:$0xff]
        %v2271 = vld [vmem:[#allocation14 + $0x160] sm:$0xff]
        %v2272 = vld [vmem:[#allocation14 + $0x168] sm:$0xff]
        %v2273 = vld [vmem:[#allocation14 + $0x170] sm:$0xff]
        %v2274 = vld [vmem:[#allocation14 + $0x178] sm:$0xff]
        %v2275 = vld [vmem:[#allocation14 + $0x180] sm:$0xff]
        %v2276 = vld [vmem:[#allocation14 + $0x188] sm:$0xff]
        %v2277 = vld [vmem:[#allocation14 + $0x190] sm:$0xff]
        %v2278 = vld [vmem:[#allocation14 + $0x198] sm:$0xff]
        %v2279 = vld [vmem:[#allocation14 + $0x1a0] sm:$0xff]
        %v2280 = vld [vmem:[#allocation14 + $0x1a8] sm:$0xff]
        %v2281 = vld [vmem:[#allocation14 + $0x1b0] sm:$0xff]
        %v2282 = vld [vmem:[#allocation14 + $0x1b8] sm:$0xff]
        %v2283 = vld [vmem:[#allocation14 + $0x1c0] sm:$0xff]
        %v2284 = vld [vmem:[#allocation14 + $0x1c8] sm:$0xff]
        %v2285 = vld [vmem:[#allocation14 + $0x1d0] sm:$0xff]
        %v2286 = vld [vmem:[#allocation14 + $0x1d8] sm:$0xff]
        %v2287 = vld [vmem:[#allocation14 + $0x1e0] sm:$0xff]
        %v2288 = vld [vmem:[#allocation14 + $0x1e8] sm:$0xff]
        %v2289 = vld [vmem:[#allocation14 + $0x1f0] sm:$0xff]
        %v2290 = vld [vmem:[#allocation14 + $0x1f8] sm:$0xff]
        %2291 = vmatprep.subr.mxu0 %v2228
        %2292 = vmatpush1.msra.mxu0 %v2227
        %2293 = vmatprep.subr.mxu0 %v2232
        %2294 = vmatpush1.msra.mxu0 %v2231
        %2295 = vmatprep.subr.mxu0 %v2236
        %2296 = vmatpush1.msra.mxu0 %v2235
        %2297 = vmatprep.subr.mxu0 %v2240
        %2298 = vmatpush1.msra.mxu0 %v2239
        %2299 = vmatprep.subr.mxu0 %v2244
        %2300 = vmatpush1.msra.mxu0 %v2243
        %2301 = vmatprep.subr.mxu0 %v2248
        %2302 = vmatpush1.msra.mxu0 %v2247
        %2303 = vmatprep.subr.mxu0 %v2252
        %2304 = vmatpush1.msra.mxu0 %v2251
        %2305 = vmatprep.subr.mxu0 %v2256
        %2306 = vmatpush1.msra.mxu0 %v2255
        %2307 = vmatprep.subr.mxu0 %v2260
        %2308 = vmatpush1.msra.mxu0 %v2259
        %2309 = vmatprep.subr.mxu0 %v2264
        %2310 = vmatpush1.msra.mxu0 %v2263
        %2311 = vmatprep.subr.mxu0 %v2268
        %2312 = vmatpush1.msra.mxu0 %v2267
        %2313 = vmatprep.subr.mxu0 %v2272
        %2314 = vmatpush1.msra.mxu0 %v2271
        %2315 = vmatprep.subr.mxu0 %v2276
        %2316 = vmatpush1.msra.mxu0 %v2275
        %2317 = vmatprep.subr.mxu0 %v2280
        %2318 = vmatpush1.msra.mxu0 %v2279
        %2319 = vmatprep.subr.mxu0 %v2284
        %2320 = vmatpush1.msra.mxu0 %v2283
        %2321 = vmatprep.subr.mxu0 %v2288
        %2322 = vmatpush1.msra.mxu0 %v2287
        %2323 = vmatprep.subr.mxu0 0.0
        %2324 = vmatpush1.msra.mxu0 0.0
        %2325 = vmatprep.subr.mxu0 0.0
        %2326 = vmatpush1.msra.mxu0 0.0
        %2327 = vmatprep.subr.mxu0 0.0
        %2328 = vmatpush1.msra.mxu0 0.0
        %2329 = vmatprep.subr.mxu0 0.0
        %2330 = vmatpush1.msra.mxu0 0.0
        %2331 = vmatprep.subr.mxu0 0.0
        %2332 = vmatpush1.msra.mxu0 0.0
        %2333 = vmatprep.subr.mxu0 0.0
        %2334 = vmatpush1.msra.mxu0 0.0
        %2335 = vmatprep.subr.mxu0 0.0
        %2336 = vmatpush1.msra.mxu0 0.0
        %2337 = vmatprep.subr.mxu0 0.0
        %2338 = vmatpush1.msra.mxu0 0.0
        %2339 = vmatprep.subr.mxu0 0.0
        %2340 = vmatpush1.msra.mxu0 0.0
        %2341 = vmatprep.subr.mxu0 0.0
        %2342 = vmatpush1.msra.mxu0 0.0
        %2343 = vmatprep.subr.mxu0 0.0
        %2344 = vmatpush1.msra.mxu0 0.0
        %2345 = vmatprep.subr.mxu0 0.0
        %2346 = vmatpush1.msra.mxu0 0.0
        %2347 = vmatprep.subr.mxu0 0.0
        %2348 = vmatpush1.msra.mxu0 0.0
        %2349 = vmatprep.subr.mxu0 0.0
        %2350 = vmatpush1.msra.mxu0 0.0
        %2351 = vmatprep.subr.mxu0 0.0
        %2352 = vmatpush1.msra.mxu0 0.0
        %2353 = vmatprep.subr.mxu0 0.0
        %2354 = vmatpush1.msra.mxu0 0.0
        %2355 = vmatprep.mubr.f32.mxu0 0.0
        %2356 = vmatmul.mubr.f32.gmra.mrb[0].mxu0 %v2219
        %v2357 = vpop.f32.mrb[0].mxu0
        %v2358 = vadd.f32 0.0, %v2357
        %v2359 = vpop.f32.mrb[0].mxu0
        %v2360 = vadd.f32 0.0, %v2359
        %2361 = vdwg.mxu0
        %2362 = vmatprep.subr.mxu0 %v2230
        %2363 = vmatpush1.msra.mxu0 %v2229
        %2364 = vmatprep.subr.mxu0 %v2234
        %2365 = vmatpush1.msra.mxu0 %v2233
        %2366 = vmatprep.subr.mxu0 %v2238
        %2367 = vmatpush1.msra.mxu0 %v2237
        %2368 = vmatprep.subr.mxu0 %v2242
        %2369 = vmatpush1.msra.mxu0 %v2241
        %2370 = vmatprep.subr.mxu0 %v2246
        %2371 = vmatpush1.msra.mxu0 %v2245
        %2372 = vmatprep.subr.mxu0 %v2250
        %2373 = vmatpush1.msra.mxu0 %v2249
        %2374 = vmatprep.subr.mxu0 %v2254
        %2375 = vmatpush1.msra.mxu0 %v2253
        %2376 = vmatprep.subr.mxu0 %v2258
        %2377 = vmatpush1.msra.mxu0 %v2257
        %2378 = vmatprep.subr.mxu0 %v2262
        %2379 = vmatpush1.msra.mxu0 %v2261
        %2380 = vmatprep.subr.mxu0 %v2266
        %2381 = vmatpush1.msra.mxu0 %v2265
        %2382 = vmatprep.subr.mxu0 %v2270
        %2383 = vmatpush1.msra.mxu0 %v2269
        %2384 = vmatprep.subr.mxu0 %v2274
        %2385 = vmatpush1.msra.mxu0 %v2273
        %2386 = vmatprep.subr.mxu0 %v2278
        %2387 = vmatpush1.msra.mxu0 %v2277
        %2388 = vmatprep.subr.mxu0 %v2282
        %2389 = vmatpush1.msra.mxu0 %v2281
        %2390 = vmatprep.subr.mxu0 %v2286
        %2391 = vmatpush1.msra.mxu0 %v2285
        %2392 = vmatprep.subr.mxu0 %v2290
        %2393 = vmatpush1.msra.mxu0 %v2289
        %2394 = vmatprep.subr.mxu0 0.0
        %2395 = vmatpush1.msra.mxu0 0.0
        %2396 = vmatprep.subr.mxu0 0.0
        %2397 = vmatpush1.msra.mxu0 0.0
        %2398 = vmatprep.subr.mxu0 0.0
        %2399 = vmatpush1.msra.mxu0 0.0
        %2400 = vmatprep.subr.mxu0 0.0
        %2401 = vmatpush1.msra.mxu0 0.0
        %2402 = vmatprep.subr.mxu0 0.0
        %2403 = vmatpush1.msra.mxu0 0.0
        %2404 = vmatprep.subr.mxu0 0.0
        %2405 = vmatpush1.msra.mxu0 0.0
        %2406 = vmatprep.subr.mxu0 0.0
        %2407 = vmatpush1.msra.mxu0 0.0
        %2408 = vmatprep.subr.mxu0 0.0
        %2409 = vmatpush1.msra.mxu0 0.0
        %2410 = vmatprep.subr.mxu0 0.0
        %2411 = vmatpush1.msra.mxu0 0.0
        %2412 = vmatprep.subr.mxu0 0.0
        %2413 = vmatpush1.msra.mxu0 0.0
        %2414 = vmatprep.subr.mxu0 0.0
        %2415 = vmatpush1.msra.mxu0 0.0
        %2416 = vmatprep.subr.mxu0 0.0
        %2417 = vmatpush1.msra.mxu0 0.0
        %2418 = vmatprep.subr.mxu0 0.0
        %2419 = vmatpush1.msra.mxu0 0.0
        %2420 = vmatprep.subr.mxu0 0.0
        %2421 = vmatpush1.msra.mxu0 0.0
        %2422 = vmatprep.subr.mxu0 0.0
        %2423 = vmatpush1.msra.mxu0 0.0
        %2424 = vmatprep.subr.mxu0 0.0
        %2425 = vmatpush1.msra.mxu0 0.0
        %2426 = vmatprep.mubr.f32.mxu0 0.0
        %2427 = vmatmul.mubr.f32.gmra.mrb[0].mxu0 %v2219
        %v2428 = vpop.f32.mrb[0].mxu0
        %v2429 = vadd.f32 0.0, %v2428
        %v2430 = vpop.f32.mrb[0].mxu0
        %v2431 = vadd.f32 0.0, %v2430
        %2432 = vdwg.mxu0
        %v2433 = vadd.f32 %v2223, %v2358
        %v2434 = vadd.f32 %v2224, %v2360
        %v2435 = vadd.f32 %v2225, %v2429
        %v2436 = vadd.f32 %v2226, %v2431
        %v2437 = vxor.u32 %v2433, 2147483648
        %v2438 = vmul.f32 %v2437, 1.442695
        %v2439 = vpow.pop %v2438
        %v2440 = vadd.f32 %v2439, 1.0
        %v2441 = vrcp.pop %v2440
        %v2442 = vmul.f32 1.0, %v2441
        %v2443 = vxor.u32 %v2434, 2147483648
        %v2444 = vmul.f32 %v2443, 1.442695
        %v2445 = vpow.pop %v2444
        %v2446 = vadd.f32 %v2445, 1.0
        %v2447 = vrcp.pop %v2446
        %v2448 = vmul.f32 1.0, %v2447
        %v2449 = vtanh.pop %v2435
        %v2450 = vxor.u32 %v2436, 2147483648
        %v2451 = vmul.f32 %v2450, 1.442695
        %v2452 = vpow.pop %v2451
        %v2453 = vadd.f32 %v2452, 1.0
        %v2454 = vrcp.pop %v2453
        %v2455 = vmul.f32 1.0, %v2454
        %v2456 = vmul.f32 %v2448, %v2217
        %v2457 = vmul.f32 %v2442, %v2449
        %v2458 = vadd.f32 %v2456, %v2457
        %v2459 = vtanh.pop %v2458
        %v2460 = vmul.f32 %v2455, %v2459
        %s2461 = scalar_lea.vmem [#allocation5], 40
        %2462 = vst [vmem:[%s2461] sm:$0xff] %v2460
        %s2463 = scalar_lea.vmem [#allocation4], 192
        %v2464 = vld [vmem:[%s2463] sm:$0xff]
        %v2465 = vld [vmem:[%s2463 + $0x8] sm:$0xff]
        %v2466 = vld [vmem:[%s2463 + $0x10] sm:$0xff]
        %v2467 = vld [vmem:[%s2463 + $0x18] sm:$0xff]
        %v2468 = vld [vmem:[#allocation14] sm:$0xff]
        %v2469 = vld [vmem:[#allocation14 + $0x8] sm:$0xff]
        %v2470 = vld [vmem:[#allocation14 + $0x10] sm:$0xff]
        %v2471 = vld [vmem:[#allocation14 + $0x18] sm:$0xff]
        %v2472 = vld [vmem:[#allocation14 + $0x20] sm:$0xff]
        %v2473 = vld [vmem:[#allocation14 + $0x28] sm:$0xff]
        %v2474 = vld [vmem:[#allocation14 + $0x30] sm:$0xff]
        %v2475 = vld [vmem:[#allocation14 + $0x38] sm:$0xff]
        %v2476 = vld [vmem:[#allocation14 + $0x40] sm:$0xff]
        %v2477 = vld [vmem:[#allocation14 + $0x48] sm:$0xff]
        %v2478 = vld [vmem:[#allocation14 + $0x50] sm:$0xff]
        %v2479 = vld [vmem:[#allocation14 + $0x58] sm:$0xff]
        %v2480 = vld [vmem:[#allocation14 + $0x60] sm:$0xff]
        %v2481 = vld [vmem:[#allocation14 + $0x68] sm:$0xff]
        %v2482 = vld [vmem:[#allocation14 + $0x70] sm:$0xff]
        %v2483 = vld [vmem:[#allocation14 + $0x78] sm:$0xff]
        %v2484 = vld [vmem:[#allocation14 + $0x80] sm:$0xff]
        %v2485 = vld [vmem:[#allocation14 + $0x88] sm:$0xff]
        %v2486 = vld [vmem:[#allocation14 + $0x90] sm:$0xff]
        %v2487 = vld [vmem:[#allocation14 + $0x98] sm:$0xff]
        %v2488 = vld [vmem:[#allocation14 + $0xa0] sm:$0xff]
        %v2489 = vld [vmem:[#allocation14 + $0xa8] sm:$0xff]
        %v2490 = vld [vmem:[#allocation14 + $0xb0] sm:$0xff]
        %v2491 = vld [vmem:[#allocation14 + $0xb8] sm:$0xff]
        %v2492 = vld [vmem:[#allocation14 + $0xc0] sm:$0xff]
        %v2493 = vld [vmem:[#allocation14 + $0xc8] sm:$0xff]
        %v2494 = vld [vmem:[#allocation14 + $0xd0] sm:$0xff]
        %v2495 = vld [vmem:[#allocation14 + $0xd8] sm:$0xff]
        %v2496 = vld [vmem:[#allocation14 + $0xe0] sm:$0xff]
        %v2497 = vld [vmem:[#allocation14 + $0xe8] sm:$0xff]
        %v2498 = vld [vmem:[#allocation14 + $0xf0] sm:$0xff]
        %v2499 = vld [vmem:[#allocation14 + $0xf8] sm:$0xff]
        %v2500 = vld [vmem:[#allocation14 + $0x100] sm:$0xff]
        %v2501 = vld [vmem:[#allocation14 + $0x108] sm:$0xff]
        %v2502 = vld [vmem:[#allocation14 + $0x110] sm:$0xff]
        %v2503 = vld [vmem:[#allocation14 + $0x118] sm:$0xff]
        %v2504 = vld [vmem:[#allocation14 + $0x120] sm:$0xff]
        %v2505 = vld [vmem:[#allocation14 + $0x128] sm:$0xff]
        %v2506 = vld [vmem:[#allocation14 + $0x130] sm:$0xff]
        %v2507 = vld [vmem:[#allocation14 + $0x138] sm:$0xff]
        %v2508 = vld [vmem:[#allocation14 + $0x140] sm:$0xff]
        %v2509 = vld [vmem:[#allocation14 + $0x148] sm:$0xff]
        %v2510 = vld [vmem:[#allocation14 + $0x150] sm:$0xff]
        %v2511 = vld [vmem:[#allocation14 + $0x158] sm:$0xff]
        %v2512 = vld [vmem:[#allocation14 + $0x160] sm:$0xff]
        %v2513 = vld [vmem:[#allocation14 + $0x168] sm:$0xff]
        %v2514 = vld [vmem:[#allocation14 + $0x170] sm:$0xff]
        %v2515 = vld [vmem:[#allocation14 + $0x178] sm:$0xff]
        %v2516 = vld [vmem:[#allocation14 + $0x180] sm:$0xff]
        %v2517 = vld [vmem:[#allocation14 + $0x188] sm:$0xff]
        %v2518 = vld [vmem:[#allocation14 + $0x190] sm:$0xff]
        %v2519 = vld [vmem:[#allocation14 + $0x198] sm:$0xff]
        %v2520 = vld [vmem:[#allocation14 + $0x1a0] sm:$0xff]
        %v2521 = vld [vmem:[#allocation14 + $0x1a8] sm:$0xff]
        %v2522 = vld [vmem:[#allocation14 + $0x1b0] sm:$0xff]
        %v2523 = vld [vmem:[#allocation14 + $0x1b8] sm:$0xff]
        %v2524 = vld [vmem:[#allocation14 + $0x1c0] sm:$0xff]
        %v2525 = vld [vmem:[#allocation14 + $0x1c8] sm:$0xff]
        %v2526 = vld [vmem:[#allocation14 + $0x1d0] sm:$0xff]
        %v2527 = vld [vmem:[#allocation14 + $0x1d8] sm:$0xff]
        %v2528 = vld [vmem:[#allocation14 + $0x1e0] sm:$0xff]
        %v2529 = vld [vmem:[#allocation14 + $0x1e8] sm:$0xff]
        %v2530 = vld [vmem:[#allocation14 + $0x1f0] sm:$0xff]
        %v2531 = vld [vmem:[#allocation14 + $0x1f8] sm:$0xff]
        %2532 = vmatprep.subr.mxu0 %v2469
        %2533 = vmatpush1.msra.mxu0 %v2468
        %2534 = vmatprep.subr.mxu0 %v2473
        %2535 = vmatpush1.msra.mxu0 %v2472
        %2536 = vmatprep.subr.mxu0 %v2477
        %2537 = vmatpush1.msra.mxu0 %v2476
        %2538 = vmatprep.subr.mxu0 %v2481
        %2539 = vmatpush1.msra.mxu0 %v2480
        %2540 = vmatprep.subr.mxu0 %v2485
        %2541 = vmatpush1.msra.mxu0 %v2484
        %2542 = vmatprep.subr.mxu0 %v2489
        %2543 = vmatpush1.msra.mxu0 %v2488
        %2544 = vmatprep.subr.mxu0 %v2493
        %2545 = vmatpush1.msra.mxu0 %v2492
        %2546 = vmatprep.subr.mxu0 %v2497
        %2547 = vmatpush1.msra.mxu0 %v2496
        %2548 = vmatprep.subr.mxu0 %v2501
        %2549 = vmatpush1.msra.mxu0 %v2500
        %2550 = vmatprep.subr.mxu0 %v2505
        %2551 = vmatpush1.msra.mxu0 %v2504
        %2552 = vmatprep.subr.mxu0 %v2509
        %2553 = vmatpush1.msra.mxu0 %v2508
        %2554 = vmatprep.subr.mxu0 %v2513
        %2555 = vmatpush1.msra.mxu0 %v2512
        %2556 = vmatprep.subr.mxu0 %v2517
        %2557 = vmatpush1.msra.mxu0 %v2516
        %2558 = vmatprep.subr.mxu0 %v2521
        %2559 = vmatpush1.msra.mxu0 %v2520
        %2560 = vmatprep.subr.mxu0 %v2525
        %2561 = vmatpush1.msra.mxu0 %v2524
        %2562 = vmatprep.subr.mxu0 %v2529
        %2563 = vmatpush1.msra.mxu0 %v2528
        %2564 = vmatprep.subr.mxu0 0.0
        %2565 = vmatpush1.msra.mxu0 0.0
        %2566 = vmatprep.subr.mxu0 0.0
        %2567 = vmatpush1.msra.mxu0 0.0
        %2568 = vmatprep.subr.mxu0 0.0
        %2569 = vmatpush1.msra.mxu0 0.0
        %2570 = vmatprep.subr.mxu0 0.0
        %2571 = vmatpush1.msra.mxu0 0.0
        %2572 = vmatprep.subr.mxu0 0.0
        %2573 = vmatpush1.msra.mxu0 0.0
        %2574 = vmatprep.subr.mxu0 0.0
        %2575 = vmatpush1.msra.mxu0 0.0
        %2576 = vmatprep.subr.mxu0 0.0
        %2577 = vmatpush1.msra.mxu0 0.0
        %2578 = vmatprep.subr.mxu0 0.0
        %2579 = vmatpush1.msra.mxu0 0.0
        %2580 = vmatprep.subr.mxu0 0.0
        %2581 = vmatpush1.msra.mxu0 0.0
        %2582 = vmatprep.subr.mxu0 0.0
        %2583 = vmatpush1.msra.mxu0 0.0
        %2584 = vmatprep.subr.mxu0 0.0
        %2585 = vmatpush1.msra.mxu0 0.0
        %2586 = vmatprep.subr.mxu0 0.0
        %2587 = vmatpush1.msra.mxu0 0.0
        %2588 = vmatprep.subr.mxu0 0.0
        %2589 = vmatpush1.msra.mxu0 0.0
        %2590 = vmatprep.subr.mxu0 0.0
        %2591 = vmatpush1.msra.mxu0 0.0
        %2592 = vmatprep.subr.mxu0 0.0
        %2593 = vmatpush1.msra.mxu0 0.0
        %2594 = vmatprep.subr.mxu0 0.0
        %2595 = vmatpush1.msra.mxu0 0.0
        %2596 = vmatprep.mubr.f32.mxu0 0.0
        %2597 = vmatmul.mubr.f32.gmra.mrb[0].mxu0 %v2460
        %v2598 = vpop.f32.mrb[0].mxu0
        %v2599 = vadd.f32 0.0, %v2598
        %v2600 = vpop.f32.mrb[0].mxu0
        %v2601 = vadd.f32 0.0, %v2600
        %2602 = vdwg.mxu0
        %2603 = vmatprep.subr.mxu0 %v2471
        %2604 = vmatpush1.msra.mxu0 %v2470
        %2605 = vmatprep.subr.mxu0 %v2475
        %2606 = vmatpush1.msra.mxu0 %v2474
        %2607 = vmatprep.subr.mxu0 %v2479
        %2608 = vmatpush1.msra.mxu0 %v2478
        %2609 = vmatprep.subr.mxu0 %v2483
        %2610 = vmatpush1.msra.mxu0 %v2482
        %2611 = vmatprep.subr.mxu0 %v2487
        %2612 = vmatpush1.msra.mxu0 %v2486
        %2613 = vmatprep.subr.mxu0 %v2491
        %2614 = vmatpush1.msra.mxu0 %v2490
        %2615 = vmatprep.subr.mxu0 %v2495
        %2616 = vmatpush1.msra.mxu0 %v2494
        %2617 = vmatprep.subr.mxu0 %v2499
        %2618 = vmatpush1.msra.mxu0 %v2498
        %2619 = vmatprep.subr.mxu0 %v2503
        %2620 = vmatpush1.msra.mxu0 %v2502
        %2621 = vmatprep.subr.mxu0 %v2507
        %2622 = vmatpush1.msra.mxu0 %v2506
        %2623 = vmatprep.subr.mxu0 %v2511
        %2624 = vmatpush1.msra.mxu0 %v2510
        %2625 = vmatprep.subr.mxu0 %v2515
        %2626 = vmatpush1.msra.mxu0 %v2514
        %2627 = vmatprep.subr.mxu0 %v2519
        %2628 = vmatpush1.msra.mxu0 %v2518
        %2629 = vmatprep.subr.mxu0 %v2523
        %2630 = vmatpush1.msra.mxu0 %v2522
        %2631 = vmatprep.subr.mxu0 %v2527
        %2632 = vmatpush1.msra.mxu0 %v2526
        %2633 = vmatprep.subr.mxu0 %v2531
        %2634 = vmatpush1.msra.mxu0 %v2530
        %2635 = vmatprep.subr.mxu0 0.0
        %2636 = vmatpush1.msra.mxu0 0.0
        %2637 = vmatprep.subr.mxu0 0.0
        %2638 = vmatpush1.msra.mxu0 0.0
        %2639 = vmatprep.subr.mxu0 0.0
        %2640 = vmatpush1.msra.mxu0 0.0
        %2641 = vmatprep.subr.mxu0 0.0
        %2642 = vmatpush1.msra.mxu0 0.0
        %2643 = vmatprep.subr.mxu0 0.0
        %2644 = vmatpush1.msra.mxu0 0.0
        %2645 = vmatprep.subr.mxu0 0.0
        %2646 = vmatpush1.msra.mxu0 0.0
        %2647 = vmatprep.subr.mxu0 0.0
        %2648 = vmatpush1.msra.mxu0 0.0
        %2649 = vmatprep.subr.mxu0 0.0
        %2650 = vmatpush1.msra.mxu0 0.0
        %2651 = vmatprep.subr.mxu0 0.0
        %2652 = vmatpush1.msra.mxu0 0.0
        %2653 = vmatprep.subr.mxu0 0.0
        %2654 = vmatpush1.msra.mxu0 0.0
        %2655 = vmatprep.subr.mxu0 0.0
        %2656 = vmatpush1.msra.mxu0 0.0
        %2657 = vmatprep.subr.mxu0 0.0
        %2658 = vmatpush1.msra.mxu0 0.0
        %2659 = vmatprep.subr.mxu0 0.0
        %2660 = vmatpush1.msra.mxu0 0.0
        %2661 = vmatprep.subr.mxu0 0.0
        %2662 = vmatpush1.msra.mxu0 0.0
        %2663 = vmatprep.subr.mxu0 0.0
        %2664 = vmatpush1.msra.mxu0 0.0
        %2665 = vmatprep.subr.mxu0 0.0
        %2666 = vmatpush1.msra.mxu0 0.0
        %2667 = vmatprep.mubr.f32.mxu0 0.0
        %2668 = vmatmul.mubr.f32.gmra.mrb[0].mxu0 %v2460
        %v2669 = vpop.f32.mrb[0].mxu0
        %v2670 = vadd.f32 0.0, %v2669
        %v2671 = vpop.f32.mrb[0].mxu0
        %v2672 = vadd.f32 0.0, %v2671
        %2673 = vdwg.mxu0
        %v2674 = vadd.f32 %v2464, %v2599
        %v2675 = vadd.f32 %v2465, %v2601
        %v2676 = vadd.f32 %v2466, %v2670
        %v2677 = vadd.f32 %v2467, %v2672
        %v2678 = vxor.u32 %v2674, 2147483648
        %v2679 = vmul.f32 %v2678, 1.442695
        %v2680 = vpow.pop %v2679
        %v2681 = vadd.f32 %v2680, 1.0
        %v2682 = vrcp.pop %v2681
        %v2683 = vmul.f32 1.0, %v2682
        %v2684 = vxor.u32 %v2675, 2147483648
        %v2685 = vmul.f32 %v2684, 1.442695
        %v2686 = vpow.pop %v2685
        %v2687 = vadd.f32 %v2686, 1.0
        %v2688 = vrcp.pop %v2687
        %v2689 = vmul.f32 1.0, %v2688
        %v2690 = vtanh.pop %v2676
        %v2691 = vxor.u32 %v2677, 2147483648
        %v2692 = vmul.f32 %v2691, 1.442695
        %v2693 = vpow.pop %v2692
        %v2694 = vadd.f32 %v2693, 1.0
        %v2695 = vrcp.pop %v2694
        %v2696 = vmul.f32 1.0, %v2695
        %v2697 = vmul.f32 %v2689, %v2458
        %v2698 = vmul.f32 %v2683, %v2690
        %v2699 = vadd.f32 %v2697, %v2698
        %v2700 = vtanh.pop %v2699
        %v2701 = vmul.f32 %v2696, %v2700
        %s2702 = scalar_lea.vmem [#allocation5], 48
        %2703 = vst [vmem:[%s2702] sm:$0xff] %v2701
        %s2704 = scalar_lea.vmem [#allocation4], 224
        %v2705 = vld [vmem:[%s2704] sm:$0xff]
        %v2706 = vld [vmem:[%s2704 + $0x8] sm:$0xff]
        %v2707 = vld [vmem:[%s2704 + $0x10] sm:$0xff]
        %v2708 = vld [vmem:[%s2704 + $0x18] sm:$0xff]
        %v2709 = vld [vmem:[#allocation14] sm:$0xff]
        %v2710 = vld [vmem:[#allocation14 + $0x8] sm:$0xff]
        %v2711 = vld [vmem:[#allocation14 + $0x10] sm:$0xff]
        %v2712 = vld [vmem:[#allocation14 + $0x18] sm:$0xff]
        %v2713 = vld [vmem:[#allocation14 + $0x20] sm:$0xff]
        %v2714 = vld [vmem:[#allocation14 + $0x28] sm:$0xff]
        %v2715 = vld [vmem:[#allocation14 + $0x30] sm:$0xff]
        %v2716 = vld [vmem:[#allocation14 + $0x38] sm:$0xff]
        %v2717 = vld [vmem:[#allocation14 + $0x40] sm:$0xff]
        %v2718 = vld [vmem:[#allocation14 + $0x48] sm:$0xff]
        %v2719 = vld [vmem:[#allocation14 + $0x50] sm:$0xff]
        %v2720 = vld [vmem:[#allocation14 + $0x58] sm:$0xff]
        %v2721 = vld [vmem:[#allocation14 + $0x60] sm:$0xff]
        %v2722 = vld [vmem:[#allocation14 + $0x68] sm:$0xff]
        %v2723 = vld [vmem:[#allocation14 + $0x70] sm:$0xff]
        %v2724 = vld [vmem:[#allocation14 + $0x78] sm:$0xff]
        %v2725 = vld [vmem:[#allocation14 + $0x80] sm:$0xff]
        %v2726 = vld [vmem:[#allocation14 + $0x88] sm:$0xff]
        %v2727 = vld [vmem:[#allocation14 + $0x90] sm:$0xff]
        %v2728 = vld [vmem:[#allocation14 + $0x98] sm:$0xff]
        %v2729 = vld [vmem:[#allocation14 + $0xa0] sm:$0xff]
        %v2730 = vld [vmem:[#allocation14 + $0xa8] sm:$0xff]
        %v2731 = vld [vmem:[#allocation14 + $0xb0] sm:$0xff]
        %v2732 = vld [vmem:[#allocation14 + $0xb8] sm:$0xff]
        %v2733 = vld [vmem:[#allocation14 + $0xc0] sm:$0xff]
        %v2734 = vld [vmem:[#allocation14 + $0xc8] sm:$0xff]
        %v2735 = vld [vmem:[#allocation14 + $0xd0] sm:$0xff]
        %v2736 = vld [vmem:[#allocation14 + $0xd8] sm:$0xff]
        %v2737 = vld [vmem:[#allocation14 + $0xe0] sm:$0xff]
        %v2738 = vld [vmem:[#allocation14 + $0xe8] sm:$0xff]
        %v2739 = vld [vmem:[#allocation14 + $0xf0] sm:$0xff]
        %v2740 = vld [vmem:[#allocation14 + $0xf8] sm:$0xff]
        %v2741 = vld [vmem:[#allocation14 + $0x100] sm:$0xff]
        %v2742 = vld [vmem:[#allocation14 + $0x108] sm:$0xff]
        %v2743 = vld [vmem:[#allocation14 + $0x110] sm:$0xff]
        %v2744 = vld [vmem:[#allocation14 + $0x118] sm:$0xff]
        %v2745 = vld [vmem:[#allocation14 + $0x120] sm:$0xff]
        %v2746 = vld [vmem:[#allocation14 + $0x128] sm:$0xff]
        %v2747 = vld [vmem:[#allocation14 + $0x130] sm:$0xff]
        %v2748 = vld [vmem:[#allocation14 + $0x138] sm:$0xff]
        %v2749 = vld [vmem:[#allocation14 + $0x140] sm:$0xff]
        %v2750 = vld [vmem:[#allocation14 + $0x148] sm:$0xff]
        %v2751 = vld [vmem:[#allocation14 + $0x150] sm:$0xff]
        %v2752 = vld [vmem:[#allocation14 + $0x158] sm:$0xff]
        %v2753 = vld [vmem:[#allocation14 + $0x160] sm:$0xff]
        %v2754 = vld [vmem:[#allocation14 + $0x168] sm:$0xff]
        %v2755 = vld [vmem:[#allocation14 + $0x170] sm:$0xff]
        %v2756 = vld [vmem:[#allocation14 + $0x178] sm:$0xff]
        %v2757 = vld [vmem:[#allocation14 + $0x180] sm:$0xff]
        %v2758 = vld [vmem:[#allocation14 + $0x188] sm:$0xff]
        %v2759 = vld [vmem:[#allocation14 + $0x190] sm:$0xff]
        %v2760 = vld [vmem:[#allocation14 + $0x198] sm:$0xff]
        %v2761 = vld [vmem:[#allocation14 + $0x1a0] sm:$0xff]
        %v2762 = vld [vmem:[#allocation14 + $0x1a8] sm:$0xff]
        %v2763 = vld [vmem:[#allocation14 + $0x1b0] sm:$0xff]
        %v2764 = vld [vmem:[#allocation14 + $0x1b8] sm:$0xff]
        %v2765 = vld [vmem:[#allocation14 + $0x1c0] sm:$0xff]
        %v2766 = vld [vmem:[#allocation14 + $0x1c8] sm:$0xff]
        %v2767 = vld [vmem:[#allocation14 + $0x1d0] sm:$0xff]
        %v2768 = vld [vmem:[#allocation14 + $0x1d8] sm:$0xff]
        %v2769 = vld [vmem:[#allocation14 + $0x1e0] sm:$0xff]
        %v2770 = vld [vmem:[#allocation14 + $0x1e8] sm:$0xff]
        %v2771 = vld [vmem:[#allocation14 + $0x1f0] sm:$0xff]
        %v2772 = vld [vmem:[#allocation14 + $0x1f8] sm:$0xff]
        %2773 = vmatprep.subr.mxu0 %v2710
        %2774 = vmatpush1.msra.mxu0 %v2709
        %2775 = vmatprep.subr.mxu0 %v2714
        %2776 = vmatpush1.msra.mxu0 %v2713
        %2777 = vmatprep.subr.mxu0 %v2718
        %2778 = vmatpush1.msra.mxu0 %v2717
        %2779 = vmatprep.subr.mxu0 %v2722
        %2780 = vmatpush1.msra.mxu0 %v2721
        %2781 = vmatprep.subr.mxu0 %v2726
        %2782 = vmatpush1.msra.mxu0 %v2725
        %2783 = vmatprep.subr.mxu0 %v2730
        %2784 = vmatpush1.msra.mxu0 %v2729
        %2785 = vmatprep.subr.mxu0 %v2734
        %2786 = vmatpush1.msra.mxu0 %v2733
        %2787 = vmatprep.subr.mxu0 %v2738
        %2788 = vmatpush1.msra.mxu0 %v2737
        %2789 = vmatprep.subr.mxu0 %v2742
        %2790 = vmatpush1.msra.mxu0 %v2741
        %2791 = vmatprep.subr.mxu0 %v2746
        %2792 = vmatpush1.msra.mxu0 %v2745
        %2793 = vmatprep.subr.mxu0 %v2750
        %2794 = vmatpush1.msra.mxu0 %v2749
        %2795 = vmatprep.subr.mxu0 %v2754
        %2796 = vmatpush1.msra.mxu0 %v2753
        %2797 = vmatprep.subr.mxu0 %v2758
        %2798 = vmatpush1.msra.mxu0 %v2757
        %2799 = vmatprep.subr.mxu0 %v2762
        %2800 = vmatpush1.msra.mxu0 %v2761
        %2801 = vmatprep.subr.mxu0 %v2766
        %2802 = vmatpush1.msra.mxu0 %v2765
        %2803 = vmatprep.subr.mxu0 %v2770
        %2804 = vmatpush1.msra.mxu0 %v2769
        %2805 = vmatprep.subr.mxu0 0.0
        %2806 = vmatpush1.msra.mxu0 0.0
        %2807 = vmatprep.subr.mxu0 0.0
        %2808 = vmatpush1.msra.mxu0 0.0
        %2809 = vmatprep.subr.mxu0 0.0
        %2810 = vmatpush1.msra.mxu0 0.0
        %2811 = vmatprep.subr.mxu0 0.0
        %2812 = vmatpush1.msra.mxu0 0.0
        %2813 = vmatprep.subr.mxu0 0.0
        %2814 = vmatpush1.msra.mxu0 0.0
        %2815 = vmatprep.subr.mxu0 0.0
        %2816 = vmatpush1.msra.mxu0 0.0
        %2817 = vmatprep.subr.mxu0 0.0
        %2818 = vmatpush1.msra.mxu0 0.0
        %2819 = vmatprep.subr.mxu0 0.0
        %2820 = vmatpush1.msra.mxu0 0.0
        %2821 = vmatprep.subr.mxu0 0.0
        %2822 = vmatpush1.msra.mxu0 0.0
        %2823 = vmatprep.subr.mxu0 0.0
        %2824 = vmatpush1.msra.mxu0 0.0
        %2825 = vmatprep.subr.mxu0 0.0
        %2826 = vmatpush1.msra.mxu0 0.0
        %2827 = vmatprep.subr.mxu0 0.0
        %2828 = vmatpush1.msra.mxu0 0.0
        %2829 = vmatprep.subr.mxu0 0.0
        %2830 = vmatpush1.msra.mxu0 0.0
        %2831 = vmatprep.subr.mxu0 0.0
        %2832 = vmatpush1.msra.mxu0 0.0
        %2833 = vmatprep.subr.mxu0 0.0
        %2834 = vmatpush1.msra.mxu0 0.0
        %2835 = vmatprep.subr.mxu0 0.0
        %2836 = vmatpush1.msra.mxu0 0.0
        %2837 = vmatprep.mubr.f32.mxu0 0.0
        %2838 = vmatmul.mubr.f32.gmra.mrb[0].mxu0 %v2701
        %v2839 = vpop.f32.mrb[0].mxu0
        %v2840 = vadd.f32 0.0, %v2839
        %v2841 = vpop.f32.mrb[0].mxu0
        %v2842 = vadd.f32 0.0, %v2841
        %2843 = vdwg.mxu0
        %2844 = vmatprep.subr.mxu0 %v2712
        %2845 = vmatpush1.msra.mxu0 %v2711
        %2846 = vmatprep.subr.mxu0 %v2716
        %2847 = vmatpush1.msra.mxu0 %v2715
        %2848 = vmatprep.subr.mxu0 %v2720
        %2849 = vmatpush1.msra.mxu0 %v2719
        %2850 = vmatprep.subr.mxu0 %v2724
        %2851 = vmatpush1.msra.mxu0 %v2723
        %2852 = vmatprep.subr.mxu0 %v2728
        %2853 = vmatpush1.msra.mxu0 %v2727
        %2854 = vmatprep.subr.mxu0 %v2732
        %2855 = vmatpush1.msra.mxu0 %v2731
        %2856 = vmatprep.subr.mxu0 %v2736
        %2857 = vmatpush1.msra.mxu0 %v2735
        %2858 = vmatprep.subr.mxu0 %v2740
        %2859 = vmatpush1.msra.mxu0 %v2739
        %2860 = vmatprep.subr.mxu0 %v2744
        %2861 = vmatpush1.msra.mxu0 %v2743
        %2862 = vmatprep.subr.mxu0 %v2748
        %2863 = vmatpush1.msra.mxu0 %v2747
        %2864 = vmatprep.subr.mxu0 %v2752
        %2865 = vmatpush1.msra.mxu0 %v2751
        %2866 = vmatprep.subr.mxu0 %v2756
        %2867 = vmatpush1.msra.mxu0 %v2755
        %2868 = vmatprep.subr.mxu0 %v2760
        %2869 = vmatpush1.msra.mxu0 %v2759
        %2870 = vmatprep.subr.mxu0 %v2764
        %2871 = vmatpush1.msra.mxu0 %v2763
        %2872 = vmatprep.subr.mxu0 %v2768
        %2873 = vmatpush1.msra.mxu0 %v2767
        %2874 = vmatprep.subr.mxu0 %v2772
        %2875 = vmatpush1.msra.mxu0 %v2771
        %2876 = vmatprep.subr.mxu0 0.0
        %2877 = vmatpush1.msra.mxu0 0.0
        %2878 = vmatprep.subr.mxu0 0.0
        %2879 = vmatpush1.msra.mxu0 0.0
        %2880 = vmatprep.subr.mxu0 0.0
        %2881 = vmatpush1.msra.mxu0 0.0
        %2882 = vmatprep.subr.mxu0 0.0
        %2883 = vmatpush1.msra.mxu0 0.0
        %2884 = vmatprep.subr.mxu0 0.0
        %2885 = vmatpush1.msra.mxu0 0.0
        %2886 = vmatprep.subr.mxu0 0.0
        %2887 = vmatpush1.msra.mxu0 0.0
        %2888 = vmatprep.subr.mxu0 0.0
        %2889 = vmatpush1.msra.mxu0 0.0
        %2890 = vmatprep.subr.mxu0 0.0
        %2891 = vmatpush1.msra.mxu0 0.0
        %2892 = vmatprep.subr.mxu0 0.0
        %2893 = vmatpush1.msra.mxu0 0.0
        %2894 = vmatprep.subr.mxu0 0.0
        %2895 = vmatpush1.msra.mxu0 0.0
        %2896 = vmatprep.subr.mxu0 0.0
        %2897 = vmatpush1.msra.mxu0 0.0
        %2898 = vmatprep.subr.mxu0 0.0
        %2899 = vmatpush1.msra.mxu0 0.0
        %2900 = vmatprep.subr.mxu0 0.0
        %2901 = vmatpush1.msra.mxu0 0.0
        %2902 = vmatprep.subr.mxu0 0.0
        %2903 = vmatpush1.msra.mxu0 0.0
        %2904 = vmatprep.subr.mxu0 0.0
        %2905 = vmatpush1.msra.mxu0 0.0
        %2906 = vmatprep.subr.mxu0 0.0
        %2907 = vmatpush1.msra.mxu0 0.0
        %2908 = vmatprep.mubr.f32.mxu0 0.0
        %2909 = vmatmul.mubr.f32.gmra.mrb[0].mxu0 %v2701
        %v2910 = vpop.f32.mrb[0].mxu0
        %v2911 = vadd.f32 0.0, %v2910
        %v2912 = vpop.f32.mrb[0].mxu0
        %v2913 = vadd.f32 0.0, %v2912
        %2914 = vdwg.mxu0
        %v2915 = vadd.f32 %v2705, %v2840
        %v2916 = vadd.f32 %v2706, %v2842
        %v2917 = vadd.f32 %v2707, %v2911
        %v2918 = vadd.f32 %v2708, %v2913
        %v2919 = vxor.u32 %v2915, 2147483648
        %v2920 = vmul.f32 %v2919, 1.442695
        %v2921 = vpow.pop %v2920
        %v2922 = vadd.f32 %v2921, 1.0
        %v2923 = vrcp.pop %v2922
        %v2924 = vmul.f32 1.0, %v2923
        %v2925 = vxor.u32 %v2916, 2147483648
        %v2926 = vmul.f32 %v2925, 1.442695
        %v2927 = vpow.pop %v2926
        %v2928 = vadd.f32 %v2927, 1.0
        %v2929 = vrcp.pop %v2928
        %v2930 = vmul.f32 1.0, %v2929
        %v2931 = vtanh.pop %v2917
        %v2932 = vxor.u32 %v2918, 2147483648
        %v2933 = vmul.f32 %v2932, 1.442695
        %v2934 = vpow.pop %v2933
        %v2935 = vadd.f32 %v2934, 1.0
        %v2936 = vrcp.pop %v2935
        %v2937 = vmul.f32 1.0, %v2936
        %v2938 = vmul.f32 %v2930, %v2699
        %v2939 = vmul.f32 %v2924, %v2931
        %v2940 = vadd.f32 %v2938, %v2939
        %v2941 = vtanh.pop %v2940
        %v2942 = vmul.f32 %v2937, %v2941
        %s2943 = scalar_lea.vmem [#allocation5], 56
        %2944 = vst [vmem:[%s2943] sm:$0xff] %v2942
        %2945 = vst [vmem:[#allocation2] sm:$0xff] %v2942
        %2946 = vst [vmem:[#allocation3] sm:$0xff] %v2940
        %2947 = vst [vmem:[%s502] sm:$0xff] %v2942
        %2948 = vst [vmem:[%s509] sm:$0xff] %v2940
        %v2949 = vld [vmem:[#allocation5] sm:$0xff]
        %v2950 = vld [vmem:[#allocation5 + $0x8] sm:$0xff]
        %v2951 = vld [vmem:[#allocation5 + $0x10] sm:$0xff]
        %v2952 = vld [vmem:[#allocation5 + $0x18] sm:$0xff]
        %v2953 = vld [vmem:[#allocation5 + $0x20] sm:$0xff]
        %v2954 = vld [vmem:[#allocation5 + $0x28] sm:$0xff]
        %v2955 = vld [vmem:[#allocation5 + $0x30] sm:$0xff]
        %v2956 = vld [vmem:[#allocation5 + $0x38] sm:$0xff]
        %v2957 = vld [vmem:[#allocation17] sm:$0xff]
        %v2958 = vld [vmem:[#allocation17 + $0x8] sm:$0xff]
        %v2959 = vld [vmem:[#allocation17 + $0x10] sm:$0xff]
        %v2960 = vld [vmem:[#allocation17 + $0x18] sm:$0xff]
        %v2961 = vld [vmem:[#allocation17 + $0x20] sm:$0xff]
        %v2962 = vld [vmem:[#allocation17 + $0x28] sm:$0xff]
        %v2963 = vld [vmem:[#allocation17 + $0x30] sm:$0xff]
        %v2964 = vld [vmem:[#allocation17 + $0x38] sm:$0xff]
        %v2965 = vld [vmem:[#allocation17 + $0x40] sm:$0xff]
        %v2966 = vld [vmem:[#allocation17 + $0x48] sm:$0xff]
        %v2967 = vld [vmem:[#allocation17 + $0x50] sm:$0xff]
        %v2968 = vld [vmem:[#allocation17 + $0x58] sm:$0xff]
        %v2969 = vld [vmem:[#allocation17 + $0x60] sm:$0xff]
        %v2970 = vld [vmem:[#allocation17 + $0x68] sm:$0xff]
        %v2971 = vld [vmem:[#allocation17 + $0x70] sm:$0xff]
        %v2972 = vld [vmem:[#allocation17 + $0x78] sm:$0xff]
        %v2973 = vld [vmem:[#allocation18] sm:$0x1]
        %v2975 = vlaneseq
        %v2976 = vshrl.u32 %v2975, 7
        %v2977 = vsub.s32 0, %v2976
        %v2978 = vrot.slane %v2973, %v2977
        %2980 = vmatprep.subr.mxu0 0.0
        %2981 = vmatpush1.msra.mxu0 %v2957
        %2982 = vmatprep.subr.mxu0 0.0
        %2983 = vmatpush1.msra.mxu0 %v2958
        %2984 = vmatprep.subr.mxu0 0.0
        %2985 = vmatpush1.msra.mxu0 %v2959
        %2986 = vmatprep.subr.mxu0 0.0
        %2987 = vmatpush1.msra.mxu0 %v2960
        %2988 = vmatprep.subr.mxu0 0.0
        %2989 = vmatpush1.msra.mxu0 %v2961
        %2990 = vmatprep.subr.mxu0 0.0
        %2991 = vmatpush1.msra.mxu0 %v2962
        %2992 = vmatprep.subr.mxu0 0.0
        %2993 = vmatpush1.msra.mxu0 %v2963
        %2994 = vmatprep.subr.mxu0 0.0
        %2995 = vmatpush1.msra.mxu0 %v2964
        %2996 = vmatprep.subr.mxu0 0.0
        %2997 = vmatpush1.msra.mxu0 %v2965
        %2998 = vmatprep.subr.mxu0 0.0
        %2999 = vmatpush1.msra.mxu0 %v2966
        %3000 = vmatprep.subr.mxu0 0.0
        %3001 = vmatpush1.msra.mxu0 %v2967
        %3002 = vmatprep.subr.mxu0 0.0
        %3003 = vmatpush1.msra.mxu0 %v2968
        %3004 = vmatprep.subr.mxu0 0.0
        %3005 = vmatpush1.msra.mxu0 %v2969
        %3006 = vmatprep.subr.mxu0 0.0
        %3007 = vmatpush1.msra.mxu0 %v2970
        %3008 = vmatprep.subr.mxu0 0.0
        %3009 = vmatpush1.msra.mxu0 %v2971
        %3010 = vmatprep.subr.mxu0 0.0
        %3011 = vmatpush1.msra.mxu0 %v2972
        %3012 = vmatprep.subr.mxu0 0.0
        %3013 = vmatpush1.msra.mxu0 0.0
        %3014 = vmatprep.subr.mxu0 0.0
        %3015 = vmatpush1.msra.mxu0 0.0
        %3016 = vmatprep.subr.mxu0 0.0
        %3017 = vmatpush1.msra.mxu0 0.0
        %3018 = vmatprep.subr.mxu0 0.0
        %3019 = vmatpush1.msra.mxu0 0.0
        %3020 = vmatprep.subr.mxu0 0.0
        %3021 = vmatpush1.msra.mxu0 0.0
        %3022 = vmatprep.subr.mxu0 0.0
        %3023 = vmatpush1.msra.mxu0 0.0
        %3024 = vmatprep.subr.mxu0 0.0
        %3025 = vmatpush1.msra.mxu0 0.0
        %3026 = vmatprep.subr.mxu0 0.0
        %3027 = vmatpush1.msra.mxu0 0.0
        %3028 = vmatprep.subr.mxu0 0.0
        %3029 = vmatpush1.msra.mxu0 0.0
        %3030 = vmatprep.subr.mxu0 0.0
        %3031 = vmatpush1.msra.mxu0 0.0
        %3032 = vmatprep.subr.mxu0 0.0
        %3033 = vmatpush1.msra.mxu0 0.0
        %3034 = vmatprep.subr.mxu0 0.0
        %3035 = vmatpush1.msra.mxu0 0.0
        %3036 = vmatprep.subr.mxu0 0.0
        %3037 = vmatpush1.msra.mxu0 0.0
        %3038 = vmatprep.subr.mxu0 0.0
        %3039 = vmatpush1.msra.mxu0 0.0
        %3040 = vmatprep.subr.mxu0 0.0
        %3041 = vmatpush1.msra.mxu0 0.0
        %3042 = vmatprep.subr.mxu0 0.0
        %3043 = vmatpush1.msra.mxu0 0.0
        %3044 = vmatprep.mubr.f32.mxu0 0.0
        %3045 = vmatmul.mubr.f32.gmra.mrb[0].mxu0 %v2949
        %v3046 = vpop.f32.mrb[0].mxu0
        %v3047 = vadd.f32 %v2978, %v3046
        %v3048 = vpop.f32.mrb[0].mxu0
        %3049 = vmatprep.mubr.f32.mxu0 0.0
        %3050 = vmatmul.mubr.f32.gmra.mrb[0].mxu0 %v2950
        %v3051 = vpop.f32.mrb[0].mxu0
        %v3052 = vadd.f32 %v2978, %v3051
        %v3053 = vpop.f32.mrb[0].mxu0
        %3054 = vmatprep.mubr.f32.mxu0 0.0
        %3055 = vmatmul.mubr.f32.gmra.mrb[0].mxu0 %v2951
        %v3056 = vpop.f32.mrb[0].mxu0
        %v3057 = vadd.f32 %v2978, %v3056
        %v3058 = vpop.f32.mrb[0].mxu0
        %3059 = vmatprep.mubr.f32.mxu0 0.0
        %3060 = vmatmul.mubr.f32.gmra.mrb[0].mxu0 %v2952
        %v3061 = vpop.f32.mrb[0].mxu0
        %v3062 = vadd.f32 %v2978, %v3061
        %v3063 = vpop.f32.mrb[0].mxu0
        %3064 = vmatprep.mubr.f32.mxu0 0.0
        %3065 = vmatmul.mubr.f32.gmra.mrb[0].mxu0 %v2953
        %v3066 = vpop.f32.mrb[0].mxu0
        %v3067 = vadd.f32 %v2978, %v3066
        %v3068 = vpop.f32.mrb[0].mxu0
        %3069 = vmatprep.mubr.f32.mxu0 0.0
        %3070 = vmatmul.mubr.f32.gmra.mrb[0].mxu0 %v2954
        %v3071 = vpop.f32.mrb[0].mxu0
        %v3072 = vadd.f32 %v2978, %v3071
        %v3073 = vpop.f32.mrb[0].mxu0
        %3074 = vmatprep.mubr.f32.mxu0 0.0
        %3075 = vmatmul.mubr.f32.gmra.mrb[0].mxu0 %v2955
        %v3076 = vpop.f32.mrb[0].mxu0
        %v3077 = vadd.f32 %v2978, %v3076
        %v3078 = vpop.f32.mrb[0].mxu0
        %3079 = vmatprep.mubr.f32.mxu0 0.0
        %3080 = vmatmul.mubr.f32.gmra.mrb[0].mxu0 %v2956
        %v3081 = vpop.f32.mrb[0].mxu0
        %v3082 = vadd.f32 %v2978, %v3081
        %v3083 = vpop.f32.mrb[0].mxu0
        %3084 = vdwg.mxu0
        %vm3085 = vcmask 15360
        %3086 = vst.msk [vmem:[%s495] sm:$0xff] %vm3085, %v3047
        %3087 = vst.msk [vmem:[%s495 + $0x8] sm:$0xff] %vm3085, %v3052
        %3088 = vst.msk [vmem:[%s495 + $0x10] sm:$0xff] %vm3085, %v3057
        %3089 = vst.msk [vmem:[%s495 + $0x18] sm:$0xff] %vm3085, %v3062
        %3090 = vst.msk [vmem:[%s495 + $0x20] sm:$0xff] %vm3085, %v3067
        %3091 = vst.msk [vmem:[%s495 + $0x28] sm:$0xff] %vm3085, %v3072
        %3092 = vst.msk [vmem:[%s495 + $0x30] sm:$0xff] %vm3085, %v3077
        %3093 = vst.msk [vmem:[%s495 + $0x38] sm:$0xff] %vm3085, %v3082
        %s3094 = sand.u32 %s232, 1
        %s3095 = scalar_lea.sflag [#allocation8], %s3094
        %s3096 = sand.u32 %s232, 1
        %s3097 = smul.addr %s3096, 64
        %s3098 = scalar_lea.vmem [#allocation20], %s3097
        %s3099 = sand.u32 %s35, 1
        %s3100 = scalar_lea.sflag [#allocation22], %s3099
        %s3101 = sand.u32 %s258, 1
        %s3102 = smul.addr %s3101, 8
        %s3103 = scalar_lea.vmem [#allocation21], %s3102
        %s3104 = sand.u32 %s35, 1
        %s3105 = scalar_lea.sflag [#allocation22], %s3104
        %s3106 = sand.u32 %s284, 1
        %s3107 = smul.addr %s3106, 8
        %s3108 = scalar_lea.vmem [#allocation23], %s3107
        // Predicated region
        $region89: #{cudnn_lstm_model_lstm_kernel_forward.2} parent=51 // pred_check
          %p3109 = pneg %p242
        $region90: #{cudnn_lstm_model_lstm_kernel_forward.2} parent=51 // pred_check_branch
          %3111 = sbr.rel (%p3109) target = $region92
        $region91: #{cudnn_lstm_model_lstm_kernel_forward.2} parent=51 // pred_region
          %s3112 = smul.u32 8, %s40
          %s3114 = ssub.s32 1024, 1024
          %3115 = vsyncadd %s3095, %s3114
          %s3116 = smul.addr %s3112, 2
          %s3117 = sadd.s32 %s39, %s3116
          %s3118 = smul.addr %s3117, 128
          %s3119 = scalar_lea.hbm %s8, %s3118
          %s3120 = sshll.u32 %s3098, 4
          %s3121 = int_to_ptr.vmem [resolvable:$true] %s3120
          %3126 = dma.vmem_to_hbm [thread:$0]  %s3121, 1024, %s3119, %s3095, 128, 256, 8
        $region92: #{cudnn_lstm_model_lstm_kernel_forward.2} parent=51 // pred_fallthru
          _
        // Predicated region
        $region93: #{cudnn_lstm_model_lstm_kernel_forward.2} parent=51 // pred_check
          %p3127 = pneg %p268
        $region94: #{cudnn_lstm_model_lstm_kernel_forward.2} parent=51 // pred_check_branch
          %3129 = sbr.rel (%p3127) target = $region96
        $region95: #{cudnn_lstm_model_lstm_kernel_forward.2} parent=51 // pred_region
          %s3131 = ssub.s32 128, 128
          %3132 = vsyncadd %s3100, %s3131
          %s3133 = smul.addr %s39, 128
          %s3134 = scalar_lea.hbm %s9, %s3133
          %s3136 = sshll.u32 %s3103, 4
          %s3137 = int_to_ptr.vmem [resolvable:$true] %s3136
          %3139 = dma.vmem_to_hbm [thread:$0]  %s3137, 128, %s3134, %s3100
        $region96: #{cudnn_lstm_model_lstm_kernel_forward.2} parent=51 // pred_fallthru
          _
        // Predicated region
        $region97: #{cudnn_lstm_model_lstm_kernel_forward.2} parent=51 // pred_check
          %p3140 = pneg %p294
        $region98: #{cudnn_lstm_model_lstm_kernel_forward.2} parent=51 // pred_check_branch
          %3142 = sbr.rel (%p3140) target = $region100
        $region99: #{cudnn_lstm_model_lstm_kernel_forward.2} parent=51 // pred_region
          %s3144 = ssub.s32 128, 128
          %3145 = vsyncadd %s3105, %s3144
          %s3146 = smul.addr %s39, 128
          %s3147 = scalar_lea.hbm %s10, %s3146
          %s3149 = sshll.u32 %s3108, 4
          %s3150 = int_to_ptr.vmem [resolvable:$true] %s3149
          %3152 = dma.vmem_to_hbm [thread:$0]  %s3150, 128, %s3147, %s3105
        $region100: #{cudnn_lstm_model_lstm_kernel_forward.2} parent=51 // pred_fallthru
          _
      $region52: #{cudnn_lstm_model_lstm_kernel_forward.2} parent=5 // pred_fallthru
        _
      %p3153 = scmp.le.s32.totalorder 2, %s30
      // Predicated region
      $region101: #{cudnn_lstm_model_lstm_kernel_forward.2} parent=5 // pred_check
        %p3154 = pneg %p3153
      $region102: #{cudnn_lstm_model_lstm_kernel_forward.2} parent=5 // pred_check_branch
        %3156 = sbr.rel (%p3154) target = $region104
      $region103: #{cudnn_lstm_model_lstm_kernel_forward.2} parent=5 // pred_region
        %s3157 = ssub.s32 %s30, 2
        // Predicated region
        $region105: #{cudnn_lstm_model_lstm_kernel_forward.2} parent=103 // pred_check
          %p3158 = pneg %p248
        $region106: #{cudnn_lstm_model_lstm_kernel_forward.2} parent=103 // pred_check_branch
          %3160 = sbr.rel (%p3158) target = $region108
        $region107: #{cudnn_lstm_model_lstm_kernel_forward.2} parent=103 // pred_region
          %s3161 = sand.u32 %s233, 1
          %s3162 = scalar_lea.sflag [#allocation8], %s3161
          %s3163 = sand.u32 %s233, 1
          %s3164 = smul.addr %s3163, 64
          %s3165 = scalar_lea.vmem [#allocation20], %s3164
          %3166 = dma.done %s3162, 1024
        $region108: #{cudnn_lstm_model_lstm_kernel_forward.2} parent=103 // pred_fallthru
          _
        // Predicated region
        $region109: #{cudnn_lstm_model_lstm_kernel_forward.2} parent=103 // pred_check
          %p3167 = pneg %p274
        $region110: #{cudnn_lstm_model_lstm_kernel_forward.2} parent=103 // pred_check_branch
          %3169 = sbr.rel (%p3167) target = $region112
        $region111: #{cudnn_lstm_model_lstm_kernel_forward.2} parent=103 // pred_region
          %s3170 = sand.u32 %s36, 1
          %s3171 = scalar_lea.sflag [#allocation22], %s3170
          %s3172 = sand.u32 %s259, 1
          %s3173 = smul.addr %s3172, 8
          %s3174 = scalar_lea.vmem [#allocation21], %s3173
          %3175 = dma.done %s3171, 128
        $region112: #{cudnn_lstm_model_lstm_kernel_forward.2} parent=103 // pred_fallthru
          _
        // Predicated region
        $region113: #{cudnn_lstm_model_lstm_kernel_forward.2} parent=103 // pred_check
          %p3176 = pneg %p300
        $region114: #{cudnn_lstm_model_lstm_kernel_forward.2} parent=103 // pred_check_branch
          %3178 = sbr.rel (%p3176) target = $region116
        $region115: #{cudnn_lstm_model_lstm_kernel_forward.2} parent=103 // pred_region
          %s3179 = sand.u32 %s36, 1
          %s3180 = scalar_lea.sflag [#allocation22], %s3179
          %s3181 = sand.u32 %s285, 1
          %s3182 = smul.addr %s3181, 8
          %s3183 = scalar_lea.vmem [#allocation23], %s3182
          %3184 = dma.done %s3180, 128
        $region116: #{cudnn_lstm_model_lstm_kernel_forward.2} parent=103 // pred_fallthru
          _
      $region104: #{cudnn_lstm_model_lstm_kernel_forward.2} parent=5 // pred_fallthru
        _
    $region6: #{cudnn_lstm_model_lstm_kernel_forward.2} parent=1 // loop_footer
      %s34 = sadd.s32 1, %s30
    $region7: #{cudnn_lstm_model_lstm_kernel_forward.2} parent=1 // loop_footer_branch
      %29 = sbr.rel target = $region3
    $region8: #{cudnn_lstm_model_lstm_kernel_forward.2} parent=1 // loop_exit
      _
    %3185 = vsyncpa [#allocation7], 1
    %s3186 = scalar_lea.sflag [#allocation7], 1
    %3187 = vsyncpa %s3186, 1
    %3188 = vsyncpa [#allocation10], 1
    %3189 = vsyncpa [#allocation13], 1
    %3190 = vsyncpa [#allocation16], 1
    %3191 = vsyncpa [#allocation19], 1
    %3192 = vsyncpa [#allocation8], 1
    %s3193 = scalar_lea.sflag [#allocation8], 1
    %3194 = vsyncpa %s3193, 1
    %3195 = vsyncpa [#allocation22], 1
    %s3196 = scalar_lea.sflag [#allocation22], 1
    %3197 = vsyncpa %s3196, 1

// kernel: cudnn_lstm_model_lstm_kernel_forward.3
$region0: #{cudnn_lstm_model_lstm_kernel_forward.3}
  #allocation0 [shape = 'u32[]', space=smem, size = 0x4, offset = 0x4, fixed_abs, tag = 'smem constant byte address 0x4 - core index']
  #allocation1 [shape = 'u32[144,128]{1,0:T(1,128)}', space=vmem, size = 0x12000, scoped, tag = 'internal scratch']
  #allocation2 [shape = 'f32[8,128]{1,0:T(8,128)}', space=vmem, size = 0x1000, scoped, tag = 'scratch operand']
  #allocation3 [shape = 'f32[8,128]{1,0:T(8,128)}', space=vmem, size = 0x1000, scoped, tag = 'scratch operand']
  #allocation4 [shape = 'f32[8,8,512]{2,1,0:T(8,128)}', space=vmem, size = 0x20000, scoped, tag = 'scratch operand']
  #allocation5 [shape = 'f32[8,8,128]{2,1,0:T(8,128)}', space=vmem, size = 0x8000, scoped, tag = 'scratch operand']
  %s0 = inlined_call_operand.hbm [shape: f32[16,16,18], index: 0, kind: input, shape index: {}]
  %s1 = inlined_call_operand.hbm [shape: f32[18,128], index: 1, kind: input, shape index: {}]
  %s2 = inlined_call_operand.hbm [shape: f32[1,128], index: 2, kind: input, shape index: {}]
  %s3 = inlined_call_operand.hbm [shape: f32[128,512], index: 3, kind: input, shape index: {}]
  %s4 = inlined_call_operand.hbm [shape: f32[128,512], index: 4, kind: input, shape index: {}]
  %s5 = inlined_call_operand.hbm [shape: f32[1,512], index: 5, kind: input, shape index: {}]
  %s6 = inlined_call_operand.hbm [shape: f32[128,2], index: 6, kind: input, shape index: {}]
  %s7 = inlined_call_operand.hbm [shape: f32[1,2], index: 7, kind: input, shape index: {}]
  %s8 = inlined_call_operand.hbm [shape: f32[16,16,2], index: 8, kind: output, shape index: {0}]
  %s9 = inlined_call_operand.hbm [shape: f32[16,128], index: 9, kind: output, shape index: {1}]
  %s10 = inlined_call_operand.hbm [shape: f32[16,128], index: 10, kind: output, shape index: {2}]
  %11 = xla_tuple %s8, %s9, %s10
  %s12 = sld [smem:[#allocation0]]
  $region117: #{cudnn_lstm_model_lstm_kernel_forward.3} parent=0
    _
  %s14 = ssub.s32 1, %s12
  %s15 = scalar_select 0, %s14, %s12
  $region1: #{cudnn_lstm_model_lstm_kernel_forward.3} parent=0
    #allocation6 [shape = 'u8[65536]{0}', space=vmem, size = 0x10000, scoped, tag = 'input window, operand 0']
    #allocation7 [shape = 's32[2]{0}', space=sflag, size = 0x8, scoped, tag = 'scoped memory for cudnn_lstm_model_lstm_kernel_forward.3']
    #allocation8 [shape = 's32[2]{0}', space=sflag, size = 0x8, scoped, tag = 'scoped memory for cudnn_lstm_model_lstm_kernel_forward.3']
    #allocation9 [shape = 'u8[12288]{0}', space=vmem, size = 0x3000, scoped, tag = 'input window, operand 1, single buffered']
    #allocation10 [shape = 's32[1]{0}', space=sflag, size = 0x4, scoped, tag = 'scoped memory for cudnn_lstm_model_lstm_kernel_forward.3']
    #allocation11 [shape = 'u8[512]{0}', space=vmem, size = 0x400, scoped, tag = 'input window, operand 2, single buffered']
    #allocation12 [shape = 'u8[262144]{0}', space=vmem, size = 0x40000, scoped, tag = 'input window, operand 3, single buffered']
    #allocation13 [shape = 's32[1]{0}', space=sflag, size = 0x4, scoped, tag = 'scoped memory for cudnn_lstm_model_lstm_kernel_forward.3']
    #allocation14 [shape = 'u8[262144]{0}', space=vmem, size = 0x40000, scoped, tag = 'input window, operand 4, single buffered']
    #allocation15 [shape = 'u8[2048]{0}', space=vmem, size = 0x800, scoped, tag = 'input window, operand 5, single buffered']
    #allocation16 [shape = 's32[1]{0}', space=sflag, size = 0x4, scoped, tag = 'scoped memory for cudnn_lstm_model_lstm_kernel_forward.3']
    #allocation17 [shape = 'u8[65536]{0}', space=vmem, size = 0x10000, scoped, tag = 'input window, operand 6, single buffered']
    #allocation18 [shape = 'u8[512]{0}', space=vmem, size = 0x400, scoped, tag = 'input window, operand 7, single buffered']
    #allocation19 [shape = 's32[1]{0}', space=sflag, size = 0x4, scoped, tag = 'scoped memory for cudnn_lstm_model_lstm_kernel_forward.3']
    #allocation20 [shape = 'u8[65536]{0}', space=vmem, size = 0x10000, scoped, tag = 'output window, operand 0']
    #allocation21 [shape = 'u8[8192]{0}', space=vmem, size = 0x2000, scoped, tag = 'output window, operand 1']
    #allocation22 [shape = 's32[2]{0}', space=sflag, size = 0x8, scoped, tag = 'scoped memory for cudnn_lstm_model_lstm_kernel_forward.3']
    #allocation23 [shape = 'u8[8192]{0}', space=vmem, size = 0x2000, scoped, tag = 'output window, operand 2']
    %16 = vsyncpa [#allocation7], 0
    %s17 = scalar_lea.sflag [#allocation7], 1
    %18 = vsyncpa %s17, 0
    %19 = vsyncpa [#allocation10], 0
    %20 = vsyncpa [#allocation13], 0
    %21 = vsyncpa [#allocation16], 0
    %22 = vsyncpa [#allocation19], 0
    %23 = vsyncpa [#allocation8], 0
    %s24 = scalar_lea.sflag [#allocation8], 1
    %25 = vsyncpa %s24, 0
    %26 = vsyncpa [#allocation22], 0
    %s27 = scalar_lea.sflag [#allocation22], 1
    %28 = vsyncpa %s27, 0
    loop: start=0, step=1, limit=6
    $region2: #{cudnn_lstm_model_lstm_kernel_forward.3} parent=1 // loop_pre_header
      _
    $region3: #{cudnn_lstm_model_lstm_kernel_forward.3} parent=1 // loop_header
      %s30 = sphi 0, %s34
      %p31 = scmp.ge.s32.totalorder %s30, 6
      %s37 = sphi 0, %s49
      %s38 = sphi 0, %s45
      %s39 = sphi 0, %s37
      %s40 = sphi 0, %s38
      %s41 = sphi 0, %s39
      %s42 = sphi 0, %s40
      %s54 = sphi 0, %s56
      %s57 = sphi 0, %s54
      %s58 = sphi 0, %s57
      %s74 = sphi 0, %s58
      %s78 = sphi 0, %s78
      %s80 = sphi 0, %s78
      %s81 = sphi 0, %s80
      %s95 = sphi 0, %s81
      %s99 = sphi 0, %s99
      %s101 = sphi 0, %s99
      %s102 = sphi 0, %s101
      %s116 = sphi 0, %s102
      %s120 = sphi 0, %s120
      %s122 = sphi 0, %s120
      %s123 = sphi 0, %s122
      %s137 = sphi 0, %s123
      %s141 = sphi 0, %s141
      %s143 = sphi 0, %s141
      %s144 = sphi 0, %s143
      %s158 = sphi 0, %s144
      %s162 = sphi 0, %s162
      %s164 = sphi 0, %s162
      %s165 = sphi 0, %s164
      %s179 = sphi 0, %s165
      %s183 = sphi 0, %s183
      %s185 = sphi 0, %s183
      %s186 = sphi 0, %s185
      %s200 = sphi 0, %s186
      %s204 = sphi 0, %s204
      %s206 = sphi 0, %s204
      %s207 = sphi 0, %s206
      %s221 = sphi 0, %s207
      %s229 = sphi 0, %s231
      %s232 = sphi 0, %s229
      %s233 = sphi 0, %s232
      %s249 = sphi 0, %s233
      %s255 = sphi 0, %s257
      %s258 = sphi 0, %s255
      %s259 = sphi 0, %s258
      %s275 = sphi 0, %s259
      %s281 = sphi 0, %s283
      %s284 = sphi 0, %s281
      %s285 = sphi 0, %s284
      %s301 = sphi 0, %s285
    $region4: #{cudnn_lstm_model_lstm_kernel_forward.3} parent=1 // loop_header_branch
      %33 = sbr.rel (%p31) target = $region8
    $region5: #{cudnn_lstm_model_lstm_kernel_forward.3} parent=1 // loop_body
      %s35 = ssub.s32 %s30, 1
      %s36 = ssub.s32 %s30, 2
      %s43 = sadd.s32 1, %s38
      %p44 = scmp.ge.s32.totalorder %s43, 2
      %s45 = scalar_select %p44, 0, %s43
      %s46 = sadd.s32 1, %s37
      %s47 = scalar_select %p44, %s46, %s37
      %p48 = scmp.ge.s32.totalorder %s47, 2
      %s49 = scalar_select %p48, 0, %s47
      %s50 = ssub.s32 %s38, %s45
      %s51 = ssub.s32 %s37, %s49
      %s52 = sor.u32 %s50, %s51
      %p53 = scmp.eq.s32.totalorder %s52, 0
      %s55 = sadd.s32 %s54, 1
      %s56 = scalar_select %p53, %s54, %s55
      %p59 = pneg %p53
      %p60 = scmp.eq.s32.totalorder %s30, 3
      %p61 = por %p59, %p60
      %p62 = scmp.ne.s32.totalorder %s54, %s57
      %p63 = scmp.eq.s32.totalorder %s30, 0
      %p64 = por %p62, %p63
      %p65 = scmp.ne.s32.totalorder %s54, %s57
      %p66 = scmp.eq.s32.totalorder %s35, 3
      %p67 = por %p65, %p66
      %p68 = scmp.ne.s32.totalorder %s57, %s58
      %p69 = scmp.eq.s32.totalorder %s35, 0
      %p70 = por %p68, %p69
      %p71 = scmp.ne.s32.totalorder %s57, %s58
      %p72 = scmp.eq.s32.totalorder %s36, 3
      %p73 = por %p71, %p72
      %p75 = scmp.ne.s32.totalorder %s58, %s74
      %p76 = scmp.eq.s32.totalorder %s36, 0
      %p77 = por %p75, %p76
      %s79 = sadd.s32 %s78, 1
      %p82 = scmp.eq.s32.totalorder %s30, 3
      %p83 = scmp.ne.s32.totalorder %s78, %s80
      %p84 = scmp.eq.s32.totalorder %s30, 0
      %p85 = por %p83, %p84
      %p86 = scmp.ne.s32.totalorder %s78, %s80
      %p87 = scmp.eq.s32.totalorder %s35, 3
      %p88 = por %p86, %p87
      %p89 = scmp.ne.s32.totalorder %s80, %s81
      %p90 = scmp.eq.s32.totalorder %s35, 0
      %p91 = por %p89, %p90
      %p92 = scmp.ne.s32.totalorder %s80, %s81
      %p93 = scmp.eq.s32.totalorder %s36, 3
      %p94 = por %p92, %p93
      %p96 = scmp.ne.s32.totalorder %s81, %s95
      %p97 = scmp.eq.s32.totalorder %s36, 0
      %p98 = por %p96, %p97
      %s100 = sadd.s32 %s99, 1
      %p103 = scmp.eq.s32.totalorder %s30, 3
      %p104 = scmp.ne.s32.totalorder %s99, %s101
      %p105 = scmp.eq.s32.totalorder %s30, 0
      %p106 = por %p104, %p105
      %p107 = scmp.ne.s32.totalorder %s99, %s101
      %p108 = scmp.eq.s32.totalorder %s35, 3
      %p109 = por %p107, %p108
      %p110 = scmp.ne.s32.totalorder %s101, %s102
      %p111 = scmp.eq.s32.totalorder %s35, 0
      %p112 = por %p110, %p111
      %p113 = scmp.ne.s32.totalorder %s101, %s102
      %p114 = scmp.eq.s32.totalorder %s36, 3
      %p115 = por %p113, %p114
      %p117 = scmp.ne.s32.totalorder %s102, %s116
      %p118 = scmp.eq.s32.totalorder %s36, 0
      %p119 = por %p117, %p118
      %s121 = sadd.s32 %s120, 1
      %p124 = scmp.eq.s32.totalorder %s30, 3
      %p125 = scmp.ne.s32.totalorder %s120, %s122
      %p126 = scmp.eq.s32.totalorder %s30, 0
      %p127 = por %p125, %p126
      %p128 = scmp.ne.s32.totalorder %s120, %s122
      %p129 = scmp.eq.s32.totalorder %s35, 3
      %p130 = por %p128, %p129
      %p131 = scmp.ne.s32.totalorder %s122, %s123
      %p132 = scmp.eq.s32.totalorder %s35, 0
      %p133 = por %p131, %p132
      %p134 = scmp.ne.s32.totalorder %s122, %s123
      %p135 = scmp.eq.s32.totalorder %s36, 3
      %p136 = por %p134, %p135
      %p138 = scmp.ne.s32.totalorder %s123, %s137
      %p139 = scmp.eq.s32.totalorder %s36, 0
      %p140 = por %p138, %p139
      %s142 = sadd.s32 %s141, 1
      %p145 = scmp.eq.s32.totalorder %s30, 3
      %p146 = scmp.ne.s32.totalorder %s141, %s143
      %p147 = scmp.eq.s32.totalorder %s30, 0
      %p148 = por %p146, %p147
      %p149 = scmp.ne.s32.totalorder %s141, %s143
      %p150 = scmp.eq.s32.totalorder %s35, 3
      %p151 = por %p149, %p150
      %p152 = scmp.ne.s32.totalorder %s143, %s144
      %p153 = scmp.eq.s32.totalorder %s35, 0
      %p154 = por %p152, %p153
      %p155 = scmp.ne.s32.totalorder %s143, %s144
      %p156 = scmp.eq.s32.totalorder %s36, 3
      %p157 = por %p155, %p156
      %p159 = scmp.ne.s32.totalorder %s144, %s158
      %p160 = scmp.eq.s32.totalorder %s36, 0
      %p161 = por %p159, %p160
      %s163 = sadd.s32 %s162, 1
      %p166 = scmp.eq.s32.totalorder %s30, 3
      %p167 = scmp.ne.s32.totalorder %s162, %s164
      %p168 = scmp.eq.s32.totalorder %s30, 0
      %p169 = por %p167, %p168
      %p170 = scmp.ne.s32.totalorder %s162, %s164
      %p171 = scmp.eq.s32.totalorder %s35, 3
      %p172 = por %p170, %p171
      %p173 = scmp.ne.s32.totalorder %s164, %s165
      %p174 = scmp.eq.s32.totalorder %s35, 0
      %p175 = por %p173, %p174
      %p176 = scmp.ne.s32.totalorder %s164, %s165
      %p177 = scmp.eq.s32.totalorder %s36, 3
      %p178 = por %p176, %p177
      %p180 = scmp.ne.s32.totalorder %s165, %s179
      %p181 = scmp.eq.s32.totalorder %s36, 0
      %p182 = por %p180, %p181
      %s184 = sadd.s32 %s183, 1
      %p187 = scmp.eq.s32.totalorder %s30, 3
      %p188 = scmp.ne.s32.totalorder %s183, %s185
      %p189 = scmp.eq.s32.totalorder %s30, 0
      %p190 = por %p188, %p189
      %p191 = scmp.ne.s32.totalorder %s183, %s185
      %p192 = scmp.eq.s32.totalorder %s35, 3
      %p193 = por %p191, %p192
      %p194 = scmp.ne.s32.totalorder %s185, %s186
      %p195 = scmp.eq.s32.totalorder %s35, 0
      %p196 = por %p194, %p195
      %p197 = scmp.ne.s32.totalorder %s185, %s186
      %p198 = scmp.eq.s32.totalorder %s36, 3
      %p199 = por %p197, %p198
      %p201 = scmp.ne.s32.totalorder %s186, %s200
      %p202 = scmp.eq.s32.totalorder %s36, 0
      %p203 = por %p201, %p202
      %s205 = sadd.s32 %s204, 1
      %p208 = scmp.eq.s32.totalorder %s30, 3
      %p209 = scmp.ne.s32.totalorder %s204, %s206
      %p210 = scmp.eq.s32.totalorder %s30, 0
      %p211 = por %p209, %p210
      %p212 = scmp.ne.s32.totalorder %s204, %s206
      %p213 = scmp.eq.s32.totalorder %s35, 3
      %p214 = por %p212, %p213
      %p215 = scmp.ne.s32.totalorder %s206, %s207
      %p216 = scmp.eq.s32.totalorder %s35, 0
      %p217 = por %p215, %p216
      %p218 = scmp.ne.s32.totalorder %s206, %s207
      %p219 = scmp.eq.s32.totalorder %s36, 3
      %p220 = por %p218, %p219
      %p222 = scmp.ne.s32.totalorder %s207, %s221
      %p223 = scmp.eq.s32.totalorder %s36, 0
      %p224 = por %p222, %p223
      %s225 = ssub.s32 %s38, %s45
      %s226 = ssub.s32 %s37, %s49
      %s227 = sor.u32 %s225, %s226
      %p228 = scmp.eq.s32.totalorder %s227, 0
      %s230 = sadd.s32 %s229, 1
      %s231 = scalar_select %p228, %s229, %s230
      %p234 = pneg %p228
      %p235 = scmp.eq.s32.totalorder %s30, 3
      %p236 = por %p234, %p235
      %p237 = scmp.ne.s32.totalorder %s229, %s232
      %p238 = scmp.eq.s32.totalorder %s30, 0
      %p239 = por %p237, %p238
      %p240 = scmp.ne.s32.totalorder %s229, %s232
      %p241 = scmp.eq.s32.totalorder %s35, 3
      %p242 = por %p240, %p241
      %p243 = scmp.ne.s32.totalorder %s232, %s233
      %p244 = scmp.eq.s32.totalorder %s35, 0
      %p245 = por %p243, %p244
      %p246 = scmp.ne.s32.totalorder %s232, %s233
      %p247 = scmp.eq.s32.totalorder %s36, 3
      %p248 = por %p246, %p247
      %p250 = scmp.ne.s32.totalorder %s233, %s249
      %p251 = scmp.eq.s32.totalorder %s36, 0
      %p252 = por %p250, %p251
      %s253 = ssub.s32 %s37, %s49
      %p254 = scmp.eq.s32.totalorder %s253, 0
      %s256 = sadd.s32 %s255, 1
      %s257 = scalar_select %p254, %s255, %s256
      %p260 = pneg %p254
      %p261 = scmp.eq.s32.totalorder %s30, 3
      %p262 = por %p260, %p261
      %p263 = scmp.ne.s32.totalorder %s255, %s258
      %p264 = scmp.eq.s32.totalorder %s30, 0
      %p265 = por %p263, %p264
      %p266 = scmp.ne.s32.totalorder %s255, %s258
      %p267 = scmp.eq.s32.totalorder %s35, 3
      %p268 = por %p266, %p267
      %p269 = scmp.ne.s32.totalorder %s258, %s259
      %p270 = scmp.eq.s32.totalorder %s35, 0
      %p271 = por %p269, %p270
      %p272 = scmp.ne.s32.totalorder %s258, %s259
      %p273 = scmp.eq.s32.totalorder %s36, 3
      %p274 = por %p272, %p273
      %p276 = scmp.ne.s32.totalorder %s259, %s275
      %p277 = scmp.eq.s32.totalorder %s36, 0
      %p278 = por %p276, %p277
      %s279 = ssub.s32 %s37, %s49
      %p280 = scmp.eq.s32.totalorder %s279, 0
      %s282 = sadd.s32 %s281, 1
      %s283 = scalar_select %p280, %s281, %s282
      %p286 = pneg %p280
      %p287 = scmp.eq.s32.totalorder %s30, 3
      %p288 = por %p286, %p287
      %p289 = scmp.ne.s32.totalorder %s281, %s284
      %p290 = scmp.eq.s32.totalorder %s30, 0
      %p291 = por %p289, %p290
      %p292 = scmp.ne.s32.totalorder %s281, %s284
      %p293 = scmp.eq.s32.totalorder %s35, 3
      %p294 = por %p292, %p293
      %p295 = scmp.ne.s32.totalorder %s284, %s285
      %p296 = scmp.eq.s32.totalorder %s35, 0
      %p297 = por %p295, %p296
      %p298 = scmp.ne.s32.totalorder %s284, %s285
      %p299 = scmp.eq.s32.totalorder %s36, 3
      %p300 = por %p298, %p299
      %p302 = scmp.ne.s32.totalorder %s285, %s301
      %p303 = scmp.eq.s32.totalorder %s36, 0
      %p304 = por %p302, %p303
      %p305 = scmp.le.s32.totalorder 1, %s30
      %p306 = scmp.lt.s32.totalorder %s30, 5
      %p307 = pnand %p305, %p306
      %p308 = pneg %p307
      // Predicated region
      $region9: #{cudnn_lstm_model_lstm_kernel_forward.3} parent=5 // pred_check
        _
      $region10: #{cudnn_lstm_model_lstm_kernel_forward.3} parent=5 // pred_check_branch
        %310 = sbr.rel (%p307) target = $region12
      $region11: #{cudnn_lstm_model_lstm_kernel_forward.3} parent=5 // pred_region
        %s311 = ssub.s32 %s30, 1
        // Predicated region
        $region13: #{cudnn_lstm_model_lstm_kernel_forward.3} parent=11 // pred_check
          %p312 = pneg %p91
        $region14: #{cudnn_lstm_model_lstm_kernel_forward.3} parent=11 // pred_check_branch
          %314 = sbr.rel (%p312) target = $region16
        $region15: #{cudnn_lstm_model_lstm_kernel_forward.3} parent=11 // pred_region
          %s316 = ssub.s32 384, 384
          %317 = vsyncadd [#allocation10], %s316
          %s318 = sshll.u32 [#allocation9], 4
          %s319 = int_to_ptr.vmem [resolvable:$true] %s318
          %324 = dma.hbm_to_vmem [thread:$0]  %s1, 384, %s319, [#allocation10], 128, 128, 8
        $region16: #{cudnn_lstm_model_lstm_kernel_forward.3} parent=11 // pred_fallthru
          _
        // Predicated region
        $region17: #{cudnn_lstm_model_lstm_kernel_forward.3} parent=11 // pred_check
          %p325 = pneg %p112
        $region18: #{cudnn_lstm_model_lstm_kernel_forward.3} parent=11 // pred_check_branch
          %327 = sbr.rel (%p325) target = $region20
        $region19: #{cudnn_lstm_model_lstm_kernel_forward.3} parent=11 // pred_region
          %s329 = ssub.s32 16, 16
          %330 = vsyncadd [#allocation10], %s329
          %s332 = sshll.u32 [#allocation11], 4
          %s333 = int_to_ptr.vmem [resolvable:$true] %s332
          %335 = dma.hbm_to_vmem [thread:$0]  %s2, 16, %s333, [#allocation10]
        $region20: #{cudnn_lstm_model_lstm_kernel_forward.3} parent=11 // pred_fallthru
          _
        // Predicated region
        $region21: #{cudnn_lstm_model_lstm_kernel_forward.3} parent=11 // pred_check
          %p336 = pneg %p133
        $region22: #{cudnn_lstm_model_lstm_kernel_forward.3} parent=11 // pred_check_branch
          %338 = sbr.rel (%p336) target = $region24
        $region23: #{cudnn_lstm_model_lstm_kernel_forward.3} parent=11 // pred_region
          %s340 = ssub.s32 8192, 8192
          %341 = vsyncadd [#allocation13], %s340
          %s342 = sshll.u32 [#allocation12], 4
          %s343 = int_to_ptr.vmem [resolvable:$true] %s342
          %348 = dma.hbm_to_vmem [thread:$0]  %s3, 8192, %s343, [#allocation13], 512, 512, 32
        $region24: #{cudnn_lstm_model_lstm_kernel_forward.3} parent=11 // pred_fallthru
          _
        // Predicated region
        $region25: #{cudnn_lstm_model_lstm_kernel_forward.3} parent=11 // pred_check
          %p349 = pneg %p154
        $region26: #{cudnn_lstm_model_lstm_kernel_forward.3} parent=11 // pred_check_branch
          %351 = sbr.rel (%p349) target = $region28
        $region27: #{cudnn_lstm_model_lstm_kernel_forward.3} parent=11 // pred_region
          %s353 = ssub.s32 8192, 8192
          %354 = vsyncadd [#allocation13], %s353
          %s355 = sshll.u32 [#allocation14], 4
          %s356 = int_to_ptr.vmem [resolvable:$true] %s355
          %361 = dma.hbm_to_vmem [thread:$0]  %s4, 8192, %s356, [#allocation13], 512, 512, 32
        $region28: #{cudnn_lstm_model_lstm_kernel_forward.3} parent=11 // pred_fallthru
          _
        // Predicated region
        $region29: #{cudnn_lstm_model_lstm_kernel_forward.3} parent=11 // pred_check
          %p362 = pneg %p175
        $region30: #{cudnn_lstm_model_lstm_kernel_forward.3} parent=11 // pred_check_branch
          %364 = sbr.rel (%p362) target = $region32
        $region31: #{cudnn_lstm_model_lstm_kernel_forward.3} parent=11 // pred_region
          %s366 = ssub.s32 64, 64
          %367 = vsyncadd [#allocation16], %s366
          %s369 = sshll.u32 [#allocation15], 4
          %s370 = int_to_ptr.vmem [resolvable:$true] %s369
          %372 = dma.hbm_to_vmem [thread:$0]  %s5, 64, %s370, [#allocation16]
        $region32: #{cudnn_lstm_model_lstm_kernel_forward.3} parent=11 // pred_fallthru
          _
        // Predicated region
        $region33: #{cudnn_lstm_model_lstm_kernel_forward.3} parent=11 // pred_check
          %p373 = pneg %p196
        $region34: #{cudnn_lstm_model_lstm_kernel_forward.3} parent=11 // pred_check_branch
          %375 = sbr.rel (%p373) target = $region36
        $region35: #{cudnn_lstm_model_lstm_kernel_forward.3} parent=11 // pred_region
          %s377 = ssub.s32 2048, 2048
          %378 = vsyncadd [#allocation16], %s377
          %s379 = sshll.u32 [#allocation17], 4
          %s380 = int_to_ptr.vmem [resolvable:$true] %s379
          %385 = dma.hbm_to_vmem [thread:$0]  %s6, 2048, %s380, [#allocation16], 128, 128, 8
        $region36: #{cudnn_lstm_model_lstm_kernel_forward.3} parent=11 // pred_fallthru
          _
        // Predicated region
        $region37: #{cudnn_lstm_model_lstm_kernel_forward.3} parent=11 // pred_check
          %p386 = pneg %p217
        $region38: #{cudnn_lstm_model_lstm_kernel_forward.3} parent=11 // pred_check_branch
          %388 = sbr.rel (%p386) target = $region40
        $region39: #{cudnn_lstm_model_lstm_kernel_forward.3} parent=11 // pred_region
          %s390 = ssub.s32 16, 16
          %391 = vsyncadd [#allocation19], %s390
          %s393 = sshll.u32 [#allocation18], 4
          %s394 = int_to_ptr.vmem [resolvable:$true] %s393
          %396 = dma.hbm_to_vmem [thread:$0]  %s7, 16, %s394, [#allocation19]
        $region40: #{cudnn_lstm_model_lstm_kernel_forward.3} parent=11 // pred_fallthru
          _
      $region12: #{cudnn_lstm_model_lstm_kernel_forward.3} parent=5 // pred_fallthru
        _
      %p397 = scmp.lt.s32.totalorder %s30, 4
      // Predicated region
      $region41: #{cudnn_lstm_model_lstm_kernel_forward.3} parent=5 // pred_check
        %p398 = pneg %p397
      $region42: #{cudnn_lstm_model_lstm_kernel_forward.3} parent=5 // pred_check_branch
        %400 = sbr.rel (%p398) target = $region44
      $region43: #{cudnn_lstm_model_lstm_kernel_forward.3} parent=5 // pred_region
        // Predicated region
        $region45: #{cudnn_lstm_model_lstm_kernel_forward.3} parent=43 // pred_check
          %p401 = pneg %p64
        $region46: #{cudnn_lstm_model_lstm_kernel_forward.3} parent=43 // pred_check_branch
          %403 = sbr.rel (%p401) target = $region48
        $region47: #{cudnn_lstm_model_lstm_kernel_forward.3} parent=43 // pred_region
          %s404 = sand.u32 %s54, 1
          %s405 = scalar_lea.sflag [#allocation7], %s404
          %s406 = sand.u32 %s54, 1
          %s407 = smul.addr %s406, 64
          %s408 = scalar_lea.vmem [#allocation6], %s407
          %s409 = smul.u32 8, %s38
          %s411 = ssub.s32 1024, 1024
          %412 = vsyncadd %s405, %s411
          %s413 = smul.addr %s409, 2
          %s414 = sadd.s32 %s37, %s413
          %s415 = smul.addr %s414, 128
          %s416 = scalar_lea.hbm %s0, %s415
          %s417 = sshll.u32 %s408, 4
          %s418 = int_to_ptr.vmem [resolvable:$true] %s417
          %423 = dma.hbm_to_vmem [thread:$0]  %s416, 1024, %s418, %s405, 256, 128, 8
        $region48: #{cudnn_lstm_model_lstm_kernel_forward.3} parent=43 // pred_fallthru
          _
      $region44: #{cudnn_lstm_model_lstm_kernel_forward.3} parent=5 // pred_fallthru
        _
      %p424 = scmp.le.s32.totalorder 1, %s30
      %p425 = scmp.lt.s32.totalorder %s30, 5
      %p426 = pnand %p424, %p425
      %p427 = pneg %p426
      // Predicated region
      $region49: #{cudnn_lstm_model_lstm_kernel_forward.3} parent=5 // pred_check
        _
      $region50: #{cudnn_lstm_model_lstm_kernel_forward.3} parent=5 // pred_check_branch
        %429 = sbr.rel (%p426) target = $region52
      $region51: #{cudnn_lstm_model_lstm_kernel_forward.3} parent=5 // pred_region
        %s430 = ssub.s32 %s30, 1
        %s431 = sand.u32 %s57, 1
        %s432 = scalar_lea.sflag [#allocation7], %s431
        %s433 = sand.u32 %s57, 1
        %s434 = smul.addr %s433, 64
        %s435 = scalar_lea.vmem [#allocation6], %s434
        // Predicated region
        $region53: #{cudnn_lstm_model_lstm_kernel_forward.3} parent=51 // pred_check
          %p436 = pneg %p70
        $region54: #{cudnn_lstm_model_lstm_kernel_forward.3} parent=51 // pred_check_branch
          %438 = sbr.rel (%p436) target = $region56
        $region55: #{cudnn_lstm_model_lstm_kernel_forward.3} parent=51 // pred_region
          %439 = dma.done %s432, 1024
        $region56: #{cudnn_lstm_model_lstm_kernel_forward.3} parent=51 // pred_fallthru
          _
        // Predicated region
        $region57: #{cudnn_lstm_model_lstm_kernel_forward.3} parent=51 // pred_check
          %p440 = pneg %p91
        $region58: #{cudnn_lstm_model_lstm_kernel_forward.3} parent=51 // pred_check_branch
          %442 = sbr.rel (%p440) target = $region60
        $region59: #{cudnn_lstm_model_lstm_kernel_forward.3} parent=51 // pred_region
          %443 = dma.done [#allocation10], 384
        $region60: #{cudnn_lstm_model_lstm_kernel_forward.3} parent=51 // pred_fallthru
          _
        // Predicated region
        $region61: #{cudnn_lstm_model_lstm_kernel_forward.3} parent=51 // pred_check
          %p444 = pneg %p112
        $region62: #{cudnn_lstm_model_lstm_kernel_forward.3} parent=51 // pred_check_branch
          %446 = sbr.rel (%p444) target = $region64
        $region63: #{cudnn_lstm_model_lstm_kernel_forward.3} parent=51 // pred_region
          %447 = dma.done [#allocation10], 16
        $region64: #{cudnn_lstm_model_lstm_kernel_forward.3} parent=51 // pred_fallthru
          _
        // Predicated region
        $region65: #{cudnn_lstm_model_lstm_kernel_forward.3} parent=51 // pred_check
          %p448 = pneg %p133
        $region66: #{cudnn_lstm_model_lstm_kernel_forward.3} parent=51 // pred_check_branch
          %450 = sbr.rel (%p448) target = $region68
        $region67: #{cudnn_lstm_model_lstm_kernel_forward.3} parent=51 // pred_region
          %451 = dma.done [#allocation13], 8192
        $region68: #{cudnn_lstm_model_lstm_kernel_forward.3} parent=51 // pred_fallthru
          _
        // Predicated region
        $region69: #{cudnn_lstm_model_lstm_kernel_forward.3} parent=51 // pred_check
          %p452 = pneg %p154
        $region70: #{cudnn_lstm_model_lstm_kernel_forward.3} parent=51 // pred_check_branch
          %454 = sbr.rel (%p452) target = $region72
        $region71: #{cudnn_lstm_model_lstm_kernel_forward.3} parent=51 // pred_region
          %455 = dma.done [#allocation13], 8192
        $region72: #{cudnn_lstm_model_lstm_kernel_forward.3} parent=51 // pred_fallthru
          _
        // Predicated region
        $region73: #{cudnn_lstm_model_lstm_kernel_forward.3} parent=51 // pred_check
          %p456 = pneg %p175
        $region74: #{cudnn_lstm_model_lstm_kernel_forward.3} parent=51 // pred_check_branch
          %458 = sbr.rel (%p456) target = $region76
        $region75: #{cudnn_lstm_model_lstm_kernel_forward.3} parent=51 // pred_region
          %459 = dma.done [#allocation16], 64
        $region76: #{cudnn_lstm_model_lstm_kernel_forward.3} parent=51 // pred_fallthru
          _
        // Predicated region
        $region77: #{cudnn_lstm_model_lstm_kernel_forward.3} parent=51 // pred_check
          %p460 = pneg %p196
        $region78: #{cudnn_lstm_model_lstm_kernel_forward.3} parent=51 // pred_check_branch
          %462 = sbr.rel (%p460) target = $region80
        $region79: #{cudnn_lstm_model_lstm_kernel_forward.3} parent=51 // pred_region
          %463 = dma.done [#allocation16], 2048
        $region80: #{cudnn_lstm_model_lstm_kernel_forward.3} parent=51 // pred_fallthru
          _
        // Predicated region
        $region81: #{cudnn_lstm_model_lstm_kernel_forward.3} parent=51 // pred_check
          %p464 = pneg %p217
        $region82: #{cudnn_lstm_model_lstm_kernel_forward.3} parent=51 // pred_check_branch
          %466 = sbr.rel (%p464) target = $region84
        $region83: #{cudnn_lstm_model_lstm_kernel_forward.3} parent=51 // pred_region
          %467 = dma.done [#allocation19], 16
        $region84: #{cudnn_lstm_model_lstm_kernel_forward.3} parent=51 // pred_fallthru
          _
        %s468 = sand.u32 %s57, 1
        %s469 = scalar_lea.sflag [#allocation7], %s468
        %s470 = sand.u32 %s57, 1
        %s471 = smul.addr %s470, 64
        %s472 = scalar_lea.vmem [#allocation6], %s471
        %p473 = pneg %p70
        %p474 = pneg %p67
        %p475 = pneg %p91
        %p476 = pneg %p88
        %p477 = pneg %p112
        %p478 = pneg %p109
        %p479 = pneg %p133
        %p480 = pneg %p130
        %p481 = pneg %p154
        %p482 = pneg %p151
        %p483 = pneg %p175
        %p484 = pneg %p172
        %p485 = pneg %p196
        %p486 = pneg %p193
        %p487 = pneg %p217
        %p488 = pneg %p214
        %p489 = pneg %p245
        %p490 = pneg %p242
        %s491 = sand.u32 %s232, 1
        %s492 = scalar_lea.sflag [#allocation8], %s491
        %s493 = sand.u32 %s232, 1
        %s494 = smul.addr %s493, 64
        %s495 = scalar_lea.vmem [#allocation20], %s494
        %p496 = pneg %p271
        %p497 = pneg %p268
        %s498 = sand.u32 %s35, 1
        %s499 = scalar_lea.sflag [#allocation22], %s498
        %s500 = sand.u32 %s258, 1
        %s501 = smul.addr %s500, 8
        %s502 = scalar_lea.vmem [#allocation21], %s501
        %p503 = pneg %p297
        %p504 = pneg %p294
        %s505 = sand.u32 %s35, 1
        %s506 = scalar_lea.sflag [#allocation22], %s505
        %s507 = sand.u32 %s284, 1
        %s508 = smul.addr %s507, 8
        %s509 = scalar_lea.vmem [#allocation23], %s508
        %s510 = smul.u32 8, %s40
        %s511 = smul.u32 8, %s40
        %p512 = scmp.eq.s32.totalorder %s40, 0
        // Predicated region
        $region85: #{cudnn_lstm_model_lstm_kernel_forward.3} parent=51 // pred_check
          %p513 = pneg %p512
        $region86: #{cudnn_lstm_model_lstm_kernel_forward.3} parent=51 // pred_check_branch
          %515 = sbr.rel (%p513) target = $region88
        $region87: #{cudnn_lstm_model_lstm_kernel_forward.3} parent=51 // pred_region
          %516 = vst [vmem:[#allocation2] sm:$0xff] 0.0
          %517 = vst [vmem:[#allocation3] sm:$0xff] 0.0
        $region88: #{cudnn_lstm_model_lstm_kernel_forward.3} parent=51 // pred_fallthru
          _
        %v518 = vld [vmem:[%s435] sm:$0xff]
        %v519 = vld [vmem:[%s435 + $0x8] sm:$0xff]
        %v520 = vld [vmem:[%s435 + $0x10] sm:$0xff]
        %v521 = vld [vmem:[%s435 + $0x18] sm:$0xff]
        %v522 = vld [vmem:[%s435 + $0x20] sm:$0xff]
        %v523 = vld [vmem:[%s435 + $0x28] sm:$0xff]
        %v524 = vld [vmem:[%s435 + $0x30] sm:$0xff]
        %v525 = vld [vmem:[%s435 + $0x38] sm:$0xff]
        %v526 = vld [vmem:[#allocation9] sm:$0xff]
        %v527 = vld [vmem:[#allocation9 + $0x8] sm:$0xff]
        %v528 = vld [vmem:[#allocation9 + $0x10] sm:$0x3]
        %v529 = vld [vmem:[#allocation11] sm:$0x1]
        %v531 = vlaneseq
        %v532 = vshrl.u32 %v531, 7
        %v533 = vsub.s32 0, %v532
        %v534 = vrot.slane %v529, %v533
        %vm536 = vcmask 146432
        %v538 = vsel %vm536, %v518, 0
        %v541 = vsel %vm536, %v519, 0
        %v544 = vsel %vm536, %v520, 0
        %v547 = vsel %vm536, %v521, 0
        %v550 = vsel %vm536, %v522, 0
        %v553 = vsel %vm536, %v523, 0
        %v556 = vsel %vm536, %v524, 0
        %v559 = vsel %vm536, %v525, 0
        %vm561 = vcmask 1041408
        %v563 = vsel %vm561, %v528, 0
        %565 = vmatprep.subr.mxu0 0.0
        %566 = vmatpush1.msra.mxu0 %v526
        %567 = vmatprep.subr.mxu0 0.0
        %568 = vmatpush1.msra.mxu0 %v527
        %569 = vmatprep.subr.mxu0 0.0
        %570 = vmatpush1.msra.mxu0 %v563
        %571 = vmatprep.subr.mxu0 0.0
        %572 = vmatpush1.msra.mxu0 0.0
        %573 = vmatprep.subr.mxu0 0.0
        %574 = vmatpush1.msra.mxu0 0.0
        %575 = vmatprep.subr.mxu0 0.0
        %576 = vmatpush1.msra.mxu0 0.0
        %577 = vmatprep.subr.mxu0 0.0
        %578 = vmatpush1.msra.mxu0 0.0
        %579 = vmatprep.subr.mxu0 0.0
        %580 = vmatpush1.msra.mxu0 0.0
        %581 = vmatprep.subr.mxu0 0.0
        %582 = vmatpush1.msra.mxu0 0.0
        %583 = vmatprep.subr.mxu0 0.0
        %584 = vmatpush1.msra.mxu0 0.0
        %585 = vmatprep.subr.mxu0 0.0
        %586 = vmatpush1.msra.mxu0 0.0
        %587 = vmatprep.subr.mxu0 0.0
        %588 = vmatpush1.msra.mxu0 0.0
        %589 = vmatprep.subr.mxu0 0.0
        %590 = vmatpush1.msra.mxu0 0.0
        %591 = vmatprep.subr.mxu0 0.0
        %592 = vmatpush1.msra.mxu0 0.0
        %593 = vmatprep.subr.mxu0 0.0
        %594 = vmatpush1.msra.mxu0 0.0
        %595 = vmatprep.subr.mxu0 0.0
        %596 = vmatpush1.msra.mxu0 0.0
        %597 = vmatprep.subr.mxu0 0.0
        %598 = vmatpush1.msra.mxu0 0.0
        %599 = vmatprep.subr.mxu0 0.0
        %600 = vmatpush1.msra.mxu0 0.0
        %601 = vmatprep.subr.mxu0 0.0
        %602 = vmatpush1.msra.mxu0 0.0
        %603 = vmatprep.subr.mxu0 0.0
        %604 = vmatpush1.msra.mxu0 0.0
        %605 = vmatprep.subr.mxu0 0.0
        %606 = vmatpush1.msra.mxu0 0.0
        %607 = vmatprep.subr.mxu0 0.0
        %608 = vmatpush1.msra.mxu0 0.0
        %609 = vmatprep.subr.mxu0 0.0
        %610 = vmatpush1.msra.mxu0 0.0
        %611 = vmatprep.subr.mxu0 0.0
        %612 = vmatpush1.msra.mxu0 0.0
        %613 = vmatprep.subr.mxu0 0.0
        %614 = vmatpush1.msra.mxu0 0.0
        %615 = vmatprep.subr.mxu0 0.0
        %616 = vmatpush1.msra.mxu0 0.0
        %617 = vmatprep.subr.mxu0 0.0
        %618 = vmatpush1.msra.mxu0 0.0
        %619 = vmatprep.subr.mxu0 0.0
        %620 = vmatpush1.msra.mxu0 0.0
        %621 = vmatprep.subr.mxu0 0.0
        %622 = vmatpush1.msra.mxu0 0.0
        %623 = vmatprep.subr.mxu0 0.0
        %624 = vmatpush1.msra.mxu0 0.0
        %625 = vmatprep.subr.mxu0 0.0
        %626 = vmatpush1.msra.mxu0 0.0
        %627 = vmatprep.subr.mxu0 0.0
        %628 = vmatpush1.msra.mxu0 0.0
        %629 = vmatprep.mubr.f32.mxu0 0.0
        %630 = vmatmul.mubr.f32.gmra.mrb[0].mxu0 %v538
        %v631 = vpop.f32.mrb[0].mxu0
        %v632 = vadd.f32 %v534, %v631
        %v633 = vpop.f32.mrb[0].mxu0
        %634 = vmatprep.mubr.f32.mxu0 0.0
        %635 = vmatmul.mubr.f32.gmra.mrb[0].mxu0 %v541
        %v636 = vpop.f32.mrb[0].mxu0
        %v637 = vadd.f32 %v534, %v636
        %v638 = vpop.f32.mrb[0].mxu0
        %639 = vmatprep.mubr.f32.mxu0 0.0
        %640 = vmatmul.mubr.f32.gmra.mrb[0].mxu0 %v544
        %v641 = vpop.f32.mrb[0].mxu0
        %v642 = vadd.f32 %v534, %v641
        %v643 = vpop.f32.mrb[0].mxu0
        %644 = vmatprep.mubr.f32.mxu0 0.0
        %645 = vmatmul.mubr.f32.gmra.mrb[0].mxu0 %v547
        %v646 = vpop.f32.mrb[0].mxu0
        %v647 = vadd.f32 %v534, %v646
        %v648 = vpop.f32.mrb[0].mxu0
        %649 = vmatprep.mubr.f32.mxu0 0.0
        %650 = vmatmul.mubr.f32.gmra.mrb[0].mxu0 %v550
        %v651 = vpop.f32.mrb[0].mxu0
        %v652 = vadd.f32 %v534, %v651
        %v653 = vpop.f32.mrb[0].mxu0
        %654 = vmatprep.mubr.f32.mxu0 0.0
        %655 = vmatmul.mubr.f32.gmra.mrb[0].mxu0 %v553
        %v656 = vpop.f32.mrb[0].mxu0
        %v657 = vadd.f32 %v534, %v656
        %v658 = vpop.f32.mrb[0].mxu0
        %659 = vmatprep.mubr.f32.mxu0 0.0
        %660 = vmatmul.mubr.f32.gmra.mrb[0].mxu0 %v556
        %v661 = vpop.f32.mrb[0].mxu0
        %v662 = vadd.f32 %v534, %v661
        %v663 = vpop.f32.mrb[0].mxu0
        %664 = vmatprep.mubr.f32.mxu0 0.0
        %665 = vmatmul.mubr.f32.gmra.mrb[0].mxu0 %v559
        %v666 = vpop.f32.mrb[0].mxu0
        %v667 = vadd.f32 %v534, %v666
        %v668 = vpop.f32.mrb[0].mxu0
        %669 = vdwg.mxu0
        %v670 = vmax.f32 %v632, 0.0
        %v671 = vmax.f32 %v637, 0.0
        %v672 = vmax.f32 %v642, 0.0
        %v673 = vmax.f32 %v647, 0.0
        %v674 = vmax.f32 %v652, 0.0
        %v675 = vmax.f32 %v657, 0.0
        %v676 = vmax.f32 %v662, 0.0
        %v677 = vmax.f32 %v667, 0.0
        %v678 = vld [vmem:[#allocation12] sm:$0xff]
        %v679 = vld [vmem:[#allocation12 + $0x8] sm:$0xff]
        %v680 = vld [vmem:[#allocation12 + $0x10] sm:$0xff]
        %v681 = vld [vmem:[#allocation12 + $0x18] sm:$0xff]
        %v682 = vld [vmem:[#allocation12 + $0x20] sm:$0xff]
        %v683 = vld [vmem:[#allocation12 + $0x28] sm:$0xff]
        %v684 = vld [vmem:[#allocation12 + $0x30] sm:$0xff]
        %v685 = vld [vmem:[#allocation12 + $0x38] sm:$0xff]
        %v686 = vld [vmem:[#allocation12 + $0x40] sm:$0xff]
        %v687 = vld [vmem:[#allocation12 + $0x48] sm:$0xff]
        %v688 = vld [vmem:[#allocation12 + $0x50] sm:$0xff]
        %v689 = vld [vmem:[#allocation12 + $0x58] sm:$0xff]
        %v690 = vld [vmem:[#allocation12 + $0x60] sm:$0xff]
        %v691 = vld [vmem:[#allocation12 + $0x68] sm:$0xff]
        %v692 = vld [vmem:[#allocation12 + $0x70] sm:$0xff]
        %v693 = vld [vmem:[#allocation12 + $0x78] sm:$0xff]
        %v694 = vld [vmem:[#allocation12 + $0x80] sm:$0xff]
        %v695 = vld [vmem:[#allocation12 + $0x88] sm:$0xff]
        %v696 = vld [vmem:[#allocation12 + $0x90] sm:$0xff]
        %v697 = vld [vmem:[#allocation12 + $0x98] sm:$0xff]
        %v698 = vld [vmem:[#allocation12 + $0xa0] sm:$0xff]
        %v699 = vld [vmem:[#allocation12 + $0xa8] sm:$0xff]
        %v700 = vld [vmem:[#allocation12 + $0xb0] sm:$0xff]
        %v701 = vld [vmem:[#allocation12 + $0xb8] sm:$0xff]
        %v702 = vld [vmem:[#allocation12 + $0xc0] sm:$0xff]
        %v703 = vld [vmem:[#allocation12 + $0xc8] sm:$0xff]
        %v704 = vld [vmem:[#allocation12 + $0xd0] sm:$0xff]
        %v705 = vld [vmem:[#allocation12 + $0xd8] sm:$0xff]
        %v706 = vld [vmem:[#allocation12 + $0xe0] sm:$0xff]
        %v707 = vld [vmem:[#allocation12 + $0xe8] sm:$0xff]
        %v708 = vld [vmem:[#allocation12 + $0xf0] sm:$0xff]
        %v709 = vld [vmem:[#allocation12 + $0xf8] sm:$0xff]
        %v710 = vld [vmem:[#allocation12 + $0x100] sm:$0xff]
        %v711 = vld [vmem:[#allocation12 + $0x108] sm:$0xff]
        %v712 = vld [vmem:[#allocation12 + $0x110] sm:$0xff]
        %v713 = vld [vmem:[#allocation12 + $0x118] sm:$0xff]
        %v714 = vld [vmem:[#allocation12 + $0x120] sm:$0xff]
        %v715 = vld [vmem:[#allocation12 + $0x128] sm:$0xff]
        %v716 = vld [vmem:[#allocation12 + $0x130] sm:$0xff]
        %v717 = vld [vmem:[#allocation12 + $0x138] sm:$0xff]
        %v718 = vld [vmem:[#allocation12 + $0x140] sm:$0xff]
        %v719 = vld [vmem:[#allocation12 + $0x148] sm:$0xff]
        %v720 = vld [vmem:[#allocation12 + $0x150] sm:$0xff]
        %v721 = vld [vmem:[#allocation12 + $0x158] sm:$0xff]
        %v722 = vld [vmem:[#allocation12 + $0x160] sm:$0xff]
        %v723 = vld [vmem:[#allocation12 + $0x168] sm:$0xff]
        %v724 = vld [vmem:[#allocation12 + $0x170] sm:$0xff]
        %v725 = vld [vmem:[#allocation12 + $0x178] sm:$0xff]
        %v726 = vld [vmem:[#allocation12 + $0x180] sm:$0xff]
        %v727 = vld [vmem:[#allocation12 + $0x188] sm:$0xff]
        %v728 = vld [vmem:[#allocation12 + $0x190] sm:$0xff]
        %v729 = vld [vmem:[#allocation12 + $0x198] sm:$0xff]
        %v730 = vld [vmem:[#allocation12 + $0x1a0] sm:$0xff]
        %v731 = vld [vmem:[#allocation12 + $0x1a8] sm:$0xff]
        %v732 = vld [vmem:[#allocation12 + $0x1b0] sm:$0xff]
        %v733 = vld [vmem:[#allocation12 + $0x1b8] sm:$0xff]
        %v734 = vld [vmem:[#allocation12 + $0x1c0] sm:$0xff]
        %v735 = vld [vmem:[#allocation12 + $0x1c8] sm:$0xff]
        %v736 = vld [vmem:[#allocation12 + $0x1d0] sm:$0xff]
        %v737 = vld [vmem:[#allocation12 + $0x1d8] sm:$0xff]
        %v738 = vld [vmem:[#allocation12 + $0x1e0] sm:$0xff]
        %v739 = vld [vmem:[#allocation12 + $0x1e8] sm:$0xff]
        %v740 = vld [vmem:[#allocation12 + $0x1f0] sm:$0xff]
        %v741 = vld [vmem:[#allocation12 + $0x1f8] sm:$0xff]
        %v742 = vld [vmem:[#allocation15] sm:$0xf]
        %v744 = vlaneseq
        %v745 = vshrl.u32 %v744, 7
        %v746 = vsub.s32 0, %v745
        %v747 = vrot.slane %v742, %v746
        %v748 = vlaneseq
        %v749 = vshrl.u32 %v748, 7
        %v750 = vsub.s32 1, %v749
        %v751 = vrot.slane %v742, %v750
        %v752 = vlaneseq
        %v753 = vshrl.u32 %v752, 7
        %v754 = vsub.s32 2, %v753
        %v755 = vrot.slane %v742, %v754
        %v756 = vlaneseq
        %v757 = vshrl.u32 %v756, 7
        %v758 = vsub.s32 3, %v757
        %v759 = vrot.slane %v742, %v758
        %764 = vmatprep.subr.mxu0 %v679
        %765 = vmatpush1.msra.mxu0 %v678
        %766 = vmatprep.subr.mxu0 %v683
        %767 = vmatpush1.msra.mxu0 %v682
        %768 = vmatprep.subr.mxu0 %v687
        %769 = vmatpush1.msra.mxu0 %v686
        %770 = vmatprep.subr.mxu0 %v691
        %771 = vmatpush1.msra.mxu0 %v690
        %772 = vmatprep.subr.mxu0 %v695
        %773 = vmatpush1.msra.mxu0 %v694
        %774 = vmatprep.subr.mxu0 %v699
        %775 = vmatpush1.msra.mxu0 %v698
        %776 = vmatprep.subr.mxu0 %v703
        %777 = vmatpush1.msra.mxu0 %v702
        %778 = vmatprep.subr.mxu0 %v707
        %779 = vmatpush1.msra.mxu0 %v706
        %780 = vmatprep.subr.mxu0 %v711
        %781 = vmatpush1.msra.mxu0 %v710
        %782 = vmatprep.subr.mxu0 %v715
        %783 = vmatpush1.msra.mxu0 %v714
        %784 = vmatprep.subr.mxu0 %v719
        %785 = vmatpush1.msra.mxu0 %v718
        %786 = vmatprep.subr.mxu0 %v723
        %787 = vmatpush1.msra.mxu0 %v722
        %788 = vmatprep.subr.mxu0 %v727
        %789 = vmatpush1.msra.mxu0 %v726
        %790 = vmatprep.subr.mxu0 %v731
        %791 = vmatpush1.msra.mxu0 %v730
        %792 = vmatprep.subr.mxu0 %v735
        %793 = vmatpush1.msra.mxu0 %v734
        %794 = vmatprep.subr.mxu0 %v739
        %795 = vmatpush1.msra.mxu0 %v738
        %796 = vmatprep.subr.mxu0 0.0
        %797 = vmatpush1.msra.mxu0 0.0
        %798 = vmatprep.subr.mxu0 0.0
        %799 = vmatpush1.msra.mxu0 0.0
        %800 = vmatprep.subr.mxu0 0.0
        %801 = vmatpush1.msra.mxu0 0.0
        %802 = vmatprep.subr.mxu0 0.0
        %803 = vmatpush1.msra.mxu0 0.0
        %804 = vmatprep.subr.mxu0 0.0
        %805 = vmatpush1.msra.mxu0 0.0
        %806 = vmatprep.subr.mxu0 0.0
        %807 = vmatpush1.msra.mxu0 0.0
        %808 = vmatprep.subr.mxu0 0.0
        %809 = vmatpush1.msra.mxu0 0.0
        %810 = vmatprep.subr.mxu0 0.0
        %811 = vmatpush1.msra.mxu0 0.0
        %812 = vmatprep.subr.mxu0 0.0
        %813 = vmatpush1.msra.mxu0 0.0
        %814 = vmatprep.subr.mxu0 0.0
        %815 = vmatpush1.msra.mxu0 0.0
        %816 = vmatprep.subr.mxu0 0.0
        %817 = vmatpush1.msra.mxu0 0.0
        %818 = vmatprep.subr.mxu0 0.0
        %819 = vmatpush1.msra.mxu0 0.0
        %820 = vmatprep.subr.mxu0 0.0
        %821 = vmatpush1.msra.mxu0 0.0
        %822 = vmatprep.subr.mxu0 0.0
        %823 = vmatpush1.msra.mxu0 0.0
        %824 = vmatprep.subr.mxu0 0.0
        %825 = vmatpush1.msra.mxu0 0.0
        %826 = vmatprep.subr.mxu0 0.0
        %827 = vmatpush1.msra.mxu0 0.0
        %828 = vmatprep.mubr.f32.mxu0 0.0
        %829 = vmatmul.mubr.f32.gmra.mrb[0].mxu0 %v670
        %v830 = vpop.f32.mrb[0].mxu0
        %v831 = vadd.f32 %v747, %v830
        %v832 = vpop.f32.mrb[0].mxu0
        %v833 = vadd.f32 %v751, %v832
        %834 = vmatprep.mubr.f32.mxu0 0.0
        %835 = vmatmul.mubr.f32.gmra.mrb[0].mxu0 %v671
        %v836 = vpop.f32.mrb[0].mxu0
        %v837 = vadd.f32 %v747, %v836
        %v838 = vpop.f32.mrb[0].mxu0
        %v839 = vadd.f32 %v751, %v838
        %840 = vmatprep.mubr.f32.mxu0 0.0
        %841 = vmatmul.mubr.f32.gmra.mrb[0].mxu0 %v672
        %v842 = vpop.f32.mrb[0].mxu0
        %v843 = vadd.f32 %v747, %v842
        %v844 = vpop.f32.mrb[0].mxu0
        %v845 = vadd.f32 %v751, %v844
        %846 = vmatprep.mubr.f32.mxu0 0.0
        %847 = vmatmul.mubr.f32.gmra.mrb[0].mxu0 %v673
        %v848 = vpop.f32.mrb[0].mxu0
        %v849 = vadd.f32 %v747, %v848
        %v850 = vpop.f32.mrb[0].mxu0
        %v851 = vadd.f32 %v751, %v850
        %852 = vmatprep.mubr.f32.mxu0 0.0
        %853 = vmatmul.mubr.f32.gmra.mrb[0].mxu0 %v674
        %v854 = vpop.f32.mrb[0].mxu0
        %v855 = vadd.f32 %v747, %v854
        %v856 = vpop.f32.mrb[0].mxu0
        %v857 = vadd.f32 %v751, %v856
        %858 = vmatprep.mubr.f32.mxu0 0.0
        %859 = vmatmul.mubr.f32.gmra.mrb[0].mxu0 %v675
        %v860 = vpop.f32.mrb[0].mxu0
        %v861 = vadd.f32 %v747, %v860
        %v862 = vpop.f32.mrb[0].mxu0
        %v863 = vadd.f32 %v751, %v862
        %864 = vmatprep.mubr.f32.mxu0 0.0
        %865 = vmatmul.mubr.f32.gmra.mrb[0].mxu0 %v676
        %v866 = vpop.f32.mrb[0].mxu0
        %v867 = vadd.f32 %v747, %v866
        %v868 = vpop.f32.mrb[0].mxu0
        %v869 = vadd.f32 %v751, %v868
        %870 = vmatprep.mubr.f32.mxu0 0.0
        %871 = vmatmul.mubr.f32.gmra.mrb[0].mxu0 %v677
        %v872 = vpop.f32.mrb[0].mxu0
        %v873 = vadd.f32 %v747, %v872
        %v874 = vpop.f32.mrb[0].mxu0
        %v875 = vadd.f32 %v751, %v874
        %876 = vdwg.mxu0
        %877 = vmatprep.subr.mxu0 %v681
        %878 = vmatpush1.msra.mxu0 %v680
        %879 = vmatprep.subr.mxu0 %v685
        %880 = vmatpush1.msra.mxu0 %v684
        %881 = vmatprep.subr.mxu0 %v689
        %882 = vmatpush1.msra.mxu0 %v688
        %883 = vmatprep.subr.mxu0 %v693
        %884 = vmatpush1.msra.mxu0 %v692
        %885 = vmatprep.subr.mxu0 %v697
        %886 = vmatpush1.msra.mxu0 %v696
        %887 = vmatprep.subr.mxu0 %v701
        %888 = vmatpush1.msra.mxu0 %v700
        %889 = vmatprep.subr.mxu0 %v705
        %890 = vmatpush1.msra.mxu0 %v704
        %891 = vmatprep.subr.mxu0 %v709
        %892 = vmatpush1.msra.mxu0 %v708
        %893 = vmatprep.subr.mxu0 %v713
        %894 = vmatpush1.msra.mxu0 %v712
        %895 = vmatprep.subr.mxu0 %v717
        %896 = vmatpush1.msra.mxu0 %v716
        %897 = vmatprep.subr.mxu0 %v721
        %898 = vmatpush1.msra.mxu0 %v720
        %899 = vmatprep.subr.mxu0 %v725
        %900 = vmatpush1.msra.mxu0 %v724
        %901 = vmatprep.subr.mxu0 %v729
        %902 = vmatpush1.msra.mxu0 %v728
        %903 = vmatprep.subr.mxu0 %v733
        %904 = vmatpush1.msra.mxu0 %v732
        %905 = vmatprep.subr.mxu0 %v737
        %906 = vmatpush1.msra.mxu0 %v736
        %907 = vmatprep.subr.mxu0 %v741
        %908 = vmatpush1.msra.mxu0 %v740
        %909 = vmatprep.subr.mxu0 0.0
        %910 = vmatpush1.msra.mxu0 0.0
        %911 = vmatprep.subr.mxu0 0.0
        %912 = vmatpush1.msra.mxu0 0.0
        %913 = vmatprep.subr.mxu0 0.0
        %914 = vmatpush1.msra.mxu0 0.0
        %915 = vmatprep.subr.mxu0 0.0
        %916 = vmatpush1.msra.mxu0 0.0
        %917 = vmatprep.subr.mxu0 0.0
        %918 = vmatpush1.msra.mxu0 0.0
        %919 = vmatprep.subr.mxu0 0.0
        %920 = vmatpush1.msra.mxu0 0.0
        %921 = vmatprep.subr.mxu0 0.0
        %922 = vmatpush1.msra.mxu0 0.0
        %923 = vmatprep.subr.mxu0 0.0
        %924 = vmatpush1.msra.mxu0 0.0
        %925 = vmatprep.subr.mxu0 0.0
        %926 = vmatpush1.msra.mxu0 0.0
        %927 = vmatprep.subr.mxu0 0.0
        %928 = vmatpush1.msra.mxu0 0.0
        %929 = vmatprep.subr.mxu0 0.0
        %930 = vmatpush1.msra.mxu0 0.0
        %931 = vmatprep.subr.mxu0 0.0
        %932 = vmatpush1.msra.mxu0 0.0
        %933 = vmatprep.subr.mxu0 0.0
        %934 = vmatpush1.msra.mxu0 0.0
        %935 = vmatprep.subr.mxu0 0.0
        %936 = vmatpush1.msra.mxu0 0.0
        %937 = vmatprep.subr.mxu0 0.0
        %938 = vmatpush1.msra.mxu0 0.0
        %939 = vmatprep.subr.mxu0 0.0
        %940 = vmatpush1.msra.mxu0 0.0
        %941 = vmatprep.mubr.f32.mxu0 0.0
        %942 = vmatmul.mubr.f32.gmra.mrb[0].mxu0 %v670
        %v943 = vpop.f32.mrb[0].mxu0
        %v944 = vadd.f32 %v755, %v943
        %v945 = vpop.f32.mrb[0].mxu0
        %v946 = vadd.f32 %v759, %v945
        %947 = vmatprep.mubr.f32.mxu0 0.0
        %948 = vmatmul.mubr.f32.gmra.mrb[0].mxu0 %v671
        %v949 = vpop.f32.mrb[0].mxu0
        %v950 = vadd.f32 %v755, %v949
        %v951 = vpop.f32.mrb[0].mxu0
        %v952 = vadd.f32 %v759, %v951
        %953 = vmatprep.mubr.f32.mxu0 0.0
        %954 = vmatmul.mubr.f32.gmra.mrb[0].mxu0 %v672
        %v955 = vpop.f32.mrb[0].mxu0
        %v956 = vadd.f32 %v755, %v955
        %v957 = vpop.f32.mrb[0].mxu0
        %v958 = vadd.f32 %v759, %v957
        %959 = vmatprep.mubr.f32.mxu0 0.0
        %960 = vmatmul.mubr.f32.gmra.mrb[0].mxu0 %v673
        %v961 = vpop.f32.mrb[0].mxu0
        %v962 = vadd.f32 %v755, %v961
        %v963 = vpop.f32.mrb[0].mxu0
        %v964 = vadd.f32 %v759, %v963
        %965 = vmatprep.mubr.f32.mxu0 0.0
        %966 = vmatmul.mubr.f32.gmra.mrb[0].mxu0 %v674
        %v967 = vpop.f32.mrb[0].mxu0
        %v968 = vadd.f32 %v755, %v967
        %v969 = vpop.f32.mrb[0].mxu0
        %v970 = vadd.f32 %v759, %v969
        %971 = vmatprep.mubr.f32.mxu0 0.0
        %972 = vmatmul.mubr.f32.gmra.mrb[0].mxu0 %v675
        %v973 = vpop.f32.mrb[0].mxu0
        %v974 = vadd.f32 %v755, %v973
        %v975 = vpop.f32.mrb[0].mxu0
        %v976 = vadd.f32 %v759, %v975
        %977 = vmatprep.mubr.f32.mxu0 0.0
        %978 = vmatmul.mubr.f32.gmra.mrb[0].mxu0 %v676
        %v979 = vpop.f32.mrb[0].mxu0
        %v980 = vadd.f32 %v755, %v979
        %v981 = vpop.f32.mrb[0].mxu0
        %v982 = vadd.f32 %v759, %v981
        %983 = vmatprep.mubr.f32.mxu0 0.0
        %984 = vmatmul.mubr.f32.gmra.mrb[0].mxu0 %v677
        %v985 = vpop.f32.mrb[0].mxu0
        %v986 = vadd.f32 %v755, %v985
        %v987 = vpop.f32.mrb[0].mxu0
        %v988 = vadd.f32 %v759, %v987
        %989 = vdwg.mxu0
        %990 = vst [vmem:[#allocation4] sm:$0xff] %v831
        %991 = vst [vmem:[#allocation4 + $0x8] sm:$0xff] %v833
        %992 = vst [vmem:[#allocation4 + $0x10] sm:$0xff] %v944
        %993 = vst [vmem:[#allocation4 + $0x18] sm:$0xff] %v946
        %994 = vst [vmem:[#allocation4 + $0x20] sm:$0xff] %v837
        %995 = vst [vmem:[#allocation4 + $0x28] sm:$0xff] %v839
        %996 = vst [vmem:[#allocation4 + $0x30] sm:$0xff] %v950
        %997 = vst [vmem:[#allocation4 + $0x38] sm:$0xff] %v952
        %998 = vst [vmem:[#allocation4 + $0x40] sm:$0xff] %v843
        %999 = vst [vmem:[#allocation4 + $0x48] sm:$0xff] %v845
        %1000 = vst [vmem:[#allocation4 + $0x50] sm:$0xff] %v956
        %1001 = vst [vmem:[#allocation4 + $0x58] sm:$0xff] %v958
        %1002 = vst [vmem:[#allocation4 + $0x60] sm:$0xff] %v849
        %1003 = vst [vmem:[#allocation4 + $0x68] sm:$0xff] %v851
        %1004 = vst [vmem:[#allocation4 + $0x70] sm:$0xff] %v962
        %1005 = vst [vmem:[#allocation4 + $0x78] sm:$0xff] %v964
        %1006 = vst [vmem:[#allocation4 + $0x80] sm:$0xff] %v855
        %1007 = vst [vmem:[#allocation4 + $0x88] sm:$0xff] %v857
        %1008 = vst [vmem:[#allocation4 + $0x90] sm:$0xff] %v968
        %1009 = vst [vmem:[#allocation4 + $0x98] sm:$0xff] %v970
        %1010 = vst [vmem:[#allocation4 + $0xa0] sm:$0xff] %v861
        %1011 = vst [vmem:[#allocation4 + $0xa8] sm:$0xff] %v863
        %1012 = vst [vmem:[#allocation4 + $0xb0] sm:$0xff] %v974
        %1013 = vst [vmem:[#allocation4 + $0xb8] sm:$0xff] %v976
        %1014 = vst [vmem:[#allocation4 + $0xc0] sm:$0xff] %v867
        %1015 = vst [vmem:[#allocation4 + $0xc8] sm:$0xff] %v869
        %1016 = vst [vmem:[#allocation4 + $0xd0] sm:$0xff] %v980
        %1017 = vst [vmem:[#allocation4 + $0xd8] sm:$0xff] %v982
        %1018 = vst [vmem:[#allocation4 + $0xe0] sm:$0xff] %v873
        %1019 = vst [vmem:[#allocation4 + $0xe8] sm:$0xff] %v875
        %1020 = vst [vmem:[#allocation4 + $0xf0] sm:$0xff] %v986
        %1021 = vst [vmem:[#allocation4 + $0xf8] sm:$0xff] %v988
        %v1022 = vld [vmem:[#allocation2] sm:$0xff]
        %v1023 = vld [vmem:[#allocation3] sm:$0xff]
        %v1024 = vld [vmem:[#allocation4] sm:$0xff]
        %v1025 = vld [vmem:[#allocation4 + $0x8] sm:$0xff]
        %v1026 = vld [vmem:[#allocation4 + $0x10] sm:$0xff]
        %v1027 = vld [vmem:[#allocation4 + $0x18] sm:$0xff]
        %v1028 = vld [vmem:[#allocation14] sm:$0xff]
        %v1029 = vld [vmem:[#allocation14 + $0x8] sm:$0xff]
        %v1030 = vld [vmem:[#allocation14 + $0x10] sm:$0xff]
        %v1031 = vld [vmem:[#allocation14 + $0x18] sm:$0xff]
        %v1032 = vld [vmem:[#allocation14 + $0x20] sm:$0xff]
        %v1033 = vld [vmem:[#allocation14 + $0x28] sm:$0xff]
        %v1034 = vld [vmem:[#allocation14 + $0x30] sm:$0xff]
        %v1035 = vld [vmem:[#allocation14 + $0x38] sm:$0xff]
        %v1036 = vld [vmem:[#allocation14 + $0x40] sm:$0xff]
        %v1037 = vld [vmem:[#allocation14 + $0x48] sm:$0xff]
        %v1038 = vld [vmem:[#allocation14 + $0x50] sm:$0xff]
        %v1039 = vld [vmem:[#allocation14 + $0x58] sm:$0xff]
        %v1040 = vld [vmem:[#allocation14 + $0x60] sm:$0xff]
        %v1041 = vld [vmem:[#allocation14 + $0x68] sm:$0xff]
        %v1042 = vld [vmem:[#allocation14 + $0x70] sm:$0xff]
        %v1043 = vld [vmem:[#allocation14 + $0x78] sm:$0xff]
        %v1044 = vld [vmem:[#allocation14 + $0x80] sm:$0xff]
        %v1045 = vld [vmem:[#allocation14 + $0x88] sm:$0xff]
        %v1046 = vld [vmem:[#allocation14 + $0x90] sm:$0xff]
        %v1047 = vld [vmem:[#allocation14 + $0x98] sm:$0xff]
        %v1048 = vld [vmem:[#allocation14 + $0xa0] sm:$0xff]
        %v1049 = vld [vmem:[#allocation14 + $0xa8] sm:$0xff]
        %v1050 = vld [vmem:[#allocation14 + $0xb0] sm:$0xff]
        %v1051 = vld [vmem:[#allocation14 + $0xb8] sm:$0xff]
        %v1052 = vld [vmem:[#allocation14 + $0xc0] sm:$0xff]
        %v1053 = vld [vmem:[#allocation14 + $0xc8] sm:$0xff]
        %v1054 = vld [vmem:[#allocation14 + $0xd0] sm:$0xff]
        %v1055 = vld [vmem:[#allocation14 + $0xd8] sm:$0xff]
        %v1056 = vld [vmem:[#allocation14 + $0xe0] sm:$0xff]
        %v1057 = vld [vmem:[#allocation14 + $0xe8] sm:$0xff]
        %v1058 = vld [vmem:[#allocation14 + $0xf0] sm:$0xff]
        %v1059 = vld [vmem:[#allocation14 + $0xf8] sm:$0xff]
        %v1060 = vld [vmem:[#allocation14 + $0x100] sm:$0xff]
        %v1061 = vld [vmem:[#allocation14 + $0x108] sm:$0xff]
        %v1062 = vld [vmem:[#allocation14 + $0x110] sm:$0xff]
        %v1063 = vld [vmem:[#allocation14 + $0x118] sm:$0xff]
        %v1064 = vld [vmem:[#allocation14 + $0x120] sm:$0xff]
        %v1065 = vld [vmem:[#allocation14 + $0x128] sm:$0xff]
        %v1066 = vld [vmem:[#allocation14 + $0x130] sm:$0xff]
        %v1067 = vld [vmem:[#allocation14 + $0x138] sm:$0xff]
        %v1068 = vld [vmem:[#allocation14 + $0x140] sm:$0xff]
        %v1069 = vld [vmem:[#allocation14 + $0x148] sm:$0xff]
        %v1070 = vld [vmem:[#allocation14 + $0x150] sm:$0xff]
        %v1071 = vld [vmem:[#allocation14 + $0x158] sm:$0xff]
        %v1072 = vld [vmem:[#allocation14 + $0x160] sm:$0xff]
        %v1073 = vld [vmem:[#allocation14 + $0x168] sm:$0xff]
        %v1074 = vld [vmem:[#allocation14 + $0x170] sm:$0xff]
        %v1075 = vld [vmem:[#allocation14 + $0x178] sm:$0xff]
        %v1076 = vld [vmem:[#allocation14 + $0x180] sm:$0xff]
        %v1077 = vld [vmem:[#allocation14 + $0x188] sm:$0xff]
        %v1078 = vld [vmem:[#allocation14 + $0x190] sm:$0xff]
        %v1079 = vld [vmem:[#allocation14 + $0x198] sm:$0xff]
        %v1080 = vld [vmem:[#allocation14 + $0x1a0] sm:$0xff]
        %v1081 = vld [vmem:[#allocation14 + $0x1a8] sm:$0xff]
        %v1082 = vld [vmem:[#allocation14 + $0x1b0] sm:$0xff]
        %v1083 = vld [vmem:[#allocation14 + $0x1b8] sm:$0xff]
        %v1084 = vld [vmem:[#allocation14 + $0x1c0] sm:$0xff]
        %v1085 = vld [vmem:[#allocation14 + $0x1c8] sm:$0xff]
        %v1086 = vld [vmem:[#allocation14 + $0x1d0] sm:$0xff]
        %v1087 = vld [vmem:[#allocation14 + $0x1d8] sm:$0xff]
        %v1088 = vld [vmem:[#allocation14 + $0x1e0] sm:$0xff]
        %v1089 = vld [vmem:[#allocation14 + $0x1e8] sm:$0xff]
        %v1090 = vld [vmem:[#allocation14 + $0x1f0] sm:$0xff]
        %v1091 = vld [vmem:[#allocation14 + $0x1f8] sm:$0xff]
        %1092 = vmatprep.subr.mxu0 %v1029
        %1093 = vmatpush1.msra.mxu0 %v1028
        %1094 = vmatprep.subr.mxu0 %v1033
        %1095 = vmatpush1.msra.mxu0 %v1032
        %1096 = vmatprep.subr.mxu0 %v1037
        %1097 = vmatpush1.msra.mxu0 %v1036
        %1098 = vmatprep.subr.mxu0 %v1041
        %1099 = vmatpush1.msra.mxu0 %v1040
        %1100 = vmatprep.subr.mxu0 %v1045
        %1101 = vmatpush1.msra.mxu0 %v1044
        %1102 = vmatprep.subr.mxu0 %v1049
        %1103 = vmatpush1.msra.mxu0 %v1048
        %1104 = vmatprep.subr.mxu0 %v1053
        %1105 = vmatpush1.msra.mxu0 %v1052
        %1106 = vmatprep.subr.mxu0 %v1057
        %1107 = vmatpush1.msra.mxu0 %v1056
        %1108 = vmatprep.subr.mxu0 %v1061
        %1109 = vmatpush1.msra.mxu0 %v1060
        %1110 = vmatprep.subr.mxu0 %v1065
        %1111 = vmatpush1.msra.mxu0 %v1064
        %1112 = vmatprep.subr.mxu0 %v1069
        %1113 = vmatpush1.msra.mxu0 %v1068
        %1114 = vmatprep.subr.mxu0 %v1073
        %1115 = vmatpush1.msra.mxu0 %v1072
        %1116 = vmatprep.subr.mxu0 %v1077
        %1117 = vmatpush1.msra.mxu0 %v1076
        %1118 = vmatprep.subr.mxu0 %v1081
        %1119 = vmatpush1.msra.mxu0 %v1080
        %1120 = vmatprep.subr.mxu0 %v1085
        %1121 = vmatpush1.msra.mxu0 %v1084
        %1122 = vmatprep.subr.mxu0 %v1089
        %1123 = vmatpush1.msra.mxu0 %v1088
        %1124 = vmatprep.subr.mxu0 0.0
        %1125 = vmatpush1.msra.mxu0 0.0
        %1126 = vmatprep.subr.mxu0 0.0
        %1127 = vmatpush1.msra.mxu0 0.0
        %1128 = vmatprep.subr.mxu0 0.0
        %1129 = vmatpush1.msra.mxu0 0.0
        %1130 = vmatprep.subr.mxu0 0.0
        %1131 = vmatpush1.msra.mxu0 0.0
        %1132 = vmatprep.subr.mxu0 0.0
        %1133 = vmatpush1.msra.mxu0 0.0
        %1134 = vmatprep.subr.mxu0 0.0
        %1135 = vmatpush1.msra.mxu0 0.0
        %1136 = vmatprep.subr.mxu0 0.0
        %1137 = vmatpush1.msra.mxu0 0.0
        %1138 = vmatprep.subr.mxu0 0.0
        %1139 = vmatpush1.msra.mxu0 0.0
        %1140 = vmatprep.subr.mxu0 0.0
        %1141 = vmatpush1.msra.mxu0 0.0
        %1142 = vmatprep.subr.mxu0 0.0
        %1143 = vmatpush1.msra.mxu0 0.0
        %1144 = vmatprep.subr.mxu0 0.0
        %1145 = vmatpush1.msra.mxu0 0.0
        %1146 = vmatprep.subr.mxu0 0.0
        %1147 = vmatpush1.msra.mxu0 0.0
        %1148 = vmatprep.subr.mxu0 0.0
        %1149 = vmatpush1.msra.mxu0 0.0
        %1150 = vmatprep.subr.mxu0 0.0
        %1151 = vmatpush1.msra.mxu0 0.0
        %1152 = vmatprep.subr.mxu0 0.0
        %1153 = vmatpush1.msra.mxu0 0.0
        %1154 = vmatprep.subr.mxu0 0.0
        %1155 = vmatpush1.msra.mxu0 0.0
        %1156 = vmatprep.mubr.f32.mxu0 0.0
        %1157 = vmatmul.mubr.f32.gmra.mrb[0].mxu0 %v1022
        %v1158 = vpop.f32.mrb[0].mxu0
        %v1159 = vadd.f32 0.0, %v1158
        %v1160 = vpop.f32.mrb[0].mxu0
        %v1161 = vadd.f32 0.0, %v1160
        %1162 = vdwg.mxu0
        %1163 = vmatprep.subr.mxu0 %v1031
        %1164 = vmatpush1.msra.mxu0 %v1030
        %1165 = vmatprep.subr.mxu0 %v1035
        %1166 = vmatpush1.msra.mxu0 %v1034
        %1167 = vmatprep.subr.mxu0 %v1039
        %1168 = vmatpush1.msra.mxu0 %v1038
        %1169 = vmatprep.subr.mxu0 %v1043
        %1170 = vmatpush1.msra.mxu0 %v1042
        %1171 = vmatprep.subr.mxu0 %v1047
        %1172 = vmatpush1.msra.mxu0 %v1046
        %1173 = vmatprep.subr.mxu0 %v1051
        %1174 = vmatpush1.msra.mxu0 %v1050
        %1175 = vmatprep.subr.mxu0 %v1055
        %1176 = vmatpush1.msra.mxu0 %v1054
        %1177 = vmatprep.subr.mxu0 %v1059
        %1178 = vmatpush1.msra.mxu0 %v1058
        %1179 = vmatprep.subr.mxu0 %v1063
        %1180 = vmatpush1.msra.mxu0 %v1062
        %1181 = vmatprep.subr.mxu0 %v1067
        %1182 = vmatpush1.msra.mxu0 %v1066
        %1183 = vmatprep.subr.mxu0 %v1071
        %1184 = vmatpush1.msra.mxu0 %v1070
        %1185 = vmatprep.subr.mxu0 %v1075
        %1186 = vmatpush1.msra.mxu0 %v1074
        %1187 = vmatprep.subr.mxu0 %v1079
        %1188 = vmatpush1.msra.mxu0 %v1078
        %1189 = vmatprep.subr.mxu0 %v1083
        %1190 = vmatpush1.msra.mxu0 %v1082
        %1191 = vmatprep.subr.mxu0 %v1087
        %1192 = vmatpush1.msra.mxu0 %v1086
        %1193 = vmatprep.subr.mxu0 %v1091
        %1194 = vmatpush1.msra.mxu0 %v1090
        %1195 = vmatprep.subr.mxu0 0.0
        %1196 = vmatpush1.msra.mxu0 0.0
        %1197 = vmatprep.subr.mxu0 0.0
        %1198 = vmatpush1.msra.mxu0 0.0
        %1199 = vmatprep.subr.mxu0 0.0
        %1200 = vmatpush1.msra.mxu0 0.0
        %1201 = vmatprep.subr.mxu0 0.0
        %1202 = vmatpush1.msra.mxu0 0.0
        %1203 = vmatprep.subr.mxu0 0.0
        %1204 = vmatpush1.msra.mxu0 0.0
        %1205 = vmatprep.subr.mxu0 0.0
        %1206 = vmatpush1.msra.mxu0 0.0
        %1207 = vmatprep.subr.mxu0 0.0
        %1208 = vmatpush1.msra.mxu0 0.0
        %1209 = vmatprep.subr.mxu0 0.0
        %1210 = vmatpush1.msra.mxu0 0.0
        %1211 = vmatprep.subr.mxu0 0.0
        %1212 = vmatpush1.msra.mxu0 0.0
        %1213 = vmatprep.subr.mxu0 0.0
        %1214 = vmatpush1.msra.mxu0 0.0
        %1215 = vmatprep.subr.mxu0 0.0
        %1216 = vmatpush1.msra.mxu0 0.0
        %1217 = vmatprep.subr.mxu0 0.0
        %1218 = vmatpush1.msra.mxu0 0.0
        %1219 = vmatprep.subr.mxu0 0.0
        %1220 = vmatpush1.msra.mxu0 0.0
        %1221 = vmatprep.subr.mxu0 0.0
        %1222 = vmatpush1.msra.mxu0 0.0
        %1223 = vmatprep.subr.mxu0 0.0
        %1224 = vmatpush1.msra.mxu0 0.0
        %1225 = vmatprep.subr.mxu0 0.0
        %1226 = vmatpush1.msra.mxu0 0.0
        %1227 = vmatprep.mubr.f32.mxu0 0.0
        %1228 = vmatmul.mubr.f32.gmra.mrb[0].mxu0 %v1022
        %v1229 = vpop.f32.mrb[0].mxu0
        %v1230 = vadd.f32 0.0, %v1229
        %v1231 = vpop.f32.mrb[0].mxu0
        %v1232 = vadd.f32 0.0, %v1231
        %1233 = vdwg.mxu0
        %v1234 = vadd.f32 %v1024, %v1159
        %v1235 = vadd.f32 %v1025, %v1161
        %v1236 = vadd.f32 %v1026, %v1230
        %v1237 = vadd.f32 %v1027, %v1232
        %v1238 = vxor.u32 %v1234, 2147483648
        %v1239 = vmul.f32 %v1238, 1.442695
        %v1240 = vpow.pop %v1239
        %v1241 = vadd.f32 %v1240, 1.0
        %v1242 = vrcp.pop %v1241
        %v1243 = vmul.f32 1.0, %v1242
        %v1244 = vxor.u32 %v1235, 2147483648
        %v1245 = vmul.f32 %v1244, 1.442695
        %v1246 = vpow.pop %v1245
        %v1247 = vadd.f32 %v1246, 1.0
        %v1248 = vrcp.pop %v1247
        %v1249 = vmul.f32 1.0, %v1248
        %v1250 = vtanh.pop %v1236
        %v1251 = vxor.u32 %v1237, 2147483648
        %v1252 = vmul.f32 %v1251, 1.442695
        %v1253 = vpow.pop %v1252
        %v1254 = vadd.f32 %v1253, 1.0
        %v1255 = vrcp.pop %v1254
        %v1256 = vmul.f32 1.0, %v1255
        %v1257 = vmul.f32 %v1249, %v1023
        %v1258 = vmul.f32 %v1243, %v1250
        %v1259 = vadd.f32 %v1257, %v1258
        %v1260 = vtanh.pop %v1259
        %v1261 = vmul.f32 %v1256, %v1260
        %1262 = vst [vmem:[#allocation5] sm:$0xff] %v1261
        %s1263 = scalar_lea.vmem [#allocation4], 32
        %v1264 = vld [vmem:[%s1263] sm:$0xff]
        %v1265 = vld [vmem:[%s1263 + $0x8] sm:$0xff]
        %v1266 = vld [vmem:[%s1263 + $0x10] sm:$0xff]
        %v1267 = vld [vmem:[%s1263 + $0x18] sm:$0xff]
        %v1268 = vld [vmem:[#allocation14] sm:$0xff]
        %v1269 = vld [vmem:[#allocation14 + $0x8] sm:$0xff]
        %v1270 = vld [vmem:[#allocation14 + $0x10] sm:$0xff]
        %v1271 = vld [vmem:[#allocation14 + $0x18] sm:$0xff]
        %v1272 = vld [vmem:[#allocation14 + $0x20] sm:$0xff]
        %v1273 = vld [vmem:[#allocation14 + $0x28] sm:$0xff]
        %v1274 = vld [vmem:[#allocation14 + $0x30] sm:$0xff]
        %v1275 = vld [vmem:[#allocation14 + $0x38] sm:$0xff]
        %v1276 = vld [vmem:[#allocation14 + $0x40] sm:$0xff]
        %v1277 = vld [vmem:[#allocation14 + $0x48] sm:$0xff]
        %v1278 = vld [vmem:[#allocation14 + $0x50] sm:$0xff]
        %v1279 = vld [vmem:[#allocation14 + $0x58] sm:$0xff]
        %v1280 = vld [vmem:[#allocation14 + $0x60] sm:$0xff]
        %v1281 = vld [vmem:[#allocation14 + $0x68] sm:$0xff]
        %v1282 = vld [vmem:[#allocation14 + $0x70] sm:$0xff]
        %v1283 = vld [vmem:[#allocation14 + $0x78] sm:$0xff]
        %v1284 = vld [vmem:[#allocation14 + $0x80] sm:$0xff]
        %v1285 = vld [vmem:[#allocation14 + $0x88] sm:$0xff]
        %v1286 = vld [vmem:[#allocation14 + $0x90] sm:$0xff]
        %v1287 = vld [vmem:[#allocation14 + $0x98] sm:$0xff]
        %v1288 = vld [vmem:[#allocation14 + $0xa0] sm:$0xff]
        %v1289 = vld [vmem:[#allocation14 + $0xa8] sm:$0xff]
        %v1290 = vld [vmem:[#allocation14 + $0xb0] sm:$0xff]
        %v1291 = vld [vmem:[#allocation14 + $0xb8] sm:$0xff]
        %v1292 = vld [vmem:[#allocation14 + $0xc0] sm:$0xff]
        %v1293 = vld [vmem:[#allocation14 + $0xc8] sm:$0xff]
        %v1294 = vld [vmem:[#allocation14 + $0xd0] sm:$0xff]
        %v1295 = vld [vmem:[#allocation14 + $0xd8] sm:$0xff]
        %v1296 = vld [vmem:[#allocation14 + $0xe0] sm:$0xff]
        %v1297 = vld [vmem:[#allocation14 + $0xe8] sm:$0xff]
        %v1298 = vld [vmem:[#allocation14 + $0xf0] sm:$0xff]
        %v1299 = vld [vmem:[#allocation14 + $0xf8] sm:$0xff]
        %v1300 = vld [vmem:[#allocation14 + $0x100] sm:$0xff]
        %v1301 = vld [vmem:[#allocation14 + $0x108] sm:$0xff]
        %v1302 = vld [vmem:[#allocation14 + $0x110] sm:$0xff]
        %v1303 = vld [vmem:[#allocation14 + $0x118] sm:$0xff]
        %v1304 = vld [vmem:[#allocation14 + $0x120] sm:$0xff]
        %v1305 = vld [vmem:[#allocation14 + $0x128] sm:$0xff]
        %v1306 = vld [vmem:[#allocation14 + $0x130] sm:$0xff]
        %v1307 = vld [vmem:[#allocation14 + $0x138] sm:$0xff]
        %v1308 = vld [vmem:[#allocation14 + $0x140] sm:$0xff]
        %v1309 = vld [vmem:[#allocation14 + $0x148] sm:$0xff]
        %v1310 = vld [vmem:[#allocation14 + $0x150] sm:$0xff]
        %v1311 = vld [vmem:[#allocation14 + $0x158] sm:$0xff]
        %v1312 = vld [vmem:[#allocation14 + $0x160] sm:$0xff]
        %v1313 = vld [vmem:[#allocation14 + $0x168] sm:$0xff]
        %v1314 = vld [vmem:[#allocation14 + $0x170] sm:$0xff]
        %v1315 = vld [vmem:[#allocation14 + $0x178] sm:$0xff]
        %v1316 = vld [vmem:[#allocation14 + $0x180] sm:$0xff]
        %v1317 = vld [vmem:[#allocation14 + $0x188] sm:$0xff]
        %v1318 = vld [vmem:[#allocation14 + $0x190] sm:$0xff]
        %v1319 = vld [vmem:[#allocation14 + $0x198] sm:$0xff]
        %v1320 = vld [vmem:[#allocation14 + $0x1a0] sm:$0xff]
        %v1321 = vld [vmem:[#allocation14 + $0x1a8] sm:$0xff]
        %v1322 = vld [vmem:[#allocation14 + $0x1b0] sm:$0xff]
        %v1323 = vld [vmem:[#allocation14 + $0x1b8] sm:$0xff]
        %v1324 = vld [vmem:[#allocation14 + $0x1c0] sm:$0xff]
        %v1325 = vld [vmem:[#allocation14 + $0x1c8] sm:$0xff]
        %v1326 = vld [vmem:[#allocation14 + $0x1d0] sm:$0xff]
        %v1327 = vld [vmem:[#allocation14 + $0x1d8] sm:$0xff]
        %v1328 = vld [vmem:[#allocation14 + $0x1e0] sm:$0xff]
        %v1329 = vld [vmem:[#allocation14 + $0x1e8] sm:$0xff]
        %v1330 = vld [vmem:[#allocation14 + $0x1f0] sm:$0xff]
        %v1331 = vld [vmem:[#allocation14 + $0x1f8] sm:$0xff]
        %1332 = vmatprep.subr.mxu0 %v1269
        %1333 = vmatpush1.msra.mxu0 %v1268
        %1334 = vmatprep.subr.mxu0 %v1273
        %1335 = vmatpush1.msra.mxu0 %v1272
        %1336 = vmatprep.subr.mxu0 %v1277
        %1337 = vmatpush1.msra.mxu0 %v1276
        %1338 = vmatprep.subr.mxu0 %v1281
        %1339 = vmatpush1.msra.mxu0 %v1280
        %1340 = vmatprep.subr.mxu0 %v1285
        %1341 = vmatpush1.msra.mxu0 %v1284
        %1342 = vmatprep.subr.mxu0 %v1289
        %1343 = vmatpush1.msra.mxu0 %v1288
        %1344 = vmatprep.subr.mxu0 %v1293
        %1345 = vmatpush1.msra.mxu0 %v1292
        %1346 = vmatprep.subr.mxu0 %v1297
        %1347 = vmatpush1.msra.mxu0 %v1296
        %1348 = vmatprep.subr.mxu0 %v1301
        %1349 = vmatpush1.msra.mxu0 %v1300
        %1350 = vmatprep.subr.mxu0 %v1305
        %1351 = vmatpush1.msra.mxu0 %v1304
        %1352 = vmatprep.subr.mxu0 %v1309
        %1353 = vmatpush1.msra.mxu0 %v1308
        %1354 = vmatprep.subr.mxu0 %v1313
        %1355 = vmatpush1.msra.mxu0 %v1312
        %1356 = vmatprep.subr.mxu0 %v1317
        %1357 = vmatpush1.msra.mxu0 %v1316
        %1358 = vmatprep.subr.mxu0 %v1321
        %1359 = vmatpush1.msra.mxu0 %v1320
        %1360 = vmatprep.subr.mxu0 %v1325
        %1361 = vmatpush1.msra.mxu0 %v1324
        %1362 = vmatprep.subr.mxu0 %v1329
        %1363 = vmatpush1.msra.mxu0 %v1328
        %1364 = vmatprep.subr.mxu0 0.0
        %1365 = vmatpush1.msra.mxu0 0.0
        %1366 = vmatprep.subr.mxu0 0.0
        %1367 = vmatpush1.msra.mxu0 0.0
        %1368 = vmatprep.subr.mxu0 0.0
        %1369 = vmatpush1.msra.mxu0 0.0
        %1370 = vmatprep.subr.mxu0 0.0
        %1371 = vmatpush1.msra.mxu0 0.0
        %1372 = vmatprep.subr.mxu0 0.0
        %1373 = vmatpush1.msra.mxu0 0.0
        %1374 = vmatprep.subr.mxu0 0.0
        %1375 = vmatpush1.msra.mxu0 0.0
        %1376 = vmatprep.subr.mxu0 0.0
        %1377 = vmatpush1.msra.mxu0 0.0
        %1378 = vmatprep.subr.mxu0 0.0
        %1379 = vmatpush1.msra.mxu0 0.0
        %1380 = vmatprep.subr.mxu0 0.0
        %1381 = vmatpush1.msra.mxu0 0.0
        %1382 = vmatprep.subr.mxu0 0.0
        %1383 = vmatpush1.msra.mxu0 0.0
        %1384 = vmatprep.subr.mxu0 0.0
        %1385 = vmatpush1.msra.mxu0 0.0
        %1386 = vmatprep.subr.mxu0 0.0
        %1387 = vmatpush1.msra.mxu0 0.0
        %1388 = vmatprep.subr.mxu0 0.0
        %1389 = vmatpush1.msra.mxu0 0.0
        %1390 = vmatprep.subr.mxu0 0.0
        %1391 = vmatpush1.msra.mxu0 0.0
        %1392 = vmatprep.subr.mxu0 0.0
        %1393 = vmatpush1.msra.mxu0 0.0
        %1394 = vmatprep.subr.mxu0 0.0
        %1395 = vmatpush1.msra.mxu0 0.0
        %1396 = vmatprep.mubr.f32.mxu0 0.0
        %1397 = vmatmul.mubr.f32.gmra.mrb[0].mxu0 %v1261
        %v1398 = vpop.f32.mrb[0].mxu0
        %v1399 = vadd.f32 0.0, %v1398
        %v1400 = vpop.f32.mrb[0].mxu0
        %v1401 = vadd.f32 0.0, %v1400
        %1402 = vdwg.mxu0
        %1403 = vmatprep.subr.mxu0 %v1271
        %1404 = vmatpush1.msra.mxu0 %v1270
        %1405 = vmatprep.subr.mxu0 %v1275
        %1406 = vmatpush1.msra.mxu0 %v1274
        %1407 = vmatprep.subr.mxu0 %v1279
        %1408 = vmatpush1.msra.mxu0 %v1278
        %1409 = vmatprep.subr.mxu0 %v1283
        %1410 = vmatpush1.msra.mxu0 %v1282
        %1411 = vmatprep.subr.mxu0 %v1287
        %1412 = vmatpush1.msra.mxu0 %v1286
        %1413 = vmatprep.subr.mxu0 %v1291
        %1414 = vmatpush1.msra.mxu0 %v1290
        %1415 = vmatprep.subr.mxu0 %v1295
        %1416 = vmatpush1.msra.mxu0 %v1294
        %1417 = vmatprep.subr.mxu0 %v1299
        %1418 = vmatpush1.msra.mxu0 %v1298
        %1419 = vmatprep.subr.mxu0 %v1303
        %1420 = vmatpush1.msra.mxu0 %v1302
        %1421 = vmatprep.subr.mxu0 %v1307
        %1422 = vmatpush1.msra.mxu0 %v1306
        %1423 = vmatprep.subr.mxu0 %v1311
        %1424 = vmatpush1.msra.mxu0 %v1310
        %1425 = vmatprep.subr.mxu0 %v1315
        %1426 = vmatpush1.msra.mxu0 %v1314
        %1427 = vmatprep.subr.mxu0 %v1319
        %1428 = vmatpush1.msra.mxu0 %v1318
        %1429 = vmatprep.subr.mxu0 %v1323
        %1430 = vmatpush1.msra.mxu0 %v1322
        %1431 = vmatprep.subr.mxu0 %v1327
        %1432 = vmatpush1.msra.mxu0 %v1326
        %1433 = vmatprep.subr.mxu0 %v1331
        %1434 = vmatpush1.msra.mxu0 %v1330
        %1435 = vmatprep.subr.mxu0 0.0
        %1436 = vmatpush1.msra.mxu0 0.0
        %1437 = vmatprep.subr.mxu0 0.0
        %1438 = vmatpush1.msra.mxu0 0.0
        %1439 = vmatprep.subr.mxu0 0.0
        %1440 = vmatpush1.msra.mxu0 0.0
        %1441 = vmatprep.subr.mxu0 0.0
        %1442 = vmatpush1.msra.mxu0 0.0
        %1443 = vmatprep.subr.mxu0 0.0
        %1444 = vmatpush1.msra.mxu0 0.0
        %1445 = vmatprep.subr.mxu0 0.0
        %1446 = vmatpush1.msra.mxu0 0.0
        %1447 = vmatprep.subr.mxu0 0.0
        %1448 = vmatpush1.msra.mxu0 0.0
        %1449 = vmatprep.subr.mxu0 0.0
        %1450 = vmatpush1.msra.mxu0 0.0
        %1451 = vmatprep.subr.mxu0 0.0
        %1452 = vmatpush1.msra.mxu0 0.0
        %1453 = vmatprep.subr.mxu0 0.0
        %1454 = vmatpush1.msra.mxu0 0.0
        %1455 = vmatprep.subr.mxu0 0.0
        %1456 = vmatpush1.msra.mxu0 0.0
        %1457 = vmatprep.subr.mxu0 0.0
        %1458 = vmatpush1.msra.mxu0 0.0
        %1459 = vmatprep.subr.mxu0 0.0
        %1460 = vmatpush1.msra.mxu0 0.0
        %1461 = vmatprep.subr.mxu0 0.0
        %1462 = vmatpush1.msra.mxu0 0.0
        %1463 = vmatprep.subr.mxu0 0.0
        %1464 = vmatpush1.msra.mxu0 0.0
        %1465 = vmatprep.subr.mxu0 0.0
        %1466 = vmatpush1.msra.mxu0 0.0
        %1467 = vmatprep.mubr.f32.mxu0 0.0
        %1468 = vmatmul.mubr.f32.gmra.mrb[0].mxu0 %v1261
        %v1469 = vpop.f32.mrb[0].mxu0
        %v1470 = vadd.f32 0.0, %v1469
        %v1471 = vpop.f32.mrb[0].mxu0
        %v1472 = vadd.f32 0.0, %v1471
        %1473 = vdwg.mxu0
        %v1474 = vadd.f32 %v1264, %v1399
        %v1475 = vadd.f32 %v1265, %v1401
        %v1476 = vadd.f32 %v1266, %v1470
        %v1477 = vadd.f32 %v1267, %v1472
        %v1478 = vxor.u32 %v1474, 2147483648
        %v1479 = vmul.f32 %v1478, 1.442695
        %v1480 = vpow.pop %v1479
        %v1481 = vadd.f32 %v1480, 1.0
        %v1482 = vrcp.pop %v1481
        %v1483 = vmul.f32 1.0, %v1482
        %v1484 = vxor.u32 %v1475, 2147483648
        %v1485 = vmul.f32 %v1484, 1.442695
        %v1486 = vpow.pop %v1485
        %v1487 = vadd.f32 %v1486, 1.0
        %v1488 = vrcp.pop %v1487
        %v1489 = vmul.f32 1.0, %v1488
        %v1490 = vtanh.pop %v1476
        %v1491 = vxor.u32 %v1477, 2147483648
        %v1492 = vmul.f32 %v1491, 1.442695
        %v1493 = vpow.pop %v1492
        %v1494 = vadd.f32 %v1493, 1.0
        %v1495 = vrcp.pop %v1494
        %v1496 = vmul.f32 1.0, %v1495
        %v1497 = vmul.f32 %v1489, %v1259
        %v1498 = vmul.f32 %v1483, %v1490
        %v1499 = vadd.f32 %v1497, %v1498
        %v1500 = vtanh.pop %v1499
        %v1501 = vmul.f32 %v1496, %v1500
        %s1502 = scalar_lea.vmem [#allocation5], 8
        %1503 = vst [vmem:[%s1502] sm:$0xff] %v1501
        %s1504 = scalar_lea.vmem [#allocation4], 64
        %v1505 = vld [vmem:[%s1504] sm:$0xff]
        %v1506 = vld [vmem:[%s1504 + $0x8] sm:$0xff]
        %v1507 = vld [vmem:[%s1504 + $0x10] sm:$0xff]
        %v1508 = vld [vmem:[%s1504 + $0x18] sm:$0xff]
        %v1509 = vld [vmem:[#allocation14] sm:$0xff]
        %v1510 = vld [vmem:[#allocation14 + $0x8] sm:$0xff]
        %v1511 = vld [vmem:[#allocation14 + $0x10] sm:$0xff]
        %v1512 = vld [vmem:[#allocation14 + $0x18] sm:$0xff]
        %v1513 = vld [vmem:[#allocation14 + $0x20] sm:$0xff]
        %v1514 = vld [vmem:[#allocation14 + $0x28] sm:$0xff]
        %v1515 = vld [vmem:[#allocation14 + $0x30] sm:$0xff]
        %v1516 = vld [vmem:[#allocation14 + $0x38] sm:$0xff]
        %v1517 = vld [vmem:[#allocation14 + $0x40] sm:$0xff]
        %v1518 = vld [vmem:[#allocation14 + $0x48] sm:$0xff]
        %v1519 = vld [vmem:[#allocation14 + $0x50] sm:$0xff]
        %v1520 = vld [vmem:[#allocation14 + $0x58] sm:$0xff]
        %v1521 = vld [vmem:[#allocation14 + $0x60] sm:$0xff]
        %v1522 = vld [vmem:[#allocation14 + $0x68] sm:$0xff]
        %v1523 = vld [vmem:[#allocation14 + $0x70] sm:$0xff]
        %v1524 = vld [vmem:[#allocation14 + $0x78] sm:$0xff]
        %v1525 = vld [vmem:[#allocation14 + $0x80] sm:$0xff]
        %v1526 = vld [vmem:[#allocation14 + $0x88] sm:$0xff]
        %v1527 = vld [vmem:[#allocation14 + $0x90] sm:$0xff]
        %v1528 = vld [vmem:[#allocation14 + $0x98] sm:$0xff]
        %v1529 = vld [vmem:[#allocation14 + $0xa0] sm:$0xff]
        %v1530 = vld [vmem:[#allocation14 + $0xa8] sm:$0xff]
        %v1531 = vld [vmem:[#allocation14 + $0xb0] sm:$0xff]
        %v1532 = vld [vmem:[#allocation14 + $0xb8] sm:$0xff]
        %v1533 = vld [vmem:[#allocation14 + $0xc0] sm:$0xff]
        %v1534 = vld [vmem:[#allocation14 + $0xc8] sm:$0xff]
        %v1535 = vld [vmem:[#allocation14 + $0xd0] sm:$0xff]
        %v1536 = vld [vmem:[#allocation14 + $0xd8] sm:$0xff]
        %v1537 = vld [vmem:[#allocation14 + $0xe0] sm:$0xff]
        %v1538 = vld [vmem:[#allocation14 + $0xe8] sm:$0xff]
        %v1539 = vld [vmem:[#allocation14 + $0xf0] sm:$0xff]
        %v1540 = vld [vmem:[#allocation14 + $0xf8] sm:$0xff]
        %v1541 = vld [vmem:[#allocation14 + $0x100] sm:$0xff]
        %v1542 = vld [vmem:[#allocation14 + $0x108] sm:$0xff]
        %v1543 = vld [vmem:[#allocation14 + $0x110] sm:$0xff]
        %v1544 = vld [vmem:[#allocation14 + $0x118] sm:$0xff]
        %v1545 = vld [vmem:[#allocation14 + $0x120] sm:$0xff]
        %v1546 = vld [vmem:[#allocation14 + $0x128] sm:$0xff]
        %v1547 = vld [vmem:[#allocation14 + $0x130] sm:$0xff]
        %v1548 = vld [vmem:[#allocation14 + $0x138] sm:$0xff]
        %v1549 = vld [vmem:[#allocation14 + $0x140] sm:$0xff]
        %v1550 = vld [vmem:[#allocation14 + $0x148] sm:$0xff]
        %v1551 = vld [vmem:[#allocation14 + $0x150] sm:$0xff]
        %v1552 = vld [vmem:[#allocation14 + $0x158] sm:$0xff]
        %v1553 = vld [vmem:[#allocation14 + $0x160] sm:$0xff]
        %v1554 = vld [vmem:[#allocation14 + $0x168] sm:$0xff]
        %v1555 = vld [vmem:[#allocation14 + $0x170] sm:$0xff]
        %v1556 = vld [vmem:[#allocation14 + $0x178] sm:$0xff]
        %v1557 = vld [vmem:[#allocation14 + $0x180] sm:$0xff]
        %v1558 = vld [vmem:[#allocation14 + $0x188] sm:$0xff]
        %v1559 = vld [vmem:[#allocation14 + $0x190] sm:$0xff]
        %v1560 = vld [vmem:[#allocation14 + $0x198] sm:$0xff]
        %v1561 = vld [vmem:[#allocation14 + $0x1a0] sm:$0xff]
        %v1562 = vld [vmem:[#allocation14 + $0x1a8] sm:$0xff]
        %v1563 = vld [vmem:[#allocation14 + $0x1b0] sm:$0xff]
        %v1564 = vld [vmem:[#allocation14 + $0x1b8] sm:$0xff]
        %v1565 = vld [vmem:[#allocation14 + $0x1c0] sm:$0xff]
        %v1566 = vld [vmem:[#allocation14 + $0x1c8] sm:$0xff]
        %v1567 = vld [vmem:[#allocation14 + $0x1d0] sm:$0xff]
        %v1568 = vld [vmem:[#allocation14 + $0x1d8] sm:$0xff]
        %v1569 = vld [vmem:[#allocation14 + $0x1e0] sm:$0xff]
        %v1570 = vld [vmem:[#allocation14 + $0x1e8] sm:$0xff]
        %v1571 = vld [vmem:[#allocation14 + $0x1f0] sm:$0xff]
        %v1572 = vld [vmem:[#allocation14 + $0x1f8] sm:$0xff]
        %1573 = vmatprep.subr.mxu0 %v1510
        %1574 = vmatpush1.msra.mxu0 %v1509
        %1575 = vmatprep.subr.mxu0 %v1514
        %1576 = vmatpush1.msra.mxu0 %v1513
        %1577 = vmatprep.subr.mxu0 %v1518
        %1578 = vmatpush1.msra.mxu0 %v1517
        %1579 = vmatprep.subr.mxu0 %v1522
        %1580 = vmatpush1.msra.mxu0 %v1521
        %1581 = vmatprep.subr.mxu0 %v1526
        %1582 = vmatpush1.msra.mxu0 %v1525
        %1583 = vmatprep.subr.mxu0 %v1530
        %1584 = vmatpush1.msra.mxu0 %v1529
        %1585 = vmatprep.subr.mxu0 %v1534
        %1586 = vmatpush1.msra.mxu0 %v1533
        %1587 = vmatprep.subr.mxu0 %v1538
        %1588 = vmatpush1.msra.mxu0 %v1537
        %1589 = vmatprep.subr.mxu0 %v1542
        %1590 = vmatpush1.msra.mxu0 %v1541
        %1591 = vmatprep.subr.mxu0 %v1546
        %1592 = vmatpush1.msra.mxu0 %v1545
        %1593 = vmatprep.subr.mxu0 %v1550
        %1594 = vmatpush1.msra.mxu0 %v1549
        %1595 = vmatprep.subr.mxu0 %v1554
        %1596 = vmatpush1.msra.mxu0 %v1553
        %1597 = vmatprep.subr.mxu0 %v1558
        %1598 = vmatpush1.msra.mxu0 %v1557
        %1599 = vmatprep.subr.mxu0 %v1562
        %1600 = vmatpush1.msra.mxu0 %v1561
        %1601 = vmatprep.subr.mxu0 %v1566
        %1602 = vmatpush1.msra.mxu0 %v1565
        %1603 = vmatprep.subr.mxu0 %v1570
        %1604 = vmatpush1.msra.mxu0 %v1569
        %1605 = vmatprep.subr.mxu0 0.0
        %1606 = vmatpush1.msra.mxu0 0.0
        %1607 = vmatprep.subr.mxu0 0.0
        %1608 = vmatpush1.msra.mxu0 0.0
        %1609 = vmatprep.subr.mxu0 0.0
        %1610 = vmatpush1.msra.mxu0 0.0
        %1611 = vmatprep.subr.mxu0 0.0
        %1612 = vmatpush1.msra.mxu0 0.0
        %1613 = vmatprep.subr.mxu0 0.0
        %1614 = vmatpush1.msra.mxu0 0.0
        %1615 = vmatprep.subr.mxu0 0.0
        %1616 = vmatpush1.msra.mxu0 0.0
        %1617 = vmatprep.subr.mxu0 0.0
        %1618 = vmatpush1.msra.mxu0 0.0
        %1619 = vmatprep.subr.mxu0 0.0
        %1620 = vmatpush1.msra.mxu0 0.0
        %1621 = vmatprep.subr.mxu0 0.0
        %1622 = vmatpush1.msra.mxu0 0.0
        %1623 = vmatprep.subr.mxu0 0.0
        %1624 = vmatpush1.msra.mxu0 0.0
        %1625 = vmatprep.subr.mxu0 0.0
        %1626 = vmatpush1.msra.mxu0 0.0
        %1627 = vmatprep.subr.mxu0 0.0
        %1628 = vmatpush1.msra.mxu0 0.0
        %1629 = vmatprep.subr.mxu0 0.0
        %1630 = vmatpush1.msra.mxu0 0.0
        %1631 = vmatprep.subr.mxu0 0.0
        %1632 = vmatpush1.msra.mxu0 0.0
        %1633 = vmatprep.subr.mxu0 0.0
        %1634 = vmatpush1.msra.mxu0 0.0
        %1635 = vmatprep.subr.mxu0 0.0
        %1636 = vmatpush1.msra.mxu0 0.0
        %1637 = vmatprep.mubr.f32.mxu0 0.0
        %1638 = vmatmul.mubr.f32.gmra.mrb[0].mxu0 %v1501
        %v1639 = vpop.f32.mrb[0].mxu0
        %v1640 = vadd.f32 0.0, %v1639
        %v1641 = vpop.f32.mrb[0].mxu0
        %v1642 = vadd.f32 0.0, %v1641
        %1643 = vdwg.mxu0
        %1644 = vmatprep.subr.mxu0 %v1512
        %1645 = vmatpush1.msra.mxu0 %v1511
        %1646 = vmatprep.subr.mxu0 %v1516
        %1647 = vmatpush1.msra.mxu0 %v1515
        %1648 = vmatprep.subr.mxu0 %v1520
        %1649 = vmatpush1.msra.mxu0 %v1519
        %1650 = vmatprep.subr.mxu0 %v1524
        %1651 = vmatpush1.msra.mxu0 %v1523
        %1652 = vmatprep.subr.mxu0 %v1528
        %1653 = vmatpush1.msra.mxu0 %v1527
        %1654 = vmatprep.subr.mxu0 %v1532
        %1655 = vmatpush1.msra.mxu0 %v1531
        %1656 = vmatprep.subr.mxu0 %v1536
        %1657 = vmatpush1.msra.mxu0 %v1535
        %1658 = vmatprep.subr.mxu0 %v1540
        %1659 = vmatpush1.msra.mxu0 %v1539
        %1660 = vmatprep.subr.mxu0 %v1544
        %1661 = vmatpush1.msra.mxu0 %v1543
        %1662 = vmatprep.subr.mxu0 %v1548
        %1663 = vmatpush1.msra.mxu0 %v1547
        %1664 = vmatprep.subr.mxu0 %v1552
        %1665 = vmatpush1.msra.mxu0 %v1551
        %1666 = vmatprep.subr.mxu0 %v1556
        %1667 = vmatpush1.msra.mxu0 %v1555
        %1668 = vmatprep.subr.mxu0 %v1560
        %1669 = vmatpush1.msra.mxu0 %v1559
        %1670 = vmatprep.subr.mxu0 %v1564
        %1671 = vmatpush1.msra.mxu0 %v1563
        %1672 = vmatprep.subr.mxu0 %v1568
        %1673 = vmatpush1.msra.mxu0 %v1567
        %1674 = vmatprep.subr.mxu0 %v1572
        %1675 = vmatpush1.msra.mxu0 %v1571
        %1676 = vmatprep.subr.mxu0 0.0
        %1677 = vmatpush1.msra.mxu0 0.0
        %1678 = vmatprep.subr.mxu0 0.0
        %1679 = vmatpush1.msra.mxu0 0.0
        %1680 = vmatprep.subr.mxu0 0.0
        %1681 = vmatpush1.msra.mxu0 0.0
        %1682 = vmatprep.subr.mxu0 0.0
        %1683 = vmatpush1.msra.mxu0 0.0
        %1684 = vmatprep.subr.mxu0 0.0
        %1685 = vmatpush1.msra.mxu0 0.0
        %1686 = vmatprep.subr.mxu0 0.0
        %1687 = vmatpush1.msra.mxu0 0.0
        %1688 = vmatprep.subr.mxu0 0.0
        %1689 = vmatpush1.msra.mxu0 0.0
        %1690 = vmatprep.subr.mxu0 0.0
        %1691 = vmatpush1.msra.mxu0 0.0
        %1692 = vmatprep.subr.mxu0 0.0
        %1693 = vmatpush1.msra.mxu0 0.0
        %1694 = vmatprep.subr.mxu0 0.0
        %1695 = vmatpush1.msra.mxu0 0.0
        %1696 = vmatprep.subr.mxu0 0.0
        %1697 = vmatpush1.msra.mxu0 0.0
        %1698 = vmatprep.subr.mxu0 0.0
        %1699 = vmatpush1.msra.mxu0 0.0
        %1700 = vmatprep.subr.mxu0 0.0
        %1701 = vmatpush1.msra.mxu0 0.0
        %1702 = vmatprep.subr.mxu0 0.0
        %1703 = vmatpush1.msra.mxu0 0.0
        %1704 = vmatprep.subr.mxu0 0.0
        %1705 = vmatpush1.msra.mxu0 0.0
        %1706 = vmatprep.subr.mxu0 0.0
        %1707 = vmatpush1.msra.mxu0 0.0
        %1708 = vmatprep.mubr.f32.mxu0 0.0
        %1709 = vmatmul.mubr.f32.gmra.mrb[0].mxu0 %v1501
        %v1710 = vpop.f32.mrb[0].mxu0
        %v1711 = vadd.f32 0.0, %v1710
        %v1712 = vpop.f32.mrb[0].mxu0
        %v1713 = vadd.f32 0.0, %v1712
        %1714 = vdwg.mxu0
        %v1715 = vadd.f32 %v1505, %v1640
        %v1716 = vadd.f32 %v1506, %v1642
        %v1717 = vadd.f32 %v1507, %v1711
        %v1718 = vadd.f32 %v1508, %v1713
        %v1719 = vxor.u32 %v1715, 2147483648
        %v1720 = vmul.f32 %v1719, 1.442695
        %v1721 = vpow.pop %v1720
        %v1722 = vadd.f32 %v1721, 1.0
        %v1723 = vrcp.pop %v1722
        %v1724 = vmul.f32 1.0, %v1723
        %v1725 = vxor.u32 %v1716, 2147483648
        %v1726 = vmul.f32 %v1725, 1.442695
        %v1727 = vpow.pop %v1726
        %v1728 = vadd.f32 %v1727, 1.0
        %v1729 = vrcp.pop %v1728
        %v1730 = vmul.f32 1.0, %v1729
        %v1731 = vtanh.pop %v1717
        %v1732 = vxor.u32 %v1718, 2147483648
        %v1733 = vmul.f32 %v1732, 1.442695
        %v1734 = vpow.pop %v1733
        %v1735 = vadd.f32 %v1734, 1.0
        %v1736 = vrcp.pop %v1735
        %v1737 = vmul.f32 1.0, %v1736
        %v1738 = vmul.f32 %v1730, %v1499
        %v1739 = vmul.f32 %v1724, %v1731
        %v1740 = vadd.f32 %v1738, %v1739
        %v1741 = vtanh.pop %v1740
        %v1742 = vmul.f32 %v1737, %v1741
        %s1743 = scalar_lea.vmem [#allocation5], 16
        %1744 = vst [vmem:[%s1743] sm:$0xff] %v1742
        %s1745 = scalar_lea.vmem [#allocation4], 96
        %v1746 = vld [vmem:[%s1745] sm:$0xff]
        %v1747 = vld [vmem:[%s1745 + $0x8] sm:$0xff]
        %v1748 = vld [vmem:[%s1745 + $0x10] sm:$0xff]
        %v1749 = vld [vmem:[%s1745 + $0x18] sm:$0xff]
        %v1750 = vld [vmem:[#allocation14] sm:$0xff]
        %v1751 = vld [vmem:[#allocation14 + $0x8] sm:$0xff]
        %v1752 = vld [vmem:[#allocation14 + $0x10] sm:$0xff]
        %v1753 = vld [vmem:[#allocation14 + $0x18] sm:$0xff]
        %v1754 = vld [vmem:[#allocation14 + $0x20] sm:$0xff]
        %v1755 = vld [vmem:[#allocation14 + $0x28] sm:$0xff]
        %v1756 = vld [vmem:[#allocation14 + $0x30] sm:$0xff]
        %v1757 = vld [vmem:[#allocation14 + $0x38] sm:$0xff]
        %v1758 = vld [vmem:[#allocation14 + $0x40] sm:$0xff]
        %v1759 = vld [vmem:[#allocation14 + $0x48] sm:$0xff]
        %v1760 = vld [vmem:[#allocation14 + $0x50] sm:$0xff]
        %v1761 = vld [vmem:[#allocation14 + $0x58] sm:$0xff]
        %v1762 = vld [vmem:[#allocation14 + $0x60] sm:$0xff]
        %v1763 = vld [vmem:[#allocation14 + $0x68] sm:$0xff]
        %v1764 = vld [vmem:[#allocation14 + $0x70] sm:$0xff]
        %v1765 = vld [vmem:[#allocation14 + $0x78] sm:$0xff]
        %v1766 = vld [vmem:[#allocation14 + $0x80] sm:$0xff]
        %v1767 = vld [vmem:[#allocation14 + $0x88] sm:$0xff]
        %v1768 = vld [vmem:[#allocation14 + $0x90] sm:$0xff]
        %v1769 = vld [vmem:[#allocation14 + $0x98] sm:$0xff]
        %v1770 = vld [vmem:[#allocation14 + $0xa0] sm:$0xff]
        %v1771 = vld [vmem:[#allocation14 + $0xa8] sm:$0xff]
        %v1772 = vld [vmem:[#allocation14 + $0xb0] sm:$0xff]
        %v1773 = vld [vmem:[#allocation14 + $0xb8] sm:$0xff]
        %v1774 = vld [vmem:[#allocation14 + $0xc0] sm:$0xff]
        %v1775 = vld [vmem:[#allocation14 + $0xc8] sm:$0xff]
        %v1776 = vld [vmem:[#allocation14 + $0xd0] sm:$0xff]
        %v1777 = vld [vmem:[#allocation14 + $0xd8] sm:$0xff]
        %v1778 = vld [vmem:[#allocation14 + $0xe0] sm:$0xff]
        %v1779 = vld [vmem:[#allocation14 + $0xe8] sm:$0xff]
        %v1780 = vld [vmem:[#allocation14 + $0xf0] sm:$0xff]
        %v1781 = vld [vmem:[#allocation14 + $0xf8] sm:$0xff]
        %v1782 = vld [vmem:[#allocation14 + $0x100] sm:$0xff]
        %v1783 = vld [vmem:[#allocation14 + $0x108] sm:$0xff]
        %v1784 = vld [vmem:[#allocation14 + $0x110] sm:$0xff]
        %v1785 = vld [vmem:[#allocation14 + $0x118] sm:$0xff]
        %v1786 = vld [vmem:[#allocation14 + $0x120] sm:$0xff]
        %v1787 = vld [vmem:[#allocation14 + $0x128] sm:$0xff]
        %v1788 = vld [vmem:[#allocation14 + $0x130] sm:$0xff]
        %v1789 = vld [vmem:[#allocation14 + $0x138] sm:$0xff]
        %v1790 = vld [vmem:[#allocation14 + $0x140] sm:$0xff]
        %v1791 = vld [vmem:[#allocation14 + $0x148] sm:$0xff]
        %v1792 = vld [vmem:[#allocation14 + $0x150] sm:$0xff]
        %v1793 = vld [vmem:[#allocation14 + $0x158] sm:$0xff]
        %v1794 = vld [vmem:[#allocation14 + $0x160] sm:$0xff]
        %v1795 = vld [vmem:[#allocation14 + $0x168] sm:$0xff]
        %v1796 = vld [vmem:[#allocation14 + $0x170] sm:$0xff]
        %v1797 = vld [vmem:[#allocation14 + $0x178] sm:$0xff]
        %v1798 = vld [vmem:[#allocation14 + $0x180] sm:$0xff]
        %v1799 = vld [vmem:[#allocation14 + $0x188] sm:$0xff]
        %v1800 = vld [vmem:[#allocation14 + $0x190] sm:$0xff]
        %v1801 = vld [vmem:[#allocation14 + $0x198] sm:$0xff]
        %v1802 = vld [vmem:[#allocation14 + $0x1a0] sm:$0xff]
        %v1803 = vld [vmem:[#allocation14 + $0x1a8] sm:$0xff]
        %v1804 = vld [vmem:[#allocation14 + $0x1b0] sm:$0xff]
        %v1805 = vld [vmem:[#allocation14 + $0x1b8] sm:$0xff]
        %v1806 = vld [vmem:[#allocation14 + $0x1c0] sm:$0xff]
        %v1807 = vld [vmem:[#allocation14 + $0x1c8] sm:$0xff]
        %v1808 = vld [vmem:[#allocation14 + $0x1d0] sm:$0xff]
        %v1809 = vld [vmem:[#allocation14 + $0x1d8] sm:$0xff]
        %v1810 = vld [vmem:[#allocation14 + $0x1e0] sm:$0xff]
        %v1811 = vld [vmem:[#allocation14 + $0x1e8] sm:$0xff]
        %v1812 = vld [vmem:[#allocation14 + $0x1f0] sm:$0xff]
        %v1813 = vld [vmem:[#allocation14 + $0x1f8] sm:$0xff]
        %1814 = vmatprep.subr.mxu0 %v1751
        %1815 = vmatpush1.msra.mxu0 %v1750
        %1816 = vmatprep.subr.mxu0 %v1755
        %1817 = vmatpush1.msra.mxu0 %v1754
        %1818 = vmatprep.subr.mxu0 %v1759
        %1819 = vmatpush1.msra.mxu0 %v1758
        %1820 = vmatprep.subr.mxu0 %v1763
        %1821 = vmatpush1.msra.mxu0 %v1762
        %1822 = vmatprep.subr.mxu0 %v1767
        %1823 = vmatpush1.msra.mxu0 %v1766
        %1824 = vmatprep.subr.mxu0 %v1771
        %1825 = vmatpush1.msra.mxu0 %v1770
        %1826 = vmatprep.subr.mxu0 %v1775
        %1827 = vmatpush1.msra.mxu0 %v1774
        %1828 = vmatprep.subr.mxu0 %v1779
        %1829 = vmatpush1.msra.mxu0 %v1778
        %1830 = vmatprep.subr.mxu0 %v1783
        %1831 = vmatpush1.msra.mxu0 %v1782
        %1832 = vmatprep.subr.mxu0 %v1787
        %1833 = vmatpush1.msra.mxu0 %v1786
        %1834 = vmatprep.subr.mxu0 %v1791
        %1835 = vmatpush1.msra.mxu0 %v1790
        %1836 = vmatprep.subr.mxu0 %v1795
        %1837 = vmatpush1.msra.mxu0 %v1794
        %1838 = vmatprep.subr.mxu0 %v1799
        %1839 = vmatpush1.msra.mxu0 %v1798
        %1840 = vmatprep.subr.mxu0 %v1803
        %1841 = vmatpush1.msra.mxu0 %v1802
        %1842 = vmatprep.subr.mxu0 %v1807
        %1843 = vmatpush1.msra.mxu0 %v1806
        %1844 = vmatprep.subr.mxu0 %v1811
        %1845 = vmatpush1.msra.mxu0 %v1810
        %1846 = vmatprep.subr.mxu0 0.0
        %1847 = vmatpush1.msra.mxu0 0.0
        %1848 = vmatprep.subr.mxu0 0.0
        %1849 = vmatpush1.msra.mxu0 0.0
        %1850 = vmatprep.subr.mxu0 0.0
        %1851 = vmatpush1.msra.mxu0 0.0
        %1852 = vmatprep.subr.mxu0 0.0
        %1853 = vmatpush1.msra.mxu0 0.0
        %1854 = vmatprep.subr.mxu0 0.0
        %1855 = vmatpush1.msra.mxu0 0.0
        %1856 = vmatprep.subr.mxu0 0.0
        %1857 = vmatpush1.msra.mxu0 0.0
        %1858 = vmatprep.subr.mxu0 0.0
        %1859 = vmatpush1.msra.mxu0 0.0
        %1860 = vmatprep.subr.mxu0 0.0
        %1861 = vmatpush1.msra.mxu0 0.0
        %1862 = vmatprep.subr.mxu0 0.0
        %1863 = vmatpush1.msra.mxu0 0.0
        %1864 = vmatprep.subr.mxu0 0.0
        %1865 = vmatpush1.msra.mxu0 0.0
        %1866 = vmatprep.subr.mxu0 0.0
        %1867 = vmatpush1.msra.mxu0 0.0
        %1868 = vmatprep.subr.mxu0 0.0
        %1869 = vmatpush1.msra.mxu0 0.0
        %1870 = vmatprep.subr.mxu0 0.0
        %1871 = vmatpush1.msra.mxu0 0.0
        %1872 = vmatprep.subr.mxu0 0.0
        %1873 = vmatpush1.msra.mxu0 0.0
        %1874 = vmatprep.subr.mxu0 0.0
        %1875 = vmatpush1.msra.mxu0 0.0
        %1876 = vmatprep.subr.mxu0 0.0
        %1877 = vmatpush1.msra.mxu0 0.0
        %1878 = vmatprep.mubr.f32.mxu0 0.0
        %1879 = vmatmul.mubr.f32.gmra.mrb[0].mxu0 %v1742
        %v1880 = vpop.f32.mrb[0].mxu0
        %v1881 = vadd.f32 0.0, %v1880
        %v1882 = vpop.f32.mrb[0].mxu0
        %v1883 = vadd.f32 0.0, %v1882
        %1884 = vdwg.mxu0
        %1885 = vmatprep.subr.mxu0 %v1753
        %1886 = vmatpush1.msra.mxu0 %v1752
        %1887 = vmatprep.subr.mxu0 %v1757
        %1888 = vmatpush1.msra.mxu0 %v1756
        %1889 = vmatprep.subr.mxu0 %v1761
        %1890 = vmatpush1.msra.mxu0 %v1760
        %1891 = vmatprep.subr.mxu0 %v1765
        %1892 = vmatpush1.msra.mxu0 %v1764
        %1893 = vmatprep.subr.mxu0 %v1769
        %1894 = vmatpush1.msra.mxu0 %v1768
        %1895 = vmatprep.subr.mxu0 %v1773
        %1896 = vmatpush1.msra.mxu0 %v1772
        %1897 = vmatprep.subr.mxu0 %v1777
        %1898 = vmatpush1.msra.mxu0 %v1776
        %1899 = vmatprep.subr.mxu0 %v1781
        %1900 = vmatpush1.msra.mxu0 %v1780
        %1901 = vmatprep.subr.mxu0 %v1785
        %1902 = vmatpush1.msra.mxu0 %v1784
        %1903 = vmatprep.subr.mxu0 %v1789
        %1904 = vmatpush1.msra.mxu0 %v1788
        %1905 = vmatprep.subr.mxu0 %v1793
        %1906 = vmatpush1.msra.mxu0 %v1792
        %1907 = vmatprep.subr.mxu0 %v1797
        %1908 = vmatpush1.msra.mxu0 %v1796
        %1909 = vmatprep.subr.mxu0 %v1801
        %1910 = vmatpush1.msra.mxu0 %v1800
        %1911 = vmatprep.subr.mxu0 %v1805
        %1912 = vmatpush1.msra.mxu0 %v1804
        %1913 = vmatprep.subr.mxu0 %v1809
        %1914 = vmatpush1.msra.mxu0 %v1808
        %1915 = vmatprep.subr.mxu0 %v1813
        %1916 = vmatpush1.msra.mxu0 %v1812
        %1917 = vmatprep.subr.mxu0 0.0
        %1918 = vmatpush1.msra.mxu0 0.0
        %1919 = vmatprep.subr.mxu0 0.0
        %1920 = vmatpush1.msra.mxu0 0.0
        %1921 = vmatprep.subr.mxu0 0.0
        %1922 = vmatpush1.msra.mxu0 0.0
        %1923 = vmatprep.subr.mxu0 0.0
        %1924 = vmatpush1.msra.mxu0 0.0
        %1925 = vmatprep.subr.mxu0 0.0
        %1926 = vmatpush1.msra.mxu0 0.0
        %1927 = vmatprep.subr.mxu0 0.0
        %1928 = vmatpush1.msra.mxu0 0.0
        %1929 = vmatprep.subr.mxu0 0.0
        %1930 = vmatpush1.msra.mxu0 0.0
        %1931 = vmatprep.subr.mxu0 0.0
        %1932 = vmatpush1.msra.mxu0 0.0
        %1933 = vmatprep.subr.mxu0 0.0
        %1934 = vmatpush1.msra.mxu0 0.0
        %1935 = vmatprep.subr.mxu0 0.0
        %1936 = vmatpush1.msra.mxu0 0.0
        %1937 = vmatprep.subr.mxu0 0.0
        %1938 = vmatpush1.msra.mxu0 0.0
        %1939 = vmatprep.subr.mxu0 0.0
        %1940 = vmatpush1.msra.mxu0 0.0
        %1941 = vmatprep.subr.mxu0 0.0
        %1942 = vmatpush1.msra.mxu0 0.0
        %1943 = vmatprep.subr.mxu0 0.0
        %1944 = vmatpush1.msra.mxu0 0.0
        %1945 = vmatprep.subr.mxu0 0.0
        %1946 = vmatpush1.msra.mxu0 0.0
        %1947 = vmatprep.subr.mxu0 0.0
        %1948 = vmatpush1.msra.mxu0 0.0
        %1949 = vmatprep.mubr.f32.mxu0 0.0
        %1950 = vmatmul.mubr.f32.gmra.mrb[0].mxu0 %v1742
        %v1951 = vpop.f32.mrb[0].mxu0
        %v1952 = vadd.f32 0.0, %v1951
        %v1953 = vpop.f32.mrb[0].mxu0
        %v1954 = vadd.f32 0.0, %v1953
        %1955 = vdwg.mxu0
        %v1956 = vadd.f32 %v1746, %v1881
        %v1957 = vadd.f32 %v1747, %v1883
        %v1958 = vadd.f32 %v1748, %v1952
        %v1959 = vadd.f32 %v1749, %v1954
        %v1960 = vxor.u32 %v1956, 2147483648
        %v1961 = vmul.f32 %v1960, 1.442695
        %v1962 = vpow.pop %v1961
        %v1963 = vadd.f32 %v1962, 1.0
        %v1964 = vrcp.pop %v1963
        %v1965 = vmul.f32 1.0, %v1964
        %v1966 = vxor.u32 %v1957, 2147483648
        %v1967 = vmul.f32 %v1966, 1.442695
        %v1968 = vpow.pop %v1967
        %v1969 = vadd.f32 %v1968, 1.0
        %v1970 = vrcp.pop %v1969
        %v1971 = vmul.f32 1.0, %v1970
        %v1972 = vtanh.pop %v1958
        %v1973 = vxor.u32 %v1959, 2147483648
        %v1974 = vmul.f32 %v1973, 1.442695
        %v1975 = vpow.pop %v1974
        %v1976 = vadd.f32 %v1975, 1.0
        %v1977 = vrcp.pop %v1976
        %v1978 = vmul.f32 1.0, %v1977
        %v1979 = vmul.f32 %v1971, %v1740
        %v1980 = vmul.f32 %v1965, %v1972
        %v1981 = vadd.f32 %v1979, %v1980
        %v1982 = vtanh.pop %v1981
        %v1983 = vmul.f32 %v1978, %v1982
        %s1984 = scalar_lea.vmem [#allocation5], 24
        %1985 = vst [vmem:[%s1984] sm:$0xff] %v1983
        %s1986 = scalar_lea.vmem [#allocation4], 128
        %v1987 = vld [vmem:[%s1986] sm:$0xff]
        %v1988 = vld [vmem:[%s1986 + $0x8] sm:$0xff]
        %v1989 = vld [vmem:[%s1986 + $0x10] sm:$0xff]
        %v1990 = vld [vmem:[%s1986 + $0x18] sm:$0xff]
        %v1991 = vld [vmem:[#allocation14] sm:$0xff]
        %v1992 = vld [vmem:[#allocation14 + $0x8] sm:$0xff]
        %v1993 = vld [vmem:[#allocation14 + $0x10] sm:$0xff]
        %v1994 = vld [vmem:[#allocation14 + $0x18] sm:$0xff]
        %v1995 = vld [vmem:[#allocation14 + $0x20] sm:$0xff]
        %v1996 = vld [vmem:[#allocation14 + $0x28] sm:$0xff]
        %v1997 = vld [vmem:[#allocation14 + $0x30] sm:$0xff]
        %v1998 = vld [vmem:[#allocation14 + $0x38] sm:$0xff]
        %v1999 = vld [vmem:[#allocation14 + $0x40] sm:$0xff]
        %v2000 = vld [vmem:[#allocation14 + $0x48] sm:$0xff]
        %v2001 = vld [vmem:[#allocation14 + $0x50] sm:$0xff]
        %v2002 = vld [vmem:[#allocation14 + $0x58] sm:$0xff]
        %v2003 = vld [vmem:[#allocation14 + $0x60] sm:$0xff]
        %v2004 = vld [vmem:[#allocation14 + $0x68] sm:$0xff]
        %v2005 = vld [vmem:[#allocation14 + $0x70] sm:$0xff]
        %v2006 = vld [vmem:[#allocation14 + $0x78] sm:$0xff]
        %v2007 = vld [vmem:[#allocation14 + $0x80] sm:$0xff]
        %v2008 = vld [vmem:[#allocation14 + $0x88] sm:$0xff]
        %v2009 = vld [vmem:[#allocation14 + $0x90] sm:$0xff]
        %v2010 = vld [vmem:[#allocation14 + $0x98] sm:$0xff]
        %v2011 = vld [vmem:[#allocation14 + $0xa0] sm:$0xff]
        %v2012 = vld [vmem:[#allocation14 + $0xa8] sm:$0xff]
        %v2013 = vld [vmem:[#allocation14 + $0xb0] sm:$0xff]
        %v2014 = vld [vmem:[#allocation14 + $0xb8] sm:$0xff]
        %v2015 = vld [vmem:[#allocation14 + $0xc0] sm:$0xff]
        %v2016 = vld [vmem:[#allocation14 + $0xc8] sm:$0xff]
        %v2017 = vld [vmem:[#allocation14 + $0xd0] sm:$0xff]
        %v2018 = vld [vmem:[#allocation14 + $0xd8] sm:$0xff]
        %v2019 = vld [vmem:[#allocation14 + $0xe0] sm:$0xff]
        %v2020 = vld [vmem:[#allocation14 + $0xe8] sm:$0xff]
        %v2021 = vld [vmem:[#allocation14 + $0xf0] sm:$0xff]
        %v2022 = vld [vmem:[#allocation14 + $0xf8] sm:$0xff]
        %v2023 = vld [vmem:[#allocation14 + $0x100] sm:$0xff]
        %v2024 = vld [vmem:[#allocation14 + $0x108] sm:$0xff]
        %v2025 = vld [vmem:[#allocation14 + $0x110] sm:$0xff]
        %v2026 = vld [vmem:[#allocation14 + $0x118] sm:$0xff]
        %v2027 = vld [vmem:[#allocation14 + $0x120] sm:$0xff]
        %v2028 = vld [vmem:[#allocation14 + $0x128] sm:$0xff]
        %v2029 = vld [vmem:[#allocation14 + $0x130] sm:$0xff]
        %v2030 = vld [vmem:[#allocation14 + $0x138] sm:$0xff]
        %v2031 = vld [vmem:[#allocation14 + $0x140] sm:$0xff]
        %v2032 = vld [vmem:[#allocation14 + $0x148] sm:$0xff]
        %v2033 = vld [vmem:[#allocation14 + $0x150] sm:$0xff]
        %v2034 = vld [vmem:[#allocation14 + $0x158] sm:$0xff]
        %v2035 = vld [vmem:[#allocation14 + $0x160] sm:$0xff]
        %v2036 = vld [vmem:[#allocation14 + $0x168] sm:$0xff]
        %v2037 = vld [vmem:[#allocation14 + $0x170] sm:$0xff]
        %v2038 = vld [vmem:[#allocation14 + $0x178] sm:$0xff]
        %v2039 = vld [vmem:[#allocation14 + $0x180] sm:$0xff]
        %v2040 = vld [vmem:[#allocation14 + $0x188] sm:$0xff]
        %v2041 = vld [vmem:[#allocation14 + $0x190] sm:$0xff]
        %v2042 = vld [vmem:[#allocation14 + $0x198] sm:$0xff]
        %v2043 = vld [vmem:[#allocation14 + $0x1a0] sm:$0xff]
        %v2044 = vld [vmem:[#allocation14 + $0x1a8] sm:$0xff]
        %v2045 = vld [vmem:[#allocation14 + $0x1b0] sm:$0xff]
        %v2046 = vld [vmem:[#allocation14 + $0x1b8] sm:$0xff]
        %v2047 = vld [vmem:[#allocation14 + $0x1c0] sm:$0xff]
        %v2048 = vld [vmem:[#allocation14 + $0x1c8] sm:$0xff]
        %v2049 = vld [vmem:[#allocation14 + $0x1d0] sm:$0xff]
        %v2050 = vld [vmem:[#allocation14 + $0x1d8] sm:$0xff]
        %v2051 = vld [vmem:[#allocation14 + $0x1e0] sm:$0xff]
        %v2052 = vld [vmem:[#allocation14 + $0x1e8] sm:$0xff]
        %v2053 = vld [vmem:[#allocation14 + $0x1f0] sm:$0xff]
        %v2054 = vld [vmem:[#allocation14 + $0x1f8] sm:$0xff]
        %2055 = vmatprep.subr.mxu0 %v1992
        %2056 = vmatpush1.msra.mxu0 %v1991
        %2057 = vmatprep.subr.mxu0 %v1996
        %2058 = vmatpush1.msra.mxu0 %v1995
        %2059 = vmatprep.subr.mxu0 %v2000
        %2060 = vmatpush1.msra.mxu0 %v1999
        %2061 = vmatprep.subr.mxu0 %v2004
        %2062 = vmatpush1.msra.mxu0 %v2003
        %2063 = vmatprep.subr.mxu0 %v2008
        %2064 = vmatpush1.msra.mxu0 %v2007
        %2065 = vmatprep.subr.mxu0 %v2012
        %2066 = vmatpush1.msra.mxu0 %v2011
        %2067 = vmatprep.subr.mxu0 %v2016
        %2068 = vmatpush1.msra.mxu0 %v2015
        %2069 = vmatprep.subr.mxu0 %v2020
        %2070 = vmatpush1.msra.mxu0 %v2019
        %2071 = vmatprep.subr.mxu0 %v2024
        %2072 = vmatpush1.msra.mxu0 %v2023
        %2073 = vmatprep.subr.mxu0 %v2028
        %2074 = vmatpush1.msra.mxu0 %v2027
        %2075 = vmatprep.subr.mxu0 %v2032
        %2076 = vmatpush1.msra.mxu0 %v2031
        %2077 = vmatprep.subr.mxu0 %v2036
        %2078 = vmatpush1.msra.mxu0 %v2035
        %2079 = vmatprep.subr.mxu0 %v2040
        %2080 = vmatpush1.msra.mxu0 %v2039
        %2081 = vmatprep.subr.mxu0 %v2044
        %2082 = vmatpush1.msra.mxu0 %v2043
        %2083 = vmatprep.subr.mxu0 %v2048
        %2084 = vmatpush1.msra.mxu0 %v2047
        %2085 = vmatprep.subr.mxu0 %v2052
        %2086 = vmatpush1.msra.mxu0 %v2051
        %2087 = vmatprep.subr.mxu0 0.0
        %2088 = vmatpush1.msra.mxu0 0.0
        %2089 = vmatprep.subr.mxu0 0.0
        %2090 = vmatpush1.msra.mxu0 0.0
        %2091 = vmatprep.subr.mxu0 0.0
        %2092 = vmatpush1.msra.mxu0 0.0
        %2093 = vmatprep.subr.mxu0 0.0
        %2094 = vmatpush1.msra.mxu0 0.0
        %2095 = vmatprep.subr.mxu0 0.0
        %2096 = vmatpush1.msra.mxu0 0.0
        %2097 = vmatprep.subr.mxu0 0.0
        %2098 = vmatpush1.msra.mxu0 0.0
        %2099 = vmatprep.subr.mxu0 0.0
        %2100 = vmatpush1.msra.mxu0 0.0
        %2101 = vmatprep.subr.mxu0 0.0
        %2102 = vmatpush1.msra.mxu0 0.0
        %2103 = vmatprep.subr.mxu0 0.0
        %2104 = vmatpush1.msra.mxu0 0.0
        %2105 = vmatprep.subr.mxu0 0.0
        %2106 = vmatpush1.msra.mxu0 0.0
        %2107 = vmatprep.subr.mxu0 0.0
        %2108 = vmatpush1.msra.mxu0 0.0
        %2109 = vmatprep.subr.mxu0 0.0
        %2110 = vmatpush1.msra.mxu0 0.0
        %2111 = vmatprep.subr.mxu0 0.0
        %2112 = vmatpush1.msra.mxu0 0.0
        %2113 = vmatprep.subr.mxu0 0.0
        %2114 = vmatpush1.msra.mxu0 0.0
        %2115 = vmatprep.subr.mxu0 0.0
        %2116 = vmatpush1.msra.mxu0 0.0
        %2117 = vmatprep.subr.mxu0 0.0
        %2118 = vmatpush1.msra.mxu0 0.0
        %2119 = vmatprep.mubr.f32.mxu0 0.0
        %2120 = vmatmul.mubr.f32.gmra.mrb[0].mxu0 %v1983
        %v2121 = vpop.f32.mrb[0].mxu0
        %v2122 = vadd.f32 0.0, %v2121
        %v2123 = vpop.f32.mrb[0].mxu0
        %v2124 = vadd.f32 0.0, %v2123
        %2125 = vdwg.mxu0
        %2126 = vmatprep.subr.mxu0 %v1994
        %2127 = vmatpush1.msra.mxu0 %v1993
        %2128 = vmatprep.subr.mxu0 %v1998
        %2129 = vmatpush1.msra.mxu0 %v1997
        %2130 = vmatprep.subr.mxu0 %v2002
        %2131 = vmatpush1.msra.mxu0 %v2001
        %2132 = vmatprep.subr.mxu0 %v2006
        %2133 = vmatpush1.msra.mxu0 %v2005
        %2134 = vmatprep.subr.mxu0 %v2010
        %2135 = vmatpush1.msra.mxu0 %v2009
        %2136 = vmatprep.subr.mxu0 %v2014
        %2137 = vmatpush1.msra.mxu0 %v2013
        %2138 = vmatprep.subr.mxu0 %v2018
        %2139 = vmatpush1.msra.mxu0 %v2017
        %2140 = vmatprep.subr.mxu0 %v2022
        %2141 = vmatpush1.msra.mxu0 %v2021
        %2142 = vmatprep.subr.mxu0 %v2026
        %2143 = vmatpush1.msra.mxu0 %v2025
        %2144 = vmatprep.subr.mxu0 %v2030
        %2145 = vmatpush1.msra.mxu0 %v2029
        %2146 = vmatprep.subr.mxu0 %v2034
        %2147 = vmatpush1.msra.mxu0 %v2033
        %2148 = vmatprep.subr.mxu0 %v2038
        %2149 = vmatpush1.msra.mxu0 %v2037
        %2150 = vmatprep.subr.mxu0 %v2042
        %2151 = vmatpush1.msra.mxu0 %v2041
        %2152 = vmatprep.subr.mxu0 %v2046
        %2153 = vmatpush1.msra.mxu0 %v2045
        %2154 = vmatprep.subr.mxu0 %v2050
        %2155 = vmatpush1.msra.mxu0 %v2049
        %2156 = vmatprep.subr.mxu0 %v2054
        %2157 = vmatpush1.msra.mxu0 %v2053
        %2158 = vmatprep.subr.mxu0 0.0
        %2159 = vmatpush1.msra.mxu0 0.0
        %2160 = vmatprep.subr.mxu0 0.0
        %2161 = vmatpush1.msra.mxu0 0.0
        %2162 = vmatprep.subr.mxu0 0.0
        %2163 = vmatpush1.msra.mxu0 0.0
        %2164 = vmatprep.subr.mxu0 0.0
        %2165 = vmatpush1.msra.mxu0 0.0
        %2166 = vmatprep.subr.mxu0 0.0
        %2167 = vmatpush1.msra.mxu0 0.0
        %2168 = vmatprep.subr.mxu0 0.0
        %2169 = vmatpush1.msra.mxu0 0.0
        %2170 = vmatprep.subr.mxu0 0.0
        %2171 = vmatpush1.msra.mxu0 0.0
        %2172 = vmatprep.subr.mxu0 0.0
        %2173 = vmatpush1.msra.mxu0 0.0
        %2174 = vmatprep.subr.mxu0 0.0
        %2175 = vmatpush1.msra.mxu0 0.0
        %2176 = vmatprep.subr.mxu0 0.0
        %2177 = vmatpush1.msra.mxu0 0.0
        %2178 = vmatprep.subr.mxu0 0.0
        %2179 = vmatpush1.msra.mxu0 0.0
        %2180 = vmatprep.subr.mxu0 0.0
        %2181 = vmatpush1.msra.mxu0 0.0
        %2182 = vmatprep.subr.mxu0 0.0
        %2183 = vmatpush1.msra.mxu0 0.0
        %2184 = vmatprep.subr.mxu0 0.0
        %2185 = vmatpush1.msra.mxu0 0.0
        %2186 = vmatprep.subr.mxu0 0.0
        %2187 = vmatpush1.msra.mxu0 0.0
        %2188 = vmatprep.subr.mxu0 0.0
        %2189 = vmatpush1.msra.mxu0 0.0
        %2190 = vmatprep.mubr.f32.mxu0 0.0
        %2191 = vmatmul.mubr.f32.gmra.mrb[0].mxu0 %v1983
        %v2192 = vpop.f32.mrb[0].mxu0
        %v2193 = vadd.f32 0.0, %v2192
        %v2194 = vpop.f32.mrb[0].mxu0
        %v2195 = vadd.f32 0.0, %v2194
        %2196 = vdwg.mxu0
        %v2197 = vadd.f32 %v1987, %v2122
        %v2198 = vadd.f32 %v1988, %v2124
        %v2199 = vadd.f32 %v1989, %v2193
        %v2200 = vadd.f32 %v1990, %v2195
        %v2201 = vxor.u32 %v2197, 2147483648
        %v2202 = vmul.f32 %v2201, 1.442695
        %v2203 = vpow.pop %v2202
        %v2204 = vadd.f32 %v2203, 1.0
        %v2205 = vrcp.pop %v2204
        %v2206 = vmul.f32 1.0, %v2205
        %v2207 = vxor.u32 %v2198, 2147483648
        %v2208 = vmul.f32 %v2207, 1.442695
        %v2209 = vpow.pop %v2208
        %v2210 = vadd.f32 %v2209, 1.0
        %v2211 = vrcp.pop %v2210
        %v2212 = vmul.f32 1.0, %v2211
        %v2213 = vtanh.pop %v2199
        %v2214 = vxor.u32 %v2200, 2147483648
        %v2215 = vmul.f32 %v2214, 1.442695
        %v2216 = vpow.pop %v2215
        %v2217 = vadd.f32 %v2216, 1.0
        %v2218 = vrcp.pop %v2217
        %v2219 = vmul.f32 1.0, %v2218
        %v2220 = vmul.f32 %v2212, %v1981
        %v2221 = vmul.f32 %v2206, %v2213
        %v2222 = vadd.f32 %v2220, %v2221
        %v2223 = vtanh.pop %v2222
        %v2224 = vmul.f32 %v2219, %v2223
        %s2225 = scalar_lea.vmem [#allocation5], 32
        %2226 = vst [vmem:[%s2225] sm:$0xff] %v2224
        %s2227 = scalar_lea.vmem [#allocation4], 160
        %v2228 = vld [vmem:[%s2227] sm:$0xff]
        %v2229 = vld [vmem:[%s2227 + $0x8] sm:$0xff]
        %v2230 = vld [vmem:[%s2227 + $0x10] sm:$0xff]
        %v2231 = vld [vmem:[%s2227 + $0x18] sm:$0xff]
        %v2232 = vld [vmem:[#allocation14] sm:$0xff]
        %v2233 = vld [vmem:[#allocation14 + $0x8] sm:$0xff]
        %v2234 = vld [vmem:[#allocation14 + $0x10] sm:$0xff]
        %v2235 = vld [vmem:[#allocation14 + $0x18] sm:$0xff]
        %v2236 = vld [vmem:[#allocation14 + $0x20] sm:$0xff]
        %v2237 = vld [vmem:[#allocation14 + $0x28] sm:$0xff]
        %v2238 = vld [vmem:[#allocation14 + $0x30] sm:$0xff]
        %v2239 = vld [vmem:[#allocation14 + $0x38] sm:$0xff]
        %v2240 = vld [vmem:[#allocation14 + $0x40] sm:$0xff]
        %v2241 = vld [vmem:[#allocation14 + $0x48] sm:$0xff]
        %v2242 = vld [vmem:[#allocation14 + $0x50] sm:$0xff]
        %v2243 = vld [vmem:[#allocation14 + $0x58] sm:$0xff]
        %v2244 = vld [vmem:[#allocation14 + $0x60] sm:$0xff]
        %v2245 = vld [vmem:[#allocation14 + $0x68] sm:$0xff]
        %v2246 = vld [vmem:[#allocation14 + $0x70] sm:$0xff]
        %v2247 = vld [vmem:[#allocation14 + $0x78] sm:$0xff]
        %v2248 = vld [vmem:[#allocation14 + $0x80] sm:$0xff]
        %v2249 = vld [vmem:[#allocation14 + $0x88] sm:$0xff]
        %v2250 = vld [vmem:[#allocation14 + $0x90] sm:$0xff]
        %v2251 = vld [vmem:[#allocation14 + $0x98] sm:$0xff]
        %v2252 = vld [vmem:[#allocation14 + $0xa0] sm:$0xff]
        %v2253 = vld [vmem:[#allocation14 + $0xa8] sm:$0xff]
        %v2254 = vld [vmem:[#allocation14 + $0xb0] sm:$0xff]
        %v2255 = vld [vmem:[#allocation14 + $0xb8] sm:$0xff]
        %v2256 = vld [vmem:[#allocation14 + $0xc0] sm:$0xff]
        %v2257 = vld [vmem:[#allocation14 + $0xc8] sm:$0xff]
        %v2258 = vld [vmem:[#allocation14 + $0xd0] sm:$0xff]
        %v2259 = vld [vmem:[#allocation14 + $0xd8] sm:$0xff]
        %v2260 = vld [vmem:[#allocation14 + $0xe0] sm:$0xff]
        %v2261 = vld [vmem:[#allocation14 + $0xe8] sm:$0xff]
        %v2262 = vld [vmem:[#allocation14 + $0xf0] sm:$0xff]
        %v2263 = vld [vmem:[#allocation14 + $0xf8] sm:$0xff]
        %v2264 = vld [vmem:[#allocation14 + $0x100] sm:$0xff]
        %v2265 = vld [vmem:[#allocation14 + $0x108] sm:$0xff]
        %v2266 = vld [vmem:[#allocation14 + $0x110] sm:$0xff]
        %v2267 = vld [vmem:[#allocation14 + $0x118] sm:$0xff]
        %v2268 = vld [vmem:[#allocation14 + $0x120] sm:$0xff]
        %v2269 = vld [vmem:[#allocation14 + $0x128] sm:$0xff]
        %v2270 = vld [vmem:[#allocation14 + $0x130] sm:$0xff]
        %v2271 = vld [vmem:[#allocation14 + $0x138] sm:$0xff]
        %v2272 = vld [vmem:[#allocation14 + $0x140] sm:$0xff]
        %v2273 = vld [vmem:[#allocation14 + $0x148] sm:$0xff]
        %v2274 = vld [vmem:[#allocation14 + $0x150] sm:$0xff]
        %v2275 = vld [vmem:[#allocation14 + $0x158] sm:$0xff]
        %v2276 = vld [vmem:[#allocation14 + $0x160] sm:$0xff]
        %v2277 = vld [vmem:[#allocation14 + $0x168] sm:$0xff]
        %v2278 = vld [vmem:[#allocation14 + $0x170] sm:$0xff]
        %v2279 = vld [vmem:[#allocation14 + $0x178] sm:$0xff]
        %v2280 = vld [vmem:[#allocation14 + $0x180] sm:$0xff]
        %v2281 = vld [vmem:[#allocation14 + $0x188] sm:$0xff]
        %v2282 = vld [vmem:[#allocation14 + $0x190] sm:$0xff]
        %v2283 = vld [vmem:[#allocation14 + $0x198] sm:$0xff]
        %v2284 = vld [vmem:[#allocation14 + $0x1a0] sm:$0xff]
        %v2285 = vld [vmem:[#allocation14 + $0x1a8] sm:$0xff]
        %v2286 = vld [vmem:[#allocation14 + $0x1b0] sm:$0xff]
        %v2287 = vld [vmem:[#allocation14 + $0x1b8] sm:$0xff]
        %v2288 = vld [vmem:[#allocation14 + $0x1c0] sm:$0xff]
        %v2289 = vld [vmem:[#allocation14 + $0x1c8] sm:$0xff]
        %v2290 = vld [vmem:[#allocation14 + $0x1d0] sm:$0xff]
        %v2291 = vld [vmem:[#allocation14 + $0x1d8] sm:$0xff]
        %v2292 = vld [vmem:[#allocation14 + $0x1e0] sm:$0xff]
        %v2293 = vld [vmem:[#allocation14 + $0x1e8] sm:$0xff]
        %v2294 = vld [vmem:[#allocation14 + $0x1f0] sm:$0xff]
        %v2295 = vld [vmem:[#allocation14 + $0x1f8] sm:$0xff]
        %2296 = vmatprep.subr.mxu0 %v2233
        %2297 = vmatpush1.msra.mxu0 %v2232
        %2298 = vmatprep.subr.mxu0 %v2237
        %2299 = vmatpush1.msra.mxu0 %v2236
        %2300 = vmatprep.subr.mxu0 %v2241
        %2301 = vmatpush1.msra.mxu0 %v2240
        %2302 = vmatprep.subr.mxu0 %v2245
        %2303 = vmatpush1.msra.mxu0 %v2244
        %2304 = vmatprep.subr.mxu0 %v2249
        %2305 = vmatpush1.msra.mxu0 %v2248
        %2306 = vmatprep.subr.mxu0 %v2253
        %2307 = vmatpush1.msra.mxu0 %v2252
        %2308 = vmatprep.subr.mxu0 %v2257
        %2309 = vmatpush1.msra.mxu0 %v2256
        %2310 = vmatprep.subr.mxu0 %v2261
        %2311 = vmatpush1.msra.mxu0 %v2260
        %2312 = vmatprep.subr.mxu0 %v2265
        %2313 = vmatpush1.msra.mxu0 %v2264
        %2314 = vmatprep.subr.mxu0 %v2269
        %2315 = vmatpush1.msra.mxu0 %v2268
        %2316 = vmatprep.subr.mxu0 %v2273
        %2317 = vmatpush1.msra.mxu0 %v2272
        %2318 = vmatprep.subr.mxu0 %v2277
        %2319 = vmatpush1.msra.mxu0 %v2276
        %2320 = vmatprep.subr.mxu0 %v2281
        %2321 = vmatpush1.msra.mxu0 %v2280
        %2322 = vmatprep.subr.mxu0 %v2285
        %2323 = vmatpush1.msra.mxu0 %v2284
        %2324 = vmatprep.subr.mxu0 %v2289
        %2325 = vmatpush1.msra.mxu0 %v2288
        %2326 = vmatprep.subr.mxu0 %v2293
        %2327 = vmatpush1.msra.mxu0 %v2292
        %2328 = vmatprep.subr.mxu0 0.0
        %2329 = vmatpush1.msra.mxu0 0.0
        %2330 = vmatprep.subr.mxu0 0.0
        %2331 = vmatpush1.msra.mxu0 0.0
        %2332 = vmatprep.subr.mxu0 0.0
        %2333 = vmatpush1.msra.mxu0 0.0
        %2334 = vmatprep.subr.mxu0 0.0
        %2335 = vmatpush1.msra.mxu0 0.0
        %2336 = vmatprep.subr.mxu0 0.0
        %2337 = vmatpush1.msra.mxu0 0.0
        %2338 = vmatprep.subr.mxu0 0.0
        %2339 = vmatpush1.msra.mxu0 0.0
        %2340 = vmatprep.subr.mxu0 0.0
        %2341 = vmatpush1.msra.mxu0 0.0
        %2342 = vmatprep.subr.mxu0 0.0
        %2343 = vmatpush1.msra.mxu0 0.0
        %2344 = vmatprep.subr.mxu0 0.0
        %2345 = vmatpush1.msra.mxu0 0.0
        %2346 = vmatprep.subr.mxu0 0.0
        %2347 = vmatpush1.msra.mxu0 0.0
        %2348 = vmatprep.subr.mxu0 0.0
        %2349 = vmatpush1.msra.mxu0 0.0
        %2350 = vmatprep.subr.mxu0 0.0
        %2351 = vmatpush1.msra.mxu0 0.0
        %2352 = vmatprep.subr.mxu0 0.0
        %2353 = vmatpush1.msra.mxu0 0.0
        %2354 = vmatprep.subr.mxu0 0.0
        %2355 = vmatpush1.msra.mxu0 0.0
        %2356 = vmatprep.subr.mxu0 0.0
        %2357 = vmatpush1.msra.mxu0 0.0
        %2358 = vmatprep.subr.mxu0 0.0
        %2359 = vmatpush1.msra.mxu0 0.0
        %2360 = vmatprep.mubr.f32.mxu0 0.0
        %2361 = vmatmul.mubr.f32.gmra.mrb[0].mxu0 %v2224
        %v2362 = vpop.f32.mrb[0].mxu0
        %v2363 = vadd.f32 0.0, %v2362
        %v2364 = vpop.f32.mrb[0].mxu0
        %v2365 = vadd.f32 0.0, %v2364
        %2366 = vdwg.mxu0
        %2367 = vmatprep.subr.mxu0 %v2235
        %2368 = vmatpush1.msra.mxu0 %v2234
        %2369 = vmatprep.subr.mxu0 %v2239
        %2370 = vmatpush1.msra.mxu0 %v2238
        %2371 = vmatprep.subr.mxu0 %v2243
        %2372 = vmatpush1.msra.mxu0 %v2242
        %2373 = vmatprep.subr.mxu0 %v2247
        %2374 = vmatpush1.msra.mxu0 %v2246
        %2375 = vmatprep.subr.mxu0 %v2251
        %2376 = vmatpush1.msra.mxu0 %v2250
        %2377 = vmatprep.subr.mxu0 %v2255
        %2378 = vmatpush1.msra.mxu0 %v2254
        %2379 = vmatprep.subr.mxu0 %v2259
        %2380 = vmatpush1.msra.mxu0 %v2258
        %2381 = vmatprep.subr.mxu0 %v2263
        %2382 = vmatpush1.msra.mxu0 %v2262
        %2383 = vmatprep.subr.mxu0 %v2267
        %2384 = vmatpush1.msra.mxu0 %v2266
        %2385 = vmatprep.subr.mxu0 %v2271
        %2386 = vmatpush1.msra.mxu0 %v2270
        %2387 = vmatprep.subr.mxu0 %v2275
        %2388 = vmatpush1.msra.mxu0 %v2274
        %2389 = vmatprep.subr.mxu0 %v2279
        %2390 = vmatpush1.msra.mxu0 %v2278
        %2391 = vmatprep.subr.mxu0 %v2283
        %2392 = vmatpush1.msra.mxu0 %v2282
        %2393 = vmatprep.subr.mxu0 %v2287
        %2394 = vmatpush1.msra.mxu0 %v2286
        %2395 = vmatprep.subr.mxu0 %v2291
        %2396 = vmatpush1.msra.mxu0 %v2290
        %2397 = vmatprep.subr.mxu0 %v2295
        %2398 = vmatpush1.msra.mxu0 %v2294
        %2399 = vmatprep.subr.mxu0 0.0
        %2400 = vmatpush1.msra.mxu0 0.0
        %2401 = vmatprep.subr.mxu0 0.0
        %2402 = vmatpush1.msra.mxu0 0.0
        %2403 = vmatprep.subr.mxu0 0.0
        %2404 = vmatpush1.msra.mxu0 0.0
        %2405 = vmatprep.subr.mxu0 0.0
        %2406 = vmatpush1.msra.mxu0 0.0
        %2407 = vmatprep.subr.mxu0 0.0
        %2408 = vmatpush1.msra.mxu0 0.0
        %2409 = vmatprep.subr.mxu0 0.0
        %2410 = vmatpush1.msra.mxu0 0.0
        %2411 = vmatprep.subr.mxu0 0.0
        %2412 = vmatpush1.msra.mxu0 0.0
        %2413 = vmatprep.subr.mxu0 0.0
        %2414 = vmatpush1.msra.mxu0 0.0
        %2415 = vmatprep.subr.mxu0 0.0
        %2416 = vmatpush1.msra.mxu0 0.0
        %2417 = vmatprep.subr.mxu0 0.0
        %2418 = vmatpush1.msra.mxu0 0.0
        %2419 = vmatprep.subr.mxu0 0.0
        %2420 = vmatpush1.msra.mxu0 0.0
        %2421 = vmatprep.subr.mxu0 0.0
        %2422 = vmatpush1.msra.mxu0 0.0
        %2423 = vmatprep.subr.mxu0 0.0
        %2424 = vmatpush1.msra.mxu0 0.0
        %2425 = vmatprep.subr.mxu0 0.0
        %2426 = vmatpush1.msra.mxu0 0.0
        %2427 = vmatprep.subr.mxu0 0.0
        %2428 = vmatpush1.msra.mxu0 0.0
        %2429 = vmatprep.subr.mxu0 0.0
        %2430 = vmatpush1.msra.mxu0 0.0
        %2431 = vmatprep.mubr.f32.mxu0 0.0
        %2432 = vmatmul.mubr.f32.gmra.mrb[0].mxu0 %v2224
        %v2433 = vpop.f32.mrb[0].mxu0
        %v2434 = vadd.f32 0.0, %v2433
        %v2435 = vpop.f32.mrb[0].mxu0
        %v2436 = vadd.f32 0.0, %v2435
        %2437 = vdwg.mxu0
        %v2438 = vadd.f32 %v2228, %v2363
        %v2439 = vadd.f32 %v2229, %v2365
        %v2440 = vadd.f32 %v2230, %v2434
        %v2441 = vadd.f32 %v2231, %v2436
        %v2442 = vxor.u32 %v2438, 2147483648
        %v2443 = vmul.f32 %v2442, 1.442695
        %v2444 = vpow.pop %v2443
        %v2445 = vadd.f32 %v2444, 1.0
        %v2446 = vrcp.pop %v2445
        %v2447 = vmul.f32 1.0, %v2446
        %v2448 = vxor.u32 %v2439, 2147483648
        %v2449 = vmul.f32 %v2448, 1.442695
        %v2450 = vpow.pop %v2449
        %v2451 = vadd.f32 %v2450, 1.0
        %v2452 = vrcp.pop %v2451
        %v2453 = vmul.f32 1.0, %v2452
        %v2454 = vtanh.pop %v2440
        %v2455 = vxor.u32 %v2441, 2147483648
        %v2456 = vmul.f32 %v2455, 1.442695
        %v2457 = vpow.pop %v2456
        %v2458 = vadd.f32 %v2457, 1.0
        %v2459 = vrcp.pop %v2458
        %v2460 = vmul.f32 1.0, %v2459
        %v2461 = vmul.f32 %v2453, %v2222
        %v2462 = vmul.f32 %v2447, %v2454
        %v2463 = vadd.f32 %v2461, %v2462
        %v2464 = vtanh.pop %v2463
        %v2465 = vmul.f32 %v2460, %v2464
        %s2466 = scalar_lea.vmem [#allocation5], 40
        %2467 = vst [vmem:[%s2466] sm:$0xff] %v2465
        %s2468 = scalar_lea.vmem [#allocation4], 192
        %v2469 = vld [vmem:[%s2468] sm:$0xff]
        %v2470 = vld [vmem:[%s2468 + $0x8] sm:$0xff]
        %v2471 = vld [vmem:[%s2468 + $0x10] sm:$0xff]
        %v2472 = vld [vmem:[%s2468 + $0x18] sm:$0xff]
        %v2473 = vld [vmem:[#allocation14] sm:$0xff]
        %v2474 = vld [vmem:[#allocation14 + $0x8] sm:$0xff]
        %v2475 = vld [vmem:[#allocation14 + $0x10] sm:$0xff]
        %v2476 = vld [vmem:[#allocation14 + $0x18] sm:$0xff]
        %v2477 = vld [vmem:[#allocation14 + $0x20] sm:$0xff]
        %v2478 = vld [vmem:[#allocation14 + $0x28] sm:$0xff]
        %v2479 = vld [vmem:[#allocation14 + $0x30] sm:$0xff]
        %v2480 = vld [vmem:[#allocation14 + $0x38] sm:$0xff]
        %v2481 = vld [vmem:[#allocation14 + $0x40] sm:$0xff]
        %v2482 = vld [vmem:[#allocation14 + $0x48] sm:$0xff]
        %v2483 = vld [vmem:[#allocation14 + $0x50] sm:$0xff]
        %v2484 = vld [vmem:[#allocation14 + $0x58] sm:$0xff]
        %v2485 = vld [vmem:[#allocation14 + $0x60] sm:$0xff]
        %v2486 = vld [vmem:[#allocation14 + $0x68] sm:$0xff]
        %v2487 = vld [vmem:[#allocation14 + $0x70] sm:$0xff]
        %v2488 = vld [vmem:[#allocation14 + $0x78] sm:$0xff]
        %v2489 = vld [vmem:[#allocation14 + $0x80] sm:$0xff]
        %v2490 = vld [vmem:[#allocation14 + $0x88] sm:$0xff]
        %v2491 = vld [vmem:[#allocation14 + $0x90] sm:$0xff]
        %v2492 = vld [vmem:[#allocation14 + $0x98] sm:$0xff]
        %v2493 = vld [vmem:[#allocation14 + $0xa0] sm:$0xff]
        %v2494 = vld [vmem:[#allocation14 + $0xa8] sm:$0xff]
        %v2495 = vld [vmem:[#allocation14 + $0xb0] sm:$0xff]
        %v2496 = vld [vmem:[#allocation14 + $0xb8] sm:$0xff]
        %v2497 = vld [vmem:[#allocation14 + $0xc0] sm:$0xff]
        %v2498 = vld [vmem:[#allocation14 + $0xc8] sm:$0xff]
        %v2499 = vld [vmem:[#allocation14 + $0xd0] sm:$0xff]
        %v2500 = vld [vmem:[#allocation14 + $0xd8] sm:$0xff]
        %v2501 = vld [vmem:[#allocation14 + $0xe0] sm:$0xff]
        %v2502 = vld [vmem:[#allocation14 + $0xe8] sm:$0xff]
        %v2503 = vld [vmem:[#allocation14 + $0xf0] sm:$0xff]
        %v2504 = vld [vmem:[#allocation14 + $0xf8] sm:$0xff]
        %v2505 = vld [vmem:[#allocation14 + $0x100] sm:$0xff]
        %v2506 = vld [vmem:[#allocation14 + $0x108] sm:$0xff]
        %v2507 = vld [vmem:[#allocation14 + $0x110] sm:$0xff]
        %v2508 = vld [vmem:[#allocation14 + $0x118] sm:$0xff]
        %v2509 = vld [vmem:[#allocation14 + $0x120] sm:$0xff]
        %v2510 = vld [vmem:[#allocation14 + $0x128] sm:$0xff]
        %v2511 = vld [vmem:[#allocation14 + $0x130] sm:$0xff]
        %v2512 = vld [vmem:[#allocation14 + $0x138] sm:$0xff]
        %v2513 = vld [vmem:[#allocation14 + $0x140] sm:$0xff]
        %v2514 = vld [vmem:[#allocation14 + $0x148] sm:$0xff]
        %v2515 = vld [vmem:[#allocation14 + $0x150] sm:$0xff]
        %v2516 = vld [vmem:[#allocation14 + $0x158] sm:$0xff]
        %v2517 = vld [vmem:[#allocation14 + $0x160] sm:$0xff]
        %v2518 = vld [vmem:[#allocation14 + $0x168] sm:$0xff]
        %v2519 = vld [vmem:[#allocation14 + $0x170] sm:$0xff]
        %v2520 = vld [vmem:[#allocation14 + $0x178] sm:$0xff]
        %v2521 = vld [vmem:[#allocation14 + $0x180] sm:$0xff]
        %v2522 = vld [vmem:[#allocation14 + $0x188] sm:$0xff]
        %v2523 = vld [vmem:[#allocation14 + $0x190] sm:$0xff]
        %v2524 = vld [vmem:[#allocation14 + $0x198] sm:$0xff]
        %v2525 = vld [vmem:[#allocation14 + $0x1a0] sm:$0xff]
        %v2526 = vld [vmem:[#allocation14 + $0x1a8] sm:$0xff]
        %v2527 = vld [vmem:[#allocation14 + $0x1b0] sm:$0xff]
        %v2528 = vld [vmem:[#allocation14 + $0x1b8] sm:$0xff]
        %v2529 = vld [vmem:[#allocation14 + $0x1c0] sm:$0xff]
        %v2530 = vld [vmem:[#allocation14 + $0x1c8] sm:$0xff]
        %v2531 = vld [vmem:[#allocation14 + $0x1d0] sm:$0xff]
        %v2532 = vld [vmem:[#allocation14 + $0x1d8] sm:$0xff]
        %v2533 = vld [vmem:[#allocation14 + $0x1e0] sm:$0xff]
        %v2534 = vld [vmem:[#allocation14 + $0x1e8] sm:$0xff]
        %v2535 = vld [vmem:[#allocation14 + $0x1f0] sm:$0xff]
        %v2536 = vld [vmem:[#allocation14 + $0x1f8] sm:$0xff]
        %2537 = vmatprep.subr.mxu0 %v2474
        %2538 = vmatpush1.msra.mxu0 %v2473
        %2539 = vmatprep.subr.mxu0 %v2478
        %2540 = vmatpush1.msra.mxu0 %v2477
        %2541 = vmatprep.subr.mxu0 %v2482
        %2542 = vmatpush1.msra.mxu0 %v2481
        %2543 = vmatprep.subr.mxu0 %v2486
        %2544 = vmatpush1.msra.mxu0 %v2485
        %2545 = vmatprep.subr.mxu0 %v2490
        %2546 = vmatpush1.msra.mxu0 %v2489
        %2547 = vmatprep.subr.mxu0 %v2494
        %2548 = vmatpush1.msra.mxu0 %v2493
        %2549 = vmatprep.subr.mxu0 %v2498
        %2550 = vmatpush1.msra.mxu0 %v2497
        %2551 = vmatprep.subr.mxu0 %v2502
        %2552 = vmatpush1.msra.mxu0 %v2501
        %2553 = vmatprep.subr.mxu0 %v2506
        %2554 = vmatpush1.msra.mxu0 %v2505
        %2555 = vmatprep.subr.mxu0 %v2510
        %2556 = vmatpush1.msra.mxu0 %v2509
        %2557 = vmatprep.subr.mxu0 %v2514
        %2558 = vmatpush1.msra.mxu0 %v2513
        %2559 = vmatprep.subr.mxu0 %v2518
        %2560 = vmatpush1.msra.mxu0 %v2517
        %2561 = vmatprep.subr.mxu0 %v2522
        %2562 = vmatpush1.msra.mxu0 %v2521
        %2563 = vmatprep.subr.mxu0 %v2526
        %2564 = vmatpush1.msra.mxu0 %v2525
        %2565 = vmatprep.subr.mxu0 %v2530
        %2566 = vmatpush1.msra.mxu0 %v2529
        %2567 = vmatprep.subr.mxu0 %v2534
        %2568 = vmatpush1.msra.mxu0 %v2533
        %2569 = vmatprep.subr.mxu0 0.0
        %2570 = vmatpush1.msra.mxu0 0.0
        %2571 = vmatprep.subr.mxu0 0.0
        %2572 = vmatpush1.msra.mxu0 0.0
        %2573 = vmatprep.subr.mxu0 0.0
        %2574 = vmatpush1.msra.mxu0 0.0
        %2575 = vmatprep.subr.mxu0 0.0
        %2576 = vmatpush1.msra.mxu0 0.0
        %2577 = vmatprep.subr.mxu0 0.0
        %2578 = vmatpush1.msra.mxu0 0.0
        %2579 = vmatprep.subr.mxu0 0.0
        %2580 = vmatpush1.msra.mxu0 0.0
        %2581 = vmatprep.subr.mxu0 0.0
        %2582 = vmatpush1.msra.mxu0 0.0
        %2583 = vmatprep.subr.mxu0 0.0
        %2584 = vmatpush1.msra.mxu0 0.0
        %2585 = vmatprep.subr.mxu0 0.0
        %2586 = vmatpush1.msra.mxu0 0.0
        %2587 = vmatprep.subr.mxu0 0.0
        %2588 = vmatpush1.msra.mxu0 0.0
        %2589 = vmatprep.subr.mxu0 0.0
        %2590 = vmatpush1.msra.mxu0 0.0
        %2591 = vmatprep.subr.mxu0 0.0
        %2592 = vmatpush1.msra.mxu0 0.0
        %2593 = vmatprep.subr.mxu0 0.0
        %2594 = vmatpush1.msra.mxu0 0.0
        %2595 = vmatprep.subr.mxu0 0.0
        %2596 = vmatpush1.msra.mxu0 0.0
        %2597 = vmatprep.subr.mxu0 0.0
        %2598 = vmatpush1.msra.mxu0 0.0
        %2599 = vmatprep.subr.mxu0 0.0
        %2600 = vmatpush1.msra.mxu0 0.0
        %2601 = vmatprep.mubr.f32.mxu0 0.0
        %2602 = vmatmul.mubr.f32.gmra.mrb[0].mxu0 %v2465
        %v2603 = vpop.f32.mrb[0].mxu0
        %v2604 = vadd.f32 0.0, %v2603
        %v2605 = vpop.f32.mrb[0].mxu0
        %v2606 = vadd.f32 0.0, %v2605
        %2607 = vdwg.mxu0
        %2608 = vmatprep.subr.mxu0 %v2476
        %2609 = vmatpush1.msra.mxu0 %v2475
        %2610 = vmatprep.subr.mxu0 %v2480
        %2611 = vmatpush1.msra.mxu0 %v2479
        %2612 = vmatprep.subr.mxu0 %v2484
        %2613 = vmatpush1.msra.mxu0 %v2483
        %2614 = vmatprep.subr.mxu0 %v2488
        %2615 = vmatpush1.msra.mxu0 %v2487
        %2616 = vmatprep.subr.mxu0 %v2492
        %2617 = vmatpush1.msra.mxu0 %v2491
        %2618 = vmatprep.subr.mxu0 %v2496
        %2619 = vmatpush1.msra.mxu0 %v2495
        %2620 = vmatprep.subr.mxu0 %v2500
        %2621 = vmatpush1.msra.mxu0 %v2499
        %2622 = vmatprep.subr.mxu0 %v2504
        %2623 = vmatpush1.msra.mxu0 %v2503
        %2624 = vmatprep.subr.mxu0 %v2508
        %2625 = vmatpush1.msra.mxu0 %v2507
        %2626 = vmatprep.subr.mxu0 %v2512
        %2627 = vmatpush1.msra.mxu0 %v2511
        %2628 = vmatprep.subr.mxu0 %v2516
        %2629 = vmatpush1.msra.mxu0 %v2515
        %2630 = vmatprep.subr.mxu0 %v2520
        %2631 = vmatpush1.msra.mxu0 %v2519
        %2632 = vmatprep.subr.mxu0 %v2524
        %2633 = vmatpush1.msra.mxu0 %v2523
        %2634 = vmatprep.subr.mxu0 %v2528
        %2635 = vmatpush1.msra.mxu0 %v2527
        %2636 = vmatprep.subr.mxu0 %v2532
        %2637 = vmatpush1.msra.mxu0 %v2531
        %2638 = vmatprep.subr.mxu0 %v2536
        %2639 = vmatpush1.msra.mxu0 %v2535
        %2640 = vmatprep.subr.mxu0 0.0
        %2641 = vmatpush1.msra.mxu0 0.0
        %2642 = vmatprep.subr.mxu0 0.0
        %2643 = vmatpush1.msra.mxu0 0.0
        %2644 = vmatprep.subr.mxu0 0.0
        %2645 = vmatpush1.msra.mxu0 0.0
        %2646 = vmatprep.subr.mxu0 0.0
        %2647 = vmatpush1.msra.mxu0 0.0
        %2648 = vmatprep.subr.mxu0 0.0
        %2649 = vmatpush1.msra.mxu0 0.0
        %2650 = vmatprep.subr.mxu0 0.0
        %2651 = vmatpush1.msra.mxu0 0.0
        %2652 = vmatprep.subr.mxu0 0.0
        %2653 = vmatpush1.msra.mxu0 0.0
        %2654 = vmatprep.subr.mxu0 0.0
        %2655 = vmatpush1.msra.mxu0 0.0
        %2656 = vmatprep.subr.mxu0 0.0
        %2657 = vmatpush1.msra.mxu0 0.0
        %2658 = vmatprep.subr.mxu0 0.0
        %2659 = vmatpush1.msra.mxu0 0.0
        %2660 = vmatprep.subr.mxu0 0.0
        %2661 = vmatpush1.msra.mxu0 0.0
        %2662 = vmatprep.subr.mxu0 0.0
        %2663 = vmatpush1.msra.mxu0 0.0
        %2664 = vmatprep.subr.mxu0 0.0
        %2665 = vmatpush1.msra.mxu0 0.0
        %2666 = vmatprep.subr.mxu0 0.0
        %2667 = vmatpush1.msra.mxu0 0.0
        %2668 = vmatprep.subr.mxu0 0.0
        %2669 = vmatpush1.msra.mxu0 0.0
        %2670 = vmatprep.subr.mxu0 0.0
        %2671 = vmatpush1.msra.mxu0 0.0
        %2672 = vmatprep.mubr.f32.mxu0 0.0
        %2673 = vmatmul.mubr.f32.gmra.mrb[0].mxu0 %v2465
        %v2674 = vpop.f32.mrb[0].mxu0
        %v2675 = vadd.f32 0.0, %v2674
        %v2676 = vpop.f32.mrb[0].mxu0
        %v2677 = vadd.f32 0.0, %v2676
        %2678 = vdwg.mxu0
        %v2679 = vadd.f32 %v2469, %v2604
        %v2680 = vadd.f32 %v2470, %v2606
        %v2681 = vadd.f32 %v2471, %v2675
        %v2682 = vadd.f32 %v2472, %v2677
        %v2683 = vxor.u32 %v2679, 2147483648
        %v2684 = vmul.f32 %v2683, 1.442695
        %v2685 = vpow.pop %v2684
        %v2686 = vadd.f32 %v2685, 1.0
        %v2687 = vrcp.pop %v2686
        %v2688 = vmul.f32 1.0, %v2687
        %v2689 = vxor.u32 %v2680, 2147483648
        %v2690 = vmul.f32 %v2689, 1.442695
        %v2691 = vpow.pop %v2690
        %v2692 = vadd.f32 %v2691, 1.0
        %v2693 = vrcp.pop %v2692
        %v2694 = vmul.f32 1.0, %v2693
        %v2695 = vtanh.pop %v2681
        %v2696 = vxor.u32 %v2682, 2147483648
        %v2697 = vmul.f32 %v2696, 1.442695
        %v2698 = vpow.pop %v2697
        %v2699 = vadd.f32 %v2698, 1.0
        %v2700 = vrcp.pop %v2699
        %v2701 = vmul.f32 1.0, %v2700
        %v2702 = vmul.f32 %v2694, %v2463
        %v2703 = vmul.f32 %v2688, %v2695
        %v2704 = vadd.f32 %v2702, %v2703
        %v2705 = vtanh.pop %v2704
        %v2706 = vmul.f32 %v2701, %v2705
        %s2707 = scalar_lea.vmem [#allocation5], 48
        %2708 = vst [vmem:[%s2707] sm:$0xff] %v2706
        %s2709 = scalar_lea.vmem [#allocation4], 224
        %v2710 = vld [vmem:[%s2709] sm:$0xff]
        %v2711 = vld [vmem:[%s2709 + $0x8] sm:$0xff]
        %v2712 = vld [vmem:[%s2709 + $0x10] sm:$0xff]
        %v2713 = vld [vmem:[%s2709 + $0x18] sm:$0xff]
        %v2714 = vld [vmem:[#allocation14] sm:$0xff]
        %v2715 = vld [vmem:[#allocation14 + $0x8] sm:$0xff]
        %v2716 = vld [vmem:[#allocation14 + $0x10] sm:$0xff]
        %v2717 = vld [vmem:[#allocation14 + $0x18] sm:$0xff]
        %v2718 = vld [vmem:[#allocation14 + $0x20] sm:$0xff]
        %v2719 = vld [vmem:[#allocation14 + $0x28] sm:$0xff]
        %v2720 = vld [vmem:[#allocation14 + $0x30] sm:$0xff]
        %v2721 = vld [vmem:[#allocation14 + $0x38] sm:$0xff]
        %v2722 = vld [vmem:[#allocation14 + $0x40] sm:$0xff]
        %v2723 = vld [vmem:[#allocation14 + $0x48] sm:$0xff]
        %v2724 = vld [vmem:[#allocation14 + $0x50] sm:$0xff]
        %v2725 = vld [vmem:[#allocation14 + $0x58] sm:$0xff]
        %v2726 = vld [vmem:[#allocation14 + $0x60] sm:$0xff]
        %v2727 = vld [vmem:[#allocation14 + $0x68] sm:$0xff]
        %v2728 = vld [vmem:[#allocation14 + $0x70] sm:$0xff]
        %v2729 = vld [vmem:[#allocation14 + $0x78] sm:$0xff]
        %v2730 = vld [vmem:[#allocation14 + $0x80] sm:$0xff]
        %v2731 = vld [vmem:[#allocation14 + $0x88] sm:$0xff]
        %v2732 = vld [vmem:[#allocation14 + $0x90] sm:$0xff]
        %v2733 = vld [vmem:[#allocation14 + $0x98] sm:$0xff]
        %v2734 = vld [vmem:[#allocation14 + $0xa0] sm:$0xff]
        %v2735 = vld [vmem:[#allocation14 + $0xa8] sm:$0xff]
        %v2736 = vld [vmem:[#allocation14 + $0xb0] sm:$0xff]
        %v2737 = vld [vmem:[#allocation14 + $0xb8] sm:$0xff]
        %v2738 = vld [vmem:[#allocation14 + $0xc0] sm:$0xff]
        %v2739 = vld [vmem:[#allocation14 + $0xc8] sm:$0xff]
        %v2740 = vld [vmem:[#allocation14 + $0xd0] sm:$0xff]
        %v2741 = vld [vmem:[#allocation14 + $0xd8] sm:$0xff]
        %v2742 = vld [vmem:[#allocation14 + $0xe0] sm:$0xff]
        %v2743 = vld [vmem:[#allocation14 + $0xe8] sm:$0xff]
        %v2744 = vld [vmem:[#allocation14 + $0xf0] sm:$0xff]
        %v2745 = vld [vmem:[#allocation14 + $0xf8] sm:$0xff]
        %v2746 = vld [vmem:[#allocation14 + $0x100] sm:$0xff]
        %v2747 = vld [vmem:[#allocation14 + $0x108] sm:$0xff]
        %v2748 = vld [vmem:[#allocation14 + $0x110] sm:$0xff]
        %v2749 = vld [vmem:[#allocation14 + $0x118] sm:$0xff]
        %v2750 = vld [vmem:[#allocation14 + $0x120] sm:$0xff]
        %v2751 = vld [vmem:[#allocation14 + $0x128] sm:$0xff]
        %v2752 = vld [vmem:[#allocation14 + $0x130] sm:$0xff]
        %v2753 = vld [vmem:[#allocation14 + $0x138] sm:$0xff]
        %v2754 = vld [vmem:[#allocation14 + $0x140] sm:$0xff]
        %v2755 = vld [vmem:[#allocation14 + $0x148] sm:$0xff]
        %v2756 = vld [vmem:[#allocation14 + $0x150] sm:$0xff]
        %v2757 = vld [vmem:[#allocation14 + $0x158] sm:$0xff]
        %v2758 = vld [vmem:[#allocation14 + $0x160] sm:$0xff]
        %v2759 = vld [vmem:[#allocation14 + $0x168] sm:$0xff]
        %v2760 = vld [vmem:[#allocation14 + $0x170] sm:$0xff]
        %v2761 = vld [vmem:[#allocation14 + $0x178] sm:$0xff]
        %v2762 = vld [vmem:[#allocation14 + $0x180] sm:$0xff]
        %v2763 = vld [vmem:[#allocation14 + $0x188] sm:$0xff]
        %v2764 = vld [vmem:[#allocation14 + $0x190] sm:$0xff]
        %v2765 = vld [vmem:[#allocation14 + $0x198] sm:$0xff]
        %v2766 = vld [vmem:[#allocation14 + $0x1a0] sm:$0xff]
        %v2767 = vld [vmem:[#allocation14 + $0x1a8] sm:$0xff]
        %v2768 = vld [vmem:[#allocation14 + $0x1b0] sm:$0xff]
        %v2769 = vld [vmem:[#allocation14 + $0x1b8] sm:$0xff]
        %v2770 = vld [vmem:[#allocation14 + $0x1c0] sm:$0xff]
        %v2771 = vld [vmem:[#allocation14 + $0x1c8] sm:$0xff]
        %v2772 = vld [vmem:[#allocation14 + $0x1d0] sm:$0xff]
        %v2773 = vld [vmem:[#allocation14 + $0x1d8] sm:$0xff]
        %v2774 = vld [vmem:[#allocation14 + $0x1e0] sm:$0xff]
        %v2775 = vld [vmem:[#allocation14 + $0x1e8] sm:$0xff]
        %v2776 = vld [vmem:[#allocation14 + $0x1f0] sm:$0xff]
        %v2777 = vld [vmem:[#allocation14 + $0x1f8] sm:$0xff]
        %2778 = vmatprep.subr.mxu0 %v2715
        %2779 = vmatpush1.msra.mxu0 %v2714
        %2780 = vmatprep.subr.mxu0 %v2719
        %2781 = vmatpush1.msra.mxu0 %v2718
        %2782 = vmatprep.subr.mxu0 %v2723
        %2783 = vmatpush1.msra.mxu0 %v2722
        %2784 = vmatprep.subr.mxu0 %v2727
        %2785 = vmatpush1.msra.mxu0 %v2726
        %2786 = vmatprep.subr.mxu0 %v2731
        %2787 = vmatpush1.msra.mxu0 %v2730
        %2788 = vmatprep.subr.mxu0 %v2735
        %2789 = vmatpush1.msra.mxu0 %v2734
        %2790 = vmatprep.subr.mxu0 %v2739
        %2791 = vmatpush1.msra.mxu0 %v2738
        %2792 = vmatprep.subr.mxu0 %v2743
        %2793 = vmatpush1.msra.mxu0 %v2742
        %2794 = vmatprep.subr.mxu0 %v2747
        %2795 = vmatpush1.msra.mxu0 %v2746
        %2796 = vmatprep.subr.mxu0 %v2751
        %2797 = vmatpush1.msra.mxu0 %v2750
        %2798 = vmatprep.subr.mxu0 %v2755
        %2799 = vmatpush1.msra.mxu0 %v2754
        %2800 = vmatprep.subr.mxu0 %v2759
        %2801 = vmatpush1.msra.mxu0 %v2758
        %2802 = vmatprep.subr.mxu0 %v2763
        %2803 = vmatpush1.msra.mxu0 %v2762
        %2804 = vmatprep.subr.mxu0 %v2767
        %2805 = vmatpush1.msra.mxu0 %v2766
        %2806 = vmatprep.subr.mxu0 %v2771
        %2807 = vmatpush1.msra.mxu0 %v2770
        %2808 = vmatprep.subr.mxu0 %v2775
        %2809 = vmatpush1.msra.mxu0 %v2774
        %2810 = vmatprep.subr.mxu0 0.0
        %2811 = vmatpush1.msra.mxu0 0.0
        %2812 = vmatprep.subr.mxu0 0.0
        %2813 = vmatpush1.msra.mxu0 0.0
        %2814 = vmatprep.subr.mxu0 0.0
        %2815 = vmatpush1.msra.mxu0 0.0
        %2816 = vmatprep.subr.mxu0 0.0
        %2817 = vmatpush1.msra.mxu0 0.0
        %2818 = vmatprep.subr.mxu0 0.0
        %2819 = vmatpush1.msra.mxu0 0.0
        %2820 = vmatprep.subr.mxu0 0.0
        %2821 = vmatpush1.msra.mxu0 0.0
        %2822 = vmatprep.subr.mxu0 0.0
        %2823 = vmatpush1.msra.mxu0 0.0
        %2824 = vmatprep.subr.mxu0 0.0
        %2825 = vmatpush1.msra.mxu0 0.0
        %2826 = vmatprep.subr.mxu0 0.0
        %2827 = vmatpush1.msra.mxu0 0.0
        %2828 = vmatprep.subr.mxu0 0.0
        %2829 = vmatpush1.msra.mxu0 0.0
        %2830 = vmatprep.subr.mxu0 0.0
        %2831 = vmatpush1.msra.mxu0 0.0
        %2832 = vmatprep.subr.mxu0 0.0
        %2833 = vmatpush1.msra.mxu0 0.0
        %2834 = vmatprep.subr.mxu0 0.0
        %2835 = vmatpush1.msra.mxu0 0.0
        %2836 = vmatprep.subr.mxu0 0.0
        %2837 = vmatpush1.msra.mxu0 0.0
        %2838 = vmatprep.subr.mxu0 0.0
        %2839 = vmatpush1.msra.mxu0 0.0
        %2840 = vmatprep.subr.mxu0 0.0
        %2841 = vmatpush1.msra.mxu0 0.0
        %2842 = vmatprep.mubr.f32.mxu0 0.0
        %2843 = vmatmul.mubr.f32.gmra.mrb[0].mxu0 %v2706
        %v2844 = vpop.f32.mrb[0].mxu0
        %v2845 = vadd.f32 0.0, %v2844
        %v2846 = vpop.f32.mrb[0].mxu0
        %v2847 = vadd.f32 0.0, %v2846
        %2848 = vdwg.mxu0
        %2849 = vmatprep.subr.mxu0 %v2717
        %2850 = vmatpush1.msra.mxu0 %v2716
        %2851 = vmatprep.subr.mxu0 %v2721
        %2852 = vmatpush1.msra.mxu0 %v2720
        %2853 = vmatprep.subr.mxu0 %v2725
        %2854 = vmatpush1.msra.mxu0 %v2724
        %2855 = vmatprep.subr.mxu0 %v2729
        %2856 = vmatpush1.msra.mxu0 %v2728
        %2857 = vmatprep.subr.mxu0 %v2733
        %2858 = vmatpush1.msra.mxu0 %v2732
        %2859 = vmatprep.subr.mxu0 %v2737
        %2860 = vmatpush1.msra.mxu0 %v2736
        %2861 = vmatprep.subr.mxu0 %v2741
        %2862 = vmatpush1.msra.mxu0 %v2740
        %2863 = vmatprep.subr.mxu0 %v2745
        %2864 = vmatpush1.msra.mxu0 %v2744
        %2865 = vmatprep.subr.mxu0 %v2749
        %2866 = vmatpush1.msra.mxu0 %v2748
        %2867 = vmatprep.subr.mxu0 %v2753
        %2868 = vmatpush1.msra.mxu0 %v2752
        %2869 = vmatprep.subr.mxu0 %v2757
        %2870 = vmatpush1.msra.mxu0 %v2756
        %2871 = vmatprep.subr.mxu0 %v2761
        %2872 = vmatpush1.msra.mxu0 %v2760
        %2873 = vmatprep.subr.mxu0 %v2765
        %2874 = vmatpush1.msra.mxu0 %v2764
        %2875 = vmatprep.subr.mxu0 %v2769
        %2876 = vmatpush1.msra.mxu0 %v2768
        %2877 = vmatprep.subr.mxu0 %v2773
        %2878 = vmatpush1.msra.mxu0 %v2772
        %2879 = vmatprep.subr.mxu0 %v2777
        %2880 = vmatpush1.msra.mxu0 %v2776
        %2881 = vmatprep.subr.mxu0 0.0
        %2882 = vmatpush1.msra.mxu0 0.0
        %2883 = vmatprep.subr.mxu0 0.0
        %2884 = vmatpush1.msra.mxu0 0.0
        %2885 = vmatprep.subr.mxu0 0.0
        %2886 = vmatpush1.msra.mxu0 0.0
        %2887 = vmatprep.subr.mxu0 0.0
        %2888 = vmatpush1.msra.mxu0 0.0
        %2889 = vmatprep.subr.mxu0 0.0
        %2890 = vmatpush1.msra.mxu0 0.0
        %2891 = vmatprep.subr.mxu0 0.0
        %2892 = vmatpush1.msra.mxu0 0.0
        %2893 = vmatprep.subr.mxu0 0.0
        %2894 = vmatpush1.msra.mxu0 0.0
        %2895 = vmatprep.subr.mxu0 0.0
        %2896 = vmatpush1.msra.mxu0 0.0
        %2897 = vmatprep.subr.mxu0 0.0
        %2898 = vmatpush1.msra.mxu0 0.0
        %2899 = vmatprep.subr.mxu0 0.0
        %2900 = vmatpush1.msra.mxu0 0.0
        %2901 = vmatprep.subr.mxu0 0.0
        %2902 = vmatpush1.msra.mxu0 0.0
        %2903 = vmatprep.subr.mxu0 0.0
        %2904 = vmatpush1.msra.mxu0 0.0
        %2905 = vmatprep.subr.mxu0 0.0
        %2906 = vmatpush1.msra.mxu0 0.0
        %2907 = vmatprep.subr.mxu0 0.0
        %2908 = vmatpush1.msra.mxu0 0.0
        %2909 = vmatprep.subr.mxu0 0.0
        %2910 = vmatpush1.msra.mxu0 0.0
        %2911 = vmatprep.subr.mxu0 0.0
        %2912 = vmatpush1.msra.mxu0 0.0
        %2913 = vmatprep.mubr.f32.mxu0 0.0
        %2914 = vmatmul.mubr.f32.gmra.mrb[0].mxu0 %v2706
        %v2915 = vpop.f32.mrb[0].mxu0
        %v2916 = vadd.f32 0.0, %v2915
        %v2917 = vpop.f32.mrb[0].mxu0
        %v2918 = vadd.f32 0.0, %v2917
        %2919 = vdwg.mxu0
        %v2920 = vadd.f32 %v2710, %v2845
        %v2921 = vadd.f32 %v2711, %v2847
        %v2922 = vadd.f32 %v2712, %v2916
        %v2923 = vadd.f32 %v2713, %v2918
        %v2924 = vxor.u32 %v2920, 2147483648
        %v2925 = vmul.f32 %v2924, 1.442695
        %v2926 = vpow.pop %v2925
        %v2927 = vadd.f32 %v2926, 1.0
        %v2928 = vrcp.pop %v2927
        %v2929 = vmul.f32 1.0, %v2928
        %v2930 = vxor.u32 %v2921, 2147483648
        %v2931 = vmul.f32 %v2930, 1.442695
        %v2932 = vpow.pop %v2931
        %v2933 = vadd.f32 %v2932, 1.0
        %v2934 = vrcp.pop %v2933
        %v2935 = vmul.f32 1.0, %v2934
        %v2936 = vtanh.pop %v2922
        %v2937 = vxor.u32 %v2923, 2147483648
        %v2938 = vmul.f32 %v2937, 1.442695
        %v2939 = vpow.pop %v2938
        %v2940 = vadd.f32 %v2939, 1.0
        %v2941 = vrcp.pop %v2940
        %v2942 = vmul.f32 1.0, %v2941
        %v2943 = vmul.f32 %v2935, %v2704
        %v2944 = vmul.f32 %v2929, %v2936
        %v2945 = vadd.f32 %v2943, %v2944
        %v2946 = vtanh.pop %v2945
        %v2947 = vmul.f32 %v2942, %v2946
        %s2948 = scalar_lea.vmem [#allocation5], 56
        %2949 = vst [vmem:[%s2948] sm:$0xff] %v2947
        %2950 = vst [vmem:[#allocation2] sm:$0xff] %v2947
        %2951 = vst [vmem:[#allocation3] sm:$0xff] %v2945
        %2952 = vst [vmem:[%s502] sm:$0xff] %v2947
        %2953 = vst [vmem:[%s509] sm:$0xff] %v2945
        %v2954 = vld [vmem:[#allocation5] sm:$0xff]
        %v2955 = vld [vmem:[#allocation5 + $0x8] sm:$0xff]
        %v2956 = vld [vmem:[#allocation5 + $0x10] sm:$0xff]
        %v2957 = vld [vmem:[#allocation5 + $0x18] sm:$0xff]
        %v2958 = vld [vmem:[#allocation5 + $0x20] sm:$0xff]
        %v2959 = vld [vmem:[#allocation5 + $0x28] sm:$0xff]
        %v2960 = vld [vmem:[#allocation5 + $0x30] sm:$0xff]
        %v2961 = vld [vmem:[#allocation5 + $0x38] sm:$0xff]
        %v2962 = vld [vmem:[#allocation17] sm:$0xff]
        %v2963 = vld [vmem:[#allocation17 + $0x8] sm:$0xff]
        %v2964 = vld [vmem:[#allocation17 + $0x10] sm:$0xff]
        %v2965 = vld [vmem:[#allocation17 + $0x18] sm:$0xff]
        %v2966 = vld [vmem:[#allocation17 + $0x20] sm:$0xff]
        %v2967 = vld [vmem:[#allocation17 + $0x28] sm:$0xff]
        %v2968 = vld [vmem:[#allocation17 + $0x30] sm:$0xff]
        %v2969 = vld [vmem:[#allocation17 + $0x38] sm:$0xff]
        %v2970 = vld [vmem:[#allocation17 + $0x40] sm:$0xff]
        %v2971 = vld [vmem:[#allocation17 + $0x48] sm:$0xff]
        %v2972 = vld [vmem:[#allocation17 + $0x50] sm:$0xff]
        %v2973 = vld [vmem:[#allocation17 + $0x58] sm:$0xff]
        %v2974 = vld [vmem:[#allocation17 + $0x60] sm:$0xff]
        %v2975 = vld [vmem:[#allocation17 + $0x68] sm:$0xff]
        %v2976 = vld [vmem:[#allocation17 + $0x70] sm:$0xff]
        %v2977 = vld [vmem:[#allocation17 + $0x78] sm:$0xff]
        %v2978 = vld [vmem:[#allocation18] sm:$0x1]
        %v2980 = vlaneseq
        %v2981 = vshrl.u32 %v2980, 7
        %v2982 = vsub.s32 0, %v2981
        %v2983 = vrot.slane %v2978, %v2982
        %2985 = vmatprep.subr.mxu0 0.0
        %2986 = vmatpush1.msra.mxu0 %v2962
        %2987 = vmatprep.subr.mxu0 0.0
        %2988 = vmatpush1.msra.mxu0 %v2963
        %2989 = vmatprep.subr.mxu0 0.0
        %2990 = vmatpush1.msra.mxu0 %v2964
        %2991 = vmatprep.subr.mxu0 0.0
        %2992 = vmatpush1.msra.mxu0 %v2965
        %2993 = vmatprep.subr.mxu0 0.0
        %2994 = vmatpush1.msra.mxu0 %v2966
        %2995 = vmatprep.subr.mxu0 0.0
        %2996 = vmatpush1.msra.mxu0 %v2967
        %2997 = vmatprep.subr.mxu0 0.0
        %2998 = vmatpush1.msra.mxu0 %v2968
        %2999 = vmatprep.subr.mxu0 0.0
        %3000 = vmatpush1.msra.mxu0 %v2969
        %3001 = vmatprep.subr.mxu0 0.0
        %3002 = vmatpush1.msra.mxu0 %v2970
        %3003 = vmatprep.subr.mxu0 0.0
        %3004 = vmatpush1.msra.mxu0 %v2971
        %3005 = vmatprep.subr.mxu0 0.0
        %3006 = vmatpush1.msra.mxu0 %v2972
        %3007 = vmatprep.subr.mxu0 0.0
        %3008 = vmatpush1.msra.mxu0 %v2973
        %3009 = vmatprep.subr.mxu0 0.0
        %3010 = vmatpush1.msra.mxu0 %v2974
        %3011 = vmatprep.subr.mxu0 0.0
        %3012 = vmatpush1.msra.mxu0 %v2975
        %3013 = vmatprep.subr.mxu0 0.0
        %3014 = vmatpush1.msra.mxu0 %v2976
        %3015 = vmatprep.subr.mxu0 0.0
        %3016 = vmatpush1.msra.mxu0 %v2977
        %3017 = vmatprep.subr.mxu0 0.0
        %3018 = vmatpush1.msra.mxu0 0.0
        %3019 = vmatprep.subr.mxu0 0.0
        %3020 = vmatpush1.msra.mxu0 0.0
        %3021 = vmatprep.subr.mxu0 0.0
        %3022 = vmatpush1.msra.mxu0 0.0
        %3023 = vmatprep.subr.mxu0 0.0
        %3024 = vmatpush1.msra.mxu0 0.0
        %3025 = vmatprep.subr.mxu0 0.0
        %3026 = vmatpush1.msra.mxu0 0.0
        %3027 = vmatprep.subr.mxu0 0.0
        %3028 = vmatpush1.msra.mxu0 0.0
        %3029 = vmatprep.subr.mxu0 0.0
        %3030 = vmatpush1.msra.mxu0 0.0
        %3031 = vmatprep.subr.mxu0 0.0
        %3032 = vmatpush1.msra.mxu0 0.0
        %3033 = vmatprep.subr.mxu0 0.0
        %3034 = vmatpush1.msra.mxu0 0.0
        %3035 = vmatprep.subr.mxu0 0.0
        %3036 = vmatpush1.msra.mxu0 0.0
        %3037 = vmatprep.subr.mxu0 0.0
        %3038 = vmatpush1.msra.mxu0 0.0
        %3039 = vmatprep.subr.mxu0 0.0
        %3040 = vmatpush1.msra.mxu0 0.0
        %3041 = vmatprep.subr.mxu0 0.0
        %3042 = vmatpush1.msra.mxu0 0.0
        %3043 = vmatprep.subr.mxu0 0.0
        %3044 = vmatpush1.msra.mxu0 0.0
        %3045 = vmatprep.subr.mxu0 0.0
        %3046 = vmatpush1.msra.mxu0 0.0
        %3047 = vmatprep.subr.mxu0 0.0
        %3048 = vmatpush1.msra.mxu0 0.0
        %3049 = vmatprep.mubr.f32.mxu0 0.0
        %3050 = vmatmul.mubr.f32.gmra.mrb[0].mxu0 %v2954
        %v3051 = vpop.f32.mrb[0].mxu0
        %v3052 = vadd.f32 %v2983, %v3051
        %v3053 = vpop.f32.mrb[0].mxu0
        %3054 = vmatprep.mubr.f32.mxu0 0.0
        %3055 = vmatmul.mubr.f32.gmra.mrb[0].mxu0 %v2955
        %v3056 = vpop.f32.mrb[0].mxu0
        %v3057 = vadd.f32 %v2983, %v3056
        %v3058 = vpop.f32.mrb[0].mxu0
        %3059 = vmatprep.mubr.f32.mxu0 0.0
        %3060 = vmatmul.mubr.f32.gmra.mrb[0].mxu0 %v2956
        %v3061 = vpop.f32.mrb[0].mxu0
        %v3062 = vadd.f32 %v2983, %v3061
        %v3063 = vpop.f32.mrb[0].mxu0
        %3064 = vmatprep.mubr.f32.mxu0 0.0
        %3065 = vmatmul.mubr.f32.gmra.mrb[0].mxu0 %v2957
        %v3066 = vpop.f32.mrb[0].mxu0
        %v3067 = vadd.f32 %v2983, %v3066
        %v3068 = vpop.f32.mrb[0].mxu0
        %3069 = vmatprep.mubr.f32.mxu0 0.0
        %3070 = vmatmul.mubr.f32.gmra.mrb[0].mxu0 %v2958
        %v3071 = vpop.f32.mrb[0].mxu0
        %v3072 = vadd.f32 %v2983, %v3071
        %v3073 = vpop.f32.mrb[0].mxu0
        %3074 = vmatprep.mubr.f32.mxu0 0.0
        %3075 = vmatmul.mubr.f32.gmra.mrb[0].mxu0 %v2959
        %v3076 = vpop.f32.mrb[0].mxu0
        %v3077 = vadd.f32 %v2983, %v3076
        %v3078 = vpop.f32.mrb[0].mxu0
        %3079 = vmatprep.mubr.f32.mxu0 0.0
        %3080 = vmatmul.mubr.f32.gmra.mrb[0].mxu0 %v2960
        %v3081 = vpop.f32.mrb[0].mxu0
        %v3082 = vadd.f32 %v2983, %v3081
        %v3083 = vpop.f32.mrb[0].mxu0
        %3084 = vmatprep.mubr.f32.mxu0 0.0
        %3085 = vmatmul.mubr.f32.gmra.mrb[0].mxu0 %v2961
        %v3086 = vpop.f32.mrb[0].mxu0
        %v3087 = vadd.f32 %v2983, %v3086
        %v3088 = vpop.f32.mrb[0].mxu0
        %3089 = vdwg.mxu0
        %vm3090 = vcmask 15360
        %3091 = vst.msk [vmem:[%s495] sm:$0xff] %vm3090, %v3052
        %3092 = vst.msk [vmem:[%s495 + $0x8] sm:$0xff] %vm3090, %v3057
        %3093 = vst.msk [vmem:[%s495 + $0x10] sm:$0xff] %vm3090, %v3062
        %3094 = vst.msk [vmem:[%s495 + $0x18] sm:$0xff] %vm3090, %v3067
        %3095 = vst.msk [vmem:[%s495 + $0x20] sm:$0xff] %vm3090, %v3072
        %3096 = vst.msk [vmem:[%s495 + $0x28] sm:$0xff] %vm3090, %v3077
        %3097 = vst.msk [vmem:[%s495 + $0x30] sm:$0xff] %vm3090, %v3082
        %3098 = vst.msk [vmem:[%s495 + $0x38] sm:$0xff] %vm3090, %v3087
        %s3099 = sand.u32 %s232, 1
        %s3100 = scalar_lea.sflag [#allocation8], %s3099
        %s3101 = sand.u32 %s232, 1
        %s3102 = smul.addr %s3101, 64
        %s3103 = scalar_lea.vmem [#allocation20], %s3102
        %s3104 = sand.u32 %s35, 1
        %s3105 = scalar_lea.sflag [#allocation22], %s3104
        %s3106 = sand.u32 %s258, 1
        %s3107 = smul.addr %s3106, 8
        %s3108 = scalar_lea.vmem [#allocation21], %s3107
        %s3109 = sand.u32 %s35, 1
        %s3110 = scalar_lea.sflag [#allocation22], %s3109
        %s3111 = sand.u32 %s284, 1
        %s3112 = smul.addr %s3111, 8
        %s3113 = scalar_lea.vmem [#allocation23], %s3112
        // Predicated region
        $region89: #{cudnn_lstm_model_lstm_kernel_forward.3} parent=51 // pred_check
          %p3114 = pneg %p242
        $region90: #{cudnn_lstm_model_lstm_kernel_forward.3} parent=51 // pred_check_branch
          %3116 = sbr.rel (%p3114) target = $region92
        $region91: #{cudnn_lstm_model_lstm_kernel_forward.3} parent=51 // pred_region
          %s3117 = smul.u32 8, %s40
          %s3119 = ssub.s32 1024, 1024
          %3120 = vsyncadd %s3100, %s3119
          %s3121 = smul.addr %s3117, 2
          %s3122 = sadd.s32 %s39, %s3121
          %s3123 = smul.addr %s3122, 128
          %s3124 = scalar_lea.hbm %s8, %s3123
          %s3125 = sshll.u32 %s3103, 4
          %s3126 = int_to_ptr.vmem [resolvable:$true] %s3125
          %3131 = dma.vmem_to_hbm [thread:$0]  %s3126, 1024, %s3124, %s3100, 128, 256, 8
        $region92: #{cudnn_lstm_model_lstm_kernel_forward.3} parent=51 // pred_fallthru
          _
        // Predicated region
        $region93: #{cudnn_lstm_model_lstm_kernel_forward.3} parent=51 // pred_check
          %p3132 = pneg %p268
        $region94: #{cudnn_lstm_model_lstm_kernel_forward.3} parent=51 // pred_check_branch
          %3134 = sbr.rel (%p3132) target = $region96
        $region95: #{cudnn_lstm_model_lstm_kernel_forward.3} parent=51 // pred_region
          %s3136 = ssub.s32 128, 128
          %3137 = vsyncadd %s3105, %s3136
          %s3138 = smul.addr %s39, 128
          %s3139 = scalar_lea.hbm %s9, %s3138
          %s3141 = sshll.u32 %s3108, 4
          %s3142 = int_to_ptr.vmem [resolvable:$true] %s3141
          %3144 = dma.vmem_to_hbm [thread:$0]  %s3142, 128, %s3139, %s3105
        $region96: #{cudnn_lstm_model_lstm_kernel_forward.3} parent=51 // pred_fallthru
          _
        // Predicated region
        $region97: #{cudnn_lstm_model_lstm_kernel_forward.3} parent=51 // pred_check
          %p3145 = pneg %p294
        $region98: #{cudnn_lstm_model_lstm_kernel_forward.3} parent=51 // pred_check_branch
          %3147 = sbr.rel (%p3145) target = $region100
        $region99: #{cudnn_lstm_model_lstm_kernel_forward.3} parent=51 // pred_region
          %s3149 = ssub.s32 128, 128
          %3150 = vsyncadd %s3110, %s3149
          %s3151 = smul.addr %s39, 128
          %s3152 = scalar_lea.hbm %s10, %s3151
          %s3154 = sshll.u32 %s3113, 4
          %s3155 = int_to_ptr.vmem [resolvable:$true] %s3154
          %3157 = dma.vmem_to_hbm [thread:$0]  %s3155, 128, %s3152, %s3110
        $region100: #{cudnn_lstm_model_lstm_kernel_forward.3} parent=51 // pred_fallthru
          _
      $region52: #{cudnn_lstm_model_lstm_kernel_forward.3} parent=5 // pred_fallthru
        _
      %p3158 = scmp.le.s32.totalorder 2, %s30
      // Predicated region
      $region101: #{cudnn_lstm_model_lstm_kernel_forward.3} parent=5 // pred_check
        %p3159 = pneg %p3158
      $region102: #{cudnn_lstm_model_lstm_kernel_forward.3} parent=5 // pred_check_branch
        %3161 = sbr.rel (%p3159) target = $region104
      $region103: #{cudnn_lstm_model_lstm_kernel_forward.3} parent=5 // pred_region
        %s3162 = ssub.s32 %s30, 2
        // Predicated region
        $region105: #{cudnn_lstm_model_lstm_kernel_forward.3} parent=103 // pred_check
          %p3163 = pneg %p248
        $region106: #{cudnn_lstm_model_lstm_kernel_forward.3} parent=103 // pred_check_branch
          %3165 = sbr.rel (%p3163) target = $region108
        $region107: #{cudnn_lstm_model_lstm_kernel_forward.3} parent=103 // pred_region
          %s3166 = sand.u32 %s233, 1
          %s3167 = scalar_lea.sflag [#allocation8], %s3166
          %s3168 = sand.u32 %s233, 1
          %s3169 = smul.addr %s3168, 64
          %s3170 = scalar_lea.vmem [#allocation20], %s3169
          %3171 = dma.done %s3167, 1024
        $region108: #{cudnn_lstm_model_lstm_kernel_forward.3} parent=103 // pred_fallthru
          _
        // Predicated region
        $region109: #{cudnn_lstm_model_lstm_kernel_forward.3} parent=103 // pred_check
          %p3172 = pneg %p274
        $region110: #{cudnn_lstm_model_lstm_kernel_forward.3} parent=103 // pred_check_branch
          %3174 = sbr.rel (%p3172) target = $region112
        $region111: #{cudnn_lstm_model_lstm_kernel_forward.3} parent=103 // pred_region
          %s3175 = sand.u32 %s36, 1
          %s3176 = scalar_lea.sflag [#allocation22], %s3175
          %s3177 = sand.u32 %s259, 1
          %s3178 = smul.addr %s3177, 8
          %s3179 = scalar_lea.vmem [#allocation21], %s3178
          %3180 = dma.done %s3176, 128
        $region112: #{cudnn_lstm_model_lstm_kernel_forward.3} parent=103 // pred_fallthru
          _
        // Predicated region
        $region113: #{cudnn_lstm_model_lstm_kernel_forward.3} parent=103 // pred_check
          %p3181 = pneg %p300
        $region114: #{cudnn_lstm_model_lstm_kernel_forward.3} parent=103 // pred_check_branch
          %3183 = sbr.rel (%p3181) target = $region116
        $region115: #{cudnn_lstm_model_lstm_kernel_forward.3} parent=103 // pred_region
          %s3184 = sand.u32 %s36, 1
          %s3185 = scalar_lea.sflag [#allocation22], %s3184
          %s3186 = sand.u32 %s285, 1
          %s3187 = smul.addr %s3186, 8
          %s3188 = scalar_lea.vmem [#allocation23], %s3187
          %3189 = dma.done %s3185, 128
        $region116: #{cudnn_lstm_model_lstm_kernel_forward.3} parent=103 // pred_fallthru
          _
      $region104: #{cudnn_lstm_model_lstm_kernel_forward.3} parent=5 // pred_fallthru
        _
    $region6: #{cudnn_lstm_model_lstm_kernel_forward.3} parent=1 // loop_footer
      %s34 = sadd.s32 1, %s30
    $region7: #{cudnn_lstm_model_lstm_kernel_forward.3} parent=1 // loop_footer_branch
      %29 = sbr.rel target = $region3
    $region8: #{cudnn_lstm_model_lstm_kernel_forward.3} parent=1 // loop_exit
      _
    %3190 = vsyncpa [#allocation7], 1
    %s3191 = scalar_lea.sflag [#allocation7], 1
    %3192 = vsyncpa %s3191, 1
    %3193 = vsyncpa [#allocation10], 1
    %3194 = vsyncpa [#allocation13], 1
    %3195 = vsyncpa [#allocation16], 1
    %3196 = vsyncpa [#allocation19], 1
    %3197 = vsyncpa [#allocation8], 1
    %s3198 = scalar_lea.sflag [#allocation8], 1
    %3199 = vsyncpa %s3198, 1
    %3200 = vsyncpa [#allocation22], 1
    %s3201 = scalar_lea.sflag [#allocation22], 1
    %3202 = vsyncpa %s3201, 1

</llo_original>
